<compile_context>
chip_gen: v6e
topology: v6e:2x2x1
jax: 0.10.0
libtpu: 0.0.40
codegen_flags: <defaults>
</compile_context>

<pallas_src>
import functools

import jax
import jax.numpy as jnp
import numpy as np
from jax import lax
from jax.experimental import pallas as pl
from jax.experimental.pallas import tpu as pltpu


def _basic_block_kernel(x_ref, w1_ref, w2_ref, b1_ref, b2_ref, o_ref,
                        pad1, pad2, *, H, W, C, Wq):
    # x_ref  : (1, H, W, C)   raw NHWC activations (any float dtype)
    # w*_ref : (3, C, 3C)     bf16, [dy, ci, dx*C + co], BN scale folded in
    # b*_ref : (1, C)         f32 folded BN bias
    # o_ref  : (1, H, W, C)   f32 output, dense NHWC
    # pad1/2 : (P, C)         bf16 scratch: zero-padded image, row width Wq
    M = H * Wq                     # rows of the "extended width" layout
    L = M + 8                      # window length (covers the dx shifts)
    f32 = jnp.float32
    bf16 = jnp.bfloat16

    # Hoisted zero constants (padding borders / row pads).
    z_top1 = jnp.zeros((Wq, C), bf16)
    z_bot1 = jnp.zeros((Wq + 8, C), bf16)
    z_top2 = jnp.zeros((Wq + 1, C), bf16)
    z_bot2 = jnp.zeros((Wq + 7, C), bf16)
    z_left = jnp.zeros((1, C), bf16)
    z_right = jnp.zeros((Wq - W - 1, C), bf16)

    # ---- conv1 input: build the zero-padded image in VMEM (in-kernel padding)
    pad1[pl.ds(0, Wq), :] = z_top1
    pad1[pl.ds((H + 1) * Wq, Wq + 8), :] = z_bot1
    for h in range(H):
        row = jnp.concatenate(
            [z_left, x_ref[0, h, :, :].astype(bf16), z_right], axis=0)
        pad1[pl.ds((h + 1) * Wq, Wq), :] = row        # aligned (Wq % 8 == 0)

    def conv3x3(pad, w_ref):
        # 3 aligned window loads + 3 bf16 MXU matmuls (K=C, N=3C); then the
        # three dx taps are combined by shifting the f32 partial sums:
        #   out[j] = sum_dx acc[j + dx, dx*C:(dx+1)*C]
        acc = None
        for dy in range(3):
            win = pad[pl.ds(dy * Wq, L), :]           # (L, C) bf16, aligned
            part = jnp.dot(win, w_ref[dy], preferred_element_type=f32)
            acc = part if acc is None else acc + part  # (L, 3C) f32
        return (acc[0:M, 0:C]
                + acc[1:M + 1, C:2 * C]
                + acc[2:M + 2, 2 * C:3 * C])          # (M, C) f32

    # ---- conv1 + bn1 (scale folded into w1) + relu ---------------------------
    y = jnp.maximum(conv3x3(pad1, w1_ref) + b1_ref[...], 0.0)     # (M, C) f32

    # ---- conv2 input: mask wrap columns, single shifted store = zero padding -
    w_ext = lax.broadcasted_iota(jnp.int32, (M, 1), 0) % Wq
    y = jnp.where(w_ext < W, y, 0.0)
    pad2[pl.ds(0, Wq + 1), :] = z_top2
    pad2[pl.ds((H + 1) * Wq + 1, Wq + 7), :] = z_bot2
    pad2[pl.ds(Wq + 1, M), :] = y.astype(bf16)

    # ---- conv2 + bn2 + identity residual + relu, dense NHWC output -----------
    z = conv3x3(pad2, w2_ref) + b2_ref[...]                       # (M, C) f32
    for h in range(H):                         # aligned source slices (h*Wq)
        zrow = z[h * Wq:h * Wq + W, :] + x_ref[0, h, :, :].astype(f32)
        o_ref[0, h, :, :] = jnp.maximum(zrow, 0.0)


def _fold_bn(gamma, beta, mean, var, eps=1e-5):
    scale = gamma / jnp.sqrt(var + eps)
    bias = beta - mean * scale
    return scale, bias


def basic_block_forward_nhwc(x_nhwc, w1, w2, bn1, bn2):
    """BasicBlock forward on NHWC activations (stride=1, no downsample)."""
    N, H, W, C = x_nhwc.shape
    Cout = w1.shape[-1]
    assert w1.shape == (3, 3, C, Cout) and w2.shape == (3, 3, Cout, Cout)
    assert C == Cout, "identity residual requires inplanes == planes"

    Wq = -(-(W + 2) // 8) * 8          # padded row width, multiple of 8
    P = (H + 2) * Wq + 8               # scratch rows (incl. tap-window tail)

    # Fold BN scale into the conv weights; rearrange to [dy, ci, dx*C + co].
    s1, b1 = _fold_bn(**bn1)
    s2, b2 = _fold_bn(**bn2)

    def prep_w(w, s):
        w = w * s[None, None, None, :]
        w = jnp.transpose(w, (0, 2, 1, 3)).reshape(3, C, 3 * Cout)
        return w.astype(jnp.bfloat16)

    w1r, w2r = prep_w(w1, s1), prep_w(w2, s2)
    b1r = b1.reshape(1, Cout).astype(jnp.float32)
    b2r = b2.reshape(1, Cout).astype(jnp.float32)

    kernel = functools.partial(_basic_block_kernel, H=H, W=W, C=Cout, Wq=Wq)

    return pl.pallas_call(
        kernel,
        out_shape=jax.ShapeDtypeStruct((N, H, W, Cout), jnp.float32),
        grid_spec=pltpu.PrefetchScalarGridSpec(
            num_scalar_prefetch=0,
            grid=(N,),
            in_specs=[
                pl.BlockSpec((1, H, W, C), lambda n: (n, 0, 0, 0)),
                pl.BlockSpec((3, C, 3 * Cout), lambda n: (0, 0, 0)),
                pl.BlockSpec((3, Cout, 3 * Cout), lambda n: (0, 0, 0)),
                pl.BlockSpec((1, Cout), lambda n: (0, 0)),
                pl.BlockSpec((1, Cout), lambda n: (0, 0)),
            ],
            out_specs=pl.BlockSpec((1, H, W, Cout), lambda n: (n, 0, 0, 0)),
            scratch_shapes=[pltpu.VMEM((P, Cout), jnp.bfloat16),
                            pltpu.VMEM((P, Cout), jnp.bfloat16)],
        ),
        compiler_params=pltpu.CompilerParams(
            dimension_semantics=("parallel",),
            # Raise towards 64-96 MiB on v5e/v6e for large whole-image tiles.
            vmem_limit_bytes=32 * 1024 * 1024),
    )(x_nhwc, w1r, w2r, b1r, b2r)


@jax.jit
def basic_block_forward(x_nchw, w1, w2, bn1, bn2):
    """NCHW adapter matching the PyTorch module interface.

    The transpose + bf16 cast fuse into a single HBM pass; a fully NHWC/bf16
    pipeline should call basic_block_forward_nhwc directly (zero wrapper
    layout passes).
    """
    x_nhwc = jnp.transpose(x_nchw, (0, 2, 3, 1)).astype(jnp.bfloat16)
    out = basic_block_forward_nhwc(x_nhwc, w1, w2, bn1, bn2)
    return jnp.transpose(out, (0, 3, 1, 2))


def _reference_forward(x_nchw, w1, w2, bn1, bn2):
    """Pure-JAX f32 reference (lax.conv) with identical semantics, NCHW."""
    def conv3x3(x, w_hwio):
        w_oihw = jnp.transpose(w_hwio, (3, 2, 0, 1))
        return lax.conv_general_dilated(
            x, w_oihw, window_strides=(1, 1), padding=((1, 1), (1, 1)),
            dimension_numbers=("NCHW", "OIHW", "NCHW"))

    def bn(x, p):
        s, b = _fold_bn(**p)
        return x * s[None, :, None, None] + b[None, :, None, None]

    out = jnp.maximum(bn(conv3x3(x_nchw, w1), bn1), 0.0)
    out = bn(conv3x3(out, w2), bn2)
    out = out + x_nchw
    return jnp.maximum(out, 0.0)


if __name__ == "__main__":
    # BasicBlock(inplanes=4, planes=4, stride=1, downsample=None)
    N, C, H, W = 2, 4, 16, 16
    Cout = C

    key = jax.random.PRNGKey(0)
    keys = jax.random.split(key, 12)

    x = jax.random.normal(keys[0], (N, C, H, W), jnp.float32)

    # conv weights, HWIO layout
    w1 = jax.random.normal(keys[1], (3, 3, C, Cout), jnp.float32) * 0.1
    w2 = jax.random.normal(keys[2], (3, 3, Cout, Cout), jnp.float32) * 0.1

    bn1 = dict(
        gamma=1.0 + 0.1 * jax.random.normal(keys[3], (Cout,), jnp.float32),
        beta=0.1 * jax.random.normal(keys[4], (Cout,), jnp.float32),
        mean=0.1 * jax.random.normal(keys[5], (Cout,), jnp.float32),
        var=1.0 + 0.1 * jax.random.uniform(keys[6], (Cout,), jnp.float32),
    )
    bn2 = dict(
        gamma=1.0 + 0.1 * jax.random.normal(keys[7], (Cout,), jnp.float32),
        beta=0.1 * jax.random.normal(keys[8], (Cout,), jnp.float32),
        mean=0.1 * jax.random.normal(keys[9], (Cout,), jnp.float32),
        var=1.0 + 0.1 * jax.random.uniform(keys[10], (Cout,), jnp.float32),
    )

    out = jax.block_until_ready(basic_block_forward(x, w1, w2, bn1, bn2))
    ref = jax.block_until_ready(_reference_forward(x, w1, w2, bn1, bn2))

    # bf16 MXU operands / bf16 residual source (f32 accumulation) -> small
    # drift vs. the f32 reference.
    np.testing.assert_allclose(np.asarray(out), np.asarray(ref),
                               rtol=3e-2, atol=3e-2)

    print("KERNEL_OK")
</pallas_src>

<mosaic_0001>
module attributes {stable_mosaic.version = 11 : i64} {
  func.func @_basic_block_kernel(%arg0: i32, %arg1: memref<1x16x16x4xbf16, #tpu.memory_space<vmem>>, %arg2: memref<3x4x12xbf16, #tpu.memory_space<vmem>>, %arg3: memref<3x4x12xbf16, #tpu.memory_space<vmem>>, %arg4: memref<1x4xf32, #tpu.memory_space<vmem>>, %arg5: memref<1x4xf32, #tpu.memory_space<vmem>>, %arg6: memref<1x16x16x4xf32, #tpu.memory_space<vmem>>, %arg7: memref<440x4xbf16, #tpu.memory_space<vmem>>, %arg8: memref<440x4xbf16, #tpu.memory_space<vmem>>) attributes {dimension_semantics = [#tpu.dimension_semantics<parallel>], iteration_bounds = array<i64: 2>, scalar_prefetch = 0 : i64, scratch_operands = 2 : i64, tpu.core_type = #tpu.core_type<tc>, window_params = [{transform_indices = @transform_0, window_bounds = array<i64: 1, 16, 16, 4>}, {pipeline_mode = #tpu.pipeline_mode<synchronous>, transform_indices = @transform_1, window_bounds = array<i64: 3, 4, 12>}, {pipeline_mode = #tpu.pipeline_mode<synchronous>, transform_indices = @transform_2, window_bounds = array<i64: 3, 4, 12>}, {pipeline_mode = #tpu.pipeline_mode<synchronous>, transform_indices = @transform_3, window_bounds = array<i64: 1, 4>}, {pipeline_mode = #tpu.pipeline_mode<synchronous>, transform_indices = @transform_4, window_bounds = array<i64: 1, 4>}, {transform_indices = @transform_5, window_bounds = array<i64: 1, 16, 16, 4>}]} {
    %cst = arith.constant 0.000000e+00 : bf16
    %0 = vector.broadcast %cst : bf16 to vector<24x4xbf16>
    %cst_0 = arith.constant 0.000000e+00 : bf16
    %1 = vector.broadcast %cst_0 : bf16 to vector<32x4xbf16>
    %cst_1 = arith.constant 0.000000e+00 : bf16
    %2 = vector.broadcast %cst_1 : bf16 to vector<25x4xbf16>
    %cst_2 = arith.constant 0.000000e+00 : bf16
    %3 = vector.broadcast %cst_2 : bf16 to vector<31x4xbf16>
    %cst_3 = arith.constant 0.000000e+00 : bf16
    %4 = vector.broadcast %cst_3 : bf16 to vector<1x4xbf16>
    %cst_4 = arith.constant 0.000000e+00 : bf16
    %5 = vector.broadcast %cst_4 : bf16 to vector<7x4xbf16>
    %c0 = arith.constant 0 : index
    %c0_5 = arith.constant 0 : index
    %6 = vector.load %arg7[%c0, %c0_5] : memref<440x4xbf16, #tpu.memory_space<vmem>>, vector<24x4xbf16>
    tpu.vector_store %arg7[%c0, %c0_5], %0 {strides = array<i32>} : memref<440x4xbf16, #tpu.memory_space<vmem>>, vector<24x4xbf16>,
    %c408 = arith.constant 408 : index
    %c0_6 = arith.constant 0 : index
    %7 = vector.load %arg7[%c408, %c0_6] : memref<440x4xbf16, #tpu.memory_space<vmem>>, vector<32x4xbf16>
    tpu.vector_store %arg7[%c408, %c0_6], %1 {strides = array<i32>} : memref<440x4xbf16, #tpu.memory_space<vmem>>, vector<32x4xbf16>,
    %c0_7 = arith.constant 0 : index
    %c0_8 = arith.constant 0 : index
    %c0_9 = arith.constant 0 : index
    %c0_10 = arith.constant 0 : index
    %8 = vector.load %arg1[%c0_7, %c0_8, %c0_9, %c0_10] : memref<1x16x16x4xbf16, #tpu.memory_space<vmem>>, vector<1x1x16x4xbf16>
    %9 = vector.shape_cast %8 : vector<1x1x16x4xbf16> to vector<16x4xbf16>
    %10 = tpu.concatenate %4, %9, %5 in 0 : vector<1x4xbf16>, vector<16x4xbf16>, vector<7x4xbf16> -> vector<24x4xbf16>
    %c24 = arith.constant 24 : index
    %c0_11 = arith.constant 0 : index
    %11 = vector.load %arg7[%c24, %c0_11] : memref<440x4xbf16, #tpu.memory_space<vmem>>, vector<24x4xbf16>
    tpu.vector_store %arg7[%c24, %c0_11], %10 {strides = array<i32>} : memref<440x4xbf16, #tpu.memory_space<vmem>>, vector<24x4xbf16>,
    %c0_12 = arith.constant 0 : index
    %c1 = arith.constant 1 : index
    %c0_13 = arith.constant 0 : index
    %c0_14 = arith.constant 0 : index
    %12 = vector.load %arg1[%c0_12, %c1, %c0_13, %c0_14] : memref<1x16x16x4xbf16, #tpu.memory_space<vmem>>, vector<1x1x16x4xbf16>
    %13 = vector.shape_cast %12 : vector<1x1x16x4xbf16> to vector<16x4xbf16>
    %14 = tpu.concatenate %4, %13, %5 in 0 : vector<1x4xbf16>, vector<16x4xbf16>, vector<7x4xbf16> -> vector<24x4xbf16>
    %c48 = arith.constant 48 : index
    %c0_15 = arith.constant 0 : index
    %15 = vector.load %arg7[%c48, %c0_15] : memref<440x4xbf16, #tpu.memory_space<vmem>>, vector<24x4xbf16>
    tpu.vector_store %arg7[%c48, %c0_15], %14 {strides = array<i32>} : memref<440x4xbf16, #tpu.memory_space<vmem>>, vector<24x4xbf16>,
    %c0_16 = arith.constant 0 : index
    %c2 = arith.constant 2 : index
    %c0_17 = arith.constant 0 : index
    %c0_18 = arith.constant 0 : index
    %16 = vector.load %arg1[%c0_16, %c2, %c0_17, %c0_18] : memref<1x16x16x4xbf16, #tpu.memory_space<vmem>>, vector<1x1x16x4xbf16>
    %17 = vector.shape_cast %16 : vector<1x1x16x4xbf16> to vector<16x4xbf16>
    %18 = tpu.concatenate %4, %17, %5 in 0 : vector<1x4xbf16>, vector<16x4xbf16>, vector<7x4xbf16> -> vector<24x4xbf16>
    %c72 = arith.constant 72 : index
    %c0_19 = arith.constant 0 : index
    %19 = vector.load %arg7[%c72, %c0_19] : memref<440x4xbf16, #tpu.memory_space<vmem>>, vector<24x4xbf16>
    tpu.vector_store %arg7[%c72, %c0_19], %18 {strides = array<i32>} : memref<440x4xbf16, #tpu.memory_space<vmem>>, vector<24x4xbf16>,
    %c0_20 = arith.constant 0 : index
    %c3 = arith.constant 3 : index
    %c0_21 = arith.constant 0 : index
    %c0_22 = arith.constant 0 : index
    %20 = vector.load %arg1[%c0_20, %c3, %c0_21, %c0_22] : memref<1x16x16x4xbf16, #tpu.memory_space<vmem>>, vector<1x1x16x4xbf16>
    %21 = vector.shape_cast %20 : vector<1x1x16x4xbf16> to vector<16x4xbf16>
    %22 = tpu.concatenate %4, %21, %5 in 0 : vector<1x4xbf16>, vector<16x4xbf16>, vector<7x4xbf16> -> vector<24x4xbf16>
    %c96 = arith.constant 96 : index
    %c0_23 = arith.constant 0 : index
    %23 = vector.load %arg7[%c96, %c0_23] : memref<440x4xbf16, #tpu.memory_space<vmem>>, vector<24x4xbf16>
    tpu.vector_store %arg7[%c96, %c0_23], %22 {strides = array<i32>} : memref<440x4xbf16, #tpu.memory_space<vmem>>, vector<24x4xbf16>,
    %c0_24 = arith.constant 0 : index
    %c4 = arith.constant 4 : index
    %c0_25 = arith.constant 0 : index
    %c0_26 = arith.constant 0 : index
    %24 = vector.load %arg1[%c0_24, %c4, %c0_25, %c0_26] : memref<1x16x16x4xbf16, #tpu.memory_space<vmem>>, vector<1x1x16x4xbf16>
    %25 = vector.shape_cast %24 : vector<1x1x16x4xbf16> to vector<16x4xbf16>
    %26 = tpu.concatenate %4, %25, %5 in 0 : vector<1x4xbf16>, vector<16x4xbf16>, vector<7x4xbf16> -> vector<24x4xbf16>
    %c120 = arith.constant 120 : index
    %c0_27 = arith.constant 0 : index
    %27 = vector.load %arg7[%c120, %c0_27] : memref<440x4xbf16, #tpu.memory_space<vmem>>, vector<24x4xbf16>
    tpu.vector_store %arg7[%c120, %c0_27], %26 {strides = array<i32>} : memref<440x4xbf16, #tpu.memory_space<vmem>>, vector<24x4xbf16>,
    %c0_28 = arith.constant 0 : index
    %c5 = arith.constant 5 : index
    %c0_29 = arith.constant 0 : index
    %c0_30 = arith.constant 0 : index
    %28 = vector.load %arg1[%c0_28, %c5, %c0_29, %c0_30] : memref<1x16x16x4xbf16, #tpu.memory_space<vmem>>, vector<1x1x16x4xbf16>
    %29 = vector.shape_cast %28 : vector<1x1x16x4xbf16> to vector<16x4xbf16>
    %30 = tpu.concatenate %4, %29, %5 in 0 : vector<1x4xbf16>, vector<16x4xbf16>, vector<7x4xbf16> -> vector<24x4xbf16>
    %c144 = arith.constant 144 : index
    %c0_31 = arith.constant 0 : index
    %31 = vector.load %arg7[%c144, %c0_31] : memref<440x4xbf16, #tpu.memory_space<vmem>>, vector<24x4xbf16>
    tpu.vector_store %arg7[%c144, %c0_31], %30 {strides = array<i32>} : memref<440x4xbf16, #tpu.memory_space<vmem>>, vector<24x4xbf16>,
    %c0_32 = arith.constant 0 : index
    %c6 = arith.constant 6 : index
    %c0_33 = arith.constant 0 : index
    %c0_34 = arith.constant 0 : index
    %32 = vector.load %arg1[%c0_32, %c6, %c0_33, %c0_34] : memref<1x16x16x4xbf16, #tpu.memory_space<vmem>>, vector<1x1x16x4xbf16>
    %33 = vector.shape_cast %32 : vector<1x1x16x4xbf16> to vector<16x4xbf16>
    %34 = tpu.concatenate %4, %33, %5 in 0 : vector<1x4xbf16>, vector<16x4xbf16>, vector<7x4xbf16> -> vector<24x4xbf16>
    %c168 = arith.constant 168 : index
    %c0_35 = arith.constant 0 : index
    %35 = vector.load %arg7[%c168, %c0_35] : memref<440x4xbf16, #tpu.memory_space<vmem>>, vector<24x4xbf16>
    tpu.vector_store %arg7[%c168, %c0_35], %34 {strides = array<i32>} : memref<440x4xbf16, #tpu.memory_space<vmem>>, vector<24x4xbf16>,
    %c0_36 = arith.constant 0 : index
    %c7 = arith.constant 7 : index
    %c0_37 = arith.constant 0 : index
    %c0_38 = arith.constant 0 : index
    %36 = vector.load %arg1[%c0_36, %c7, %c0_37, %c0_38] : memref<1x16x16x4xbf16, #tpu.memory_space<vmem>>, vector<1x1x16x4xbf16>
    %37 = vector.shape_cast %36 : vector<1x1x16x4xbf16> to vector<16x4xbf16>
    %38 = tpu.concatenate %4, %37, %5 in 0 : vector<1x4xbf16>, vector<16x4xbf16>, vector<7x4xbf16> -> vector<24x4xbf16>
    %c192 = arith.constant 192 : index
    %c0_39 = arith.constant 0 : index
    %39 = vector.load %arg7[%c192, %c0_39] : memref<440x4xbf16, #tpu.memory_space<vmem>>, vector<24x4xbf16>
    tpu.vector_store %arg7[%c192, %c0_39], %38 {strides = array<i32>} : memref<440x4xbf16, #tpu.memory_space<vmem>>, vector<24x4xbf16>,
    %c0_40 = arith.constant 0 : index
    %c8 = arith.constant 8 : index
    %c0_41 = arith.constant 0 : index
    %c0_42 = arith.constant 0 : index
    %40 = vector.load %arg1[%c0_40, %c8, %c0_41, %c0_42] : memref<1x16x16x4xbf16, #tpu.memory_space<vmem>>, vector<1x1x16x4xbf16>
    %41 = vector.shape_cast %40 : vector<1x1x16x4xbf16> to vector<16x4xbf16>
    %42 = tpu.concatenate %4, %41, %5 in 0 : vector<1x4xbf16>, vector<16x4xbf16>, vector<7x4xbf16> -> vector<24x4xbf16>
    %c216 = arith.constant 216 : index
    %c0_43 = arith.constant 0 : index
    %43 = vector.load %arg7[%c216, %c0_43] : memref<440x4xbf16, #tpu.memory_space<vmem>>, vector<24x4xbf16>
    tpu.vector_store %arg7[%c216, %c0_43], %42 {strides = array<i32>} : memref<440x4xbf16, #tpu.memory_space<vmem>>, vector<24x4xbf16>,
    %c0_44 = arith.constant 0 : index
    %c9 = arith.constant 9 : index
    %c0_45 = arith.constant 0 : index
    %c0_46 = arith.constant 0 : index
    %44 = vector.load %arg1[%c0_44, %c9, %c0_45, %c0_46] : memref<1x16x16x4xbf16, #tpu.memory_space<vmem>>, vector<1x1x16x4xbf16>
    %45 = vector.shape_cast %44 : vector<1x1x16x4xbf16> to vector<16x4xbf16>
    %46 = tpu.concatenate %4, %45, %5 in 0 : vector<1x4xbf16>, vector<16x4xbf16>, vector<7x4xbf16> -> vector<24x4xbf16>
    %c240 = arith.constant 240 : index
    %c0_47 = arith.constant 0 : index
    %47 = vector.load %arg7[%c240, %c0_47] : memref<440x4xbf16, #tpu.memory_space<vmem>>, vector<24x4xbf16>
    tpu.vector_store %arg7[%c240, %c0_47], %46 {strides = array<i32>} : memref<440x4xbf16, #tpu.memory_space<vmem>>, vector<24x4xbf16>,
    %c0_48 = arith.constant 0 : index
    %c10 = arith.constant 10 : index
    %c0_49 = arith.constant 0 : index
    %c0_50 = arith.constant 0 : index
    %48 = vector.load %arg1[%c0_48, %c10, %c0_49, %c0_50] : memref<1x16x16x4xbf16, #tpu.memory_space<vmem>>, vector<1x1x16x4xbf16>
    %49 = vector.shape_cast %48 : vector<1x1x16x4xbf16> to vector<16x4xbf16>
    %50 = tpu.concatenate %4, %49, %5 in 0 : vector<1x4xbf16>, vector<16x4xbf16>, vector<7x4xbf16> -> vector<24x4xbf16>
    %c264 = arith.constant 264 : index
    %c0_51 = arith.constant 0 : index
    %51 = vector.load %arg7[%c264, %c0_51] : memref<440x4xbf16, #tpu.memory_space<vmem>>, vector<24x4xbf16>
    tpu.vector_store %arg7[%c264, %c0_51], %50 {strides = array<i32>} : memref<440x4xbf16, #tpu.memory_space<vmem>>, vector<24x4xbf16>,
    %c0_52 = arith.constant 0 : index
    %c11 = arith.constant 11 : index
    %c0_53 = arith.constant 0 : index
    %c0_54 = arith.constant 0 : index
    %52 = vector.load %arg1[%c0_52, %c11, %c0_53, %c0_54] : memref<1x16x16x4xbf16, #tpu.memory_space<vmem>>, vector<1x1x16x4xbf16>
    %53 = vector.shape_cast %52 : vector<1x1x16x4xbf16> to vector<16x4xbf16>
    %54 = tpu.concatenate %4, %53, %5 in 0 : vector<1x4xbf16>, vector<16x4xbf16>, vector<7x4xbf16> -> vector<24x4xbf16>
    %c288 = arith.constant 288 : index
    %c0_55 = arith.constant 0 : index
    %55 = vector.load %arg7[%c288, %c0_55] : memref<440x4xbf16, #tpu.memory_space<vmem>>, vector<24x4xbf16>
    tpu.vector_store %arg7[%c288, %c0_55], %54 {strides = array<i32>} : memref<440x4xbf16, #tpu.memory_space<vmem>>, vector<24x4xbf16>,
    %c0_56 = arith.constant 0 : index
    %c12 = arith.constant 12 : index
    %c0_57 = arith.constant 0 : index
    %c0_58 = arith.constant 0 : index
    %56 = vector.load %arg1[%c0_56, %c12, %c0_57, %c0_58] : memref<1x16x16x4xbf16, #tpu.memory_space<vmem>>, vector<1x1x16x4xbf16>
    %57 = vector.shape_cast %56 : vector<1x1x16x4xbf16> to vector<16x4xbf16>
    %58 = tpu.concatenate %4, %57, %5 in 0 : vector<1x4xbf16>, vector<16x4xbf16>, vector<7x4xbf16> -> vector<24x4xbf16>
    %c312 = arith.constant 312 : index
    %c0_59 = arith.constant 0 : index
    %59 = vector.load %arg7[%c312, %c0_59] : memref<440x4xbf16, #tpu.memory_space<vmem>>, vector<24x4xbf16>
    tpu.vector_store %arg7[%c312, %c0_59], %58 {strides = array<i32>} : memref<440x4xbf16, #tpu.memory_space<vmem>>, vector<24x4xbf16>,
    %c0_60 = arith.constant 0 : index
    %c13 = arith.constant 13 : index
    %c0_61 = arith.constant 0 : index
    %c0_62 = arith.constant 0 : index
    %60 = vector.load %arg1[%c0_60, %c13, %c0_61, %c0_62] : memref<1x16x16x4xbf16, #tpu.memory_space<vmem>>, vector<1x1x16x4xbf16>
    %61 = vector.shape_cast %60 : vector<1x1x16x4xbf16> to vector<16x4xbf16>
    %62 = tpu.concatenate %4, %61, %5 in 0 : vector<1x4xbf16>, vector<16x4xbf16>, vector<7x4xbf16> -> vector<24x4xbf16>
    %c336 = arith.constant 336 : index
    %c0_63 = arith.constant 0 : index
    %63 = vector.load %arg7[%c336, %c0_63] : memref<440x4xbf16, #tpu.memory_space<vmem>>, vector<24x4xbf16>
    tpu.vector_store %arg7[%c336, %c0_63], %62 {strides = array<i32>} : memref<440x4xbf16, #tpu.memory_space<vmem>>, vector<24x4xbf16>,
    %c0_64 = arith.constant 0 : index
    %c14 = arith.constant 14 : index
    %c0_65 = arith.constant 0 : index
    %c0_66 = arith.constant 0 : index
    %64 = vector.load %arg1[%c0_64, %c14, %c0_65, %c0_66] : memref<1x16x16x4xbf16, #tpu.memory_space<vmem>>, vector<1x1x16x4xbf16>
    %65 = vector.shape_cast %64 : vector<1x1x16x4xbf16> to vector<16x4xbf16>
    %66 = tpu.concatenate %4, %65, %5 in 0 : vector<1x4xbf16>, vector<16x4xbf16>, vector<7x4xbf16> -> vector<24x4xbf16>
    %c360 = arith.constant 360 : index
    %c0_67 = arith.constant 0 : index
    %67 = vector.load %arg7[%c360, %c0_67] : memref<440x4xbf16, #tpu.memory_space<vmem>>, vector<24x4xbf16>
    tpu.vector_store %arg7[%c360, %c0_67], %66 {strides = array<i32>} : memref<440x4xbf16, #tpu.memory_space<vmem>>, vector<24x4xbf16>,
    %c0_68 = arith.constant 0 : index
    %c15 = arith.constant 15 : index
    %c0_69 = arith.constant 0 : index
    %c0_70 = arith.constant 0 : index
    %68 = vector.load %arg1[%c0_68, %c15, %c0_69, %c0_70] : memref<1x16x16x4xbf16, #tpu.memory_space<vmem>>, vector<1x1x16x4xbf16>
    %69 = vector.shape_cast %68 : vector<1x1x16x4xbf16> to vector<16x4xbf16>
    %70 = tpu.concatenate %4, %69, %5 in 0 : vector<1x4xbf16>, vector<16x4xbf16>, vector<7x4xbf16> -> vector<24x4xbf16>
    %c384 = arith.constant 384 : index
    %c0_71 = arith.constant 0 : index
    %71 = vector.load %arg7[%c384, %c0_71] : memref<440x4xbf16, #tpu.memory_space<vmem>>, vector<24x4xbf16>
    tpu.vector_store %arg7[%c384, %c0_71], %70 {strides = array<i32>} : memref<440x4xbf16, #tpu.memory_space<vmem>>, vector<24x4xbf16>,
    %c0_72 = arith.constant 0 : index
    %c0_73 = arith.constant 0 : index
    %72 = vector.load %arg7[%c0_72, %c0_73] : memref<440x4xbf16, #tpu.memory_space<vmem>>, vector<392x4xbf16>
    %c0_74 = arith.constant 0 : index
    %c0_75 = arith.constant 0 : index
    %c0_76 = arith.constant 0 : index
    %73 = vector.load %arg2[%c0_74, %c0_75, %c0_76] : memref<3x4x12xbf16, #tpu.memory_space<vmem>>, vector<1x4x12xbf16>
    %74 = vector.shape_cast %73 : vector<1x4x12xbf16> to vector<4x12xbf16>
    %cst_77 = arith.constant dense<0.000000e+00> : vector<392x12xf32>
    %75 = tpu.matmul %72, %74, %cst_77 {dimension_numbers = #tpu.dot_dimension_numbers<[1], [0], [0], [1], [0, 0, 1, 1], [], []>} : vector<392x4xbf16>, vector<4x12xbf16>, vector<392x12xf32> -> vector<392x12xf32>
    %c24_78 = arith.constant 24 : index
    %c0_79 = arith.constant 0 : index
    %76 = vector.load %arg7[%c24_78, %c0_79] : memref<440x4xbf16, #tpu.memory_space<vmem>>, vector<392x4xbf16>
    %c1_80 = arith.constant 1 : index
    %c0_81 = arith.constant 0 : index
    %c0_82 = arith.constant 0 : index
    %77 = vector.load %arg2[%c1_80, %c0_81, %c0_82] : memref<3x4x12xbf16, #tpu.memory_space<vmem>>, vector<1x4x12xbf16>
    %78 = vector.shape_cast %77 : vector<1x4x12xbf16> to vector<4x12xbf16>
    %cst_83 = arith.constant dense<0.000000e+00> : vector<392x12xf32>
    %79 = tpu.matmul %76, %78, %cst_83 {dimension_numbers = #tpu.dot_dimension_numbers<[1], [0], [0], [1], [0, 0, 1, 1], [], []>} : vector<392x4xbf16>, vector<4x12xbf16>, vector<392x12xf32> -> vector<392x12xf32>
    %80 = arith.addf %75, %79 : vector<392x12xf32>
    %c48_84 = arith.constant 48 : index
    %c0_85 = arith.constant 0 : index
    %81 = vector.load %arg7[%c48_84, %c0_85] : memref<440x4xbf16, #tpu.memory_space<vmem>>, vector<392x4xbf16>
    %c2_86 = arith.constant 2 : index
    %c0_87 = arith.constant 0 : index
    %c0_88 = arith.constant 0 : index
    %82 = vector.load %arg2[%c2_86, %c0_87, %c0_88] : memref<3x4x12xbf16, #tpu.memory_space<vmem>>, vector<1x4x12xbf16>
    %83 = vector.shape_cast %82 : vector<1x4x12xbf16> to vector<4x12xbf16>
    %cst_89 = arith.constant dense<0.000000e+00> : vector<392x12xf32>
    %84 = tpu.matmul %81, %83, %cst_89 {dimension_numbers = #tpu.dot_dimension_numbers<[1], [0], [0], [1], [0, 0, 1, 1], [], []>} : vector<392x4xbf16>, vector<4x12xbf16>, vector<392x12xf32> -> vector<392x12xf32>
    %85 = arith.addf %80, %84 : vector<392x12xf32>
    %86 = vector.extract_strided_slice %85 {offsets = [0, 0], sizes = [384, 4], strides = [1, 1]} : vector<392x12xf32> to vector<384x4xf32>
    %87 = vector.extract_strided_slice %85 {offsets = [1, 4], sizes = [384, 4], strides = [1, 1]} : vector<392x12xf32> to vector<384x4xf32>
    %88 = arith.addf %86, %87 : vector<384x4xf32>
    %89 = vector.extract_strided_slice %85 {offsets = [2, 8], sizes = [384, 4], strides = [1, 1]} : vector<392x12xf32> to vector<384x4xf32>
    %90 = arith.addf %88, %89 : vector<384x4xf32>
    %c0_90 = arith.constant 0 : index
    %c0_91 = arith.constant 0 : index
    %91 = vector.load %arg4[%c0_90, %c0_91] : memref<1x4xf32, #tpu.memory_space<vmem>>, vector<1x4xf32>
    %92 = vector.broadcast %91 : vector<1x4xf32> to vector<384x4xf32>
    %93 = arith.addf %90, %92 : vector<384x4xf32>
    %cst_92 = arith.constant 0.000000e+00 : f32
    %94 = vector.broadcast %cst_92 : f32 to vector<384x4xf32>
    %95 = arith.maximumf %93, %94 : vector<384x4xf32>
    %96 = tpu.iota {dimensions = array<i32: 0>} : vector<384x1xi32>
    %c24_i32 = arith.constant 24 : i32
    %c0_i32 = arith.constant 0 : i32
    %97 = arith.cmpi eq, %c24_i32, %c0_i32 : i32
    %c1_i32 = arith.constant 1 : i32
    %98 = arith.select %97, %c1_i32, %c24_i32 : i32
    %99 = vector.broadcast %98 : i32 to vector<384x1xi32>
    %100 = arith.remsi %96, %99 : vector<384x1xi32>
    %c0_i32_93 = arith.constant 0 : i32
    %101 = vector.broadcast %c0_i32_93 : i32 to vector<384x1xi32>
    %102 = arith.cmpi ne, %100, %101 : vector<384x1xi32>
    %c0_i32_94 = arith.constant 0 : i32
    %103 = vector.broadcast %c0_i32_94 : i32 to vector<384x1xi32>
    %104 = arith.cmpi slt, %100, %103 : vector<384x1xi32>
    %c0_i32_95 = arith.constant 0 : i32
    %105 = arith.cmpi slt, %98, %c0_i32_95 : i32
    %106 = vector.broadcast %105 : i1 to vector<384x1xi1>
    %107 = vector.broadcast %106 : vector<384x1xi1> to vector<384x1xi1>
    %108 = arith.xori %104, %107 : vector<384x1xi1>
    %109 = arith.andi %108, %102 : vector<384x1xi1>
    %110 = vector.broadcast %98 : i32 to vector<384x1xi32>
    %111 = arith.addi %100, %110 : vector<384x1xi32>
    %112 = arith.select %109, %111, %100 : vector<384x1xi1>, vector<384x1xi32>
    %c16_i32 = arith.constant 16 : i32
    %113 = vector.broadcast %c16_i32 : i32 to vector<384x1xi32>
    %114 = arith.cmpi slt, %112, %113 : vector<384x1xi32>
    %cst_96 = arith.constant 0.000000e+00 : f32
    %115 = vector.shape_cast %114 : vector<384x1xi1> to vector<384x1xi1>
    %116 = vector.broadcast %115 : vector<384x1xi1> to vector<384x4xi1>
    %117 = vector.broadcast %cst_96 : f32 to vector<384x4xf32>
    %118 = arith.select %116, %95, %117 : vector<384x4xi1>, vector<384x4xf32>
    %c0_97 = arith.constant 0 : index
    %c0_98 = arith.constant 0 : index
    %119 = vector.load %arg8[%c0_97, %c0_98] : memref<440x4xbf16, #tpu.memory_space<vmem>>, vector<25x4xbf16>
    tpu.vector_store %arg8[%c0_97, %c0_98], %2 {strides = array<i32>} : memref<440x4xbf16, #tpu.memory_space<vmem>>, vector<25x4xbf16>,
    %c409 = arith.constant 409 : index
    %c0_99 = arith.constant 0 : index
    %120 = vector.load %arg8[%c409, %c0_99] : memref<440x4xbf16, #tpu.memory_space<vmem>>, vector<31x4xbf16>
    tpu.vector_store %arg8[%c409, %c0_99], %3 {strides = array<i32>} : memref<440x4xbf16, #tpu.memory_space<vmem>>, vector<31x4xbf16>,
    %121 = arith.truncf %118 : vector<384x4xf32> to vector<384x4xbf16>
    %c25 = arith.constant 25 : index
    %c0_100 = arith.constant 0 : index
    %122 = vector.load %arg8[%c25, %c0_100] : memref<440x4xbf16, #tpu.memory_space<vmem>>, vector<384x4xbf16>
    tpu.vector_store %arg8[%c25, %c0_100], %121 {strides = array<i32>} : memref<440x4xbf16, #tpu.memory_space<vmem>>, vector<384x4xbf16>,
    %c0_101 = arith.constant 0 : index
    %c0_102 = arith.constant 0 : index
    %123 = vector.load %arg8[%c0_101, %c0_102] : memref<440x4xbf16, #tpu.memory_space<vmem>>, vector<392x4xbf16>
    %c0_103 = arith.constant 0 : index
    %c0_104 = arith.constant 0 : index
    %c0_105 = arith.constant 0 : index
    %124 = vector.load %arg3[%c0_103, %c0_104, %c0_105] : memref<3x4x12xbf16, #tpu.memory_space<vmem>>, vector<1x4x12xbf16>
    %125 = vector.shape_cast %124 : vector<1x4x12xbf16> to vector<4x12xbf16>
    %cst_106 = arith.constant dense<0.000000e+00> : vector<392x12xf32>
    %126 = tpu.matmul %123, %125, %cst_106 {dimension_numbers = #tpu.dot_dimension_numbers<[1], [0], [0], [1], [0, 0, 1, 1], [], []>} : vector<392x4xbf16>, vector<4x12xbf16>, vector<392x12xf32> -> vector<392x12xf32>
    %c24_107 = arith.constant 24 : index
    %c0_108 = arith.constant 0 : index
    %127 = vector.load %arg8[%c24_107, %c0_108] : memref<440x4xbf16, #tpu.memory_space<vmem>>, vector<392x4xbf16>
    %c1_109 = arith.constant 1 : index
    %c0_110 = arith.constant 0 : index
    %c0_111 = arith.constant 0 : index
    %128 = vector.load %arg3[%c1_109, %c0_110, %c0_111] : memref<3x4x12xbf16, #tpu.memory_space<vmem>>, vector<1x4x12xbf16>
    %129 = vector.shape_cast %128 : vector<1x4x12xbf16> to vector<4x12xbf16>
    %cst_112 = arith.constant dense<0.000000e+00> : vector<392x12xf32>
    %130 = tpu.matmul %127, %129, %cst_112 {dimension_numbers = #tpu.dot_dimension_numbers<[1], [0], [0], [1], [0, 0, 1, 1], [], []>} : vector<392x4xbf16>, vector<4x12xbf16>, vector<392x12xf32> -> vector<392x12xf32>
    %131 = arith.addf %126, %130 : vector<392x12xf32>
    %c48_113 = arith.constant 48 : index
    %c0_114 = arith.constant 0 : index
    %132 = vector.load %arg8[%c48_113, %c0_114] : memref<440x4xbf16, #tpu.memory_space<vmem>>, vector<392x4xbf16>
    %c2_115 = arith.constant 2 : index
    %c0_116 = arith.constant 0 : index
    %c0_117 = arith.constant 0 : index
    %133 = vector.load %arg3[%c2_115, %c0_116, %c0_117] : memref<3x4x12xbf16, #tpu.memory_space<vmem>>, vector<1x4x12xbf16>
    %134 = vector.shape_cast %133 : vector<1x4x12xbf16> to vector<4x12xbf16>
    %cst_118 = arith.constant dense<0.000000e+00> : vector<392x12xf32>
    %135 = tpu.matmul %132, %134, %cst_118 {dimension_numbers = #tpu.dot_dimension_numbers<[1], [0], [0], [1], [0, 0, 1, 1], [], []>} : vector<392x4xbf16>, vector<4x12xbf16>, vector<392x12xf32> -> vector<392x12xf32>
    %136 = arith.addf %131, %135 : vector<392x12xf32>
    %137 = vector.extract_strided_slice %136 {offsets = [0, 0], sizes = [384, 4], strides = [1, 1]} : vector<392x12xf32> to vector<384x4xf32>
    %138 = vector.extract_strided_slice %136 {offsets = [1, 4], sizes = [384, 4], strides = [1, 1]} : vector<392x12xf32> to vector<384x4xf32>
    %139 = arith.addf %137, %138 : vector<384x4xf32>
    %140 = vector.extract_strided_slice %136 {offsets = [2, 8], sizes = [384, 4], strides = [1, 1]} : vector<392x12xf32> to vector<384x4xf32>
    %141 = arith.addf %139, %140 : vector<384x4xf32>
    %c0_119 = arith.constant 0 : index
    %c0_120 = arith.constant 0 : index
    %142 = vector.load %arg5[%c0_119, %c0_120] : memref<1x4xf32, #tpu.memory_space<vmem>>, vector<1x4xf32>
    %143 = vector.broadcast %142 : vector<1x4xf32> to vector<384x4xf32>
    %144 = arith.addf %141, %143 : vector<384x4xf32>
    %145 = vector.extract_strided_slice %144 {offsets = [0, 0], sizes = [16, 4], strides = [1, 1]} : vector<384x4xf32> to vector<16x4xf32>
    %c0_121 = arith.constant 0 : index
    %c0_122 = arith.constant 0 : index
    %c0_123 = arith.constant 0 : index
    %c0_124 = arith.constant 0 : index
    %146 = vector.load %arg1[%c0_121, %c0_122, %c0_123, %c0_124] : memref<1x16x16x4xbf16, #tpu.memory_space<vmem>>, vector<1x1x16x4xbf16>
    %147 = vector.shape_cast %146 : vector<1x1x16x4xbf16> to vector<16x4xbf16>
    %148 = arith.extf %147 : vector<16x4xbf16> to vector<16x4xf32>
    %149 = arith.addf %145, %148 : vector<16x4xf32>
    %cst_125 = arith.constant 0.000000e+00 : f32
    %150 = vector.broadcast %cst_125 : f32 to vector<16x4xf32>
    %151 = arith.maximumf %149, %150 : vector<16x4xf32>
    %c0_126 = arith.constant 0 : index
    %c0_127 = arith.constant 0 : index
    %c0_128 = arith.constant 0 : index
    %c0_129 = arith.constant 0 : index
    %152 = vector.load %arg6[%c0_126, %c0_127, %c0_128, %c0_129] : memref<1x16x16x4xf32, #tpu.memory_space<vmem>>, vector<1x1x16x4xf32>
    %153 = vector.shape_cast %152 : vector<1x1x16x4xf32> to vector<16x4xf32>
    %154 = vector.shape_cast %151 : vector<16x4xf32> to vector<1x1x16x4xf32>
    tpu.vector_store %arg6[%c0_126, %c0_127, %c0_128, %c0_129], %154 {strides = array<i32>} : memref<1x16x16x4xf32, #tpu.memory_space<vmem>>, vector<1x1x16x4xf32>,
    %155 = vector.extract_strided_slice %144 {offsets = [24, 0], sizes = [16, 4], strides = [1, 1]} : vector<384x4xf32> to vector<16x4xf32>
    %c0_130 = arith.constant 0 : index
    %c1_131 = arith.constant 1 : index
    %c0_132 = arith.constant 0 : index
    %c0_133 = arith.constant 0 : index
    %156 = vector.load %arg1[%c0_130, %c1_131, %c0_132, %c0_133] : memref<1x16x16x4xbf16, #tpu.memory_space<vmem>>, vector<1x1x16x4xbf16>
    %157 = vector.shape_cast %156 : vector<1x1x16x4xbf16> to vector<16x4xbf16>
    %158 = arith.extf %157 : vector<16x4xbf16> to vector<16x4xf32>
    %159 = arith.addf %155, %158 : vector<16x4xf32>
    %cst_134 = arith.constant 0.000000e+00 : f32
    %160 = vector.broadcast %cst_134 : f32 to vector<16x4xf32>
    %161 = arith.maximumf %159, %160 : vector<16x4xf32>
    %c0_135 = arith.constant 0 : index
    %c1_136 = arith.constant 1 : index
    %c0_137 = arith.constant 0 : index
    %c0_138 = arith.constant 0 : index
    %162 = vector.load %arg6[%c0_135, %c1_136, %c0_137, %c0_138] : memref<1x16x16x4xf32, #tpu.memory_space<vmem>>, vector<1x1x16x4xf32>
    %163 = vector.shape_cast %162 : vector<1x1x16x4xf32> to vector<16x4xf32>
    %164 = vector.shape_cast %161 : vector<16x4xf32> to vector<1x1x16x4xf32>
    tpu.vector_store %arg6[%c0_135, %c1_136, %c0_137, %c0_138], %164 {strides = array<i32>} : memref<1x16x16x4xf32, #tpu.memory_space<vmem>>, vector<1x1x16x4xf32>,
    %165 = vector.extract_strided_slice %144 {offsets = [48, 0], sizes = [16, 4], strides = [1, 1]} : vector<384x4xf32> to vector<16x4xf32>
    %c0_139 = arith.constant 0 : index
    %c2_140 = arith.constant 2 : index
    %c0_141 = arith.constant 0 : index
    %c0_142 = arith.constant 0 : index
    %166 = vector.load %arg1[%c0_139, %c2_140, %c0_141, %c0_142] : memref<1x16x16x4xbf16, #tpu.memory_space<vmem>>, vector<1x1x16x4xbf16>
    %167 = vector.shape_cast %166 : vector<1x1x16x4xbf16> to vector<16x4xbf16>
    %168 = arith.extf %167 : vector<16x4xbf16> to vector<16x4xf32>
    %169 = arith.addf %165, %168 : vector<16x4xf32>
    %cst_143 = arith.constant 0.000000e+00 : f32
    %170 = vector.broadcast %cst_143 : f32 to vector<16x4xf32>
    %171 = arith.maximumf %169, %170 : vector<16x4xf32>
    %c0_144 = arith.constant 0 : index
    %c2_145 = arith.constant 2 : index
    %c0_146 = arith.constant 0 : index
    %c0_147 = arith.constant 0 : index
    %172 = vector.load %arg6[%c0_144, %c2_145, %c0_146, %c0_147] : memref<1x16x16x4xf32, #tpu.memory_space<vmem>>, vector<1x1x16x4xf32>
    %173 = vector.shape_cast %172 : vector<1x1x16x4xf32> to vector<16x4xf32>
    %174 = vector.shape_cast %171 : vector<16x4xf32> to vector<1x1x16x4xf32>
    tpu.vector_store %arg6[%c0_144, %c2_145, %c0_146, %c0_147], %174 {strides = array<i32>} : memref<1x16x16x4xf32, #tpu.memory_space<vmem>>, vector<1x1x16x4xf32>,
    %175 = vector.extract_strided_slice %144 {offsets = [72, 0], sizes = [16, 4], strides = [1, 1]} : vector<384x4xf32> to vector<16x4xf32>
    %c0_148 = arith.constant 0 : index
    %c3_149 = arith.constant 3 : index
    %c0_150 = arith.constant 0 : index
    %c0_151 = arith.constant 0 : index
    %176 = vector.load %arg1[%c0_148, %c3_149, %c0_150, %c0_151] : memref<1x16x16x4xbf16, #tpu.memory_space<vmem>>, vector<1x1x16x4xbf16>
    %177 = vector.shape_cast %176 : vector<1x1x16x4xbf16> to vector<16x4xbf16>
    %178 = arith.extf %177 : vector<16x4xbf16> to vector<16x4xf32>
    %179 = arith.addf %175, %178 : vector<16x4xf32>
    %cst_152 = arith.constant 0.000000e+00 : f32
    %180 = vector.broadcast %cst_152 : f32 to vector<16x4xf32>
    %181 = arith.maximumf %179, %180 : vector<16x4xf32>
    %c0_153 = arith.constant 0 : index
    %c3_154 = arith.constant 3 : index
    %c0_155 = arith.constant 0 : index
    %c0_156 = arith.constant 0 : index
    %182 = vector.load %arg6[%c0_153, %c3_154, %c0_155, %c0_156] : memref<1x16x16x4xf32, #tpu.memory_space<vmem>>, vector<1x1x16x4xf32>
    %183 = vector.shape_cast %182 : vector<1x1x16x4xf32> to vector<16x4xf32>
    %184 = vector.shape_cast %181 : vector<16x4xf32> to vector<1x1x16x4xf32>
    tpu.vector_store %arg6[%c0_153, %c3_154, %c0_155, %c0_156], %184 {strides = array<i32>} : memref<1x16x16x4xf32, #tpu.memory_space<vmem>>, vector<1x1x16x4xf32>,
    %185 = vector.extract_strided_slice %144 {offsets = [96, 0], sizes = [16, 4], strides = [1, 1]} : vector<384x4xf32> to vector<16x4xf32>
    %c0_157 = arith.constant 0 : index
    %c4_158 = arith.constant 4 : index
    %c0_159 = arith.constant 0 : index
    %c0_160 = arith.constant 0 : index
    %186 = vector.load %arg1[%c0_157, %c4_158, %c0_159, %c0_160] : memref<1x16x16x4xbf16, #tpu.memory_space<vmem>>, vector<1x1x16x4xbf16>
    %187 = vector.shape_cast %186 : vector<1x1x16x4xbf16> to vector<16x4xbf16>
    %188 = arith.extf %187 : vector<16x4xbf16> to vector<16x4xf32>
    %189 = arith.addf %185, %188 : vector<16x4xf32>
    %cst_161 = arith.constant 0.000000e+00 : f32
    %190 = vector.broadcast %cst_161 : f32 to vector<16x4xf32>
    %191 = arith.maximumf %189, %190 : vector<16x4xf32>
    %c0_162 = arith.constant 0 : index
    %c4_163 = arith.constant 4 : index
    %c0_164 = arith.constant 0 : index
    %c0_165 = arith.constant 0 : index
    %192 = vector.load %arg6[%c0_162, %c4_163, %c0_164, %c0_165] : memref<1x16x16x4xf32, #tpu.memory_space<vmem>>, vector<1x1x16x4xf32>
    %193 = vector.shape_cast %192 : vector<1x1x16x4xf32> to vector<16x4xf32>
    %194 = vector.shape_cast %191 : vector<16x4xf32> to vector<1x1x16x4xf32>
    tpu.vector_store %arg6[%c0_162, %c4_163, %c0_164, %c0_165], %194 {strides = array<i32>} : memref<1x16x16x4xf32, #tpu.memory_space<vmem>>, vector<1x1x16x4xf32>,
    %195 = vector.extract_strided_slice %144 {offsets = [120, 0], sizes = [16, 4], strides = [1, 1]} : vector<384x4xf32> to vector<16x4xf32>
    %c0_166 = arith.constant 0 : index
    %c5_167 = arith.constant 5 : index
    %c0_168 = arith.constant 0 : index
    %c0_169 = arith.constant 0 : index
    %196 = vector.load %arg1[%c0_166, %c5_167, %c0_168, %c0_169] : memref<1x16x16x4xbf16, #tpu.memory_space<vmem>>, vector<1x1x16x4xbf16>
    %197 = vector.shape_cast %196 : vector<1x1x16x4xbf16> to vector<16x4xbf16>
    %198 = arith.extf %197 : vector<16x4xbf16> to vector<16x4xf32>
    %199 = arith.addf %195, %198 : vector<16x4xf32>
    %cst_170 = arith.constant 0.000000e+00 : f32
    %200 = vector.broadcast %cst_170 : f32 to vector<16x4xf32>
    %201 = arith.maximumf %199, %200 : vector<16x4xf32>
    %c0_171 = arith.constant 0 : index
    %c5_172 = arith.constant 5 : index
    %c0_173 = arith.constant 0 : index
    %c0_174 = arith.constant 0 : index
    %202 = vector.load %arg6[%c0_171, %c5_172, %c0_173, %c0_174] : memref<1x16x16x4xf32, #tpu.memory_space<vmem>>, vector<1x1x16x4xf32>
    %203 = vector.shape_cast %202 : vector<1x1x16x4xf32> to vector<16x4xf32>
    %204 = vector.shape_cast %201 : vector<16x4xf32> to vector<1x1x16x4xf32>
    tpu.vector_store %arg6[%c0_171, %c5_172, %c0_173, %c0_174], %204 {strides = array<i32>} : memref<1x16x16x4xf32, #tpu.memory_space<vmem>>, vector<1x1x16x4xf32>,
    %205 = vector.extract_strided_slice %144 {offsets = [144, 0], sizes = [16, 4], strides = [1, 1]} : vector<384x4xf32> to vector<16x4xf32>
    %c0_175 = arith.constant 0 : index
    %c6_176 = arith.constant 6 : index
    %c0_177 = arith.constant 0 : index
    %c0_178 = arith.constant 0 : index
    %206 = vector.load %arg1[%c0_175, %c6_176, %c0_177, %c0_178] : memref<1x16x16x4xbf16, #tpu.memory_space<vmem>>, vector<1x1x16x4xbf16>
    %207 = vector.shape_cast %206 : vector<1x1x16x4xbf16> to vector<16x4xbf16>
    %208 = arith.extf %207 : vector<16x4xbf16> to vector<16x4xf32>
    %209 = arith.addf %205, %208 : vector<16x4xf32>
    %cst_179 = arith.constant 0.000000e+00 : f32
    %210 = vector.broadcast %cst_179 : f32 to vector<16x4xf32>
    %211 = arith.maximumf %209, %210 : vector<16x4xf32>
    %c0_180 = arith.constant 0 : index
    %c6_181 = arith.constant 6 : index
    %c0_182 = arith.constant 0 : index
    %c0_183 = arith.constant 0 : index
    %212 = vector.load %arg6[%c0_180, %c6_181, %c0_182, %c0_183] : memref<1x16x16x4xf32, #tpu.memory_space<vmem>>, vector<1x1x16x4xf32>
    %213 = vector.shape_cast %212 : vector<1x1x16x4xf32> to vector<16x4xf32>
    %214 = vector.shape_cast %211 : vector<16x4xf32> to vector<1x1x16x4xf32>
    tpu.vector_store %arg6[%c0_180, %c6_181, %c0_182, %c0_183], %214 {strides = array<i32>} : memref<1x16x16x4xf32, #tpu.memory_space<vmem>>, vector<1x1x16x4xf32>,
    %215 = vector.extract_strided_slice %144 {offsets = [168, 0], sizes = [16, 4], strides = [1, 1]} : vector<384x4xf32> to vector<16x4xf32>
    %c0_184 = arith.constant 0 : index
    %c7_185 = arith.constant 7 : index
    %c0_186 = arith.constant 0 : index
    %c0_187 = arith.constant 0 : index
    %216 = vector.load %arg1[%c0_184, %c7_185, %c0_186, %c0_187] : memref<1x16x16x4xbf16, #tpu.memory_space<vmem>>, vector<1x1x16x4xbf16>
    %217 = vector.shape_cast %216 : vector<1x1x16x4xbf16> to vector<16x4xbf16>
    %218 = arith.extf %217 : vector<16x4xbf16> to vector<16x4xf32>
    %219 = arith.addf %215, %218 : vector<16x4xf32>
    %cst_188 = arith.constant 0.000000e+00 : f32
    %220 = vector.broadcast %cst_188 : f32 to vector<16x4xf32>
    %221 = arith.maximumf %219, %220 : vector<16x4xf32>
    %c0_189 = arith.constant 0 : index
    %c7_190 = arith.constant 7 : index
    %c0_191 = arith.constant 0 : index
    %c0_192 = arith.constant 0 : index
    %222 = vector.load %arg6[%c0_189, %c7_190, %c0_191, %c0_192] : memref<1x16x16x4xf32, #tpu.memory_space<vmem>>, vector<1x1x16x4xf32>
    %223 = vector.shape_cast %222 : vector<1x1x16x4xf32> to vector<16x4xf32>
    %224 = vector.shape_cast %221 : vector<16x4xf32> to vector<1x1x16x4xf32>
    tpu.vector_store %arg6[%c0_189, %c7_190, %c0_191, %c0_192], %224 {strides = array<i32>} : memref<1x16x16x4xf32, #tpu.memory_space<vmem>>, vector<1x1x16x4xf32>,
    %225 = vector.extract_strided_slice %144 {offsets = [192, 0], sizes = [16, 4], strides = [1, 1]} : vector<384x4xf32> to vector<16x4xf32>
    %c0_193 = arith.constant 0 : index
    %c8_194 = arith.constant 8 : index
    %c0_195 = arith.constant 0 : index
    %c0_196 = arith.constant 0 : index
    %226 = vector.load %arg1[%c0_193, %c8_194, %c0_195, %c0_196] : memref<1x16x16x4xbf16, #tpu.memory_space<vmem>>, vector<1x1x16x4xbf16>
    %227 = vector.shape_cast %226 : vector<1x1x16x4xbf16> to vector<16x4xbf16>
    %228 = arith.extf %227 : vector<16x4xbf16> to vector<16x4xf32>
    %229 = arith.addf %225, %228 : vector<16x4xf32>
    %cst_197 = arith.constant 0.000000e+00 : f32
    %230 = vector.broadcast %cst_197 : f32 to vector<16x4xf32>
    %231 = arith.maximumf %229, %230 : vector<16x4xf32>
    %c0_198 = arith.constant 0 : index
    %c8_199 = arith.constant 8 : index
    %c0_200 = arith.constant 0 : index
    %c0_201 = arith.constant 0 : index
    %232 = vector.load %arg6[%c0_198, %c8_199, %c0_200, %c0_201] : memref<1x16x16x4xf32, #tpu.memory_space<vmem>>, vector<1x1x16x4xf32>
    %233 = vector.shape_cast %232 : vector<1x1x16x4xf32> to vector<16x4xf32>
    %234 = vector.shape_cast %231 : vector<16x4xf32> to vector<1x1x16x4xf32>
    tpu.vector_store %arg6[%c0_198, %c8_199, %c0_200, %c0_201], %234 {strides = array<i32>} : memref<1x16x16x4xf32, #tpu.memory_space<vmem>>, vector<1x1x16x4xf32>,
    %235 = vector.extract_strided_slice %144 {offsets = [216, 0], sizes = [16, 4], strides = [1, 1]} : vector<384x4xf32> to vector<16x4xf32>
    %c0_202 = arith.constant 0 : index
    %c9_203 = arith.constant 9 : index
    %c0_204 = arith.constant 0 : index
    %c0_205 = arith.constant 0 : index
    %236 = vector.load %arg1[%c0_202, %c9_203, %c0_204, %c0_205] : memref<1x16x16x4xbf16, #tpu.memory_space<vmem>>, vector<1x1x16x4xbf16>
    %237 = vector.shape_cast %236 : vector<1x1x16x4xbf16> to vector<16x4xbf16>
    %238 = arith.extf %237 : vector<16x4xbf16> to vector<16x4xf32>
    %239 = arith.addf %235, %238 : vector<16x4xf32>
    %cst_206 = arith.constant 0.000000e+00 : f32
    %240 = vector.broadcast %cst_206 : f32 to vector<16x4xf32>
    %241 = arith.maximumf %239, %240 : vector<16x4xf32>
    %c0_207 = arith.constant 0 : index
    %c9_208 = arith.constant 9 : index
    %c0_209 = arith.constant 0 : index
    %c0_210 = arith.constant 0 : index
    %242 = vector.load %arg6[%c0_207, %c9_208, %c0_209, %c0_210] : memref<1x16x16x4xf32, #tpu.memory_space<vmem>>, vector<1x1x16x4xf32>
    %243 = vector.shape_cast %242 : vector<1x1x16x4xf32> to vector<16x4xf32>
    %244 = vector.shape_cast %241 : vector<16x4xf32> to vector<1x1x16x4xf32>
    tpu.vector_store %arg6[%c0_207, %c9_208, %c0_209, %c0_210], %244 {strides = array<i32>} : memref<1x16x16x4xf32, #tpu.memory_space<vmem>>, vector<1x1x16x4xf32>,
    %245 = vector.extract_strided_slice %144 {offsets = [240, 0], sizes = [16, 4], strides = [1, 1]} : vector<384x4xf32> to vector<16x4xf32>
    %c0_211 = arith.constant 0 : index
    %c10_212 = arith.constant 10 : index
    %c0_213 = arith.constant 0 : index
    %c0_214 = arith.constant 0 : index
    %246 = vector.load %arg1[%c0_211, %c10_212, %c0_213, %c0_214] : memref<1x16x16x4xbf16, #tpu.memory_space<vmem>>, vector<1x1x16x4xbf16>
    %247 = vector.shape_cast %246 : vector<1x1x16x4xbf16> to vector<16x4xbf16>
    %248 = arith.extf %247 : vector<16x4xbf16> to vector<16x4xf32>
    %249 = arith.addf %245, %248 : vector<16x4xf32>
    %cst_215 = arith.constant 0.000000e+00 : f32
    %250 = vector.broadcast %cst_215 : f32 to vector<16x4xf32>
    %251 = arith.maximumf %249, %250 : vector<16x4xf32>
    %c0_216 = arith.constant 0 : index
    %c10_217 = arith.constant 10 : index
    %c0_218 = arith.constant 0 : index
    %c0_219 = arith.constant 0 : index
    %252 = vector.load %arg6[%c0_216, %c10_217, %c0_218, %c0_219] : memref<1x16x16x4xf32, #tpu.memory_space<vmem>>, vector<1x1x16x4xf32>
    %253 = vector.shape_cast %252 : vector<1x1x16x4xf32> to vector<16x4xf32>
    %254 = vector.shape_cast %251 : vector<16x4xf32> to vector<1x1x16x4xf32>
    tpu.vector_store %arg6[%c0_216, %c10_217, %c0_218, %c0_219], %254 {strides = array<i32>} : memref<1x16x16x4xf32, #tpu.memory_space<vmem>>, vector<1x1x16x4xf32>,
    %255 = vector.extract_strided_slice %144 {offsets = [264, 0], sizes = [16, 4], strides = [1, 1]} : vector<384x4xf32> to vector<16x4xf32>
    %c0_220 = arith.constant 0 : index
    %c11_221 = arith.constant 11 : index
    %c0_222 = arith.constant 0 : index
    %c0_223 = arith.constant 0 : index
    %256 = vector.load %arg1[%c0_220, %c11_221, %c0_222, %c0_223] : memref<1x16x16x4xbf16, #tpu.memory_space<vmem>>, vector<1x1x16x4xbf16>
    %257 = vector.shape_cast %256 : vector<1x1x16x4xbf16> to vector<16x4xbf16>
    %258 = arith.extf %257 : vector<16x4xbf16> to vector<16x4xf32>
    %259 = arith.addf %255, %258 : vector<16x4xf32>
    %cst_224 = arith.constant 0.000000e+00 : f32
    %260 = vector.broadcast %cst_224 : f32 to vector<16x4xf32>
    %261 = arith.maximumf %259, %260 : vector<16x4xf32>
    %c0_225 = arith.constant 0 : index
    %c11_226 = arith.constant 11 : index
    %c0_227 = arith.constant 0 : index
    %c0_228 = arith.constant 0 : index
    %262 = vector.load %arg6[%c0_225, %c11_226, %c0_227, %c0_228] : memref<1x16x16x4xf32, #tpu.memory_space<vmem>>, vector<1x1x16x4xf32>
    %263 = vector.shape_cast %262 : vector<1x1x16x4xf32> to vector<16x4xf32>
    %264 = vector.shape_cast %261 : vector<16x4xf32> to vector<1x1x16x4xf32>
    tpu.vector_store %arg6[%c0_225, %c11_226, %c0_227, %c0_228], %264 {strides = array<i32>} : memref<1x16x16x4xf32, #tpu.memory_space<vmem>>, vector<1x1x16x4xf32>,
    %265 = vector.extract_strided_slice %144 {offsets = [288, 0], sizes = [16, 4], strides = [1, 1]} : vector<384x4xf32> to vector<16x4xf32>
    %c0_229 = arith.constant 0 : index
    %c12_230 = arith.constant 12 : index
    %c0_231 = arith.constant 0 : index
    %c0_232 = arith.constant 0 : index
    %266 = vector.load %arg1[%c0_229, %c12_230, %c0_231, %c0_232] : memref<1x16x16x4xbf16, #tpu.memory_space<vmem>>, vector<1x1x16x4xbf16>
    %267 = vector.shape_cast %266 : vector<1x1x16x4xbf16> to vector<16x4xbf16>
    %268 = arith.extf %267 : vector<16x4xbf16> to vector<16x4xf32>
    %269 = arith.addf %265, %268 : vector<16x4xf32>
    %cst_233 = arith.constant 0.000000e+00 : f32
    %270 = vector.broadcast %cst_233 : f32 to vector<16x4xf32>
    %271 = arith.maximumf %269, %270 : vector<16x4xf32>
    %c0_234 = arith.constant 0 : index
    %c12_235 = arith.constant 12 : index
    %c0_236 = arith.constant 0 : index
    %c0_237 = arith.constant 0 : index
    %272 = vector.load %arg6[%c0_234, %c12_235, %c0_236, %c0_237] : memref<1x16x16x4xf32, #tpu.memory_space<vmem>>, vector<1x1x16x4xf32>
    %273 = vector.shape_cast %272 : vector<1x1x16x4xf32> to vector<16x4xf32>
    %274 = vector.shape_cast %271 : vector<16x4xf32> to vector<1x1x16x4xf32>
    tpu.vector_store %arg6[%c0_234, %c12_235, %c0_236, %c0_237], %274 {strides = array<i32>} : memref<1x16x16x4xf32, #tpu.memory_space<vmem>>, vector<1x1x16x4xf32>,
    %275 = vector.extract_strided_slice %144 {offsets = [312, 0], sizes = [16, 4], strides = [1, 1]} : vector<384x4xf32> to vector<16x4xf32>
    %c0_238 = arith.constant 0 : index
    %c13_239 = arith.constant 13 : index
    %c0_240 = arith.constant 0 : index
    %c0_241 = arith.constant 0 : index
    %276 = vector.load %arg1[%c0_238, %c13_239, %c0_240, %c0_241] : memref<1x16x16x4xbf16, #tpu.memory_space<vmem>>, vector<1x1x16x4xbf16>
    %277 = vector.shape_cast %276 : vector<1x1x16x4xbf16> to vector<16x4xbf16>
    %278 = arith.extf %277 : vector<16x4xbf16> to vector<16x4xf32>
    %279 = arith.addf %275, %278 : vector<16x4xf32>
    %cst_242 = arith.constant 0.000000e+00 : f32
    %280 = vector.broadcast %cst_242 : f32 to vector<16x4xf32>
    %281 = arith.maximumf %279, %280 : vector<16x4xf32>
    %c0_243 = arith.constant 0 : index
    %c13_244 = arith.constant 13 : index
    %c0_245 = arith.constant 0 : index
    %c0_246 = arith.constant 0 : index
    %282 = vector.load %arg6[%c0_243, %c13_244, %c0_245, %c0_246] : memref<1x16x16x4xf32, #tpu.memory_space<vmem>>, vector<1x1x16x4xf32>
    %283 = vector.shape_cast %282 : vector<1x1x16x4xf32> to vector<16x4xf32>
    %284 = vector.shape_cast %281 : vector<16x4xf32> to vector<1x1x16x4xf32>
    tpu.vector_store %arg6[%c0_243, %c13_244, %c0_245, %c0_246], %284 {strides = array<i32>} : memref<1x16x16x4xf32, #tpu.memory_space<vmem>>, vector<1x1x16x4xf32>,
    %285 = vector.extract_strided_slice %144 {offsets = [336, 0], sizes = [16, 4], strides = [1, 1]} : vector<384x4xf32> to vector<16x4xf32>
    %c0_247 = arith.constant 0 : index
    %c14_248 = arith.constant 14 : index
    %c0_249 = arith.constant 0 : index
    %c0_250 = arith.constant 0 : index
    %286 = vector.load %arg1[%c0_247, %c14_248, %c0_249, %c0_250] : memref<1x16x16x4xbf16, #tpu.memory_space<vmem>>, vector<1x1x16x4xbf16>
    %287 = vector.shape_cast %286 : vector<1x1x16x4xbf16> to vector<16x4xbf16>
    %288 = arith.extf %287 : vector<16x4xbf16> to vector<16x4xf32>
    %289 = arith.addf %285, %288 : vector<16x4xf32>
    %cst_251 = arith.constant 0.000000e+00 : f32
    %290 = vector.broadcast %cst_251 : f32 to vector<16x4xf32>
    %291 = arith.maximumf %289, %290 : vector<16x4xf32>
    %c0_252 = arith.constant 0 : index
    %c14_253 = arith.constant 14 : index
    %c0_254 = arith.constant 0 : index
    %c0_255 = arith.constant 0 : index
    %292 = vector.load %arg6[%c0_252, %c14_253, %c0_254, %c0_255] : memref<1x16x16x4xf32, #tpu.memory_space<vmem>>, vector<1x1x16x4xf32>
    %293 = vector.shape_cast %292 : vector<1x1x16x4xf32> to vector<16x4xf32>
    %294 = vector.shape_cast %291 : vector<16x4xf32> to vector<1x1x16x4xf32>
    tpu.vector_store %arg6[%c0_252, %c14_253, %c0_254, %c0_255], %294 {strides = array<i32>} : memref<1x16x16x4xf32, #tpu.memory_space<vmem>>, vector<1x1x16x4xf32>,
    %295 = vector.extract_strided_slice %144 {offsets = [360, 0], sizes = [16, 4], strides = [1, 1]} : vector<384x4xf32> to vector<16x4xf32>
    %c0_256 = arith.constant 0 : index
    %c15_257 = arith.constant 15 : index
    %c0_258 = arith.constant 0 : index
    %c0_259 = arith.constant 0 : index
    %296 = vector.load %arg1[%c0_256, %c15_257, %c0_258, %c0_259] : memref<1x16x16x4xbf16, #tpu.memory_space<vmem>>, vector<1x1x16x4xbf16>
    %297 = vector.shape_cast %296 : vector<1x1x16x4xbf16> to vector<16x4xbf16>
    %298 = arith.extf %297 : vector<16x4xbf16> to vector<16x4xf32>
    %299 = arith.addf %295, %298 : vector<16x4xf32>
    %cst_260 = arith.constant 0.000000e+00 : f32
    %300 = vector.broadcast %cst_260 : f32 to vector<16x4xf32>
    %301 = arith.maximumf %299, %300 : vector<16x4xf32>
    %c0_261 = arith.constant 0 : index
    %c15_262 = arith.constant 15 : index
    %c0_263 = arith.constant 0 : index
    %c0_264 = arith.constant 0 : index
    %302 = vector.load %arg6[%c0_261, %c15_262, %c0_263, %c0_264] : memref<1x16x16x4xf32, #tpu.memory_space<vmem>>, vector<1x1x16x4xf32>
    %303 = vector.shape_cast %302 : vector<1x1x16x4xf32> to vector<16x4xf32>
    %304 = vector.shape_cast %301 : vector<16x4xf32> to vector<1x1x16x4xf32>
    tpu.vector_store %arg6[%c0_261, %c15_262, %c0_263, %c0_264], %304 {strides = array<i32>} : memref<1x16x16x4xf32, #tpu.memory_space<vmem>>, vector<1x1x16x4xf32>,
    return
  }
  func.func @transform_0(%arg0: i32) -> (i32, i32, i32, i32) {
    %c0_i32 = arith.constant 0 : i32
    %c0_i32_0 = arith.constant 0 : i32
    %c0_i32_1 = arith.constant 0 : i32
    %c0_i32_2 = arith.constant 0 : i32
    return %arg0, %c0_i32, %c0_i32_0, %c0_i32_1 : i32, i32, i32, i32
  }
  func.func @transform_1(%arg0: i32) -> (i32, i32, i32) {
    %c0_i32 = arith.constant 0 : i32
    %c0_i32_0 = arith.constant 0 : i32
    %c0_i32_1 = arith.constant 0 : i32
    %c0_i32_2 = arith.constant 0 : i32
    return %c0_i32, %c0_i32_0, %c0_i32_1 : i32, i32, i32
  }
  func.func @transform_2(%arg0: i32) -> (i32, i32, i32) {
    %c0_i32 = arith.constant 0 : i32
    %c0_i32_0 = arith.constant 0 : i32
    %c0_i32_1 = arith.constant 0 : i32
    %c0_i32_2 = arith.constant 0 : i32
    return %c0_i32, %c0_i32_0, %c0_i32_1 : i32, i32, i32
  }
  func.func @transform_3(%arg0: i32) -> (i32, i32) {
    %c0_i32 = arith.constant 0 : i32
    %c0_i32_0 = arith.constant 0 : i32
    %c0_i32_1 = arith.constant 0 : i32
    return %c0_i32, %c0_i32_0 : i32, i32
  }
  func.func @transform_4(%arg0: i32) -> (i32, i32) {
    %c0_i32 = arith.constant 0 : i32
    %c0_i32_0 = arith.constant 0 : i32
    %c0_i32_1 = arith.constant 0 : i32
    return %c0_i32, %c0_i32_0 : i32, i32
  }
  func.func @transform_5(%arg0: i32) -> (i32, i32, i32, i32) {
    %c0_i32 = arith.constant 0 : i32
    %c0_i32_0 = arith.constant 0 : i32
    %c0_i32_1 = arith.constant 0 : i32
    %c0_i32_2 = arith.constant 0 : i32
    return %arg0, %c0_i32, %c0_i32_0, %c0_i32_1 : i32, i32, i32, i32
  }
}

</mosaic_0001>

<llo_original>
// kernel: basic_block_forward.1
$region0: #{basic_block_forward.1}
  #allocation0 [shape = 'u32[]', space=smem, size = 0x4, offset = 0x4, fixed_abs, tag = 'smem constant byte address 0x4 - core index']
  #allocation1 [shape = 'u32[144,128]{1,0:T(1,128)}', space=vmem, size = 0x12000, scoped, tag = 'internal scratch']
  #allocation2 [shape = 'bf16[440,4]{1,0:T(8,128)(2,1)}', space=vmem, size = 0x1b800, scoped, tag = 'scratch operand']
  #allocation3 [shape = 'bf16[440,4]{1,0:T(8,128)(2,1)}', space=vmem, size = 0x1b800, scoped, tag = 'scratch operand']
  %s0 = inlined_call_operand.vmem [shape: bf16[2,16,16,4], index: 0, kind: input, shape index: {}]
  %s1 = inlined_call_operand.vmem [shape: bf16[3,4,12], index: 1, kind: input, shape index: {}]
  %s2 = inlined_call_operand.vmem [shape: bf16[3,4,12], index: 2, kind: input, shape index: {}]
  %s3 = inlined_call_operand.vmem [shape: f32[1,4], index: 3, kind: input, shape index: {}]
  %s4 = inlined_call_operand.vmem [shape: f32[1,4], index: 4, kind: input, shape index: {}]
  %s5 = inlined_call_operand.vmem [shape: f32[2,16,16,4], index: 5, kind: output, shape index: {}]
  %s6 = sld [smem:[#allocation0]]
  $region53: #{basic_block_forward.1} parent=0
    _
  %s8 = ssub.s32 1, %s6
  %s9 = scalar_select 0, %s8, %s6
  loop: start=0, step=1, limit=4
  $region2: #{basic_block_forward.1} parent=0 // loop_pre_header
    _
  $region3: #{basic_block_forward.1} parent=0 // loop_header
    %s11 = sphi 0, %s15
    %p12 = scmp.ge.s32.totalorder %s11, 4
    %s21 = sphi 0, %s23
    %s24 = sphi 0, %s21
    %s25 = sphi 0, %s24
    %s41 = sphi 0, %s25
    %s45 = sphi 0, %s45
    %s47 = sphi 0, %s45
    %s48 = sphi 0, %s47
    %s62 = sphi 0, %s48
    %s66 = sphi 0, %s66
    %s68 = sphi 0, %s66
    %s69 = sphi 0, %s68
    %s83 = sphi 0, %s69
    %s87 = sphi 0, %s87
    %s89 = sphi 0, %s87
    %s90 = sphi 0, %s89
    %s104 = sphi 0, %s90
    %s108 = sphi 0, %s108
    %s110 = sphi 0, %s108
    %s111 = sphi 0, %s110
    %s125 = sphi 0, %s111
    %s131 = sphi 0, %s133
    %s134 = sphi 0, %s131
    %s135 = sphi 0, %s134
    %s151 = sphi 0, %s135
  $region4: #{basic_block_forward.1} parent=0 // loop_header_branch
    %14 = sbr.rel (%p12) target = $region8
  $region5: #{basic_block_forward.1} parent=0 // loop_body
    %s16 = ssub.s32 %s11, 1
    %s17 = ssub.s32 %s11, 2
    %s18 = sadd.s32 %s11, 1
    %s19 = ssub.s32 %s11, %s18
    %p20 = scmp.eq.s32.totalorder %s19, 0
    %s22 = sadd.s32 %s21, 1
    %s23 = scalar_select %p20, %s21, %s22
    %p26 = pneg %p20
    %p27 = scmp.eq.s32.totalorder %s11, 1
    %p28 = por %p26, %p27
    %p29 = scmp.ne.s32.totalorder %s21, %s24
    %p30 = scmp.eq.s32.totalorder %s11, 0
    %p31 = por %p29, %p30
    %p32 = scmp.ne.s32.totalorder %s21, %s24
    %p33 = scmp.eq.s32.totalorder %s16, 1
    %p34 = por %p32, %p33
    %p35 = scmp.ne.s32.totalorder %s24, %s25
    %p36 = scmp.eq.s32.totalorder %s16, 0
    %p37 = por %p35, %p36
    %p38 = scmp.ne.s32.totalorder %s24, %s25
    %p39 = scmp.eq.s32.totalorder %s17, 1
    %p40 = por %p38, %p39
    %p42 = scmp.ne.s32.totalorder %s25, %s41
    %p43 = scmp.eq.s32.totalorder %s17, 0
    %p44 = por %p42, %p43
    %s46 = sadd.s32 %s45, 1
    %p49 = scmp.eq.s32.totalorder %s11, 1
    %p50 = scmp.ne.s32.totalorder %s45, %s47
    %p51 = scmp.eq.s32.totalorder %s11, 0
    %p52 = por %p50, %p51
    %p53 = scmp.ne.s32.totalorder %s45, %s47
    %p54 = scmp.eq.s32.totalorder %s16, 1
    %p55 = por %p53, %p54
    %p56 = scmp.ne.s32.totalorder %s47, %s48
    %p57 = scmp.eq.s32.totalorder %s16, 0
    %p58 = por %p56, %p57
    %p59 = scmp.ne.s32.totalorder %s47, %s48
    %p60 = scmp.eq.s32.totalorder %s17, 1
    %p61 = por %p59, %p60
    %p63 = scmp.ne.s32.totalorder %s48, %s62
    %p64 = scmp.eq.s32.totalorder %s17, 0
    %p65 = por %p63, %p64
    %s67 = sadd.s32 %s66, 1
    %p70 = scmp.eq.s32.totalorder %s11, 1
    %p71 = scmp.ne.s32.totalorder %s66, %s68
    %p72 = scmp.eq.s32.totalorder %s11, 0
    %p73 = por %p71, %p72
    %p74 = scmp.ne.s32.totalorder %s66, %s68
    %p75 = scmp.eq.s32.totalorder %s16, 1
    %p76 = por %p74, %p75
    %p77 = scmp.ne.s32.totalorder %s68, %s69
    %p78 = scmp.eq.s32.totalorder %s16, 0
    %p79 = por %p77, %p78
    %p80 = scmp.ne.s32.totalorder %s68, %s69
    %p81 = scmp.eq.s32.totalorder %s17, 1
    %p82 = por %p80, %p81
    %p84 = scmp.ne.s32.totalorder %s69, %s83
    %p85 = scmp.eq.s32.totalorder %s17, 0
    %p86 = por %p84, %p85
    %s88 = sadd.s32 %s87, 1
    %p91 = scmp.eq.s32.totalorder %s11, 1
    %p92 = scmp.ne.s32.totalorder %s87, %s89
    %p93 = scmp.eq.s32.totalorder %s11, 0
    %p94 = por %p92, %p93
    %p95 = scmp.ne.s32.totalorder %s87, %s89
    %p96 = scmp.eq.s32.totalorder %s16, 1
    %p97 = por %p95, %p96
    %p98 = scmp.ne.s32.totalorder %s89, %s90
    %p99 = scmp.eq.s32.totalorder %s16, 0
    %p100 = por %p98, %p99
    %p101 = scmp.ne.s32.totalorder %s89, %s90
    %p102 = scmp.eq.s32.totalorder %s17, 1
    %p103 = por %p101, %p102
    %p105 = scmp.ne.s32.totalorder %s90, %s104
    %p106 = scmp.eq.s32.totalorder %s17, 0
    %p107 = por %p105, %p106
    %s109 = sadd.s32 %s108, 1
    %p112 = scmp.eq.s32.totalorder %s11, 1
    %p113 = scmp.ne.s32.totalorder %s108, %s110
    %p114 = scmp.eq.s32.totalorder %s11, 0
    %p115 = por %p113, %p114
    %p116 = scmp.ne.s32.totalorder %s108, %s110
    %p117 = scmp.eq.s32.totalorder %s16, 1
    %p118 = por %p116, %p117
    %p119 = scmp.ne.s32.totalorder %s110, %s111
    %p120 = scmp.eq.s32.totalorder %s16, 0
    %p121 = por %p119, %p120
    %p122 = scmp.ne.s32.totalorder %s110, %s111
    %p123 = scmp.eq.s32.totalorder %s17, 1
    %p124 = por %p122, %p123
    %p126 = scmp.ne.s32.totalorder %s111, %s125
    %p127 = scmp.eq.s32.totalorder %s17, 0
    %p128 = por %p126, %p127
    %s129 = ssub.s32 %s11, %s18
    %p130 = scmp.eq.s32.totalorder %s129, 0
    %s132 = sadd.s32 %s131, 1
    %s133 = scalar_select %p130, %s131, %s132
    %p136 = pneg %p130
    %p137 = scmp.eq.s32.totalorder %s11, 1
    %p138 = por %p136, %p137
    %p139 = scmp.ne.s32.totalorder %s131, %s134
    %p140 = scmp.eq.s32.totalorder %s11, 0
    %p141 = por %p139, %p140
    %p142 = scmp.ne.s32.totalorder %s131, %s134
    %p143 = scmp.eq.s32.totalorder %s16, 1
    %p144 = por %p142, %p143
    %p145 = scmp.ne.s32.totalorder %s134, %s135
    %p146 = scmp.eq.s32.totalorder %s16, 0
    %p147 = por %p145, %p146
    %p148 = scmp.ne.s32.totalorder %s134, %s135
    %p149 = scmp.eq.s32.totalorder %s17, 1
    %p150 = por %p148, %p149
    %p152 = scmp.ne.s32.totalorder %s135, %s151
    %p153 = scmp.eq.s32.totalorder %s17, 0
    %p154 = por %p152, %p153
    %p155 = scmp.le.s32.totalorder 1, %s11
    %p156 = scmp.lt.s32.totalorder %s11, 3
    %p157 = pnand %p155, %p156
    %p158 = pneg %p157
    // Predicated region
    $region9: #{basic_block_forward.1} parent=5 // pred_check
      _
    $region10: #{basic_block_forward.1} parent=5 // pred_check_branch
      %160 = sbr.rel (%p157) target = $region12
    $region11: #{basic_block_forward.1} parent=5 // pred_region
      %s161 = ssub.s32 %s11, 1
      // Predicated region
      $region13: #{basic_block_forward.1} parent=11 // pred_check
        %p162 = pneg %p58
      $region14: #{basic_block_forward.1} parent=11 // pred_check_branch
        %164 = sbr.rel (%p162) target = $region16
      $region15: #{basic_block_forward.1} parent=11 // pred_region
        _
      $region16: #{basic_block_forward.1} parent=11 // pred_fallthru
        _
      // Predicated region
      $region17: #{basic_block_forward.1} parent=11 // pred_check
        %p165 = pneg %p79
      $region18: #{basic_block_forward.1} parent=11 // pred_check_branch
        %167 = sbr.rel (%p165) target = $region20
      $region19: #{basic_block_forward.1} parent=11 // pred_region
        _
      $region20: #{basic_block_forward.1} parent=11 // pred_fallthru
        _
      // Predicated region
      $region21: #{basic_block_forward.1} parent=11 // pred_check
        %p168 = pneg %p100
      $region22: #{basic_block_forward.1} parent=11 // pred_check_branch
        %170 = sbr.rel (%p168) target = $region24
      $region23: #{basic_block_forward.1} parent=11 // pred_region
        _
      $region24: #{basic_block_forward.1} parent=11 // pred_fallthru
        _
      // Predicated region
      $region25: #{basic_block_forward.1} parent=11 // pred_check
        %p171 = pneg %p121
      $region26: #{basic_block_forward.1} parent=11 // pred_check_branch
        %173 = sbr.rel (%p171) target = $region28
      $region27: #{basic_block_forward.1} parent=11 // pred_region
        _
      $region28: #{basic_block_forward.1} parent=11 // pred_fallthru
        _
    $region12: #{basic_block_forward.1} parent=5 // pred_fallthru
      _
    %p174 = scmp.lt.s32.totalorder %s11, 2
    // Predicated region
    $region29: #{basic_block_forward.1} parent=5 // pred_check
      %p175 = pneg %p174
    $region30: #{basic_block_forward.1} parent=5 // pred_check_branch
      %177 = sbr.rel (%p175) target = $region32
    $region31: #{basic_block_forward.1} parent=5 // pred_region
      // Predicated region
      $region33: #{basic_block_forward.1} parent=31 // pred_check
        %p178 = pneg %p31
      $region34: #{basic_block_forward.1} parent=31 // pred_check_branch
        %180 = sbr.rel (%p178) target = $region36
      $region35: #{basic_block_forward.1} parent=31 // pred_region
        %p181 = scmp.lt.s32.totalorder %s11, 1
        %s182 = scalar_select %p181, %s11, 1
        %s183 = smul.addr %s182, 32
        %s184 = smul.addr %s183, 4
        %s185 = scalar_lea.vmem %s0, %s184
      $region36: #{basic_block_forward.1} parent=31 // pred_fallthru
        _
    $region32: #{basic_block_forward.1} parent=5 // pred_fallthru
      _
    %p186 = scmp.le.s32.totalorder 1, %s11
    %p187 = scmp.lt.s32.totalorder %s11, 3
    %p188 = pnand %p186, %p187
    %p189 = pneg %p188
    // Predicated region
    $region37: #{basic_block_forward.1} parent=5 // pred_check
      _
    $region38: #{basic_block_forward.1} parent=5 // pred_check_branch
      %191 = sbr.rel (%p188) target = $region40
    $region39: #{basic_block_forward.1} parent=5 // pred_region
      %s192 = ssub.s32 %s11, 1
      %p193 = scmp.lt.s32.totalorder %s16, 1
      %s194 = scalar_select %p193, %s16, 1
      %s195 = smul.addr %s194, 32
      %s196 = smul.addr %s195, 4
      %s197 = scalar_lea.vmem %s0, %s196
      %p198 = pneg %p37
      %p199 = pneg %p34
      %p200 = pneg %p58
      %p201 = pneg %p55
      %p202 = pneg %p79
      %p203 = pneg %p76
      %p204 = pneg %p100
      %p205 = pneg %p97
      %p206 = pneg %p121
      %p207 = pneg %p118
      %p208 = pneg %p147
      %p209 = pneg %p144
      %p210 = scmp.lt.s32.totalorder %s16, 1
      %s211 = scalar_select %p210, %s16, 1
      %s212 = smul.addr %s211, 32
      %s213 = smul.addr %s212, 8
      %s214 = scalar_lea.vmem %s5, %s213
      %p215 = scmp.lt.s32.totalorder %s16, 1
      %s216 = scalar_select %p215, %s16, 1
      %s217 = smul.addr %s216, 32
      %s218 = smul.addr %s217, 4
      %s219 = scalar_lea.vmem %s0, %s218
      %p220 = scmp.lt.s32.totalorder %s16, 1
      %s221 = scalar_select %p220, %s16, 1
      %s222 = smul.addr %s221, 32
      %s223 = smul.addr %s222, 8
      %s224 = scalar_lea.vmem %s5, %s223
      %vm226 = vcmask 27648
      %227 = vst.msk [vmem:[#allocation2] sm:$0xf] %vm226, 0
      %228 = vst.msk [vmem:[#allocation2 + $0x4] sm:$0xf] %vm226, 0
      %229 = vst.msk [vmem:[#allocation2 + $0x8] sm:$0xf] %vm226, 0
      %230 = vst.msk [vmem:[#allocation2 + $0xcc] sm:$0xf] %vm226, 0
      %231 = vst.msk [vmem:[#allocation2 + $0xd0] sm:$0xf] %vm226, 0
      %232 = vst.msk [vmem:[#allocation2 + $0xd4] sm:$0xf] %vm226, 0
      %233 = vst.msk [vmem:[#allocation2 + $0xd8] sm:$0xf] %vm226, 0
      %v234 = vld [vmem:[%s219] sm:$0xf]
      %v235 = vld [vmem:[%s219 + $0x4] sm:$0xf]
      %v238 = vunpack.c.l.b16 %v234
      %v239 = vunpack.c.l.b16 %v235
      %v240 = vpack.c.b16 %v239, %v238
      %v242 = vshrl.u32 %v240, 16
      %v244 = vrot.slane %v242, 7
      %v245 = vshll.u32 %v240, 16
      %v247 = vor.u32 %v244, %v245
      %vm250 = vcmask 1040384
      %vm251 = vsmask.f32 256
      %vm252 = vmand %vm250, %vm251
      %v253 = vsel %vm252, 0, %v247
      %v254 = vsel %vm252, %v244, 0
      %v257 = vunpack.c.l.b16 %v253
      %v258 = vunpack.c.h.b16 %v253
      %v259 = vunpack.c.l.b16 %v254
      %v260 = vpack.c.b16 %v257, %v257
      %v261 = vpack.c.b16 %v258, %v258
      %v262 = vpack.c.b16 %v259, %v259
      %266 = vst.msk [vmem:[#allocation2 + $0xc] sm:$0xf] %vm226, %v260
      %267 = vst.msk [vmem:[#allocation2 + $0x10] sm:$0xf] %vm226, %v261
      %268 = vst.msk [vmem:[#allocation2 + $0x14] sm:$0xf] %vm226, %v262
      %s269 = scalar_lea.vmem %s219, 8
      %v270 = vld [vmem:[%s269] sm:$0xf]
      %v271 = vld [vmem:[%s269 + $0x4] sm:$0xf]
      %v274 = vunpack.c.l.b16 %v270
      %v275 = vunpack.c.l.b16 %v271
      %v276 = vpack.c.b16 %v275, %v274
      %v278 = vshrl.u32 %v276, 16
      %v280 = vrot.slane %v278, 7
      %v281 = vshll.u32 %v276, 16
      %v283 = vor.u32 %v280, %v281
      %v286 = vsel %vm252, 0, %v283
      %v287 = vsel %vm252, %v280, 0
      %v290 = vunpack.c.l.b16 %v286
      %v291 = vunpack.c.h.b16 %v286
      %v292 = vunpack.c.l.b16 %v287
      %v293 = vpack.c.b16 %v290, %v290
      %v294 = vpack.c.b16 %v291, %v291
      %v295 = vpack.c.b16 %v292, %v292
      %299 = vst.msk [vmem:[#allocation2 + $0x18] sm:$0xf] %vm226, %v293
      %300 = vst.msk [vmem:[#allocation2 + $0x1c] sm:$0xf] %vm226, %v294
      %301 = vst.msk [vmem:[#allocation2 + $0x20] sm:$0xf] %vm226, %v295
      %s302 = scalar_lea.vmem %s219, 16
      %v303 = vld [vmem:[%s302] sm:$0xf]
      %v304 = vld [vmem:[%s302 + $0x4] sm:$0xf]
      %v307 = vunpack.c.l.b16 %v303
      %v308 = vunpack.c.l.b16 %v304
      %v309 = vpack.c.b16 %v308, %v307
      %v311 = vshrl.u32 %v309, 16
      %v313 = vrot.slane %v311, 7
      %v314 = vshll.u32 %v309, 16
      %v316 = vor.u32 %v313, %v314
      %v319 = vsel %vm252, 0, %v316
      %v320 = vsel %vm252, %v313, 0
      %v323 = vunpack.c.l.b16 %v319
      %v324 = vunpack.c.h.b16 %v319
      %v325 = vunpack.c.l.b16 %v320
      %v326 = vpack.c.b16 %v323, %v323
      %v327 = vpack.c.b16 %v324, %v324
      %v328 = vpack.c.b16 %v325, %v325
      %332 = vst.msk [vmem:[#allocation2 + $0x24] sm:$0xf] %vm226, %v326
      %333 = vst.msk [vmem:[#allocation2 + $0x28] sm:$0xf] %vm226, %v327
      %334 = vst.msk [vmem:[#allocation2 + $0x2c] sm:$0xf] %vm226, %v328
      %s335 = scalar_lea.vmem %s219, 24
      %v336 = vld [vmem:[%s335] sm:$0xf]
      %v337 = vld [vmem:[%s335 + $0x4] sm:$0xf]
      %v340 = vunpack.c.l.b16 %v336
      %v341 = vunpack.c.l.b16 %v337
      %v342 = vpack.c.b16 %v341, %v340
      %v344 = vshrl.u32 %v342, 16
      %v346 = vrot.slane %v344, 7
      %v347 = vshll.u32 %v342, 16
      %v349 = vor.u32 %v346, %v347
      %v352 = vsel %vm252, 0, %v349
      %v353 = vsel %vm252, %v346, 0
      %v356 = vunpack.c.l.b16 %v352
      %v357 = vunpack.c.h.b16 %v352
      %v358 = vunpack.c.l.b16 %v353
      %v359 = vpack.c.b16 %v356, %v356
      %v360 = vpack.c.b16 %v357, %v357
      %v361 = vpack.c.b16 %v358, %v358
      %365 = vst.msk [vmem:[#allocation2 + $0x30] sm:$0xf] %vm226, %v359
      %366 = vst.msk [vmem:[#allocation2 + $0x34] sm:$0xf] %vm226, %v360
      %367 = vst.msk [vmem:[#allocation2 + $0x38] sm:$0xf] %vm226, %v361
      %s368 = scalar_lea.vmem %s219, 32
      %v369 = vld [vmem:[%s368] sm:$0xf]
      %v370 = vld [vmem:[%s368 + $0x4] sm:$0xf]
      %v373 = vunpack.c.l.b16 %v369
      %v374 = vunpack.c.l.b16 %v370
      %v375 = vpack.c.b16 %v374, %v373
      %v377 = vshrl.u32 %v375, 16
      %v379 = vrot.slane %v377, 7
      %v380 = vshll.u32 %v375, 16
      %v382 = vor.u32 %v379, %v380
      %v385 = vsel %vm252, 0, %v382
      %v386 = vsel %vm252, %v379, 0
      %v389 = vunpack.c.l.b16 %v385
      %v390 = vunpack.c.h.b16 %v385
      %v391 = vunpack.c.l.b16 %v386
      %v392 = vpack.c.b16 %v389, %v389
      %v393 = vpack.c.b16 %v390, %v390
      %v394 = vpack.c.b16 %v391, %v391
      %398 = vst.msk [vmem:[#allocation2 + $0x3c] sm:$0xf] %vm226, %v392
      %399 = vst.msk [vmem:[#allocation2 + $0x40] sm:$0xf] %vm226, %v393
      %400 = vst.msk [vmem:[#allocation2 + $0x44] sm:$0xf] %vm226, %v394
      %s401 = scalar_lea.vmem %s219, 40
      %v402 = vld [vmem:[%s401] sm:$0xf]
      %v403 = vld [vmem:[%s401 + $0x4] sm:$0xf]
      %v406 = vunpack.c.l.b16 %v402
      %v407 = vunpack.c.l.b16 %v403
      %v408 = vpack.c.b16 %v407, %v406
      %v410 = vshrl.u32 %v408, 16
      %v412 = vrot.slane %v410, 7
      %v413 = vshll.u32 %v408, 16
      %v415 = vor.u32 %v412, %v413
      %v418 = vsel %vm252, 0, %v415
      %v419 = vsel %vm252, %v412, 0
      %v422 = vunpack.c.l.b16 %v418
      %v423 = vunpack.c.h.b16 %v418
      %v424 = vunpack.c.l.b16 %v419
      %v425 = vpack.c.b16 %v422, %v422
      %v426 = vpack.c.b16 %v423, %v423
      %v427 = vpack.c.b16 %v424, %v424
      %431 = vst.msk [vmem:[#allocation2 + $0x48] sm:$0xf] %vm226, %v425
      %432 = vst.msk [vmem:[#allocation2 + $0x4c] sm:$0xf] %vm226, %v426
      %433 = vst.msk [vmem:[#allocation2 + $0x50] sm:$0xf] %vm226, %v427
      %s434 = scalar_lea.vmem %s219, 48
      %v435 = vld [vmem:[%s434] sm:$0xf]
      %v436 = vld [vmem:[%s434 + $0x4] sm:$0xf]
      %v439 = vunpack.c.l.b16 %v435
      %v440 = vunpack.c.l.b16 %v436
      %v441 = vpack.c.b16 %v440, %v439
      %v443 = vshrl.u32 %v441, 16
      %v445 = vrot.slane %v443, 7
      %v446 = vshll.u32 %v441, 16
      %v448 = vor.u32 %v445, %v446
      %v451 = vsel %vm252, 0, %v448
      %v452 = vsel %vm252, %v445, 0
      %v455 = vunpack.c.l.b16 %v451
      %v456 = vunpack.c.h.b16 %v451
      %v457 = vunpack.c.l.b16 %v452
      %v458 = vpack.c.b16 %v455, %v455
      %v459 = vpack.c.b16 %v456, %v456
      %v460 = vpack.c.b16 %v457, %v457
      %464 = vst.msk [vmem:[#allocation2 + $0x54] sm:$0xf] %vm226, %v458
      %465 = vst.msk [vmem:[#allocation2 + $0x58] sm:$0xf] %vm226, %v459
      %466 = vst.msk [vmem:[#allocation2 + $0x5c] sm:$0xf] %vm226, %v460
      %s467 = scalar_lea.vmem %s219, 56
      %v468 = vld [vmem:[%s467] sm:$0xf]
      %v469 = vld [vmem:[%s467 + $0x4] sm:$0xf]
      %v472 = vunpack.c.l.b16 %v468
      %v473 = vunpack.c.l.b16 %v469
      %v474 = vpack.c.b16 %v473, %v472
      %v476 = vshrl.u32 %v474, 16
      %v478 = vrot.slane %v476, 7
      %v479 = vshll.u32 %v474, 16
      %v481 = vor.u32 %v478, %v479
      %v484 = vsel %vm252, 0, %v481
      %v485 = vsel %vm252, %v478, 0
      %v488 = vunpack.c.l.b16 %v484
      %v489 = vunpack.c.h.b16 %v484
      %v490 = vunpack.c.l.b16 %v485
      %v491 = vpack.c.b16 %v488, %v488
      %v492 = vpack.c.b16 %v489, %v489
      %v493 = vpack.c.b16 %v490, %v490
      %497 = vst.msk [vmem:[#allocation2 + $0x60] sm:$0xf] %vm226, %v491
      %498 = vst.msk [vmem:[#allocation2 + $0x64] sm:$0xf] %vm226, %v492
      %499 = vst.msk [vmem:[#allocation2 + $0x68] sm:$0xf] %vm226, %v493
      %s500 = scalar_lea.vmem %s219, 64
      %v501 = vld [vmem:[%s500] sm:$0xf]
      %v502 = vld [vmem:[%s500 + $0x4] sm:$0xf]
      %v505 = vunpack.c.l.b16 %v501
      %v506 = vunpack.c.l.b16 %v502
      %v507 = vpack.c.b16 %v506, %v505
      %v509 = vshrl.u32 %v507, 16
      %v511 = vrot.slane %v509, 7
      %v512 = vshll.u32 %v507, 16
      %v514 = vor.u32 %v511, %v512
      %v517 = vsel %vm252, 0, %v514
      %v518 = vsel %vm252, %v511, 0
      %v521 = vunpack.c.l.b16 %v517
      %v522 = vunpack.c.h.b16 %v517
      %v523 = vunpack.c.l.b16 %v518
      %v524 = vpack.c.b16 %v521, %v521
      %v525 = vpack.c.b16 %v522, %v522
      %v526 = vpack.c.b16 %v523, %v523
      %530 = vst.msk [vmem:[#allocation2 + $0x6c] sm:$0xf] %vm226, %v524
      %531 = vst.msk [vmem:[#allocation2 + $0x70] sm:$0xf] %vm226, %v525
      %532 = vst.msk [vmem:[#allocation2 + $0x74] sm:$0xf] %vm226, %v526
      %s533 = scalar_lea.vmem %s219, 72
      %v534 = vld [vmem:[%s533] sm:$0xf]
      %v535 = vld [vmem:[%s533 + $0x4] sm:$0xf]
      %v538 = vunpack.c.l.b16 %v534
      %v539 = vunpack.c.l.b16 %v535
      %v540 = vpack.c.b16 %v539, %v538
      %v542 = vshrl.u32 %v540, 16
      %v544 = vrot.slane %v542, 7
      %v545 = vshll.u32 %v540, 16
      %v547 = vor.u32 %v544, %v545
      %v550 = vsel %vm252, 0, %v547
      %v551 = vsel %vm252, %v544, 0
      %v554 = vunpack.c.l.b16 %v550
      %v555 = vunpack.c.h.b16 %v550
      %v556 = vunpack.c.l.b16 %v551
      %v557 = vpack.c.b16 %v554, %v554
      %v558 = vpack.c.b16 %v555, %v555
      %v559 = vpack.c.b16 %v556, %v556
      %563 = vst.msk [vmem:[#allocation2 + $0x78] sm:$0xf] %vm226, %v557
      %564 = vst.msk [vmem:[#allocation2 + $0x7c] sm:$0xf] %vm226, %v558
      %565 = vst.msk [vmem:[#allocation2 + $0x80] sm:$0xf] %vm226, %v559
      %s566 = scalar_lea.vmem %s219, 80
      %v567 = vld [vmem:[%s566] sm:$0xf]
      %v568 = vld [vmem:[%s566 + $0x4] sm:$0xf]
      %v571 = vunpack.c.l.b16 %v567
      %v572 = vunpack.c.l.b16 %v568
      %v573 = vpack.c.b16 %v572, %v571
      %v575 = vshrl.u32 %v573, 16
      %v577 = vrot.slane %v575, 7
      %v578 = vshll.u32 %v573, 16
      %v580 = vor.u32 %v577, %v578
      %v583 = vsel %vm252, 0, %v580
      %v584 = vsel %vm252, %v577, 0
      %v587 = vunpack.c.l.b16 %v583
      %v588 = vunpack.c.h.b16 %v583
      %v589 = vunpack.c.l.b16 %v584
      %v590 = vpack.c.b16 %v587, %v587
      %v591 = vpack.c.b16 %v588, %v588
      %v592 = vpack.c.b16 %v589, %v589
      %596 = vst.msk [vmem:[#allocation2 + $0x84] sm:$0xf] %vm226, %v590
      %597 = vst.msk [vmem:[#allocation2 + $0x88] sm:$0xf] %vm226, %v591
      %598 = vst.msk [vmem:[#allocation2 + $0x8c] sm:$0xf] %vm226, %v592
      %s599 = scalar_lea.vmem %s219, 88
      %v600 = vld [vmem:[%s599] sm:$0xf]
      %v601 = vld [vmem:[%s599 + $0x4] sm:$0xf]
      %v604 = vunpack.c.l.b16 %v600
      %v605 = vunpack.c.l.b16 %v601
      %v606 = vpack.c.b16 %v605, %v604
      %v608 = vshrl.u32 %v606, 16
      %v610 = vrot.slane %v608, 7
      %v611 = vshll.u32 %v606, 16
      %v613 = vor.u32 %v610, %v611
      %v616 = vsel %vm252, 0, %v613
      %v617 = vsel %vm252, %v610, 0
      %v620 = vunpack.c.l.b16 %v616
      %v621 = vunpack.c.h.b16 %v616
      %v622 = vunpack.c.l.b16 %v617
      %v623 = vpack.c.b16 %v620, %v620
      %v624 = vpack.c.b16 %v621, %v621
      %v625 = vpack.c.b16 %v622, %v622
      %629 = vst.msk [vmem:[#allocation2 + $0x90] sm:$0xf] %vm226, %v623
      %630 = vst.msk [vmem:[#allocation2 + $0x94] sm:$0xf] %vm226, %v624
      %631 = vst.msk [vmem:[#allocation2 + $0x98] sm:$0xf] %vm226, %v625
      %s632 = scalar_lea.vmem %s219, 96
      %v633 = vld [vmem:[%s632] sm:$0xf]
      %v634 = vld [vmem:[%s632 + $0x4] sm:$0xf]
      %v637 = vunpack.c.l.b16 %v633
      %v638 = vunpack.c.l.b16 %v634
      %v639 = vpack.c.b16 %v638, %v637
      %v641 = vshrl.u32 %v639, 16
      %v643 = vrot.slane %v641, 7
      %v644 = vshll.u32 %v639, 16
      %v646 = vor.u32 %v643, %v644
      %v649 = vsel %vm252, 0, %v646
      %v650 = vsel %vm252, %v643, 0
      %v653 = vunpack.c.l.b16 %v649
      %v654 = vunpack.c.h.b16 %v649
      %v655 = vunpack.c.l.b16 %v650
      %v656 = vpack.c.b16 %v653, %v653
      %v657 = vpack.c.b16 %v654, %v654
      %v658 = vpack.c.b16 %v655, %v655
      %662 = vst.msk [vmem:[#allocation2 + $0x9c] sm:$0xf] %vm226, %v656
      %663 = vst.msk [vmem:[#allocation2 + $0xa0] sm:$0xf] %vm226, %v657
      %664 = vst.msk [vmem:[#allocation2 + $0xa4] sm:$0xf] %vm226, %v658
      %s665 = scalar_lea.vmem %s219, 104
      %v666 = vld [vmem:[%s665] sm:$0xf]
      %v667 = vld [vmem:[%s665 + $0x4] sm:$0xf]
      %v670 = vunpack.c.l.b16 %v666
      %v671 = vunpack.c.l.b16 %v667
      %v672 = vpack.c.b16 %v671, %v670
      %v674 = vshrl.u32 %v672, 16
      %v676 = vrot.slane %v674, 7
      %v677 = vshll.u32 %v672, 16
      %v679 = vor.u32 %v676, %v677
      %v682 = vsel %vm252, 0, %v679
      %v683 = vsel %vm252, %v676, 0
      %v686 = vunpack.c.l.b16 %v682
      %v687 = vunpack.c.h.b16 %v682
      %v688 = vunpack.c.l.b16 %v683
      %v689 = vpack.c.b16 %v686, %v686
      %v690 = vpack.c.b16 %v687, %v687
      %v691 = vpack.c.b16 %v688, %v688
      %695 = vst.msk [vmem:[#allocation2 + $0xa8] sm:$0xf] %vm226, %v689
      %696 = vst.msk [vmem:[#allocation2 + $0xac] sm:$0xf] %vm226, %v690
      %697 = vst.msk [vmem:[#allocation2 + $0xb0] sm:$0xf] %vm226, %v691
      %s698 = scalar_lea.vmem %s219, 112
      %v699 = vld [vmem:[%s698] sm:$0xf]
      %v700 = vld [vmem:[%s698 + $0x4] sm:$0xf]
      %v703 = vunpack.c.l.b16 %v699
      %v704 = vunpack.c.l.b16 %v700
      %v705 = vpack.c.b16 %v704, %v703
      %v707 = vshrl.u32 %v705, 16
      %v709 = vrot.slane %v707, 7
      %v710 = vshll.u32 %v705, 16
      %v712 = vor.u32 %v709, %v710
      %v715 = vsel %vm252, 0, %v712
      %v716 = vsel %vm252, %v709, 0
      %v719 = vunpack.c.l.b16 %v715
      %v720 = vunpack.c.h.b16 %v715
      %v721 = vunpack.c.l.b16 %v716
      %v722 = vpack.c.b16 %v719, %v719
      %v723 = vpack.c.b16 %v720, %v720
      %v724 = vpack.c.b16 %v721, %v721
      %728 = vst.msk [vmem:[#allocation2 + $0xb4] sm:$0xf] %vm226, %v722
      %729 = vst.msk [vmem:[#allocation2 + $0xb8] sm:$0xf] %vm226, %v723
      %730 = vst.msk [vmem:[#allocation2 + $0xbc] sm:$0xf] %vm226, %v724
      %s731 = scalar_lea.vmem %s219, 120
      %v732 = vld [vmem:[%s731] sm:$0xf]
      %v733 = vld [vmem:[%s731 + $0x4] sm:$0xf]
      %v736 = vunpack.c.l.b16 %v732
      %v737 = vunpack.c.l.b16 %v733
      %v738 = vpack.c.b16 %v737, %v736
      %v740 = vshrl.u32 %v738, 16
      %v742 = vrot.slane %v740, 7
      %v743 = vshll.u32 %v738, 16
      %v745 = vor.u32 %v742, %v743
      %v748 = vsel %vm252, 0, %v745
      %v749 = vsel %vm252, %v742, 0
      %v752 = vunpack.c.l.b16 %v748
      %v753 = vunpack.c.h.b16 %v748
      %v754 = vunpack.c.l.b16 %v749
      %v755 = vpack.c.b16 %v752, %v752
      %v756 = vpack.c.b16 %v753, %v753
      %v757 = vpack.c.b16 %v754, %v754
      %761 = vst.msk [vmem:[#allocation2 + $0xc0] sm:$0xf] %vm226, %v755
      %762 = vst.msk [vmem:[#allocation2 + $0xc4] sm:$0xf] %vm226, %v756
      %763 = vst.msk [vmem:[#allocation2 + $0xc8] sm:$0xf] %vm226, %v757
      %v764 = vld [vmem:[#allocation2] sm:$0xf]
      %v765 = vld [vmem:[#allocation2 + $0x4] sm:$0xf]
      %v766 = vld [vmem:[#allocation2 + $0x8] sm:$0xf]
      %v767 = vld [vmem:[#allocation2 + $0xc] sm:$0xf]
      %v768 = vld [vmem:[#allocation2 + $0x10] sm:$0xf]
      %v769 = vld [vmem:[#allocation2 + $0x14] sm:$0xf]
      %v770 = vld [vmem:[#allocation2 + $0x18] sm:$0xf]
      %v771 = vld [vmem:[#allocation2 + $0x1c] sm:$0xf]
      %v772 = vld [vmem:[#allocation2 + $0x20] sm:$0xf]
      %v773 = vld [vmem:[#allocation2 + $0x24] sm:$0xf]
      %v774 = vld [vmem:[#allocation2 + $0x28] sm:$0xf]
      %v775 = vld [vmem:[#allocation2 + $0x2c] sm:$0xf]
      %v776 = vld [vmem:[#allocation2 + $0x30] sm:$0xf]
      %v777 = vld [vmem:[#allocation2 + $0x34] sm:$0xf]
      %v778 = vld [vmem:[#allocation2 + $0x38] sm:$0xf]
      %v779 = vld [vmem:[#allocation2 + $0x3c] sm:$0xf]
      %v780 = vld [vmem:[#allocation2 + $0x40] sm:$0xf]
      %v781 = vld [vmem:[#allocation2 + $0x44] sm:$0xf]
      %v782 = vld [vmem:[#allocation2 + $0x48] sm:$0xf]
      %v783 = vld [vmem:[#allocation2 + $0x4c] sm:$0xf]
      %v784 = vld [vmem:[#allocation2 + $0x50] sm:$0xf]
      %v785 = vld [vmem:[#allocation2 + $0x54] sm:$0xf]
      %v786 = vld [vmem:[#allocation2 + $0x58] sm:$0xf]
      %v787 = vld [vmem:[#allocation2 + $0x5c] sm:$0xf]
      %v788 = vld [vmem:[#allocation2 + $0x60] sm:$0xf]
      %v789 = vld [vmem:[#allocation2 + $0x64] sm:$0xf]
      %v790 = vld [vmem:[#allocation2 + $0x68] sm:$0xf]
      %v791 = vld [vmem:[#allocation2 + $0x6c] sm:$0xf]
      %v792 = vld [vmem:[#allocation2 + $0x70] sm:$0xf]
      %v793 = vld [vmem:[#allocation2 + $0x74] sm:$0xf]
      %v794 = vld [vmem:[#allocation2 + $0x78] sm:$0xf]
      %v795 = vld [vmem:[#allocation2 + $0x7c] sm:$0xf]
      %v796 = vld [vmem:[#allocation2 + $0x80] sm:$0xf]
      %v797 = vld [vmem:[#allocation2 + $0x84] sm:$0xf]
      %v798 = vld [vmem:[#allocation2 + $0x88] sm:$0xf]
      %v799 = vld [vmem:[#allocation2 + $0x8c] sm:$0xf]
      %v800 = vld [vmem:[#allocation2 + $0x90] sm:$0xf]
      %v801 = vld [vmem:[#allocation2 + $0x94] sm:$0xf]
      %v802 = vld [vmem:[#allocation2 + $0x98] sm:$0xf]
      %v803 = vld [vmem:[#allocation2 + $0x9c] sm:$0xf]
      %v804 = vld [vmem:[#allocation2 + $0xa0] sm:$0xf]
      %v805 = vld [vmem:[#allocation2 + $0xa4] sm:$0xf]
      %v806 = vld [vmem:[#allocation2 + $0xa8] sm:$0xf]
      %v807 = vld [vmem:[#allocation2 + $0xac] sm:$0xf]
      %v808 = vld [vmem:[#allocation2 + $0xb0] sm:$0xf]
      %v809 = vld [vmem:[#allocation2 + $0xb4] sm:$0xf]
      %v810 = vld [vmem:[#allocation2 + $0xb8] sm:$0xf]
      %v811 = vld [vmem:[#allocation2 + $0xbc] sm:$0xf]
      %v812 = vld [vmem:[#allocation2 + $0xc0] sm:$0xf]
      %v813 = vld [vmem:[%s1] sm:$0x3]
      %v814 = vld [vmem:[#allocation2 + $0xc4] sm:$0xf]
      %v815 = vld [vmem:[#allocation2 + $0xc8] sm:$0xf]
      %v816 = vld [vmem:[#allocation2 + $0xcc] sm:$0xf]
      %s817 = scalar_lea.vmem %s1, 2
      %v818 = vld [vmem:[%s817] sm:$0x3]
      %v868 = vunpack.c.l.b16 %v767
      %v869 = vunpack.c.l.b16 %v768
      %v870 = vunpack.c.l.b16 %v769
      %v871 = vunpack.c.l.b16 %v770
      %v872 = vunpack.c.l.b16 %v771
      %v873 = vunpack.c.l.b16 %v772
      %v874 = vunpack.c.l.b16 %v773
      %v875 = vunpack.c.l.b16 %v774
      %v876 = vunpack.c.l.b16 %v775
      %v877 = vunpack.c.l.b16 %v776
      %v878 = vunpack.c.l.b16 %v777
      %v879 = vunpack.c.l.b16 %v778
      %v880 = vunpack.c.l.b16 %v779
      %v881 = vunpack.c.l.b16 %v780
      %v882 = vunpack.c.l.b16 %v781
      %v883 = vunpack.c.l.b16 %v782
      %v884 = vunpack.c.l.b16 %v783
      %v885 = vunpack.c.l.b16 %v784
      %v886 = vunpack.c.l.b16 %v785
      %v887 = vunpack.c.l.b16 %v786
      %v888 = vunpack.c.l.b16 %v787
      %v889 = vunpack.c.l.b16 %v788
      %v890 = vunpack.c.l.b16 %v789
      %v891 = vunpack.c.l.b16 %v790
      %v892 = vunpack.c.l.b16 %v791
      %v893 = vunpack.c.l.b16 %v792
      %v894 = vunpack.c.l.b16 %v793
      %v895 = vunpack.c.l.b16 %v794
      %v896 = vunpack.c.l.b16 %v795
      %v897 = vunpack.c.l.b16 %v796
      %v898 = vunpack.c.l.b16 %v797
      %v899 = vunpack.c.l.b16 %v798
      %v900 = vunpack.c.l.b16 %v799
      %v901 = vunpack.c.l.b16 %v800
      %v902 = vunpack.c.l.b16 %v801
      %v903 = vunpack.c.l.b16 %v802
      %v904 = vunpack.c.l.b16 %v803
      %v905 = vunpack.c.l.b16 %v804
      %v906 = vunpack.c.l.b16 %v805
      %v907 = vunpack.c.l.b16 %v806
      %v908 = vunpack.c.l.b16 %v807
      %v909 = vunpack.c.l.b16 %v808
      %v910 = vunpack.c.l.b16 %v809
      %v911 = vunpack.c.l.b16 %v810
      %v912 = vunpack.c.l.b16 %v811
      %v913 = vunpack.c.l.b16 %v812
      %v914 = vunpack.c.l.b16 %v814
      %v915 = vunpack.c.l.b16 %v815
      %v916 = vunpack.c.l.b16 %v816
      %v917 = vpack.c.b16 %v869, %v868
      %v918 = vpack.c.b16 %v871, %v870
      %v919 = vpack.c.b16 %v873, %v872
      %v920 = vpack.c.b16 %v875, %v874
      %v921 = vpack.c.b16 %v877, %v876
      %v922 = vpack.c.b16 %v879, %v878
      %v923 = vpack.c.b16 %v881, %v880
      %v924 = vpack.c.b16 %v883, %v882
      %v925 = vpack.c.b16 %v885, %v884
      %v926 = vpack.c.b16 %v887, %v886
      %v927 = vpack.c.b16 %v889, %v888
      %v928 = vpack.c.b16 %v891, %v890
      %v929 = vpack.c.b16 %v893, %v892
      %v930 = vpack.c.b16 %v895, %v894
      %v931 = vpack.c.b16 %v897, %v896
      %v932 = vpack.c.b16 %v899, %v898
      %v933 = vpack.c.b16 %v901, %v900
      %v934 = vpack.c.b16 %v903, %v902
      %v935 = vpack.c.b16 %v905, %v904
      %v936 = vpack.c.b16 %v907, %v906
      %v937 = vpack.c.b16 %v909, %v908
      %v938 = vpack.c.b16 %v911, %v910
      %v939 = vpack.c.b16 %v913, %v912
      %v940 = vpack.c.b16 %v915, %v914
      %v941 = vpack.c.b16 %v916, %v916
      %vm942 = vcmask 31744
      %v944 = vsel %vm942, %v917, 0
      %v947 = vsel %vm942, %v918, 0
      %v950 = vsel %vm942, %v919, 0
      %v953 = vsel %vm942, %v920, 0
      %v956 = vsel %vm942, %v921, 0
      %v959 = vsel %vm942, %v922, 0
      %v962 = vsel %vm942, %v923, 0
      %v965 = vsel %vm942, %v924, 0
      %v968 = vsel %vm942, %v925, 0
      %v971 = vsel %vm942, %v926, 0
      %v974 = vsel %vm942, %v927, 0
      %v977 = vsel %vm942, %v928, 0
      %v980 = vsel %vm942, %v929, 0
      %v983 = vsel %vm942, %v930, 0
      %v986 = vsel %vm942, %v931, 0
      %v989 = vsel %vm942, %v932, 0
      %v992 = vsel %vm942, %v933, 0
      %v995 = vsel %vm942, %v934, 0
      %v998 = vsel %vm942, %v935, 0
      %v1001 = vsel %vm942, %v936, 0
      %v1004 = vsel %vm942, %v937, 0
      %v1007 = vsel %vm942, %v938, 0
      %v1010 = vsel %vm942, %v939, 0
      %v1013 = vsel %vm942, %v940, 0
      %v1016 = vsel %vm942, %v941, 0
      %vm1018 = vcmask 1041408
      %v1020 = vsel %vm1018, %v818, 0
      %1022 = vmatprep.subr.bf16.mxu0 0
      %1023 = vmatpush1.bf16.msra.mxu0 0
      %1024 = vmatprep.subr.bf16.mxu0 0
      %1025 = vmatpush1.bf16.msra.mxu0 0
      %1026 = vmatprep.subr.bf16.mxu0 0
      %1027 = vmatpush1.bf16.msra.mxu0 0
      %1028 = vmatprep.subr.bf16.mxu0 0
      %1029 = vmatpush1.bf16.msra.mxu0 0
      %1030 = vmatprep.subr.bf16.mxu0 0
      %1031 = vmatpush1.bf16.msra.mxu0 0
      %1032 = vmatprep.subr.bf16.mxu0 0
      %1033 = vmatpush1.bf16.msra.mxu0 0
      %1034 = vmatprep.subr.bf16.mxu0 0
      %1035 = vmatpush1.bf16.msra.mxu0 0
      %1036 = vmatprep.subr.bf16.mxu0 0
      %1037 = vmatpush1.bf16.msra.mxu0 %v1020
      %1038 = vmatprep.subr.bf16.mxu0 0
      %1039 = vmatpush2.bf16.msra.mxu0 0
      %1040 = vmatprep.subr.bf16.mxu0 0
      %1041 = vmatpush2.bf16.msra.mxu0 0
      %1042 = vmatprep.subr.bf16.mxu0 0
      %1043 = vmatpush2.bf16.msra.mxu0 0
      %1044 = vmatprep.subr.bf16.mxu0 0
      %1045 = vmatpush2.bf16.msra.mxu0 0
      %1046 = vmatprep.subr.bf16.mxu0 0
      %1047 = vmatpush2.bf16.msra.mxu0 0
      %1048 = vmatprep.subr.bf16.mxu0 0
      %1049 = vmatpush2.bf16.msra.mxu0 0
      %1050 = vmatprep.subr.bf16.mxu0 0
      %1051 = vmatpush2.bf16.msra.mxu0 0
      %1052 = vmatprep.subr.bf16.mxu0 0
      %1053 = vmatpush2.bf16.msra.mxu0 0
      %1054 = vmatprep.mubr.bf16.mxu0 0
      %1055 = vmatmul.mubr.bf16.gmra.mxu0 %v944
      %v1056 = vpop.f32.mrf.mxu0
      %v1057 = vadd.f32 0.0, %v1056
      %v1058 = vpop.f32.mrf.mxu0
      %v1059 = vpop.f32.mrf.mxu0
      %v1060 = vadd.f32 0.0, %v1059
      %v1061 = vpop.f32.mrf.mxu0
      %1062 = vmatprep.mubr.bf16.mxu0 0
      %1063 = vmatmul.mubr.bf16.gmra.mxu0 %v947
      %v1064 = vpop.f32.mrf.mxu0
      %v1065 = vadd.f32 0.0, %v1064
      %v1066 = vpop.f32.mrf.mxu0
      %v1067 = vpop.f32.mrf.mxu0
      %v1068 = vadd.f32 0.0, %v1067
      %v1069 = vpop.f32.mrf.mxu0
      %1070 = vmatprep.mubr.bf16.mxu0 0
      %1071 = vmatmul.mubr.bf16.gmra.mxu0 %v950
      %v1072 = vpop.f32.mrf.mxu0
      %v1073 = vadd.f32 0.0, %v1072
      %v1074 = vpop.f32.mrf.mxu0
      %v1075 = vpop.f32.mrf.mxu0
      %v1076 = vadd.f32 0.0, %v1075
      %v1077 = vpop.f32.mrf.mxu0
      %1078 = vmatprep.mubr.bf16.mxu0 0
      %1079 = vmatmul.mubr.bf16.gmra.mxu0 %v953
      %v1080 = vpop.f32.mrf.mxu0
      %v1081 = vadd.f32 0.0, %v1080
      %v1082 = vpop.f32.mrf.mxu0
      %v1083 = vpop.f32.mrf.mxu0
      %v1084 = vadd.f32 0.0, %v1083
      %v1085 = vpop.f32.mrf.mxu0
      %1086 = vmatprep.mubr.bf16.mxu0 0
      %1087 = vmatmul.mubr.bf16.gmra.mxu0 %v956
      %v1088 = vpop.f32.mrf.mxu0
      %v1089 = vadd.f32 0.0, %v1088
      %v1090 = vpop.f32.mrf.mxu0
      %v1091 = vpop.f32.mrf.mxu0
      %v1092 = vadd.f32 0.0, %v1091
      %v1093 = vpop.f32.mrf.mxu0
      %1094 = vmatprep.mubr.bf16.mxu0 0
      %1095 = vmatmul.mubr.bf16.gmra.mxu0 %v959
      %v1096 = vpop.f32.mrf.mxu0
      %v1097 = vadd.f32 0.0, %v1096
      %v1098 = vpop.f32.mrf.mxu0
      %v1099 = vpop.f32.mrf.mxu0
      %v1100 = vadd.f32 0.0, %v1099
      %v1101 = vpop.f32.mrf.mxu0
      %1102 = vmatprep.mubr.bf16.mxu0 0
      %1103 = vmatmul.mubr.bf16.gmra.mxu0 %v962
      %v1104 = vpop.f32.mrf.mxu0
      %v1105 = vadd.f32 0.0, %v1104
      %v1106 = vpop.f32.mrf.mxu0
      %v1107 = vpop.f32.mrf.mxu0
      %v1108 = vadd.f32 0.0, %v1107
      %v1109 = vpop.f32.mrf.mxu0
      %1110 = vmatprep.mubr.bf16.mxu0 0
      %1111 = vmatmul.mubr.bf16.gmra.mxu0 %v965
      %v1112 = vpop.f32.mrf.mxu0
      %v1113 = vadd.f32 0.0, %v1112
      %v1114 = vpop.f32.mrf.mxu0
      %v1115 = vpop.f32.mrf.mxu0
      %v1116 = vadd.f32 0.0, %v1115
      %v1117 = vpop.f32.mrf.mxu0
      %1118 = vmatprep.mubr.bf16.mxu0 0
      %1119 = vmatmul.mubr.bf16.gmra.mxu0 %v968
      %v1120 = vpop.f32.mrf.mxu0
      %v1121 = vadd.f32 0.0, %v1120
      %v1122 = vpop.f32.mrf.mxu0
      %v1123 = vpop.f32.mrf.mxu0
      %v1124 = vadd.f32 0.0, %v1123
      %v1125 = vpop.f32.mrf.mxu0
      %1126 = vmatprep.mubr.bf16.mxu0 0
      %1127 = vmatmul.mubr.bf16.gmra.mxu0 %v971
      %v1128 = vpop.f32.mrf.mxu0
      %v1129 = vadd.f32 0.0, %v1128
      %v1130 = vpop.f32.mrf.mxu0
      %v1131 = vpop.f32.mrf.mxu0
      %v1132 = vadd.f32 0.0, %v1131
      %v1133 = vpop.f32.mrf.mxu0
      %1134 = vmatprep.mubr.bf16.mxu0 0
      %1135 = vmatmul.mubr.bf16.gmra.mxu0 %v974
      %v1136 = vpop.f32.mrf.mxu0
      %v1137 = vadd.f32 0.0, %v1136
      %v1138 = vpop.f32.mrf.mxu0
      %v1139 = vpop.f32.mrf.mxu0
      %v1140 = vadd.f32 0.0, %v1139
      %v1141 = vpop.f32.mrf.mxu0
      %1142 = vmatprep.mubr.bf16.mxu0 0
      %1143 = vmatmul.mubr.bf16.gmra.mxu0 %v977
      %v1144 = vpop.f32.mrf.mxu0
      %v1145 = vadd.f32 0.0, %v1144
      %v1146 = vpop.f32.mrf.mxu0
      %v1147 = vpop.f32.mrf.mxu0
      %v1148 = vadd.f32 0.0, %v1147
      %v1149 = vpop.f32.mrf.mxu0
      %1150 = vmatprep.mubr.bf16.mxu0 0
      %1151 = vmatmul.mubr.bf16.gmra.mxu0 %v980
      %v1152 = vpop.f32.mrf.mxu0
      %v1153 = vadd.f32 0.0, %v1152
      %v1154 = vpop.f32.mrf.mxu0
      %v1155 = vpop.f32.mrf.mxu0
      %v1156 = vadd.f32 0.0, %v1155
      %v1157 = vpop.f32.mrf.mxu0
      %1158 = vmatprep.mubr.bf16.mxu0 0
      %1159 = vmatmul.mubr.bf16.gmra.mxu0 %v983
      %v1160 = vpop.f32.mrf.mxu0
      %v1161 = vadd.f32 0.0, %v1160
      %v1162 = vpop.f32.mrf.mxu0
      %v1163 = vpop.f32.mrf.mxu0
      %v1164 = vadd.f32 0.0, %v1163
      %v1165 = vpop.f32.mrf.mxu0
      %1166 = vmatprep.mubr.bf16.mxu0 0
      %1167 = vmatmul.mubr.bf16.gmra.mxu0 %v986
      %v1168 = vpop.f32.mrf.mxu0
      %v1169 = vadd.f32 0.0, %v1168
      %v1170 = vpop.f32.mrf.mxu0
      %v1171 = vpop.f32.mrf.mxu0
      %v1172 = vadd.f32 0.0, %v1171
      %v1173 = vpop.f32.mrf.mxu0
      %1174 = vmatprep.mubr.bf16.mxu0 0
      %1175 = vmatmul.mubr.bf16.gmra.mxu0 %v989
      %v1176 = vpop.f32.mrf.mxu0
      %v1177 = vadd.f32 0.0, %v1176
      %v1178 = vpop.f32.mrf.mxu0
      %v1179 = vpop.f32.mrf.mxu0
      %v1180 = vadd.f32 0.0, %v1179
      %v1181 = vpop.f32.mrf.mxu0
      %1182 = vmatprep.mubr.bf16.mxu0 0
      %1183 = vmatmul.mubr.bf16.gmra.mxu0 %v992
      %v1184 = vpop.f32.mrf.mxu0
      %v1185 = vadd.f32 0.0, %v1184
      %v1186 = vpop.f32.mrf.mxu0
      %v1187 = vpop.f32.mrf.mxu0
      %v1188 = vadd.f32 0.0, %v1187
      %v1189 = vpop.f32.mrf.mxu0
      %1190 = vmatprep.mubr.bf16.mxu0 0
      %1191 = vmatmul.mubr.bf16.gmra.mxu0 %v995
      %v1192 = vpop.f32.mrf.mxu0
      %v1193 = vadd.f32 0.0, %v1192
      %v1194 = vpop.f32.mrf.mxu0
      %v1195 = vpop.f32.mrf.mxu0
      %v1196 = vadd.f32 0.0, %v1195
      %v1197 = vpop.f32.mrf.mxu0
      %1198 = vmatprep.mubr.bf16.mxu0 0
      %1199 = vmatmul.mubr.bf16.gmra.mxu0 %v998
      %v1200 = vpop.f32.mrf.mxu0
      %v1201 = vadd.f32 0.0, %v1200
      %v1202 = vpop.f32.mrf.mxu0
      %v1203 = vpop.f32.mrf.mxu0
      %v1204 = vadd.f32 0.0, %v1203
      %v1205 = vpop.f32.mrf.mxu0
      %1206 = vmatprep.mubr.bf16.mxu0 0
      %1207 = vmatmul.mubr.bf16.gmra.mxu0 %v1001
      %v1208 = vpop.f32.mrf.mxu0
      %v1209 = vadd.f32 0.0, %v1208
      %v1210 = vpop.f32.mrf.mxu0
      %v1211 = vpop.f32.mrf.mxu0
      %v1212 = vadd.f32 0.0, %v1211
      %v1213 = vpop.f32.mrf.mxu0
      %1214 = vmatprep.mubr.bf16.mxu0 0
      %1215 = vmatmul.mubr.bf16.gmra.mxu0 %v1004
      %v1216 = vpop.f32.mrf.mxu0
      %v1217 = vadd.f32 0.0, %v1216
      %v1218 = vpop.f32.mrf.mxu0
      %v1219 = vpop.f32.mrf.mxu0
      %v1220 = vadd.f32 0.0, %v1219
      %v1221 = vpop.f32.mrf.mxu0
      %1222 = vmatprep.mubr.bf16.mxu0 0
      %1223 = vmatmul.mubr.bf16.gmra.mxu0 %v1007
      %v1224 = vpop.f32.mrf.mxu0
      %v1225 = vadd.f32 0.0, %v1224
      %v1226 = vpop.f32.mrf.mxu0
      %v1227 = vpop.f32.mrf.mxu0
      %v1228 = vadd.f32 0.0, %v1227
      %v1229 = vpop.f32.mrf.mxu0
      %1230 = vmatprep.mubr.bf16.mxu0 0
      %1231 = vmatmul.mubr.bf16.gmra.mxu0 %v1010
      %v1232 = vpop.f32.mrf.mxu0
      %v1233 = vadd.f32 0.0, %v1232
      %v1234 = vpop.f32.mrf.mxu0
      %v1235 = vpop.f32.mrf.mxu0
      %v1236 = vadd.f32 0.0, %v1235
      %v1237 = vpop.f32.mrf.mxu0
      %1238 = vmatprep.mubr.bf16.mxu0 0
      %1239 = vmatmul.mubr.bf16.gmra.mxu0 %v1013
      %v1240 = vpop.f32.mrf.mxu0
      %v1241 = vadd.f32 0.0, %v1240
      %v1242 = vpop.f32.mrf.mxu0
      %v1243 = vpop.f32.mrf.mxu0
      %v1244 = vadd.f32 0.0, %v1243
      %v1245 = vpop.f32.mrf.mxu0
      %1246 = vmatprep.mubr.bf16.mxu0 0
      %1247 = vmatmul.mubr.bf16.gmra.mxu0 %v1016
      %v1248 = vpop.f32.mrf.mxu0
      %v1249 = vadd.f32 0.0, %v1248
      %v1250 = vpop.f32.mrf.mxu0
      %v1251 = vpop.f32.mrf.mxu0
      %v1252 = vpop.f32.mrf.mxu0
      %1253 = vdwg.mxu0
      %v1257 = vunpack.c.l.b16 %v764
      %v1258 = vunpack.c.l.b16 %v765
      %v1259 = vunpack.c.l.b16 %v766
      %v1260 = vpack.c.b16 %v1258, %v1257
      %v1261 = vpack.c.b16 %v868, %v1259
      %v1262 = vpack.c.b16 %v870, %v869
      %v1263 = vpack.c.b16 %v872, %v871
      %v1264 = vpack.c.b16 %v874, %v873
      %v1265 = vpack.c.b16 %v876, %v875
      %v1266 = vpack.c.b16 %v878, %v877
      %v1267 = vpack.c.b16 %v880, %v879
      %v1268 = vpack.c.b16 %v882, %v881
      %v1269 = vpack.c.b16 %v884, %v883
      %v1270 = vpack.c.b16 %v886, %v885
      %v1271 = vpack.c.b16 %v888, %v887
      %v1272 = vpack.c.b16 %v890, %v889
      %v1273 = vpack.c.b16 %v892, %v891
      %v1274 = vpack.c.b16 %v894, %v893
      %v1275 = vpack.c.b16 %v896, %v895
      %v1276 = vpack.c.b16 %v898, %v897
      %v1277 = vpack.c.b16 %v900, %v899
      %v1278 = vpack.c.b16 %v902, %v901
      %v1279 = vpack.c.b16 %v904, %v903
      %v1280 = vpack.c.b16 %v906, %v905
      %v1281 = vpack.c.b16 %v908, %v907
      %v1282 = vpack.c.b16 %v910, %v909
      %v1283 = vpack.c.b16 %v912, %v911
      %v1284 = vpack.c.b16 %v913, %v913
      %v1286 = vsel %vm942, %v1260, 0
      %v1289 = vsel %vm942, %v1261, 0
      %v1292 = vsel %vm942, %v1262, 0
      %v1295 = vsel %vm942, %v1263, 0
      %v1298 = vsel %vm942, %v1264, 0
      %v1301 = vsel %vm942, %v1265, 0
      %v1304 = vsel %vm942, %v1266, 0
      %v1307 = vsel %vm942, %v1267, 0
      %v1310 = vsel %vm942, %v1268, 0
      %v1313 = vsel %vm942, %v1269, 0
      %v1316 = vsel %vm942, %v1270, 0
      %v1319 = vsel %vm942, %v1271, 0
      %v1322 = vsel %vm942, %v1272, 0
      %v1325 = vsel %vm942, %v1273, 0
      %v1328 = vsel %vm942, %v1274, 0
      %v1331 = vsel %vm942, %v1275, 0
      %v1334 = vsel %vm942, %v1276, 0
      %v1337 = vsel %vm942, %v1277, 0
      %v1340 = vsel %vm942, %v1278, 0
      %v1343 = vsel %vm942, %v1279, 0
      %v1346 = vsel %vm942, %v1280, 0
      %v1349 = vsel %vm942, %v1281, 0
      %v1352 = vsel %vm942, %v1282, 0
      %v1355 = vsel %vm942, %v1283, 0
      %v1358 = vsel %vm942, %v1284, 0
      %v1361 = vsel %vm1018, %v813, 0
      %1363 = vmatprep.subr.bf16.mxu0 0
      %1364 = vmatpush1.bf16.msra.mxu0 0
      %1365 = vmatprep.subr.bf16.mxu0 0
      %1366 = vmatpush1.bf16.msra.mxu0 0
      %1367 = vmatprep.subr.bf16.mxu0 0
      %1368 = vmatpush1.bf16.msra.mxu0 0
      %1369 = vmatprep.subr.bf16.mxu0 0
      %1370 = vmatpush1.bf16.msra.mxu0 0
      %1371 = vmatprep.subr.bf16.mxu0 0
      %1372 = vmatpush1.bf16.msra.mxu0 0
      %1373 = vmatprep.subr.bf16.mxu0 0
      %1374 = vmatpush1.bf16.msra.mxu0 0
      %1375 = vmatprep.subr.bf16.mxu0 0
      %1376 = vmatpush1.bf16.msra.mxu0 0
      %1377 = vmatprep.subr.bf16.mxu0 0
      %1378 = vmatpush1.bf16.msra.mxu0 %v1361
      %1379 = vmatprep.subr.bf16.mxu0 0
      %1380 = vmatpush2.bf16.msra.mxu0 0
      %1381 = vmatprep.subr.bf16.mxu0 0
      %1382 = vmatpush2.bf16.msra.mxu0 0
      %1383 = vmatprep.subr.bf16.mxu0 0
      %1384 = vmatpush2.bf16.msra.mxu0 0
      %1385 = vmatprep.subr.bf16.mxu0 0
      %1386 = vmatpush2.bf16.msra.mxu0 0
      %1387 = vmatprep.subr.bf16.mxu0 0
      %1388 = vmatpush2.bf16.msra.mxu0 0
      %1389 = vmatprep.subr.bf16.mxu0 0
      %1390 = vmatpush2.bf16.msra.mxu0 0
      %1391 = vmatprep.subr.bf16.mxu0 0
      %1392 = vmatpush2.bf16.msra.mxu0 0
      %1393 = vmatprep.subr.bf16.mxu0 0
      %1394 = vmatpush2.bf16.msra.mxu0 0
      %1395 = vmatprep.mubr.bf16.mxu0 0
      %1396 = vmatmul.mubr.bf16.gmra.mxu0 %v1286
      %v1397 = vpop.f32.mrf.mxu0
      %v1398 = vadd.f32 %v1057, %v1397
      %v1399 = vpop.f32.mrf.mxu0
      %v1400 = vpop.f32.mrf.mxu0
      %v1401 = vadd.f32 %v1060, %v1400
      %v1402 = vpop.f32.mrf.mxu0
      %1403 = vmatprep.mubr.bf16.mxu0 0
      %1404 = vmatmul.mubr.bf16.gmra.mxu0 %v1289
      %v1405 = vpop.f32.mrf.mxu0
      %v1406 = vadd.f32 %v1065, %v1405
      %v1407 = vpop.f32.mrf.mxu0
      %v1408 = vpop.f32.mrf.mxu0
      %v1409 = vadd.f32 %v1068, %v1408
      %v1410 = vpop.f32.mrf.mxu0
      %1411 = vmatprep.mubr.bf16.mxu0 0
      %1412 = vmatmul.mubr.bf16.gmra.mxu0 %v1292
      %v1413 = vpop.f32.mrf.mxu0
      %v1414 = vadd.f32 %v1073, %v1413
      %v1415 = vpop.f32.mrf.mxu0
      %v1416 = vpop.f32.mrf.mxu0
      %v1417 = vadd.f32 %v1076, %v1416
      %v1418 = vpop.f32.mrf.mxu0
      %1419 = vmatprep.mubr.bf16.mxu0 0
      %1420 = vmatmul.mubr.bf16.gmra.mxu0 %v1295
      %v1421 = vpop.f32.mrf.mxu0
      %v1422 = vadd.f32 %v1081, %v1421
      %v1423 = vpop.f32.mrf.mxu0
      %v1424 = vpop.f32.mrf.mxu0
      %v1425 = vadd.f32 %v1084, %v1424
      %v1426 = vpop.f32.mrf.mxu0
      %1427 = vmatprep.mubr.bf16.mxu0 0
      %1428 = vmatmul.mubr.bf16.gmra.mxu0 %v1298
      %v1429 = vpop.f32.mrf.mxu0
      %v1430 = vadd.f32 %v1089, %v1429
      %v1431 = vpop.f32.mrf.mxu0
      %v1432 = vpop.f32.mrf.mxu0
      %v1433 = vadd.f32 %v1092, %v1432
      %v1434 = vpop.f32.mrf.mxu0
      %1435 = vmatprep.mubr.bf16.mxu0 0
      %1436 = vmatmul.mubr.bf16.gmra.mxu0 %v1301
      %v1437 = vpop.f32.mrf.mxu0
      %v1438 = vadd.f32 %v1097, %v1437
      %v1439 = vpop.f32.mrf.mxu0
      %v1440 = vpop.f32.mrf.mxu0
      %v1441 = vadd.f32 %v1100, %v1440
      %v1442 = vpop.f32.mrf.mxu0
      %1443 = vmatprep.mubr.bf16.mxu0 0
      %1444 = vmatmul.mubr.bf16.gmra.mxu0 %v1304
      %v1445 = vpop.f32.mrf.mxu0
      %v1446 = vadd.f32 %v1105, %v1445
      %v1447 = vpop.f32.mrf.mxu0
      %v1448 = vpop.f32.mrf.mxu0
      %v1449 = vadd.f32 %v1108, %v1448
      %v1450 = vpop.f32.mrf.mxu0
      %1451 = vmatprep.mubr.bf16.mxu0 0
      %1452 = vmatmul.mubr.bf16.gmra.mxu0 %v1307
      %v1453 = vpop.f32.mrf.mxu0
      %v1454 = vadd.f32 %v1113, %v1453
      %v1455 = vpop.f32.mrf.mxu0
      %v1456 = vpop.f32.mrf.mxu0
      %v1457 = vadd.f32 %v1116, %v1456
      %v1458 = vpop.f32.mrf.mxu0
      %1459 = vmatprep.mubr.bf16.mxu0 0
      %1460 = vmatmul.mubr.bf16.gmra.mxu0 %v1310
      %v1461 = vpop.f32.mrf.mxu0
      %v1462 = vadd.f32 %v1121, %v1461
      %v1463 = vpop.f32.mrf.mxu0
      %v1464 = vpop.f32.mrf.mxu0
      %v1465 = vadd.f32 %v1124, %v1464
      %v1466 = vpop.f32.mrf.mxu0
      %1467 = vmatprep.mubr.bf16.mxu0 0
      %1468 = vmatmul.mubr.bf16.gmra.mxu0 %v1313
      %v1469 = vpop.f32.mrf.mxu0
      %v1470 = vadd.f32 %v1129, %v1469
      %v1471 = vpop.f32.mrf.mxu0
      %v1472 = vpop.f32.mrf.mxu0
      %v1473 = vadd.f32 %v1132, %v1472
      %v1474 = vpop.f32.mrf.mxu0
      %1475 = vmatprep.mubr.bf16.mxu0 0
      %1476 = vmatmul.mubr.bf16.gmra.mxu0 %v1316
      %v1477 = vpop.f32.mrf.mxu0
      %v1478 = vadd.f32 %v1137, %v1477
      %v1479 = vpop.f32.mrf.mxu0
      %v1480 = vpop.f32.mrf.mxu0
      %v1481 = vadd.f32 %v1140, %v1480
      %v1482 = vpop.f32.mrf.mxu0
      %1483 = vmatprep.mubr.bf16.mxu0 0
      %1484 = vmatmul.mubr.bf16.gmra.mxu0 %v1319
      %v1485 = vpop.f32.mrf.mxu0
      %v1486 = vadd.f32 %v1145, %v1485
      %v1487 = vpop.f32.mrf.mxu0
      %v1488 = vpop.f32.mrf.mxu0
      %v1489 = vadd.f32 %v1148, %v1488
      %v1490 = vpop.f32.mrf.mxu0
      %1491 = vmatprep.mubr.bf16.mxu0 0
      %1492 = vmatmul.mubr.bf16.gmra.mxu0 %v1322
      %v1493 = vpop.f32.mrf.mxu0
      %v1494 = vadd.f32 %v1153, %v1493
      %v1495 = vpop.f32.mrf.mxu0
      %v1496 = vpop.f32.mrf.mxu0
      %v1497 = vadd.f32 %v1156, %v1496
      %v1498 = vpop.f32.mrf.mxu0
      %1499 = vmatprep.mubr.bf16.mxu0 0
      %1500 = vmatmul.mubr.bf16.gmra.mxu0 %v1325
      %v1501 = vpop.f32.mrf.mxu0
      %v1502 = vadd.f32 %v1161, %v1501
      %v1503 = vpop.f32.mrf.mxu0
      %v1504 = vpop.f32.mrf.mxu0
      %v1505 = vadd.f32 %v1164, %v1504
      %v1506 = vpop.f32.mrf.mxu0
      %1507 = vmatprep.mubr.bf16.mxu0 0
      %1508 = vmatmul.mubr.bf16.gmra.mxu0 %v1328
      %v1509 = vpop.f32.mrf.mxu0
      %v1510 = vadd.f32 %v1169, %v1509
      %v1511 = vpop.f32.mrf.mxu0
      %v1512 = vpop.f32.mrf.mxu0
      %v1513 = vadd.f32 %v1172, %v1512
      %v1514 = vpop.f32.mrf.mxu0
      %1515 = vmatprep.mubr.bf16.mxu0 0
      %1516 = vmatmul.mubr.bf16.gmra.mxu0 %v1331
      %v1517 = vpop.f32.mrf.mxu0
      %v1518 = vadd.f32 %v1177, %v1517
      %v1519 = vpop.f32.mrf.mxu0
      %v1520 = vpop.f32.mrf.mxu0
      %v1521 = vadd.f32 %v1180, %v1520
      %v1522 = vpop.f32.mrf.mxu0
      %1523 = vmatprep.mubr.bf16.mxu0 0
      %1524 = vmatmul.mubr.bf16.gmra.mxu0 %v1334
      %v1525 = vpop.f32.mrf.mxu0
      %v1526 = vadd.f32 %v1185, %v1525
      %v1527 = vpop.f32.mrf.mxu0
      %v1528 = vpop.f32.mrf.mxu0
      %v1529 = vadd.f32 %v1188, %v1528
      %v1530 = vpop.f32.mrf.mxu0
      %1531 = vmatprep.mubr.bf16.mxu0 0
      %1532 = vmatmul.mubr.bf16.gmra.mxu0 %v1337
      %v1533 = vpop.f32.mrf.mxu0
      %v1534 = vadd.f32 %v1193, %v1533
      %v1535 = vpop.f32.mrf.mxu0
      %v1536 = vpop.f32.mrf.mxu0
      %v1537 = vadd.f32 %v1196, %v1536
      %v1538 = vpop.f32.mrf.mxu0
      %1539 = vmatprep.mubr.bf16.mxu0 0
      %1540 = vmatmul.mubr.bf16.gmra.mxu0 %v1340
      %v1541 = vpop.f32.mrf.mxu0
      %v1542 = vadd.f32 %v1201, %v1541
      %v1543 = vpop.f32.mrf.mxu0
      %v1544 = vpop.f32.mrf.mxu0
      %v1545 = vadd.f32 %v1204, %v1544
      %v1546 = vpop.f32.mrf.mxu0
      %1547 = vmatprep.mubr.bf16.mxu0 0
      %1548 = vmatmul.mubr.bf16.gmra.mxu0 %v1343
      %v1549 = vpop.f32.mrf.mxu0
      %v1550 = vadd.f32 %v1209, %v1549
      %v1551 = vpop.f32.mrf.mxu0
      %v1552 = vpop.f32.mrf.mxu0
      %v1553 = vadd.f32 %v1212, %v1552
      %v1554 = vpop.f32.mrf.mxu0
      %1555 = vmatprep.mubr.bf16.mxu0 0
      %1556 = vmatmul.mubr.bf16.gmra.mxu0 %v1346
      %v1557 = vpop.f32.mrf.mxu0
      %v1558 = vadd.f32 %v1217, %v1557
      %v1559 = vpop.f32.mrf.mxu0
      %v1560 = vpop.f32.mrf.mxu0
      %v1561 = vadd.f32 %v1220, %v1560
      %v1562 = vpop.f32.mrf.mxu0
      %1563 = vmatprep.mubr.bf16.mxu0 0
      %1564 = vmatmul.mubr.bf16.gmra.mxu0 %v1349
      %v1565 = vpop.f32.mrf.mxu0
      %v1566 = vadd.f32 %v1225, %v1565
      %v1567 = vpop.f32.mrf.mxu0
      %v1568 = vpop.f32.mrf.mxu0
      %v1569 = vadd.f32 %v1228, %v1568
      %v1570 = vpop.f32.mrf.mxu0
      %1571 = vmatprep.mubr.bf16.mxu0 0
      %1572 = vmatmul.mubr.bf16.gmra.mxu0 %v1352
      %v1573 = vpop.f32.mrf.mxu0
      %v1574 = vadd.f32 %v1233, %v1573
      %v1575 = vpop.f32.mrf.mxu0
      %v1576 = vpop.f32.mrf.mxu0
      %v1577 = vadd.f32 %v1236, %v1576
      %v1578 = vpop.f32.mrf.mxu0
      %1579 = vmatprep.mubr.bf16.mxu0 0
      %1580 = vmatmul.mubr.bf16.gmra.mxu0 %v1355
      %v1581 = vpop.f32.mrf.mxu0
      %v1582 = vadd.f32 %v1241, %v1581
      %v1583 = vpop.f32.mrf.mxu0
      %v1584 = vpop.f32.mrf.mxu0
      %v1585 = vadd.f32 %v1244, %v1584
      %v1586 = vpop.f32.mrf.mxu0
      %1587 = vmatprep.mubr.bf16.mxu0 0
      %1588 = vmatmul.mubr.bf16.gmra.mxu0 %v1358
      %v1589 = vpop.f32.mrf.mxu0
      %v1590 = vadd.f32 %v1249, %v1589
      %v1591 = vpop.f32.mrf.mxu0
      %v1592 = vpop.f32.mrf.mxu0
      %v1593 = vpop.f32.mrf.mxu0
      %1594 = vdwg.mxu0
      %v1595 = vld [vmem:[#allocation2 + $0x18] sm:$0xf]
      %v1596 = vld [vmem:[#allocation2 + $0x1c] sm:$0xf]
      %v1597 = vld [vmem:[#allocation2 + $0x20] sm:$0xf]
      %v1598 = vld [vmem:[#allocation2 + $0x24] sm:$0xf]
      %v1599 = vld [vmem:[#allocation2 + $0x28] sm:$0xf]
      %v1600 = vld [vmem:[#allocation2 + $0x2c] sm:$0xf]
      %v1601 = vld [vmem:[#allocation2 + $0x30] sm:$0xf]
      %v1602 = vld [vmem:[#allocation2 + $0x34] sm:$0xf]
      %v1603 = vld [vmem:[#allocation2 + $0x38] sm:$0xf]
      %v1604 = vld [vmem:[#allocation2 + $0x3c] sm:$0xf]
      %v1605 = vld [vmem:[#allocation2 + $0x40] sm:$0xf]
      %v1606 = vld [vmem:[#allocation2 + $0x44] sm:$0xf]
      %v1607 = vld [vmem:[#allocation2 + $0x48] sm:$0xf]
      %v1608 = vld [vmem:[#allocation2 + $0x4c] sm:$0xf]
      %v1609 = vld [vmem:[#allocation2 + $0x50] sm:$0xf]
      %v1610 = vld [vmem:[#allocation2 + $0x54] sm:$0xf]
      %v1611 = vld [vmem:[#allocation2 + $0x58] sm:$0xf]
      %v1612 = vld [vmem:[#allocation2 + $0x5c] sm:$0xf]
      %v1613 = vld [vmem:[#allocation2 + $0x60] sm:$0xf]
      %v1614 = vld [vmem:[#allocation2 + $0x64] sm:$0xf]
      %v1615 = vld [vmem:[#allocation2 + $0x68] sm:$0xf]
      %v1616 = vld [vmem:[#allocation2 + $0x6c] sm:$0xf]
      %v1617 = vld [vmem:[#allocation2 + $0x70] sm:$0xf]
      %v1618 = vld [vmem:[#allocation2 + $0x74] sm:$0xf]
      %v1619 = vld [vmem:[#allocation2 + $0x78] sm:$0xf]
      %v1620 = vld [vmem:[#allocation2 + $0x7c] sm:$0xf]
      %v1621 = vld [vmem:[#allocation2 + $0x80] sm:$0xf]
      %v1622 = vld [vmem:[#allocation2 + $0x84] sm:$0xf]
      %v1623 = vld [vmem:[#allocation2 + $0x88] sm:$0xf]
      %v1624 = vld [vmem:[#allocation2 + $0x8c] sm:$0xf]
      %v1625 = vld [vmem:[#allocation2 + $0x90] sm:$0xf]
      %v1626 = vld [vmem:[#allocation2 + $0x94] sm:$0xf]
      %v1627 = vld [vmem:[#allocation2 + $0x98] sm:$0xf]
      %v1628 = vld [vmem:[#allocation2 + $0x9c] sm:$0xf]
      %v1629 = vld [vmem:[#allocation2 + $0xa0] sm:$0xf]
      %v1630 = vld [vmem:[#allocation2 + $0xa4] sm:$0xf]
      %v1631 = vld [vmem:[#allocation2 + $0xa8] sm:$0xf]
      %v1632 = vld [vmem:[#allocation2 + $0xac] sm:$0xf]
      %v1633 = vld [vmem:[#allocation2 + $0xb0] sm:$0xf]
      %v1634 = vld [vmem:[#allocation2 + $0xb4] sm:$0xf]
      %v1635 = vld [vmem:[#allocation2 + $0xb8] sm:$0xf]
      %v1636 = vld [vmem:[#allocation2 + $0xbc] sm:$0xf]
      %v1637 = vld [vmem:[#allocation2 + $0xc0] sm:$0xf]
      %v1638 = vld [vmem:[#allocation2 + $0xc4] sm:$0xf]
      %v1639 = vld [vmem:[#allocation2 + $0xc8] sm:$0xf]
      %v1640 = vld [vmem:[#allocation2 + $0xcc] sm:$0xf]
      %v1641 = vld [vmem:[#allocation2 + $0xd0] sm:$0xf]
      %v1642 = vld [vmem:[#allocation2 + $0xd4] sm:$0xf]
      %v1643 = vld [vmem:[#allocation2 + $0xd8] sm:$0xf]
      %s1644 = scalar_lea.vmem %s1, 4
      %v1645 = vld [vmem:[%s1644] sm:$0x3]
      %v1695 = vunpack.c.l.b16 %v1595
      %v1696 = vunpack.c.l.b16 %v1596
      %v1697 = vunpack.c.l.b16 %v1597
      %v1698 = vunpack.c.l.b16 %v1598
      %v1699 = vunpack.c.l.b16 %v1599
      %v1700 = vunpack.c.l.b16 %v1600
      %v1701 = vunpack.c.l.b16 %v1601
      %v1702 = vunpack.c.l.b16 %v1602
      %v1703 = vunpack.c.l.b16 %v1603
      %v1704 = vunpack.c.l.b16 %v1604
      %v1705 = vunpack.c.l.b16 %v1605
      %v1706 = vunpack.c.l.b16 %v1606
      %v1707 = vunpack.c.l.b16 %v1607
      %v1708 = vunpack.c.l.b16 %v1608
      %v1709 = vunpack.c.l.b16 %v1609
      %v1710 = vunpack.c.l.b16 %v1610
      %v1711 = vunpack.c.l.b16 %v1611
      %v1712 = vunpack.c.l.b16 %v1612
      %v1713 = vunpack.c.l.b16 %v1613
      %v1714 = vunpack.c.l.b16 %v1614
      %v1715 = vunpack.c.l.b16 %v1615
      %v1716 = vunpack.c.l.b16 %v1616
      %v1717 = vunpack.c.l.b16 %v1617
      %v1718 = vunpack.c.l.b16 %v1618
      %v1719 = vunpack.c.l.b16 %v1619
      %v1720 = vunpack.c.l.b16 %v1620
      %v1721 = vunpack.c.l.b16 %v1621
      %v1722 = vunpack.c.l.b16 %v1622
      %v1723 = vunpack.c.l.b16 %v1623
      %v1724 = vunpack.c.l.b16 %v1624
      %v1725 = vunpack.c.l.b16 %v1625
      %v1726 = vunpack.c.l.b16 %v1626
      %v1727 = vunpack.c.l.b16 %v1627
      %v1728 = vunpack.c.l.b16 %v1628
      %v1729 = vunpack.c.l.b16 %v1629
      %v1730 = vunpack.c.l.b16 %v1630
      %v1731 = vunpack.c.l.b16 %v1631
      %v1732 = vunpack.c.l.b16 %v1632
      %v1733 = vunpack.c.l.b16 %v1633
      %v1734 = vunpack.c.l.b16 %v1634
      %v1735 = vunpack.c.l.b16 %v1635
      %v1736 = vunpack.c.l.b16 %v1636
      %v1737 = vunpack.c.l.b16 %v1637
      %v1738 = vunpack.c.l.b16 %v1638
      %v1739 = vunpack.c.l.b16 %v1639
      %v1740 = vunpack.c.l.b16 %v1640
      %v1741 = vunpack.c.l.b16 %v1641
      %v1742 = vunpack.c.l.b16 %v1642
      %v1743 = vunpack.c.l.b16 %v1643
      %v1744 = vpack.c.b16 %v1696, %v1695
      %v1745 = vpack.c.b16 %v1698, %v1697
      %v1746 = vpack.c.b16 %v1700, %v1699
      %v1747 = vpack.c.b16 %v1702, %v1701
      %v1748 = vpack.c.b16 %v1704, %v1703
      %v1749 = vpack.c.b16 %v1706, %v1705
      %v1750 = vpack.c.b16 %v1708, %v1707
      %v1751 = vpack.c.b16 %v1710, %v1709
      %v1752 = vpack.c.b16 %v1712, %v1711
      %v1753 = vpack.c.b16 %v1714, %v1713
      %v1754 = vpack.c.b16 %v1716, %v1715
      %v1755 = vpack.c.b16 %v1718, %v1717
      %v1756 = vpack.c.b16 %v1720, %v1719
      %v1757 = vpack.c.b16 %v1722, %v1721
      %v1758 = vpack.c.b16 %v1724, %v1723
      %v1759 = vpack.c.b16 %v1726, %v1725
      %v1760 = vpack.c.b16 %v1728, %v1727
      %v1761 = vpack.c.b16 %v1730, %v1729
      %v1762 = vpack.c.b16 %v1732, %v1731
      %v1763 = vpack.c.b16 %v1734, %v1733
      %v1764 = vpack.c.b16 %v1736, %v1735
      %v1765 = vpack.c.b16 %v1738, %v1737
      %v1766 = vpack.c.b16 %v1740, %v1739
      %v1767 = vpack.c.b16 %v1742, %v1741
      %v1768 = vpack.c.b16 %v1743, %v1743
      %v1770 = vsel %vm942, %v1744, 0
      %v1773 = vsel %vm942, %v1745, 0
      %v1776 = vsel %vm942, %v1746, 0
      %v1779 = vsel %vm942, %v1747, 0
      %v1782 = vsel %vm942, %v1748, 0
      %v1785 = vsel %vm942, %v1749, 0
      %v1788 = vsel %vm942, %v1750, 0
      %v1791 = vsel %vm942, %v1751, 0
      %v1794 = vsel %vm942, %v1752, 0
      %v1797 = vsel %vm942, %v1753, 0
      %v1800 = vsel %vm942, %v1754, 0
      %v1803 = vsel %vm942, %v1755, 0
      %v1806 = vsel %vm942, %v1756, 0
      %v1809 = vsel %vm942, %v1757, 0
      %v1812 = vsel %vm942, %v1758, 0
      %v1815 = vsel %vm942, %v1759, 0
      %v1818 = vsel %vm942, %v1760, 0
      %v1821 = vsel %vm942, %v1761, 0
      %v1824 = vsel %vm942, %v1762, 0
      %v1827 = vsel %vm942, %v1763, 0
      %v1830 = vsel %vm942, %v1764, 0
      %v1833 = vsel %vm942, %v1765, 0
      %v1836 = vsel %vm942, %v1766, 0
      %v1839 = vsel %vm942, %v1767, 0
      %v1842 = vsel %vm942, %v1768, 0
      %v1845 = vsel %vm1018, %v1645, 0
      %1847 = vmatprep.subr.bf16.mxu0 0
      %1848 = vmatpush1.bf16.msra.mxu0 0
      %1849 = vmatprep.subr.bf16.mxu0 0
      %1850 = vmatpush1.bf16.msra.mxu0 0
      %1851 = vmatprep.subr.bf16.mxu0 0
      %1852 = vmatpush1.bf16.msra.mxu0 0
      %1853 = vmatprep.subr.bf16.mxu0 0
      %1854 = vmatpush1.bf16.msra.mxu0 0
      %1855 = vmatprep.subr.bf16.mxu0 0
      %1856 = vmatpush1.bf16.msra.mxu0 0
      %1857 = vmatprep.subr.bf16.mxu0 0
      %1858 = vmatpush1.bf16.msra.mxu0 0
      %1859 = vmatprep.subr.bf16.mxu0 0
      %1860 = vmatpush1.bf16.msra.mxu0 0
      %1861 = vmatprep.subr.bf16.mxu0 0
      %1862 = vmatpush1.bf16.msra.mxu0 %v1845
      %1863 = vmatprep.subr.bf16.mxu0 0
      %1864 = vmatpush2.bf16.msra.mxu0 0
      %1865 = vmatprep.subr.bf16.mxu0 0
      %1866 = vmatpush2.bf16.msra.mxu0 0
      %1867 = vmatprep.subr.bf16.mxu0 0
      %1868 = vmatpush2.bf16.msra.mxu0 0
      %1869 = vmatprep.subr.bf16.mxu0 0
      %1870 = vmatpush2.bf16.msra.mxu0 0
      %1871 = vmatprep.subr.bf16.mxu0 0
      %1872 = vmatpush2.bf16.msra.mxu0 0
      %1873 = vmatprep.subr.bf16.mxu0 0
      %1874 = vmatpush2.bf16.msra.mxu0 0
      %1875 = vmatprep.subr.bf16.mxu0 0
      %1876 = vmatpush2.bf16.msra.mxu0 0
      %1877 = vmatprep.subr.bf16.mxu0 0
      %1878 = vmatpush2.bf16.msra.mxu0 0
      %1879 = vmatprep.mubr.bf16.mxu0 0
      %1880 = vmatmul.mubr.bf16.gmra.mxu0 %v1770
      %v1881 = vpop.f32.mrf.mxu0
      %v1882 = vadd.f32 0.0, %v1881
      %v1883 = vpop.f32.mrf.mxu0
      %v1884 = vpop.f32.mrf.mxu0
      %v1885 = vadd.f32 0.0, %v1884
      %v1886 = vpop.f32.mrf.mxu0
      %1887 = vmatprep.mubr.bf16.mxu0 0
      %1888 = vmatmul.mubr.bf16.gmra.mxu0 %v1773
      %v1889 = vpop.f32.mrf.mxu0
      %v1890 = vadd.f32 0.0, %v1889
      %v1891 = vpop.f32.mrf.mxu0
      %v1892 = vpop.f32.mrf.mxu0
      %v1893 = vadd.f32 0.0, %v1892
      %v1894 = vpop.f32.mrf.mxu0
      %1895 = vmatprep.mubr.bf16.mxu0 0
      %1896 = vmatmul.mubr.bf16.gmra.mxu0 %v1776
      %v1897 = vpop.f32.mrf.mxu0
      %v1898 = vadd.f32 0.0, %v1897
      %v1899 = vpop.f32.mrf.mxu0
      %v1900 = vpop.f32.mrf.mxu0
      %v1901 = vadd.f32 0.0, %v1900
      %v1902 = vpop.f32.mrf.mxu0
      %1903 = vmatprep.mubr.bf16.mxu0 0
      %1904 = vmatmul.mubr.bf16.gmra.mxu0 %v1779
      %v1905 = vpop.f32.mrf.mxu0
      %v1906 = vadd.f32 0.0, %v1905
      %v1907 = vpop.f32.mrf.mxu0
      %v1908 = vpop.f32.mrf.mxu0
      %v1909 = vadd.f32 0.0, %v1908
      %v1910 = vpop.f32.mrf.mxu0
      %1911 = vmatprep.mubr.bf16.mxu0 0
      %1912 = vmatmul.mubr.bf16.gmra.mxu0 %v1782
      %v1913 = vpop.f32.mrf.mxu0
      %v1914 = vadd.f32 0.0, %v1913
      %v1915 = vpop.f32.mrf.mxu0
      %v1916 = vpop.f32.mrf.mxu0
      %v1917 = vadd.f32 0.0, %v1916
      %v1918 = vpop.f32.mrf.mxu0
      %1919 = vmatprep.mubr.bf16.mxu0 0
      %1920 = vmatmul.mubr.bf16.gmra.mxu0 %v1785
      %v1921 = vpop.f32.mrf.mxu0
      %v1922 = vadd.f32 0.0, %v1921
      %v1923 = vpop.f32.mrf.mxu0
      %v1924 = vpop.f32.mrf.mxu0
      %v1925 = vadd.f32 0.0, %v1924
      %v1926 = vpop.f32.mrf.mxu0
      %1927 = vmatprep.mubr.bf16.mxu0 0
      %1928 = vmatmul.mubr.bf16.gmra.mxu0 %v1788
      %v1929 = vpop.f32.mrf.mxu0
      %v1930 = vadd.f32 0.0, %v1929
      %v1931 = vpop.f32.mrf.mxu0
      %v1932 = vpop.f32.mrf.mxu0
      %v1933 = vadd.f32 0.0, %v1932
      %v1934 = vpop.f32.mrf.mxu0
      %1935 = vmatprep.mubr.bf16.mxu0 0
      %1936 = vmatmul.mubr.bf16.gmra.mxu0 %v1791
      %v1937 = vpop.f32.mrf.mxu0
      %v1938 = vadd.f32 0.0, %v1937
      %v1939 = vpop.f32.mrf.mxu0
      %v1940 = vpop.f32.mrf.mxu0
      %v1941 = vadd.f32 0.0, %v1940
      %v1942 = vpop.f32.mrf.mxu0
      %1943 = vmatprep.mubr.bf16.mxu0 0
      %1944 = vmatmul.mubr.bf16.gmra.mxu0 %v1794
      %v1945 = vpop.f32.mrf.mxu0
      %v1946 = vadd.f32 0.0, %v1945
      %v1947 = vpop.f32.mrf.mxu0
      %v1948 = vpop.f32.mrf.mxu0
      %v1949 = vadd.f32 0.0, %v1948
      %v1950 = vpop.f32.mrf.mxu0
      %1951 = vmatprep.mubr.bf16.mxu0 0
      %1952 = vmatmul.mubr.bf16.gmra.mxu0 %v1797
      %v1953 = vpop.f32.mrf.mxu0
      %v1954 = vadd.f32 0.0, %v1953
      %v1955 = vpop.f32.mrf.mxu0
      %v1956 = vpop.f32.mrf.mxu0
      %v1957 = vadd.f32 0.0, %v1956
      %v1958 = vpop.f32.mrf.mxu0
      %1959 = vmatprep.mubr.bf16.mxu0 0
      %1960 = vmatmul.mubr.bf16.gmra.mxu0 %v1800
      %v1961 = vpop.f32.mrf.mxu0
      %v1962 = vadd.f32 0.0, %v1961
      %v1963 = vpop.f32.mrf.mxu0
      %v1964 = vpop.f32.mrf.mxu0
      %v1965 = vadd.f32 0.0, %v1964
      %v1966 = vpop.f32.mrf.mxu0
      %1967 = vmatprep.mubr.bf16.mxu0 0
      %1968 = vmatmul.mubr.bf16.gmra.mxu0 %v1803
      %v1969 = vpop.f32.mrf.mxu0
      %v1970 = vadd.f32 0.0, %v1969
      %v1971 = vpop.f32.mrf.mxu0
      %v1972 = vpop.f32.mrf.mxu0
      %v1973 = vadd.f32 0.0, %v1972
      %v1974 = vpop.f32.mrf.mxu0
      %1975 = vmatprep.mubr.bf16.mxu0 0
      %1976 = vmatmul.mubr.bf16.gmra.mxu0 %v1806
      %v1977 = vpop.f32.mrf.mxu0
      %v1978 = vadd.f32 0.0, %v1977
      %v1979 = vpop.f32.mrf.mxu0
      %v1980 = vpop.f32.mrf.mxu0
      %v1981 = vadd.f32 0.0, %v1980
      %v1982 = vpop.f32.mrf.mxu0
      %1983 = vmatprep.mubr.bf16.mxu0 0
      %1984 = vmatmul.mubr.bf16.gmra.mxu0 %v1809
      %v1985 = vpop.f32.mrf.mxu0
      %v1986 = vadd.f32 0.0, %v1985
      %v1987 = vpop.f32.mrf.mxu0
      %v1988 = vpop.f32.mrf.mxu0
      %v1989 = vadd.f32 0.0, %v1988
      %v1990 = vpop.f32.mrf.mxu0
      %1991 = vmatprep.mubr.bf16.mxu0 0
      %1992 = vmatmul.mubr.bf16.gmra.mxu0 %v1812
      %v1993 = vpop.f32.mrf.mxu0
      %v1994 = vadd.f32 0.0, %v1993
      %v1995 = vpop.f32.mrf.mxu0
      %v1996 = vpop.f32.mrf.mxu0
      %v1997 = vadd.f32 0.0, %v1996
      %v1998 = vpop.f32.mrf.mxu0
      %1999 = vmatprep.mubr.bf16.mxu0 0
      %2000 = vmatmul.mubr.bf16.gmra.mxu0 %v1815
      %v2001 = vpop.f32.mrf.mxu0
      %v2002 = vadd.f32 0.0, %v2001
      %v2003 = vpop.f32.mrf.mxu0
      %v2004 = vpop.f32.mrf.mxu0
      %v2005 = vadd.f32 0.0, %v2004
      %v2006 = vpop.f32.mrf.mxu0
      %2007 = vmatprep.mubr.bf16.mxu0 0
      %2008 = vmatmul.mubr.bf16.gmra.mxu0 %v1818
      %v2009 = vpop.f32.mrf.mxu0
      %v2010 = vadd.f32 0.0, %v2009
      %v2011 = vpop.f32.mrf.mxu0
      %v2012 = vpop.f32.mrf.mxu0
      %v2013 = vadd.f32 0.0, %v2012
      %v2014 = vpop.f32.mrf.mxu0
      %2015 = vmatprep.mubr.bf16.mxu0 0
      %2016 = vmatmul.mubr.bf16.gmra.mxu0 %v1821
      %v2017 = vpop.f32.mrf.mxu0
      %v2018 = vadd.f32 0.0, %v2017
      %v2019 = vpop.f32.mrf.mxu0
      %v2020 = vpop.f32.mrf.mxu0
      %v2021 = vadd.f32 0.0, %v2020
      %v2022 = vpop.f32.mrf.mxu0
      %2023 = vmatprep.mubr.bf16.mxu0 0
      %2024 = vmatmul.mubr.bf16.gmra.mxu0 %v1824
      %v2025 = vpop.f32.mrf.mxu0
      %v2026 = vadd.f32 0.0, %v2025
      %v2027 = vpop.f32.mrf.mxu0
      %v2028 = vpop.f32.mrf.mxu0
      %v2029 = vadd.f32 0.0, %v2028
      %v2030 = vpop.f32.mrf.mxu0
      %2031 = vmatprep.mubr.bf16.mxu0 0
      %2032 = vmatmul.mubr.bf16.gmra.mxu0 %v1827
      %v2033 = vpop.f32.mrf.mxu0
      %v2034 = vadd.f32 0.0, %v2033
      %v2035 = vpop.f32.mrf.mxu0
      %v2036 = vpop.f32.mrf.mxu0
      %v2037 = vadd.f32 0.0, %v2036
      %v2038 = vpop.f32.mrf.mxu0
      %2039 = vmatprep.mubr.bf16.mxu0 0
      %2040 = vmatmul.mubr.bf16.gmra.mxu0 %v1830
      %v2041 = vpop.f32.mrf.mxu0
      %v2042 = vadd.f32 0.0, %v2041
      %v2043 = vpop.f32.mrf.mxu0
      %v2044 = vpop.f32.mrf.mxu0
      %v2045 = vadd.f32 0.0, %v2044
      %v2046 = vpop.f32.mrf.mxu0
      %2047 = vmatprep.mubr.bf16.mxu0 0
      %2048 = vmatmul.mubr.bf16.gmra.mxu0 %v1833
      %v2049 = vpop.f32.mrf.mxu0
      %v2050 = vadd.f32 0.0, %v2049
      %v2051 = vpop.f32.mrf.mxu0
      %v2052 = vpop.f32.mrf.mxu0
      %v2053 = vadd.f32 0.0, %v2052
      %v2054 = vpop.f32.mrf.mxu0
      %2055 = vmatprep.mubr.bf16.mxu0 0
      %2056 = vmatmul.mubr.bf16.gmra.mxu0 %v1836
      %v2057 = vpop.f32.mrf.mxu0
      %v2058 = vadd.f32 0.0, %v2057
      %v2059 = vpop.f32.mrf.mxu0
      %v2060 = vpop.f32.mrf.mxu0
      %v2061 = vadd.f32 0.0, %v2060
      %v2062 = vpop.f32.mrf.mxu0
      %2063 = vmatprep.mubr.bf16.mxu0 0
      %2064 = vmatmul.mubr.bf16.gmra.mxu0 %v1839
      %v2065 = vpop.f32.mrf.mxu0
      %v2066 = vadd.f32 0.0, %v2065
      %v2067 = vpop.f32.mrf.mxu0
      %v2068 = vpop.f32.mrf.mxu0
      %v2069 = vadd.f32 0.0, %v2068
      %v2070 = vpop.f32.mrf.mxu0
      %2071 = vmatprep.mubr.bf16.mxu0 0
      %2072 = vmatmul.mubr.bf16.gmra.mxu0 %v1842
      %v2073 = vpop.f32.mrf.mxu0
      %v2074 = vadd.f32 0.0, %v2073
      %v2075 = vpop.f32.mrf.mxu0
      %v2076 = vpop.f32.mrf.mxu0
      %v2077 = vpop.f32.mrf.mxu0
      %2078 = vdwg.mxu0
      %v2079 = vadd.f32 %v1398, %v1882
      %v2080 = vadd.f32 %v1401, %v1885
      %v2081 = vadd.f32 %v1406, %v1890
      %v2082 = vadd.f32 %v1409, %v1893
      %v2083 = vadd.f32 %v1414, %v1898
      %v2084 = vadd.f32 %v1417, %v1901
      %v2085 = vadd.f32 %v1422, %v1906
      %v2086 = vadd.f32 %v1425, %v1909
      %v2087 = vadd.f32 %v1430, %v1914
      %v2088 = vadd.f32 %v1433, %v1917
      %v2089 = vadd.f32 %v1438, %v1922
      %v2090 = vadd.f32 %v1441, %v1925
      %v2091 = vadd.f32 %v1446, %v1930
      %v2092 = vadd.f32 %v1449, %v1933
      %v2093 = vadd.f32 %v1454, %v1938
      %v2094 = vadd.f32 %v1457, %v1941
      %v2095 = vadd.f32 %v1462, %v1946
      %v2096 = vadd.f32 %v1465, %v1949
      %v2097 = vadd.f32 %v1470, %v1954
      %v2098 = vadd.f32 %v1473, %v1957
      %v2099 = vadd.f32 %v1478, %v1962
      %v2100 = vadd.f32 %v1481, %v1965
      %v2101 = vadd.f32 %v1486, %v1970
      %v2102 = vadd.f32 %v1489, %v1973
      %v2103 = vadd.f32 %v1494, %v1978
      %v2104 = vadd.f32 %v1497, %v1981
      %v2105 = vadd.f32 %v1502, %v1986
      %v2106 = vadd.f32 %v1505, %v1989
      %v2107 = vadd.f32 %v1510, %v1994
      %v2108 = vadd.f32 %v1513, %v1997
      %v2109 = vadd.f32 %v1518, %v2002
      %v2110 = vadd.f32 %v1521, %v2005
      %v2111 = vadd.f32 %v1526, %v2010
      %v2112 = vadd.f32 %v1529, %v2013
      %v2113 = vadd.f32 %v1534, %v2018
      %v2114 = vadd.f32 %v1537, %v2021
      %v2115 = vadd.f32 %v1542, %v2026
      %v2116 = vadd.f32 %v1545, %v2029
      %v2117 = vadd.f32 %v1550, %v2034
      %v2118 = vadd.f32 %v1553, %v2037
      %v2119 = vadd.f32 %v1558, %v2042
      %v2120 = vadd.f32 %v1561, %v2045
      %v2121 = vadd.f32 %v1566, %v2050
      %v2122 = vadd.f32 %v1569, %v2053
      %v2123 = vadd.f32 %v1574, %v2058
      %v2124 = vadd.f32 %v1577, %v2061
      %v2125 = vadd.f32 %v1582, %v2066
      %v2126 = vadd.f32 %v1585, %v2069
      %v2127 = vadd.f32 %v1590, %v2074
      %vm2177 = vcmask 1046528
      %v2178 = vrot.slane %v2079, 1
      %v2179 = vrot.slane %v2080, 1
      %v2180 = vsel %vm2177, %v2178, %v2179
      %v2181 = vrot.slane %v2081, 1
      %v2182 = vsel %vm2177, %v2179, %v2181
      %v2183 = vrot.slane %v2082, 1
      %v2184 = vsel %vm2177, %v2181, %v2183
      %v2185 = vrot.slane %v2083, 1
      %v2186 = vsel %vm2177, %v2183, %v2185
      %v2187 = vrot.slane %v2084, 1
      %v2188 = vsel %vm2177, %v2185, %v2187
      %v2189 = vrot.slane %v2085, 1
      %v2190 = vsel %vm2177, %v2187, %v2189
      %v2191 = vrot.slane %v2086, 1
      %v2192 = vsel %vm2177, %v2189, %v2191
      %v2193 = vrot.slane %v2087, 1
      %v2194 = vsel %vm2177, %v2191, %v2193
      %v2195 = vrot.slane %v2088, 1
      %v2196 = vsel %vm2177, %v2193, %v2195
      %v2197 = vrot.slane %v2089, 1
      %v2198 = vsel %vm2177, %v2195, %v2197
      %v2199 = vrot.slane %v2090, 1
      %v2200 = vsel %vm2177, %v2197, %v2199
      %v2201 = vrot.slane %v2091, 1
      %v2202 = vsel %vm2177, %v2199, %v2201
      %v2203 = vrot.slane %v2092, 1
      %v2204 = vsel %vm2177, %v2201, %v2203
      %v2205 = vrot.slane %v2093, 1
      %v2206 = vsel %vm2177, %v2203, %v2205
      %v2207 = vrot.slane %v2094, 1
      %v2208 = vsel %vm2177, %v2205, %v2207
      %v2209 = vrot.slane %v2095, 1
      %v2210 = vsel %vm2177, %v2207, %v2209
      %v2211 = vrot.slane %v2096, 1
      %v2212 = vsel %vm2177, %v2209, %v2211
      %v2213 = vrot.slane %v2097, 1
      %v2214 = vsel %vm2177, %v2211, %v2213
      %v2215 = vrot.slane %v2098, 1
      %v2216 = vsel %vm2177, %v2213, %v2215
      %v2217 = vrot.slane %v2099, 1
      %v2218 = vsel %vm2177, %v2215, %v2217
      %v2219 = vrot.slane %v2100, 1
      %v2220 = vsel %vm2177, %v2217, %v2219
      %v2221 = vrot.slane %v2101, 1
      %v2222 = vsel %vm2177, %v2219, %v2221
      %v2223 = vrot.slane %v2102, 1
      %v2224 = vsel %vm2177, %v2221, %v2223
      %v2225 = vrot.slane %v2103, 1
      %v2226 = vsel %vm2177, %v2223, %v2225
      %v2227 = vrot.slane %v2104, 1
      %v2228 = vsel %vm2177, %v2225, %v2227
      %v2229 = vrot.slane %v2105, 1
      %v2230 = vsel %vm2177, %v2227, %v2229
      %v2231 = vrot.slane %v2106, 1
      %v2232 = vsel %vm2177, %v2229, %v2231
      %v2233 = vrot.slane %v2107, 1
      %v2234 = vsel %vm2177, %v2231, %v2233
      %v2235 = vrot.slane %v2108, 1
      %v2236 = vsel %vm2177, %v2233, %v2235
      %v2237 = vrot.slane %v2109, 1
      %v2238 = vsel %vm2177, %v2235, %v2237
      %v2239 = vrot.slane %v2110, 1
      %v2240 = vsel %vm2177, %v2237, %v2239
      %v2241 = vrot.slane %v2111, 1
      %v2242 = vsel %vm2177, %v2239, %v2241
      %v2243 = vrot.slane %v2112, 1
      %v2244 = vsel %vm2177, %v2241, %v2243
      %v2245 = vrot.slane %v2113, 1
      %v2246 = vsel %vm2177, %v2243, %v2245
      %v2247 = vrot.slane %v2114, 1
      %v2248 = vsel %vm2177, %v2245, %v2247
      %v2249 = vrot.slane %v2115, 1
      %v2250 = vsel %vm2177, %v2247, %v2249
      %v2251 = vrot.slane %v2116, 1
      %v2252 = vsel %vm2177, %v2249, %v2251
      %v2253 = vrot.slane %v2117, 1
      %v2254 = vsel %vm2177, %v2251, %v2253
      %v2255 = vrot.slane %v2118, 1
      %v2256 = vsel %vm2177, %v2253, %v2255
      %v2257 = vrot.slane %v2119, 1
      %v2258 = vsel %vm2177, %v2255, %v2257
      %v2259 = vrot.slane %v2120, 1
      %v2260 = vsel %vm2177, %v2257, %v2259
      %v2261 = vrot.slane %v2121, 1
      %v2262 = vsel %vm2177, %v2259, %v2261
      %v2263 = vrot.slane %v2122, 1
      %v2264 = vsel %vm2177, %v2261, %v2263
      %v2265 = vrot.slane %v2123, 1
      %v2266 = vsel %vm2177, %v2263, %v2265
      %v2267 = vrot.slane %v2124, 1
      %v2268 = vsel %vm2177, %v2265, %v2267
      %v2269 = vrot.slane %v2125, 1
      %v2270 = vsel %vm2177, %v2267, %v2269
      %v2271 = vrot.slane %v2126, 1
      %v2272 = vsel %vm2177, %v2269, %v2271
      %v2273 = vrot.slane %v2127, 1
      %v2274 = vsel %vm2177, %v2271, %v2273
      %2275 = vrot.lane.b32.xlu0 %v2180, 124
      %v2276 = vpop.permute.xlu0 %2275
      %2277 = vrot.lane.b32.xlu0 %v2182, 124
      %v2278 = vpop.permute.xlu0 %2277
      %2279 = vrot.lane.b32.xlu0 %v2184, 124
      %v2280 = vpop.permute.xlu0 %2279
      %2281 = vrot.lane.b32.xlu0 %v2186, 124
      %v2282 = vpop.permute.xlu0 %2281
      %2283 = vrot.lane.b32.xlu0 %v2188, 124
      %v2284 = vpop.permute.xlu0 %2283
      %2285 = vrot.lane.b32.xlu0 %v2190, 124
      %v2286 = vpop.permute.xlu0 %2285
      %2287 = vrot.lane.b32.xlu0 %v2192, 124
      %v2288 = vpop.permute.xlu0 %2287
      %2289 = vrot.lane.b32.xlu0 %v2194, 124
      %v2290 = vpop.permute.xlu0 %2289
      %2291 = vrot.lane.b32.xlu0 %v2196, 124
      %v2292 = vpop.permute.xlu0 %2291
      %2293 = vrot.lane.b32.xlu0 %v2198, 124
      %v2294 = vpop.permute.xlu0 %2293
      %2295 = vrot.lane.b32.xlu0 %v2200, 124
      %v2296 = vpop.permute.xlu0 %2295
      %2297 = vrot.lane.b32.xlu0 %v2202, 124
      %v2298 = vpop.permute.xlu0 %2297
      %2299 = vrot.lane.b32.xlu0 %v2204, 124
      %v2300 = vpop.permute.xlu0 %2299
      %2301 = vrot.lane.b32.xlu0 %v2206, 124
      %v2302 = vpop.permute.xlu0 %2301
      %2303 = vrot.lane.b32.xlu0 %v2208, 124
      %v2304 = vpop.permute.xlu0 %2303
      %2305 = vrot.lane.b32.xlu0 %v2210, 124
      %v2306 = vpop.permute.xlu0 %2305
      %2307 = vrot.lane.b32.xlu0 %v2212, 124
      %v2308 = vpop.permute.xlu0 %2307
      %2309 = vrot.lane.b32.xlu0 %v2214, 124
      %v2310 = vpop.permute.xlu0 %2309
      %2311 = vrot.lane.b32.xlu0 %v2216, 124
      %v2312 = vpop.permute.xlu0 %2311
      %2313 = vrot.lane.b32.xlu0 %v2218, 124
      %v2314 = vpop.permute.xlu0 %2313
      %2315 = vrot.lane.b32.xlu0 %v2220, 124
      %v2316 = vpop.permute.xlu0 %2315
      %2317 = vrot.lane.b32.xlu0 %v2222, 124
      %v2318 = vpop.permute.xlu0 %2317
      %2319 = vrot.lane.b32.xlu0 %v2224, 124
      %v2320 = vpop.permute.xlu0 %2319
      %2321 = vrot.lane.b32.xlu0 %v2226, 124
      %v2322 = vpop.permute.xlu0 %2321
      %2323 = vrot.lane.b32.xlu0 %v2228, 124
      %v2324 = vpop.permute.xlu0 %2323
      %2325 = vrot.lane.b32.xlu0 %v2230, 124
      %v2326 = vpop.permute.xlu0 %2325
      %2327 = vrot.lane.b32.xlu0 %v2232, 124
      %v2328 = vpop.permute.xlu0 %2327
      %2329 = vrot.lane.b32.xlu0 %v2234, 124
      %v2330 = vpop.permute.xlu0 %2329
      %2331 = vrot.lane.b32.xlu0 %v2236, 124
      %v2332 = vpop.permute.xlu0 %2331
      %2333 = vrot.lane.b32.xlu0 %v2238, 124
      %v2334 = vpop.permute.xlu0 %2333
      %2335 = vrot.lane.b32.xlu0 %v2240, 124
      %v2336 = vpop.permute.xlu0 %2335
      %2337 = vrot.lane.b32.xlu0 %v2242, 124
      %v2338 = vpop.permute.xlu0 %2337
      %2339 = vrot.lane.b32.xlu0 %v2244, 124
      %v2340 = vpop.permute.xlu0 %2339
      %2341 = vrot.lane.b32.xlu0 %v2246, 124
      %v2342 = vpop.permute.xlu0 %2341
      %2343 = vrot.lane.b32.xlu0 %v2248, 124
      %v2344 = vpop.permute.xlu0 %2343
      %2345 = vrot.lane.b32.xlu0 %v2250, 124
      %v2346 = vpop.permute.xlu0 %2345
      %2347 = vrot.lane.b32.xlu0 %v2252, 124
      %v2348 = vpop.permute.xlu0 %2347
      %2349 = vrot.lane.b32.xlu0 %v2254, 124
      %v2350 = vpop.permute.xlu0 %2349
      %2351 = vrot.lane.b32.xlu0 %v2256, 124
      %v2352 = vpop.permute.xlu0 %2351
      %2353 = vrot.lane.b32.xlu0 %v2258, 124
      %v2354 = vpop.permute.xlu0 %2353
      %2355 = vrot.lane.b32.xlu0 %v2260, 124
      %v2356 = vpop.permute.xlu0 %2355
      %2357 = vrot.lane.b32.xlu0 %v2262, 124
      %v2358 = vpop.permute.xlu0 %2357
      %2359 = vrot.lane.b32.xlu0 %v2264, 124
      %v2360 = vpop.permute.xlu0 %2359
      %2361 = vrot.lane.b32.xlu0 %v2266, 124
      %v2362 = vpop.permute.xlu0 %2361
      %2363 = vrot.lane.b32.xlu0 %v2268, 124
      %v2364 = vpop.permute.xlu0 %2363
      %2365 = vrot.lane.b32.xlu0 %v2270, 124
      %v2366 = vpop.permute.xlu0 %2365
      %2367 = vrot.lane.b32.xlu0 %v2272, 124
      %v2368 = vpop.permute.xlu0 %2367
      %2369 = vrot.lane.b32.xlu0 %v2274, 124
      %v2370 = vpop.permute.xlu0 %2369
      %v2419 = vadd.f32 %v2079, %v2276
      %v2420 = vadd.f32 %v2080, %v2278
      %v2421 = vadd.f32 %v2081, %v2280
      %v2422 = vadd.f32 %v2082, %v2282
      %v2423 = vadd.f32 %v2083, %v2284
      %v2424 = vadd.f32 %v2084, %v2286
      %v2425 = vadd.f32 %v2085, %v2288
      %v2426 = vadd.f32 %v2086, %v2290
      %v2427 = vadd.f32 %v2087, %v2292
      %v2428 = vadd.f32 %v2088, %v2294
      %v2429 = vadd.f32 %v2089, %v2296
      %v2430 = vadd.f32 %v2090, %v2298
      %v2431 = vadd.f32 %v2091, %v2300
      %v2432 = vadd.f32 %v2092, %v2302
      %v2433 = vadd.f32 %v2093, %v2304
      %v2434 = vadd.f32 %v2094, %v2306
      %v2435 = vadd.f32 %v2095, %v2308
      %v2436 = vadd.f32 %v2096, %v2310
      %v2437 = vadd.f32 %v2097, %v2312
      %v2438 = vadd.f32 %v2098, %v2314
      %v2439 = vadd.f32 %v2099, %v2316
      %v2440 = vadd.f32 %v2100, %v2318
      %v2441 = vadd.f32 %v2101, %v2320
      %v2442 = vadd.f32 %v2102, %v2322
      %v2443 = vadd.f32 %v2103, %v2324
      %v2444 = vadd.f32 %v2104, %v2326
      %v2445 = vadd.f32 %v2105, %v2328
      %v2446 = vadd.f32 %v2106, %v2330
      %v2447 = vadd.f32 %v2107, %v2332
      %v2448 = vadd.f32 %v2108, %v2334
      %v2449 = vadd.f32 %v2109, %v2336
      %v2450 = vadd.f32 %v2110, %v2338
      %v2451 = vadd.f32 %v2111, %v2340
      %v2452 = vadd.f32 %v2112, %v2342
      %v2453 = vadd.f32 %v2113, %v2344
      %v2454 = vadd.f32 %v2114, %v2346
      %v2455 = vadd.f32 %v2115, %v2348
      %v2456 = vadd.f32 %v2116, %v2350
      %v2457 = vadd.f32 %v2117, %v2352
      %v2458 = vadd.f32 %v2118, %v2354
      %v2459 = vadd.f32 %v2119, %v2356
      %v2460 = vadd.f32 %v2120, %v2358
      %v2461 = vadd.f32 %v2121, %v2360
      %v2462 = vadd.f32 %v2122, %v2362
      %v2463 = vadd.f32 %v2123, %v2364
      %v2464 = vadd.f32 %v2124, %v2366
      %v2465 = vadd.f32 %v2125, %v2368
      %v2466 = vadd.f32 %v2126, %v2370
      %vm2467 = vcmask 1045504
      %v2468 = vrot.slane %v2079, 2
      %v2469 = vrot.slane %v2080, 2
      %v2470 = vsel %vm2467, %v2468, %v2469
      %v2471 = vrot.slane %v2081, 2
      %v2472 = vsel %vm2467, %v2469, %v2471
      %v2473 = vrot.slane %v2082, 2
      %v2474 = vsel %vm2467, %v2471, %v2473
      %v2475 = vrot.slane %v2083, 2
      %v2476 = vsel %vm2467, %v2473, %v2475
      %v2477 = vrot.slane %v2084, 2
      %v2478 = vsel %vm2467, %v2475, %v2477
      %v2479 = vrot.slane %v2085, 2
      %v2480 = vsel %vm2467, %v2477, %v2479
      %v2481 = vrot.slane %v2086, 2
      %v2482 = vsel %vm2467, %v2479, %v2481
      %v2483 = vrot.slane %v2087, 2
      %v2484 = vsel %vm2467, %v2481, %v2483
      %v2485 = vrot.slane %v2088, 2
      %v2486 = vsel %vm2467, %v2483, %v2485
      %v2487 = vrot.slane %v2089, 2
      %v2488 = vsel %vm2467, %v2485, %v2487
      %v2489 = vrot.slane %v2090, 2
      %v2490 = vsel %vm2467, %v2487, %v2489
      %v2491 = vrot.slane %v2091, 2
      %v2492 = vsel %vm2467, %v2489, %v2491
      %v2493 = vrot.slane %v2092, 2
      %v2494 = vsel %vm2467, %v2491, %v2493
      %v2495 = vrot.slane %v2093, 2
      %v2496 = vsel %vm2467, %v2493, %v2495
      %v2497 = vrot.slane %v2094, 2
      %v2498 = vsel %vm2467, %v2495, %v2497
      %v2499 = vrot.slane %v2095, 2
      %v2500 = vsel %vm2467, %v2497, %v2499
      %v2501 = vrot.slane %v2096, 2
      %v2502 = vsel %vm2467, %v2499, %v2501
      %v2503 = vrot.slane %v2097, 2
      %v2504 = vsel %vm2467, %v2501, %v2503
      %v2505 = vrot.slane %v2098, 2
      %v2506 = vsel %vm2467, %v2503, %v2505
      %v2507 = vrot.slane %v2099, 2
      %v2508 = vsel %vm2467, %v2505, %v2507
      %v2509 = vrot.slane %v2100, 2
      %v2510 = vsel %vm2467, %v2507, %v2509
      %v2511 = vrot.slane %v2101, 2
      %v2512 = vsel %vm2467, %v2509, %v2511
      %v2513 = vrot.slane %v2102, 2
      %v2514 = vsel %vm2467, %v2511, %v2513
      %v2515 = vrot.slane %v2103, 2
      %v2516 = vsel %vm2467, %v2513, %v2515
      %v2517 = vrot.slane %v2104, 2
      %v2518 = vsel %vm2467, %v2515, %v2517
      %v2519 = vrot.slane %v2105, 2
      %v2520 = vsel %vm2467, %v2517, %v2519
      %v2521 = vrot.slane %v2106, 2
      %v2522 = vsel %vm2467, %v2519, %v2521
      %v2523 = vrot.slane %v2107, 2
      %v2524 = vsel %vm2467, %v2521, %v2523
      %v2525 = vrot.slane %v2108, 2
      %v2526 = vsel %vm2467, %v2523, %v2525
      %v2527 = vrot.slane %v2109, 2
      %v2528 = vsel %vm2467, %v2525, %v2527
      %v2529 = vrot.slane %v2110, 2
      %v2530 = vsel %vm2467, %v2527, %v2529
      %v2531 = vrot.slane %v2111, 2
      %v2532 = vsel %vm2467, %v2529, %v2531
      %v2533 = vrot.slane %v2112, 2
      %v2534 = vsel %vm2467, %v2531, %v2533
      %v2535 = vrot.slane %v2113, 2
      %v2536 = vsel %vm2467, %v2533, %v2535
      %v2537 = vrot.slane %v2114, 2
      %v2538 = vsel %vm2467, %v2535, %v2537
      %v2539 = vrot.slane %v2115, 2
      %v2540 = vsel %vm2467, %v2537, %v2539
      %v2541 = vrot.slane %v2116, 2
      %v2542 = vsel %vm2467, %v2539, %v2541
      %v2543 = vrot.slane %v2117, 2
      %v2544 = vsel %vm2467, %v2541, %v2543
      %v2545 = vrot.slane %v2118, 2
      %v2546 = vsel %vm2467, %v2543, %v2545
      %v2547 = vrot.slane %v2119, 2
      %v2548 = vsel %vm2467, %v2545, %v2547
      %v2549 = vrot.slane %v2120, 2
      %v2550 = vsel %vm2467, %v2547, %v2549
      %v2551 = vrot.slane %v2121, 2
      %v2552 = vsel %vm2467, %v2549, %v2551
      %v2553 = vrot.slane %v2122, 2
      %v2554 = vsel %vm2467, %v2551, %v2553
      %v2555 = vrot.slane %v2123, 2
      %v2556 = vsel %vm2467, %v2553, %v2555
      %v2557 = vrot.slane %v2124, 2
      %v2558 = vsel %vm2467, %v2555, %v2557
      %v2559 = vrot.slane %v2125, 2
      %v2560 = vsel %vm2467, %v2557, %v2559
      %v2561 = vrot.slane %v2126, 2
      %v2562 = vsel %vm2467, %v2559, %v2561
      %v2563 = vrot.slane %v2127, 2
      %v2564 = vsel %vm2467, %v2561, %v2563
      %2565 = vrot.lane.b32.xlu0 %v2470, 120
      %v2566 = vpop.permute.xlu0 %2565
      %2567 = vrot.lane.b32.xlu0 %v2472, 120
      %v2568 = vpop.permute.xlu0 %2567
      %2569 = vrot.lane.b32.xlu0 %v2474, 120
      %v2570 = vpop.permute.xlu0 %2569
      %2571 = vrot.lane.b32.xlu0 %v2476, 120
      %v2572 = vpop.permute.xlu0 %2571
      %2573 = vrot.lane.b32.xlu0 %v2478, 120
      %v2574 = vpop.permute.xlu0 %2573
      %2575 = vrot.lane.b32.xlu0 %v2480, 120
      %v2576 = vpop.permute.xlu0 %2575
      %2577 = vrot.lane.b32.xlu0 %v2482, 120
      %v2578 = vpop.permute.xlu0 %2577
      %2579 = vrot.lane.b32.xlu0 %v2484, 120
      %v2580 = vpop.permute.xlu0 %2579
      %2581 = vrot.lane.b32.xlu0 %v2486, 120
      %v2582 = vpop.permute.xlu0 %2581
      %2583 = vrot.lane.b32.xlu0 %v2488, 120
      %v2584 = vpop.permute.xlu0 %2583
      %2585 = vrot.lane.b32.xlu0 %v2490, 120
      %v2586 = vpop.permute.xlu0 %2585
      %2587 = vrot.lane.b32.xlu0 %v2492, 120
      %v2588 = vpop.permute.xlu0 %2587
      %2589 = vrot.lane.b32.xlu0 %v2494, 120
      %v2590 = vpop.permute.xlu0 %2589
      %2591 = vrot.lane.b32.xlu0 %v2496, 120
      %v2592 = vpop.permute.xlu0 %2591
      %2593 = vrot.lane.b32.xlu0 %v2498, 120
      %v2594 = vpop.permute.xlu0 %2593
      %2595 = vrot.lane.b32.xlu0 %v2500, 120
      %v2596 = vpop.permute.xlu0 %2595
      %2597 = vrot.lane.b32.xlu0 %v2502, 120
      %v2598 = vpop.permute.xlu0 %2597
      %2599 = vrot.lane.b32.xlu0 %v2504, 120
      %v2600 = vpop.permute.xlu0 %2599
      %2601 = vrot.lane.b32.xlu0 %v2506, 120
      %v2602 = vpop.permute.xlu0 %2601
      %2603 = vrot.lane.b32.xlu0 %v2508, 120
      %v2604 = vpop.permute.xlu0 %2603
      %2605 = vrot.lane.b32.xlu0 %v2510, 120
      %v2606 = vpop.permute.xlu0 %2605
      %2607 = vrot.lane.b32.xlu0 %v2512, 120
      %v2608 = vpop.permute.xlu0 %2607
      %2609 = vrot.lane.b32.xlu0 %v2514, 120
      %v2610 = vpop.permute.xlu0 %2609
      %2611 = vrot.lane.b32.xlu0 %v2516, 120
      %v2612 = vpop.permute.xlu0 %2611
      %2613 = vrot.lane.b32.xlu0 %v2518, 120
      %v2614 = vpop.permute.xlu0 %2613
      %2615 = vrot.lane.b32.xlu0 %v2520, 120
      %v2616 = vpop.permute.xlu0 %2615
      %2617 = vrot.lane.b32.xlu0 %v2522, 120
      %v2618 = vpop.permute.xlu0 %2617
      %2619 = vrot.lane.b32.xlu0 %v2524, 120
      %v2620 = vpop.permute.xlu0 %2619
      %2621 = vrot.lane.b32.xlu0 %v2526, 120
      %v2622 = vpop.permute.xlu0 %2621
      %2623 = vrot.lane.b32.xlu0 %v2528, 120
      %v2624 = vpop.permute.xlu0 %2623
      %2625 = vrot.lane.b32.xlu0 %v2530, 120
      %v2626 = vpop.permute.xlu0 %2625
      %2627 = vrot.lane.b32.xlu0 %v2532, 120
      %v2628 = vpop.permute.xlu0 %2627
      %2629 = vrot.lane.b32.xlu0 %v2534, 120
      %v2630 = vpop.permute.xlu0 %2629
      %2631 = vrot.lane.b32.xlu0 %v2536, 120
      %v2632 = vpop.permute.xlu0 %2631
      %2633 = vrot.lane.b32.xlu0 %v2538, 120
      %v2634 = vpop.permute.xlu0 %2633
      %2635 = vrot.lane.b32.xlu0 %v2540, 120
      %v2636 = vpop.permute.xlu0 %2635
      %2637 = vrot.lane.b32.xlu0 %v2542, 120
      %v2638 = vpop.permute.xlu0 %2637
      %2639 = vrot.lane.b32.xlu0 %v2544, 120
      %v2640 = vpop.permute.xlu0 %2639
      %2641 = vrot.lane.b32.xlu0 %v2546, 120
      %v2642 = vpop.permute.xlu0 %2641
      %2643 = vrot.lane.b32.xlu0 %v2548, 120
      %v2644 = vpop.permute.xlu0 %2643
      %2645 = vrot.lane.b32.xlu0 %v2550, 120
      %v2646 = vpop.permute.xlu0 %2645
      %2647 = vrot.lane.b32.xlu0 %v2552, 120
      %v2648 = vpop.permute.xlu0 %2647
      %2649 = vrot.lane.b32.xlu0 %v2554, 120
      %v2650 = vpop.permute.xlu0 %2649
      %2651 = vrot.lane.b32.xlu0 %v2556, 120
      %v2652 = vpop.permute.xlu0 %2651
      %2653 = vrot.lane.b32.xlu0 %v2558, 120
      %v2654 = vpop.permute.xlu0 %2653
      %2655 = vrot.lane.b32.xlu0 %v2560, 120
      %v2656 = vpop.permute.xlu0 %2655
      %2657 = vrot.lane.b32.xlu0 %v2562, 120
      %v2658 = vpop.permute.xlu0 %2657
      %2659 = vrot.lane.b32.xlu0 %v2564, 120
      %v2660 = vpop.permute.xlu0 %2659
      %v2709 = vadd.f32 %v2419, %v2566
      %v2710 = vadd.f32 %v2420, %v2568
      %v2711 = vadd.f32 %v2421, %v2570
      %v2712 = vadd.f32 %v2422, %v2572
      %v2713 = vadd.f32 %v2423, %v2574
      %v2714 = vadd.f32 %v2424, %v2576
      %v2715 = vadd.f32 %v2425, %v2578
      %v2716 = vadd.f32 %v2426, %v2580
      %v2717 = vadd.f32 %v2427, %v2582
      %v2718 = vadd.f32 %v2428, %v2584
      %v2719 = vadd.f32 %v2429, %v2586
      %v2720 = vadd.f32 %v2430, %v2588
      %v2721 = vadd.f32 %v2431, %v2590
      %v2722 = vadd.f32 %v2432, %v2592
      %v2723 = vadd.f32 %v2433, %v2594
      %v2724 = vadd.f32 %v2434, %v2596
      %v2725 = vadd.f32 %v2435, %v2598
      %v2726 = vadd.f32 %v2436, %v2600
      %v2727 = vadd.f32 %v2437, %v2602
      %v2728 = vadd.f32 %v2438, %v2604
      %v2729 = vadd.f32 %v2439, %v2606
      %v2730 = vadd.f32 %v2440, %v2608
      %v2731 = vadd.f32 %v2441, %v2610
      %v2732 = vadd.f32 %v2442, %v2612
      %v2733 = vadd.f32 %v2443, %v2614
      %v2734 = vadd.f32 %v2444, %v2616
      %v2735 = vadd.f32 %v2445, %v2618
      %v2736 = vadd.f32 %v2446, %v2620
      %v2737 = vadd.f32 %v2447, %v2622
      %v2738 = vadd.f32 %v2448, %v2624
      %v2739 = vadd.f32 %v2449, %v2626
      %v2740 = vadd.f32 %v2450, %v2628
      %v2741 = vadd.f32 %v2451, %v2630
      %v2742 = vadd.f32 %v2452, %v2632
      %v2743 = vadd.f32 %v2453, %v2634
      %v2744 = vadd.f32 %v2454, %v2636
      %v2745 = vadd.f32 %v2455, %v2638
      %v2746 = vadd.f32 %v2456, %v2640
      %v2747 = vadd.f32 %v2457, %v2642
      %v2748 = vadd.f32 %v2458, %v2644
      %v2749 = vadd.f32 %v2459, %v2646
      %v2750 = vadd.f32 %v2460, %v2648
      %v2751 = vadd.f32 %v2461, %v2650
      %v2752 = vadd.f32 %v2462, %v2652
      %v2753 = vadd.f32 %v2463, %v2654
      %v2754 = vadd.f32 %v2464, %v2656
      %v2755 = vadd.f32 %v2465, %v2658
      %v2756 = vadd.f32 %v2466, %v2660
      %v2757 = vld [vmem:[%s3] sm:$0x1]
      %v2759 = vlaneseq
      %v2760 = vshrl.u32 %v2759, 7
      %v2761 = vsub.s32 0, %v2760
      %v2762 = vrot.slane %v2757, %v2761
      %v2764 = vadd.f32 %v2709, %v2762
      %v2765 = vadd.f32 %v2710, %v2762
      %v2766 = vadd.f32 %v2711, %v2762
      %v2767 = vadd.f32 %v2712, %v2762
      %v2768 = vadd.f32 %v2713, %v2762
      %v2769 = vadd.f32 %v2714, %v2762
      %v2770 = vadd.f32 %v2715, %v2762
      %v2771 = vadd.f32 %v2716, %v2762
      %v2772 = vadd.f32 %v2717, %v2762
      %v2773 = vadd.f32 %v2718, %v2762
      %v2774 = vadd.f32 %v2719, %v2762
      %v2775 = vadd.f32 %v2720, %v2762
      %v2776 = vadd.f32 %v2721, %v2762
      %v2777 = vadd.f32 %v2722, %v2762
      %v2778 = vadd.f32 %v2723, %v2762
      %v2779 = vadd.f32 %v2724, %v2762
      %v2780 = vadd.f32 %v2725, %v2762
      %v2781 = vadd.f32 %v2726, %v2762
      %v2782 = vadd.f32 %v2727, %v2762
      %v2783 = vadd.f32 %v2728, %v2762
      %v2784 = vadd.f32 %v2729, %v2762
      %v2785 = vadd.f32 %v2730, %v2762
      %v2786 = vadd.f32 %v2731, %v2762
      %v2787 = vadd.f32 %v2732, %v2762
      %v2788 = vadd.f32 %v2733, %v2762
      %v2789 = vadd.f32 %v2734, %v2762
      %v2790 = vadd.f32 %v2735, %v2762
      %v2791 = vadd.f32 %v2736, %v2762
      %v2792 = vadd.f32 %v2737, %v2762
      %v2793 = vadd.f32 %v2738, %v2762
      %v2794 = vadd.f32 %v2739, %v2762
      %v2795 = vadd.f32 %v2740, %v2762
      %v2796 = vadd.f32 %v2741, %v2762
      %v2797 = vadd.f32 %v2742, %v2762
      %v2798 = vadd.f32 %v2743, %v2762
      %v2799 = vadd.f32 %v2744, %v2762
      %v2800 = vadd.f32 %v2745, %v2762
      %v2801 = vadd.f32 %v2746, %v2762
      %v2802 = vadd.f32 %v2747, %v2762
      %v2803 = vadd.f32 %v2748, %v2762
      %v2804 = vadd.f32 %v2749, %v2762
      %v2805 = vadd.f32 %v2750, %v2762
      %v2806 = vadd.f32 %v2751, %v2762
      %v2807 = vadd.f32 %v2752, %v2762
      %v2808 = vadd.f32 %v2753, %v2762
      %v2809 = vadd.f32 %v2754, %v2762
      %v2810 = vadd.f32 %v2755, %v2762
      %v2811 = vadd.f32 %v2756, %v2762
      %v2812 = vmax.f32 %v2764, 0.0
      %v2813 = vmax.f32 %v2765, 0.0
      %v2814 = vmax.f32 %v2766, 0.0
      %v2815 = vmax.f32 %v2767, 0.0
      %v2816 = vmax.f32 %v2768, 0.0
      %v2817 = vmax.f32 %v2769, 0.0
      %v2818 = vmax.f32 %v2770, 0.0
      %v2819 = vmax.f32 %v2771, 0.0
      %v2820 = vmax.f32 %v2772, 0.0
      %v2821 = vmax.f32 %v2773, 0.0
      %v2822 = vmax.f32 %v2774, 0.0
      %v2823 = vmax.f32 %v2775, 0.0
      %v2824 = vmax.f32 %v2776, 0.0
      %v2825 = vmax.f32 %v2777, 0.0
      %v2826 = vmax.f32 %v2778, 0.0
      %v2827 = vmax.f32 %v2779, 0.0
      %v2828 = vmax.f32 %v2780, 0.0
      %v2829 = vmax.f32 %v2781, 0.0
      %v2830 = vmax.f32 %v2782, 0.0
      %v2831 = vmax.f32 %v2783, 0.0
      %v2832 = vmax.f32 %v2784, 0.0
      %v2833 = vmax.f32 %v2785, 0.0
      %v2834 = vmax.f32 %v2786, 0.0
      %v2835 = vmax.f32 %v2787, 0.0
      %v2836 = vmax.f32 %v2788, 0.0
      %v2837 = vmax.f32 %v2789, 0.0
      %v2838 = vmax.f32 %v2790, 0.0
      %v2839 = vmax.f32 %v2791, 0.0
      %v2840 = vmax.f32 %v2792, 0.0
      %v2841 = vmax.f32 %v2793, 0.0
      %v2842 = vmax.f32 %v2794, 0.0
      %v2843 = vmax.f32 %v2795, 0.0
      %v2844 = vmax.f32 %v2796, 0.0
      %v2845 = vmax.f32 %v2797, 0.0
      %v2846 = vmax.f32 %v2798, 0.0
      %v2847 = vmax.f32 %v2799, 0.0
      %v2848 = vmax.f32 %v2800, 0.0
      %v2849 = vmax.f32 %v2801, 0.0
      %v2850 = vmax.f32 %v2802, 0.0
      %v2851 = vmax.f32 %v2803, 0.0
      %v2852 = vmax.f32 %v2804, 0.0
      %v2853 = vmax.f32 %v2805, 0.0
      %v2854 = vmax.f32 %v2806, 0.0
      %v2855 = vmax.f32 %v2807, 0.0
      %v2856 = vmax.f32 %v2808, 0.0
      %v2857 = vmax.f32 %v2809, 0.0
      %v2858 = vmax.f32 %v2810, 0.0
      %v2859 = vmax.f32 %v2811, 0.0
      %v2860 = vlaneseq
      %v2861 = vshrl.u32 %v2860, 7
      %v2862 = vadd.s32 %v2861, 8
      %v2863 = vadd.s32 %v2861, 16
      %v2864 = vadd.s32 %v2861, 24
      %v2865 = vadd.s32 %v2861, 32
      %v2866 = vadd.s32 %v2861, 40
      %v2867 = vadd.s32 %v2861, 48
      %v2868 = vadd.s32 %v2861, 56
      %v2869 = vadd.s32 %v2861, 64
      %v2870 = vadd.s32 %v2861, 72
      %v2871 = vadd.s32 %v2861, 80
      %v2872 = vadd.s32 %v2861, 88
      %v2873 = vadd.s32 %v2861, 96
      %v2874 = vadd.s32 %v2861, 104
      %v2875 = vadd.s32 %v2861, 112
      %v2876 = vadd.s32 %v2861, 120
      %v2877 = vadd.s32 %v2861, 128
      %v2878 = vadd.s32 %v2861, 136
      %v2879 = vadd.s32 %v2861, 144
      %v2880 = vadd.s32 %v2861, 152
      %v2881 = vadd.s32 %v2861, 160
      %v2882 = vadd.s32 %v2861, 168
      %v2883 = vadd.s32 %v2861, 176
      %v2884 = vadd.s32 %v2861, 184
      %v2885 = vadd.s32 %v2861, 192
      %v2886 = vadd.s32 %v2861, 200
      %v2887 = vadd.s32 %v2861, 208
      %v2888 = vadd.s32 %v2861, 216
      %v2889 = vadd.s32 %v2861, 224
      %v2890 = vadd.s32 %v2861, 232
      %v2891 = vadd.s32 %v2861, 240
      %v2892 = vadd.s32 %v2861, 248
      %v2893 = vadd.s32 %v2861, 256
      %v2894 = vadd.s32 %v2861, 264
      %v2895 = vadd.s32 %v2861, 272
      %v2896 = vadd.s32 %v2861, 280
      %v2897 = vadd.s32 %v2861, 288
      %v2898 = vadd.s32 %v2861, 296
      %v2899 = vadd.s32 %v2861, 304
      %v2900 = vadd.s32 %v2861, 312
      %v2901 = vadd.s32 %v2861, 320
      %v2902 = vadd.s32 %v2861, 328
      %v2903 = vadd.s32 %v2861, 336
      %v2904 = vadd.s32 %v2861, 344
      %v2905 = vadd.s32 %v2861, 352
      %v2906 = vadd.s32 %v2861, 360
      %v2907 = vadd.s32 %v2861, 368
      %v2908 = vadd.s32 %v2861, 376
      %vm2909 = vcmp.lt.s32.totalorder %v2861, 0
      %v2910 = vsub.s32 0, %v2861
      %v2911 = vsel %vm2909, %v2910, %v2861
      %v2912 = vmul.u32.u64.compose %v2911, 2863311531
      %v2913 = vextract.low.u32 %v2912
      %v2914 = vextract.high.u32 %v2912
      %v2915 = vshrl.u32 %v2914, 4
      %v2916 = vmul.u32 %v2915, 24
      %v2917 = vsub.s32 %v2911, %v2916
      %v2918 = vsub.s32 0, %v2917
      %v2919 = vsel %vm2909, %v2918, %v2917
      %vm2920 = vcmp.lt.s32.totalorder %v2862, 0
      %v2921 = vsub.s32 0, %v2862
      %v2922 = vsel %vm2920, %v2921, %v2862
      %v2923 = vmul.u32.u64.compose %v2922, 2863311531
      %v2924 = vextract.low.u32 %v2923
      %v2925 = vextract.high.u32 %v2923
      %v2926 = vshrl.u32 %v2925, 4
      %v2927 = vmul.u32 %v2926, 24
      %v2928 = vsub.s32 %v2922, %v2927
      %v2929 = vsub.s32 0, %v2928
      %v2930 = vsel %vm2920, %v2929, %v2928
      %vm2931 = vcmp.lt.s32.totalorder %v2863, 0
      %v2932 = vsub.s32 0, %v2863
      %v2933 = vsel %vm2931, %v2932, %v2863
      %v2934 = vmul.u32.u64.compose %v2933, 2863311531
      %v2935 = vextract.low.u32 %v2934
      %v2936 = vextract.high.u32 %v2934
      %v2937 = vshrl.u32 %v2936, 4
      %v2938 = vmul.u32 %v2937, 24
      %v2939 = vsub.s32 %v2933, %v2938
      %v2940 = vsub.s32 0, %v2939
      %v2941 = vsel %vm2931, %v2940, %v2939
      %vm2942 = vcmp.lt.s32.totalorder %v2864, 0
      %v2943 = vsub.s32 0, %v2864
      %v2944 = vsel %vm2942, %v2943, %v2864
      %v2945 = vmul.u32.u64.compose %v2944, 2863311531
      %v2946 = vextract.low.u32 %v2945
      %v2947 = vextract.high.u32 %v2945
      %v2948 = vshrl.u32 %v2947, 4
      %v2949 = vmul.u32 %v2948, 24
      %v2950 = vsub.s32 %v2944, %v2949
      %v2951 = vsub.s32 0, %v2950
      %v2952 = vsel %vm2942, %v2951, %v2950
      %vm2953 = vcmp.lt.s32.totalorder %v2865, 0
      %v2954 = vsub.s32 0, %v2865
      %v2955 = vsel %vm2953, %v2954, %v2865
      %v2956 = vmul.u32.u64.compose %v2955, 2863311531
      %v2957 = vextract.low.u32 %v2956
      %v2958 = vextract.high.u32 %v2956
      %v2959 = vshrl.u32 %v2958, 4
      %v2960 = vmul.u32 %v2959, 24
      %v2961 = vsub.s32 %v2955, %v2960
      %v2962 = vsub.s32 0, %v2961
      %v2963 = vsel %vm2953, %v2962, %v2961
      %vm2964 = vcmp.lt.s32.totalorder %v2866, 0
      %v2965 = vsub.s32 0, %v2866
      %v2966 = vsel %vm2964, %v2965, %v2866
      %v2967 = vmul.u32.u64.compose %v2966, 2863311531
      %v2968 = vextract.low.u32 %v2967
      %v2969 = vextract.high.u32 %v2967
      %v2970 = vshrl.u32 %v2969, 4
      %v2971 = vmul.u32 %v2970, 24
      %v2972 = vsub.s32 %v2966, %v2971
      %v2973 = vsub.s32 0, %v2972
      %v2974 = vsel %vm2964, %v2973, %v2972
      %vm2975 = vcmp.lt.s32.totalorder %v2867, 0
      %v2976 = vsub.s32 0, %v2867
      %v2977 = vsel %vm2975, %v2976, %v2867
      %v2978 = vmul.u32.u64.compose %v2977, 2863311531
      %v2979 = vextract.low.u32 %v2978
      %v2980 = vextract.high.u32 %v2978
      %v2981 = vshrl.u32 %v2980, 4
      %v2982 = vmul.u32 %v2981, 24
      %v2983 = vsub.s32 %v2977, %v2982
      %v2984 = vsub.s32 0, %v2983
      %v2985 = vsel %vm2975, %v2984, %v2983
      %vm2986 = vcmp.lt.s32.totalorder %v2868, 0
      %v2987 = vsub.s32 0, %v2868
      %v2988 = vsel %vm2986, %v2987, %v2868
      %v2989 = vmul.u32.u64.compose %v2988, 2863311531
      %v2990 = vextract.low.u32 %v2989
      %v2991 = vextract.high.u32 %v2989
      %v2992 = vshrl.u32 %v2991, 4
      %v2993 = vmul.u32 %v2992, 24
      %v2994 = vsub.s32 %v2988, %v2993
      %v2995 = vsub.s32 0, %v2994
      %v2996 = vsel %vm2986, %v2995, %v2994
      %vm2997 = vcmp.lt.s32.totalorder %v2869, 0
      %v2998 = vsub.s32 0, %v2869
      %v2999 = vsel %vm2997, %v2998, %v2869
      %v3000 = vmul.u32.u64.compose %v2999, 2863311531
      %v3001 = vextract.low.u32 %v3000
      %v3002 = vextract.high.u32 %v3000
      %v3003 = vshrl.u32 %v3002, 4
      %v3004 = vmul.u32 %v3003, 24
      %v3005 = vsub.s32 %v2999, %v3004
      %v3006 = vsub.s32 0, %v3005
      %v3007 = vsel %vm2997, %v3006, %v3005
      %vm3008 = vcmp.lt.s32.totalorder %v2870, 0
      %v3009 = vsub.s32 0, %v2870
      %v3010 = vsel %vm3008, %v3009, %v2870
      %v3011 = vmul.u32.u64.compose %v3010, 2863311531
      %v3012 = vextract.low.u32 %v3011
      %v3013 = vextract.high.u32 %v3011
      %v3014 = vshrl.u32 %v3013, 4
      %v3015 = vmul.u32 %v3014, 24
      %v3016 = vsub.s32 %v3010, %v3015
      %v3017 = vsub.s32 0, %v3016
      %v3018 = vsel %vm3008, %v3017, %v3016
      %vm3019 = vcmp.lt.s32.totalorder %v2871, 0
      %v3020 = vsub.s32 0, %v2871
      %v3021 = vsel %vm3019, %v3020, %v2871
      %v3022 = vmul.u32.u64.compose %v3021, 2863311531
      %v3023 = vextract.low.u32 %v3022
      %v3024 = vextract.high.u32 %v3022
      %v3025 = vshrl.u32 %v3024, 4
      %v3026 = vmul.u32 %v3025, 24
      %v3027 = vsub.s32 %v3021, %v3026
      %v3028 = vsub.s32 0, %v3027
      %v3029 = vsel %vm3019, %v3028, %v3027
      %vm3030 = vcmp.lt.s32.totalorder %v2872, 0
      %v3031 = vsub.s32 0, %v2872
      %v3032 = vsel %vm3030, %v3031, %v2872
      %v3033 = vmul.u32.u64.compose %v3032, 2863311531
      %v3034 = vextract.low.u32 %v3033
      %v3035 = vextract.high.u32 %v3033
      %v3036 = vshrl.u32 %v3035, 4
      %v3037 = vmul.u32 %v3036, 24
      %v3038 = vsub.s32 %v3032, %v3037
      %v3039 = vsub.s32 0, %v3038
      %v3040 = vsel %vm3030, %v3039, %v3038
      %vm3041 = vcmp.lt.s32.totalorder %v2873, 0
      %v3042 = vsub.s32 0, %v2873
      %v3043 = vsel %vm3041, %v3042, %v2873
      %v3044 = vmul.u32.u64.compose %v3043, 2863311531
      %v3045 = vextract.low.u32 %v3044
      %v3046 = vextract.high.u32 %v3044
      %v3047 = vshrl.u32 %v3046, 4
      %v3048 = vmul.u32 %v3047, 24
      %v3049 = vsub.s32 %v3043, %v3048
      %v3050 = vsub.s32 0, %v3049
      %v3051 = vsel %vm3041, %v3050, %v3049
      %vm3052 = vcmp.lt.s32.totalorder %v2874, 0
      %v3053 = vsub.s32 0, %v2874
      %v3054 = vsel %vm3052, %v3053, %v2874
      %v3055 = vmul.u32.u64.compose %v3054, 2863311531
      %v3056 = vextract.low.u32 %v3055
      %v3057 = vextract.high.u32 %v3055
      %v3058 = vshrl.u32 %v3057, 4
      %v3059 = vmul.u32 %v3058, 24
      %v3060 = vsub.s32 %v3054, %v3059
      %v3061 = vsub.s32 0, %v3060
      %v3062 = vsel %vm3052, %v3061, %v3060
      %vm3063 = vcmp.lt.s32.totalorder %v2875, 0
      %v3064 = vsub.s32 0, %v2875
      %v3065 = vsel %vm3063, %v3064, %v2875
      %v3066 = vmul.u32.u64.compose %v3065, 2863311531
      %v3067 = vextract.low.u32 %v3066
      %v3068 = vextract.high.u32 %v3066
      %v3069 = vshrl.u32 %v3068, 4
      %v3070 = vmul.u32 %v3069, 24
      %v3071 = vsub.s32 %v3065, %v3070
      %v3072 = vsub.s32 0, %v3071
      %v3073 = vsel %vm3063, %v3072, %v3071
      %vm3074 = vcmp.lt.s32.totalorder %v2876, 0
      %v3075 = vsub.s32 0, %v2876
      %v3076 = vsel %vm3074, %v3075, %v2876
      %v3077 = vmul.u32.u64.compose %v3076, 2863311531
      %v3078 = vextract.low.u32 %v3077
      %v3079 = vextract.high.u32 %v3077
      %v3080 = vshrl.u32 %v3079, 4
      %v3081 = vmul.u32 %v3080, 24
      %v3082 = vsub.s32 %v3076, %v3081
      %v3083 = vsub.s32 0, %v3082
      %v3084 = vsel %vm3074, %v3083, %v3082
      %vm3085 = vcmp.lt.s32.totalorder %v2877, 0
      %v3086 = vsub.s32 0, %v2877
      %v3087 = vsel %vm3085, %v3086, %v2877
      %v3088 = vmul.u32.u64.compose %v3087, 2863311531
      %v3089 = vextract.low.u32 %v3088
      %v3090 = vextract.high.u32 %v3088
      %v3091 = vshrl.u32 %v3090, 4
      %v3092 = vmul.u32 %v3091, 24
      %v3093 = vsub.s32 %v3087, %v3092
      %v3094 = vsub.s32 0, %v3093
      %v3095 = vsel %vm3085, %v3094, %v3093
      %vm3096 = vcmp.lt.s32.totalorder %v2878, 0
      %v3097 = vsub.s32 0, %v2878
      %v3098 = vsel %vm3096, %v3097, %v2878
      %v3099 = vmul.u32.u64.compose %v3098, 2863311531
      %v3100 = vextract.low.u32 %v3099
      %v3101 = vextract.high.u32 %v3099
      %v3102 = vshrl.u32 %v3101, 4
      %v3103 = vmul.u32 %v3102, 24
      %v3104 = vsub.s32 %v3098, %v3103
      %v3105 = vsub.s32 0, %v3104
      %v3106 = vsel %vm3096, %v3105, %v3104
      %vm3107 = vcmp.lt.s32.totalorder %v2879, 0
      %v3108 = vsub.s32 0, %v2879
      %v3109 = vsel %vm3107, %v3108, %v2879
      %v3110 = vmul.u32.u64.compose %v3109, 2863311531
      %v3111 = vextract.low.u32 %v3110
      %v3112 = vextract.high.u32 %v3110
      %v3113 = vshrl.u32 %v3112, 4
      %v3114 = vmul.u32 %v3113, 24
      %v3115 = vsub.s32 %v3109, %v3114
      %v3116 = vsub.s32 0, %v3115
      %v3117 = vsel %vm3107, %v3116, %v3115
      %vm3118 = vcmp.lt.s32.totalorder %v2880, 0
      %v3119 = vsub.s32 0, %v2880
      %v3120 = vsel %vm3118, %v3119, %v2880
      %v3121 = vmul.u32.u64.compose %v3120, 2863311531
      %v3122 = vextract.low.u32 %v3121
      %v3123 = vextract.high.u32 %v3121
      %v3124 = vshrl.u32 %v3123, 4
      %v3125 = vmul.u32 %v3124, 24
      %v3126 = vsub.s32 %v3120, %v3125
      %v3127 = vsub.s32 0, %v3126
      %v3128 = vsel %vm3118, %v3127, %v3126
      %vm3129 = vcmp.lt.s32.totalorder %v2881, 0
      %v3130 = vsub.s32 0, %v2881
      %v3131 = vsel %vm3129, %v3130, %v2881
      %v3132 = vmul.u32.u64.compose %v3131, 2863311531
      %v3133 = vextract.low.u32 %v3132
      %v3134 = vextract.high.u32 %v3132
      %v3135 = vshrl.u32 %v3134, 4
      %v3136 = vmul.u32 %v3135, 24
      %v3137 = vsub.s32 %v3131, %v3136
      %v3138 = vsub.s32 0, %v3137
      %v3139 = vsel %vm3129, %v3138, %v3137
      %vm3140 = vcmp.lt.s32.totalorder %v2882, 0
      %v3141 = vsub.s32 0, %v2882
      %v3142 = vsel %vm3140, %v3141, %v2882
      %v3143 = vmul.u32.u64.compose %v3142, 2863311531
      %v3144 = vextract.low.u32 %v3143
      %v3145 = vextract.high.u32 %v3143
      %v3146 = vshrl.u32 %v3145, 4
      %v3147 = vmul.u32 %v3146, 24
      %v3148 = vsub.s32 %v3142, %v3147
      %v3149 = vsub.s32 0, %v3148
      %v3150 = vsel %vm3140, %v3149, %v3148
      %vm3151 = vcmp.lt.s32.totalorder %v2883, 0
      %v3152 = vsub.s32 0, %v2883
      %v3153 = vsel %vm3151, %v3152, %v2883
      %v3154 = vmul.u32.u64.compose %v3153, 2863311531
      %v3155 = vextract.low.u32 %v3154
      %v3156 = vextract.high.u32 %v3154
      %v3157 = vshrl.u32 %v3156, 4
      %v3158 = vmul.u32 %v3157, 24
      %v3159 = vsub.s32 %v3153, %v3158
      %v3160 = vsub.s32 0, %v3159
      %v3161 = vsel %vm3151, %v3160, %v3159
      %vm3162 = vcmp.lt.s32.totalorder %v2884, 0
      %v3163 = vsub.s32 0, %v2884
      %v3164 = vsel %vm3162, %v3163, %v2884
      %v3165 = vmul.u32.u64.compose %v3164, 2863311531
      %v3166 = vextract.low.u32 %v3165
      %v3167 = vextract.high.u32 %v3165
      %v3168 = vshrl.u32 %v3167, 4
      %v3169 = vmul.u32 %v3168, 24
      %v3170 = vsub.s32 %v3164, %v3169
      %v3171 = vsub.s32 0, %v3170
      %v3172 = vsel %vm3162, %v3171, %v3170
      %vm3173 = vcmp.lt.s32.totalorder %v2885, 0
      %v3174 = vsub.s32 0, %v2885
      %v3175 = vsel %vm3173, %v3174, %v2885
      %v3176 = vmul.u32.u64.compose %v3175, 2863311531
      %v3177 = vextract.low.u32 %v3176
      %v3178 = vextract.high.u32 %v3176
      %v3179 = vshrl.u32 %v3178, 4
      %v3180 = vmul.u32 %v3179, 24
      %v3181 = vsub.s32 %v3175, %v3180
      %v3182 = vsub.s32 0, %v3181
      %v3183 = vsel %vm3173, %v3182, %v3181
      %vm3184 = vcmp.lt.s32.totalorder %v2886, 0
      %v3185 = vsub.s32 0, %v2886
      %v3186 = vsel %vm3184, %v3185, %v2886
      %v3187 = vmul.u32.u64.compose %v3186, 2863311531
      %v3188 = vextract.low.u32 %v3187
      %v3189 = vextract.high.u32 %v3187
      %v3190 = vshrl.u32 %v3189, 4
      %v3191 = vmul.u32 %v3190, 24
      %v3192 = vsub.s32 %v3186, %v3191
      %v3193 = vsub.s32 0, %v3192
      %v3194 = vsel %vm3184, %v3193, %v3192
      %vm3195 = vcmp.lt.s32.totalorder %v2887, 0
      %v3196 = vsub.s32 0, %v2887
      %v3197 = vsel %vm3195, %v3196, %v2887
      %v3198 = vmul.u32.u64.compose %v3197, 2863311531
      %v3199 = vextract.low.u32 %v3198
      %v3200 = vextract.high.u32 %v3198
      %v3201 = vshrl.u32 %v3200, 4
      %v3202 = vmul.u32 %v3201, 24
      %v3203 = vsub.s32 %v3197, %v3202
      %v3204 = vsub.s32 0, %v3203
      %v3205 = vsel %vm3195, %v3204, %v3203
      %vm3206 = vcmp.lt.s32.totalorder %v2888, 0
      %v3207 = vsub.s32 0, %v2888
      %v3208 = vsel %vm3206, %v3207, %v2888
      %v3209 = vmul.u32.u64.compose %v3208, 2863311531
      %v3210 = vextract.low.u32 %v3209
      %v3211 = vextract.high.u32 %v3209
      %v3212 = vshrl.u32 %v3211, 4
      %v3213 = vmul.u32 %v3212, 24
      %v3214 = vsub.s32 %v3208, %v3213
      %v3215 = vsub.s32 0, %v3214
      %v3216 = vsel %vm3206, %v3215, %v3214
      %vm3217 = vcmp.lt.s32.totalorder %v2889, 0
      %v3218 = vsub.s32 0, %v2889
      %v3219 = vsel %vm3217, %v3218, %v2889
      %v3220 = vmul.u32.u64.compose %v3219, 2863311531
      %v3221 = vextract.low.u32 %v3220
      %v3222 = vextract.high.u32 %v3220
      %v3223 = vshrl.u32 %v3222, 4
      %v3224 = vmul.u32 %v3223, 24
      %v3225 = vsub.s32 %v3219, %v3224
      %v3226 = vsub.s32 0, %v3225
      %v3227 = vsel %vm3217, %v3226, %v3225
      %vm3228 = vcmp.lt.s32.totalorder %v2890, 0
      %v3229 = vsub.s32 0, %v2890
      %v3230 = vsel %vm3228, %v3229, %v2890
      %v3231 = vmul.u32.u64.compose %v3230, 2863311531
      %v3232 = vextract.low.u32 %v3231
      %v3233 = vextract.high.u32 %v3231
      %v3234 = vshrl.u32 %v3233, 4
      %v3235 = vmul.u32 %v3234, 24
      %v3236 = vsub.s32 %v3230, %v3235
      %v3237 = vsub.s32 0, %v3236
      %v3238 = vsel %vm3228, %v3237, %v3236
      %vm3239 = vcmp.lt.s32.totalorder %v2891, 0
      %v3240 = vsub.s32 0, %v2891
      %v3241 = vsel %vm3239, %v3240, %v2891
      %v3242 = vmul.u32.u64.compose %v3241, 2863311531
      %v3243 = vextract.low.u32 %v3242
      %v3244 = vextract.high.u32 %v3242
      %v3245 = vshrl.u32 %v3244, 4
      %v3246 = vmul.u32 %v3245, 24
      %v3247 = vsub.s32 %v3241, %v3246
      %v3248 = vsub.s32 0, %v3247
      %v3249 = vsel %vm3239, %v3248, %v3247
      %vm3250 = vcmp.lt.s32.totalorder %v2892, 0
      %v3251 = vsub.s32 0, %v2892
      %v3252 = vsel %vm3250, %v3251, %v2892
      %v3253 = vmul.u32.u64.compose %v3252, 2863311531
      %v3254 = vextract.low.u32 %v3253
      %v3255 = vextract.high.u32 %v3253
      %v3256 = vshrl.u32 %v3255, 4
      %v3257 = vmul.u32 %v3256, 24
      %v3258 = vsub.s32 %v3252, %v3257
      %v3259 = vsub.s32 0, %v3258
      %v3260 = vsel %vm3250, %v3259, %v3258
      %vm3261 = vcmp.lt.s32.totalorder %v2893, 0
      %v3262 = vsub.s32 0, %v2893
      %v3263 = vsel %vm3261, %v3262, %v2893
      %v3264 = vmul.u32.u64.compose %v3263, 2863311531
      %v3265 = vextract.low.u32 %v3264
      %v3266 = vextract.high.u32 %v3264
      %v3267 = vshrl.u32 %v3266, 4
      %v3268 = vmul.u32 %v3267, 24
      %v3269 = vsub.s32 %v3263, %v3268
      %v3270 = vsub.s32 0, %v3269
      %v3271 = vsel %vm3261, %v3270, %v3269
      %vm3272 = vcmp.lt.s32.totalorder %v2894, 0
      %v3273 = vsub.s32 0, %v2894
      %v3274 = vsel %vm3272, %v3273, %v2894
      %v3275 = vmul.u32.u64.compose %v3274, 2863311531
      %v3276 = vextract.low.u32 %v3275
      %v3277 = vextract.high.u32 %v3275
      %v3278 = vshrl.u32 %v3277, 4
      %v3279 = vmul.u32 %v3278, 24
      %v3280 = vsub.s32 %v3274, %v3279
      %v3281 = vsub.s32 0, %v3280
      %v3282 = vsel %vm3272, %v3281, %v3280
      %vm3283 = vcmp.lt.s32.totalorder %v2895, 0
      %v3284 = vsub.s32 0, %v2895
      %v3285 = vsel %vm3283, %v3284, %v2895
      %v3286 = vmul.u32.u64.compose %v3285, 2863311531
      %v3287 = vextract.low.u32 %v3286
      %v3288 = vextract.high.u32 %v3286
      %v3289 = vshrl.u32 %v3288, 4
      %v3290 = vmul.u32 %v3289, 24
      %v3291 = vsub.s32 %v3285, %v3290
      %v3292 = vsub.s32 0, %v3291
      %v3293 = vsel %vm3283, %v3292, %v3291
      %vm3294 = vcmp.lt.s32.totalorder %v2896, 0
      %v3295 = vsub.s32 0, %v2896
      %v3296 = vsel %vm3294, %v3295, %v2896
      %v3297 = vmul.u32.u64.compose %v3296, 2863311531
      %v3298 = vextract.low.u32 %v3297
      %v3299 = vextract.high.u32 %v3297
      %v3300 = vshrl.u32 %v3299, 4
      %v3301 = vmul.u32 %v3300, 24
      %v3302 = vsub.s32 %v3296, %v3301
      %v3303 = vsub.s32 0, %v3302
      %v3304 = vsel %vm3294, %v3303, %v3302
      %vm3305 = vcmp.lt.s32.totalorder %v2897, 0
      %v3306 = vsub.s32 0, %v2897
      %v3307 = vsel %vm3305, %v3306, %v2897
      %v3308 = vmul.u32.u64.compose %v3307, 2863311531
      %v3309 = vextract.low.u32 %v3308
      %v3310 = vextract.high.u32 %v3308
      %v3311 = vshrl.u32 %v3310, 4
      %v3312 = vmul.u32 %v3311, 24
      %v3313 = vsub.s32 %v3307, %v3312
      %v3314 = vsub.s32 0, %v3313
      %v3315 = vsel %vm3305, %v3314, %v3313
      %vm3316 = vcmp.lt.s32.totalorder %v2898, 0
      %v3317 = vsub.s32 0, %v2898
      %v3318 = vsel %vm3316, %v3317, %v2898
      %v3319 = vmul.u32.u64.compose %v3318, 2863311531
      %v3320 = vextract.low.u32 %v3319
      %v3321 = vextract.high.u32 %v3319
      %v3322 = vshrl.u32 %v3321, 4
      %v3323 = vmul.u32 %v3322, 24
      %v3324 = vsub.s32 %v3318, %v3323
      %v3325 = vsub.s32 0, %v3324
      %v3326 = vsel %vm3316, %v3325, %v3324
      %vm3327 = vcmp.lt.s32.totalorder %v2899, 0
      %v3328 = vsub.s32 0, %v2899
      %v3329 = vsel %vm3327, %v3328, %v2899
      %v3330 = vmul.u32.u64.compose %v3329, 2863311531
      %v3331 = vextract.low.u32 %v3330
      %v3332 = vextract.high.u32 %v3330
      %v3333 = vshrl.u32 %v3332, 4
      %v3334 = vmul.u32 %v3333, 24
      %v3335 = vsub.s32 %v3329, %v3334
      %v3336 = vsub.s32 0, %v3335
      %v3337 = vsel %vm3327, %v3336, %v3335
      %vm3338 = vcmp.lt.s32.totalorder %v2900, 0
      %v3339 = vsub.s32 0, %v2900
      %v3340 = vsel %vm3338, %v3339, %v2900
      %v3341 = vmul.u32.u64.compose %v3340, 2863311531
      %v3342 = vextract.low.u32 %v3341
      %v3343 = vextract.high.u32 %v3341
      %v3344 = vshrl.u32 %v3343, 4
      %v3345 = vmul.u32 %v3344, 24
      %v3346 = vsub.s32 %v3340, %v3345
      %v3347 = vsub.s32 0, %v3346
      %v3348 = vsel %vm3338, %v3347, %v3346
      %vm3349 = vcmp.lt.s32.totalorder %v2901, 0
      %v3350 = vsub.s32 0, %v2901
      %v3351 = vsel %vm3349, %v3350, %v2901
      %v3352 = vmul.u32.u64.compose %v3351, 2863311531
      %v3353 = vextract.low.u32 %v3352
      %v3354 = vextract.high.u32 %v3352
      %v3355 = vshrl.u32 %v3354, 4
      %v3356 = vmul.u32 %v3355, 24
      %v3357 = vsub.s32 %v3351, %v3356
      %v3358 = vsub.s32 0, %v3357
      %v3359 = vsel %vm3349, %v3358, %v3357
      %vm3360 = vcmp.lt.s32.totalorder %v2902, 0
      %v3361 = vsub.s32 0, %v2902
      %v3362 = vsel %vm3360, %v3361, %v2902
      %v3363 = vmul.u32.u64.compose %v3362, 2863311531
      %v3364 = vextract.low.u32 %v3363
      %v3365 = vextract.high.u32 %v3363
      %v3366 = vshrl.u32 %v3365, 4
      %v3367 = vmul.u32 %v3366, 24
      %v3368 = vsub.s32 %v3362, %v3367
      %v3369 = vsub.s32 0, %v3368
      %v3370 = vsel %vm3360, %v3369, %v3368
      %vm3371 = vcmp.lt.s32.totalorder %v2903, 0
      %v3372 = vsub.s32 0, %v2903
      %v3373 = vsel %vm3371, %v3372, %v2903
      %v3374 = vmul.u32.u64.compose %v3373, 2863311531
      %v3375 = vextract.low.u32 %v3374
      %v3376 = vextract.high.u32 %v3374
      %v3377 = vshrl.u32 %v3376, 4
      %v3378 = vmul.u32 %v3377, 24
      %v3379 = vsub.s32 %v3373, %v3378
      %v3380 = vsub.s32 0, %v3379
      %v3381 = vsel %vm3371, %v3380, %v3379
      %vm3382 = vcmp.lt.s32.totalorder %v2904, 0
      %v3383 = vsub.s32 0, %v2904
      %v3384 = vsel %vm3382, %v3383, %v2904
      %v3385 = vmul.u32.u64.compose %v3384, 2863311531
      %v3386 = vextract.low.u32 %v3385
      %v3387 = vextract.high.u32 %v3385
      %v3388 = vshrl.u32 %v3387, 4
      %v3389 = vmul.u32 %v3388, 24
      %v3390 = vsub.s32 %v3384, %v3389
      %v3391 = vsub.s32 0, %v3390
      %v3392 = vsel %vm3382, %v3391, %v3390
      %vm3393 = vcmp.lt.s32.totalorder %v2905, 0
      %v3394 = vsub.s32 0, %v2905
      %v3395 = vsel %vm3393, %v3394, %v2905
      %v3396 = vmul.u32.u64.compose %v3395, 2863311531
      %v3397 = vextract.low.u32 %v3396
      %v3398 = vextract.high.u32 %v3396
      %v3399 = vshrl.u32 %v3398, 4
      %v3400 = vmul.u32 %v3399, 24
      %v3401 = vsub.s32 %v3395, %v3400
      %v3402 = vsub.s32 0, %v3401
      %v3403 = vsel %vm3393, %v3402, %v3401
      %vm3404 = vcmp.lt.s32.totalorder %v2906, 0
      %v3405 = vsub.s32 0, %v2906
      %v3406 = vsel %vm3404, %v3405, %v2906
      %v3407 = vmul.u32.u64.compose %v3406, 2863311531
      %v3408 = vextract.low.u32 %v3407
      %v3409 = vextract.high.u32 %v3407
      %v3410 = vshrl.u32 %v3409, 4
      %v3411 = vmul.u32 %v3410, 24
      %v3412 = vsub.s32 %v3406, %v3411
      %v3413 = vsub.s32 0, %v3412
      %v3414 = vsel %vm3404, %v3413, %v3412
      %vm3415 = vcmp.lt.s32.totalorder %v2907, 0
      %v3416 = vsub.s32 0, %v2907
      %v3417 = vsel %vm3415, %v3416, %v2907
      %v3418 = vmul.u32.u64.compose %v3417, 2863311531
      %v3419 = vextract.low.u32 %v3418
      %v3420 = vextract.high.u32 %v3418
      %v3421 = vshrl.u32 %v3420, 4
      %v3422 = vmul.u32 %v3421, 24
      %v3423 = vsub.s32 %v3417, %v3422
      %v3424 = vsub.s32 0, %v3423
      %v3425 = vsel %vm3415, %v3424, %v3423
      %vm3426 = vcmp.lt.s32.totalorder %v2908, 0
      %v3427 = vsub.s32 0, %v2908
      %v3428 = vsel %vm3426, %v3427, %v2908
      %v3429 = vmul.u32.u64.compose %v3428, 2863311531
      %v3430 = vextract.low.u32 %v3429
      %v3431 = vextract.high.u32 %v3429
      %v3432 = vshrl.u32 %v3431, 4
      %v3433 = vmul.u32 %v3432, 24
      %v3434 = vsub.s32 %v3428, %v3433
      %v3435 = vsub.s32 0, %v3434
      %v3436 = vsel %vm3426, %v3435, %v3434
      %vm3437 = vcmp.ne.s32.totalorder %v2919, 0
      %vm3438 = vcmp.ne.s32.totalorder %v2930, 0
      %vm3439 = vcmp.ne.s32.totalorder %v2941, 0
      %vm3440 = vcmp.ne.s32.totalorder %v2952, 0
      %vm3441 = vcmp.ne.s32.totalorder %v2963, 0
      %vm3442 = vcmp.ne.s32.totalorder %v2974, 0
      %vm3443 = vcmp.ne.s32.totalorder %v2985, 0
      %vm3444 = vcmp.ne.s32.totalorder %v2996, 0
      %vm3445 = vcmp.ne.s32.totalorder %v3007, 0
      %vm3446 = vcmp.ne.s32.totalorder %v3018, 0
      %vm3447 = vcmp.ne.s32.totalorder %v3029, 0
      %vm3448 = vcmp.ne.s32.totalorder %v3040, 0
      %vm3449 = vcmp.ne.s32.totalorder %v3051, 0
      %vm3450 = vcmp.ne.s32.totalorder %v3062, 0
      %vm3451 = vcmp.ne.s32.totalorder %v3073, 0
      %vm3452 = vcmp.ne.s32.totalorder %v3084, 0
      %vm3453 = vcmp.ne.s32.totalorder %v3095, 0
      %vm3454 = vcmp.ne.s32.totalorder %v3106, 0
      %vm3455 = vcmp.ne.s32.totalorder %v3117, 0
      %vm3456 = vcmp.ne.s32.totalorder %v3128, 0
      %vm3457 = vcmp.ne.s32.totalorder %v3139, 0
      %vm3458 = vcmp.ne.s32.totalorder %v3150, 0
      %vm3459 = vcmp.ne.s32.totalorder %v3161, 0
      %vm3460 = vcmp.ne.s32.totalorder %v3172, 0
      %vm3461 = vcmp.ne.s32.totalorder %v3183, 0
      %vm3462 = vcmp.ne.s32.totalorder %v3194, 0
      %vm3463 = vcmp.ne.s32.totalorder %v3205, 0
      %vm3464 = vcmp.ne.s32.totalorder %v3216, 0
      %vm3465 = vcmp.ne.s32.totalorder %v3227, 0
      %vm3466 = vcmp.ne.s32.totalorder %v3238, 0
      %vm3467 = vcmp.ne.s32.totalorder %v3249, 0
      %vm3468 = vcmp.ne.s32.totalorder %v3260, 0
      %vm3469 = vcmp.ne.s32.totalorder %v3271, 0
      %vm3470 = vcmp.ne.s32.totalorder %v3282, 0
      %vm3471 = vcmp.ne.s32.totalorder %v3293, 0
      %vm3472 = vcmp.ne.s32.totalorder %v3304, 0
      %vm3473 = vcmp.ne.s32.totalorder %v3315, 0
      %vm3474 = vcmp.ne.s32.totalorder %v3326, 0
      %vm3475 = vcmp.ne.s32.totalorder %v3337, 0
      %vm3476 = vcmp.ne.s32.totalorder %v3348, 0
      %vm3477 = vcmp.ne.s32.totalorder %v3359, 0
      %vm3478 = vcmp.ne.s32.totalorder %v3370, 0
      %vm3479 = vcmp.ne.s32.totalorder %v3381, 0
      %vm3480 = vcmp.ne.s32.totalorder %v3392, 0
      %vm3481 = vcmp.ne.s32.totalorder %v3403, 0
      %vm3482 = vcmp.ne.s32.totalorder %v3414, 0
      %vm3483 = vcmp.ne.s32.totalorder %v3425, 0
      %vm3484 = vcmp.ne.s32.totalorder %v3436, 0
      %vm3485 = vcmp.lt.s32.totalorder %v2919, 0
      %vm3486 = vcmp.lt.s32.totalorder %v2930, 0
      %vm3487 = vcmp.lt.s32.totalorder %v2941, 0
      %vm3488 = vcmp.lt.s32.totalorder %v2952, 0
      %vm3489 = vcmp.lt.s32.totalorder %v2963, 0
      %vm3490 = vcmp.lt.s32.totalorder %v2974, 0
      %vm3491 = vcmp.lt.s32.totalorder %v2985, 0
      %vm3492 = vcmp.lt.s32.totalorder %v2996, 0
      %vm3493 = vcmp.lt.s32.totalorder %v3007, 0
      %vm3494 = vcmp.lt.s32.totalorder %v3018, 0
      %vm3495 = vcmp.lt.s32.totalorder %v3029, 0
      %vm3496 = vcmp.lt.s32.totalorder %v3040, 0
      %vm3497 = vcmp.lt.s32.totalorder %v3051, 0
      %vm3498 = vcmp.lt.s32.totalorder %v3062, 0
      %vm3499 = vcmp.lt.s32.totalorder %v3073, 0
      %vm3500 = vcmp.lt.s32.totalorder %v3084, 0
      %vm3501 = vcmp.lt.s32.totalorder %v3095, 0
      %vm3502 = vcmp.lt.s32.totalorder %v3106, 0
      %vm3503 = vcmp.lt.s32.totalorder %v3117, 0
      %vm3504 = vcmp.lt.s32.totalorder %v3128, 0
      %vm3505 = vcmp.lt.s32.totalorder %v3139, 0
      %vm3506 = vcmp.lt.s32.totalorder %v3150, 0
      %vm3507 = vcmp.lt.s32.totalorder %v3161, 0
      %vm3508 = vcmp.lt.s32.totalorder %v3172, 0
      %vm3509 = vcmp.lt.s32.totalorder %v3183, 0
      %vm3510 = vcmp.lt.s32.totalorder %v3194, 0
      %vm3511 = vcmp.lt.s32.totalorder %v3205, 0
      %vm3512 = vcmp.lt.s32.totalorder %v3216, 0
      %vm3513 = vcmp.lt.s32.totalorder %v3227, 0
      %vm3514 = vcmp.lt.s32.totalorder %v3238, 0
      %vm3515 = vcmp.lt.s32.totalorder %v3249, 0
      %vm3516 = vcmp.lt.s32.totalorder %v3260, 0
      %vm3517 = vcmp.lt.s32.totalorder %v3271, 0
      %vm3518 = vcmp.lt.s32.totalorder %v3282, 0
      %vm3519 = vcmp.lt.s32.totalorder %v3293, 0
      %vm3520 = vcmp.lt.s32.totalorder %v3304, 0
      %vm3521 = vcmp.lt.s32.totalorder %v3315, 0
      %vm3522 = vcmp.lt.s32.totalorder %v3326, 0
      %vm3523 = vcmp.lt.s32.totalorder %v3337, 0
      %vm3524 = vcmp.lt.s32.totalorder %v3348, 0
      %vm3525 = vcmp.lt.s32.totalorder %v3359, 0
      %vm3526 = vcmp.lt.s32.totalorder %v3370, 0
      %vm3527 = vcmp.lt.s32.totalorder %v3381, 0
      %vm3528 = vcmp.lt.s32.totalorder %v3392, 0
      %vm3529 = vcmp.lt.s32.totalorder %v3403, 0
      %vm3530 = vcmp.lt.s32.totalorder %v3414, 0
      %vm3531 = vcmp.lt.s32.totalorder %v3425, 0
      %vm3532 = vcmp.lt.s32.totalorder %v3436, 0
      %vm3533 = vmand %vm3485, %vm3437
      %vm3534 = vmand %vm3486, %vm3438
      %vm3535 = vmand %vm3487, %vm3439
      %vm3536 = vmand %vm3488, %vm3440
      %vm3537 = vmand %vm3489, %vm3441
      %vm3538 = vmand %vm3490, %vm3442
      %vm3539 = vmand %vm3491, %vm3443
      %vm3540 = vmand %vm3492, %vm3444
      %vm3541 = vmand %vm3493, %vm3445
      %vm3542 = vmand %vm3494, %vm3446
      %vm3543 = vmand %vm3495, %vm3447
      %vm3544 = vmand %vm3496, %vm3448
      %vm3545 = vmand %vm3497, %vm3449
      %vm3546 = vmand %vm3498, %vm3450
      %vm3547 = vmand %vm3499, %vm3451
      %vm3548 = vmand %vm3500, %vm3452
      %vm3549 = vmand %vm3501, %vm3453
      %vm3550 = vmand %vm3502, %vm3454
      %vm3551 = vmand %vm3503, %vm3455
      %vm3552 = vmand %vm3504, %vm3456
      %vm3553 = vmand %vm3505, %vm3457
      %vm3554 = vmand %vm3506, %vm3458
      %vm3555 = vmand %vm3507, %vm3459
      %vm3556 = vmand %vm3508, %vm3460
      %vm3557 = vmand %vm3509, %vm3461
      %vm3558 = vmand %vm3510, %vm3462
      %vm3559 = vmand %vm3511, %vm3463
      %vm3560 = vmand %vm3512, %vm3464
      %vm3561 = vmand %vm3513, %vm3465
      %vm3562 = vmand %vm3514, %vm3466
      %vm3563 = vmand %vm3515, %vm3467
      %vm3564 = vmand %vm3516, %vm3468
      %vm3565 = vmand %vm3517, %vm3469
      %vm3566 = vmand %vm3518, %vm3470
      %vm3567 = vmand %vm3519, %vm3471
      %vm3568 = vmand %vm3520, %vm3472
      %vm3569 = vmand %vm3521, %vm3473
      %vm3570 = vmand %vm3522, %vm3474
      %vm3571 = vmand %vm3523, %vm3475
      %vm3572 = vmand %vm3524, %vm3476
      %vm3573 = vmand %vm3525, %vm3477
      %vm3574 = vmand %vm3526, %vm3478
      %vm3575 = vmand %vm3527, %vm3479
      %vm3576 = vmand %vm3528, %vm3480
      %vm3577 = vmand %vm3529, %vm3481
      %vm3578 = vmand %vm3530, %vm3482
      %vm3579 = vmand %vm3531, %vm3483
      %vm3580 = vmand %vm3532, %vm3484
      %v3581 = vadd.s32 %v2919, 24
      %v3582 = vadd.s32 %v2930, 24
      %v3583 = vadd.s32 %v2941, 24
      %v3584 = vadd.s32 %v2952, 24
      %v3585 = vadd.s32 %v2963, 24
      %v3586 = vadd.s32 %v2974, 24
      %v3587 = vadd.s32 %v2985, 24
      %v3588 = vadd.s32 %v2996, 24
      %v3589 = vadd.s32 %v3007, 24
      %v3590 = vadd.s32 %v3018, 24
      %v3591 = vadd.s32 %v3029, 24
      %v3592 = vadd.s32 %v3040, 24
      %v3593 = vadd.s32 %v3051, 24
      %v3594 = vadd.s32 %v3062, 24
      %v3595 = vadd.s32 %v3073, 24
      %v3596 = vadd.s32 %v3084, 24
      %v3597 = vadd.s32 %v3095, 24
      %v3598 = vadd.s32 %v3106, 24
      %v3599 = vadd.s32 %v3117, 24
      %v3600 = vadd.s32 %v3128, 24
      %v3601 = vadd.s32 %v3139, 24
      %v3602 = vadd.s32 %v3150, 24
      %v3603 = vadd.s32 %v3161, 24
      %v3604 = vadd.s32 %v3172, 24
      %v3605 = vadd.s32 %v3183, 24
      %v3606 = vadd.s32 %v3194, 24
      %v3607 = vadd.s32 %v3205, 24
      %v3608 = vadd.s32 %v3216, 24
      %v3609 = vadd.s32 %v3227, 24
      %v3610 = vadd.s32 %v3238, 24
      %v3611 = vadd.s32 %v3249, 24
      %v3612 = vadd.s32 %v3260, 24
      %v3613 = vadd.s32 %v3271, 24
      %v3614 = vadd.s32 %v3282, 24
      %v3615 = vadd.s32 %v3293, 24
      %v3616 = vadd.s32 %v3304, 24
      %v3617 = vadd.s32 %v3315, 24
      %v3618 = vadd.s32 %v3326, 24
      %v3619 = vadd.s32 %v3337, 24
      %v3620 = vadd.s32 %v3348, 24
      %v3621 = vadd.s32 %v3359, 24
      %v3622 = vadd.s32 %v3370, 24
      %v3623 = vadd.s32 %v3381, 24
      %v3624 = vadd.s32 %v3392, 24
      %v3625 = vadd.s32 %v3403, 24
      %v3626 = vadd.s32 %v3414, 24
      %v3627 = vadd.s32 %v3425, 24
      %v3628 = vadd.s32 %v3436, 24
      %v3629 = vsel %vm3533, %v3581, %v2919
      %v3630 = vsel %vm3534, %v3582, %v2930
      %v3631 = vsel %vm3535, %v3583, %v2941
      %v3632 = vsel %vm3536, %v3584, %v2952
      %v3633 = vsel %vm3537, %v3585, %v2963
      %v3634 = vsel %vm3538, %v3586, %v2974
      %v3635 = vsel %vm3539, %v3587, %v2985
      %v3636 = vsel %vm3540, %v3588, %v2996
      %v3637 = vsel %vm3541, %v3589, %v3007
      %v3638 = vsel %vm3542, %v3590, %v3018
      %v3639 = vsel %vm3543, %v3591, %v3029
      %v3640 = vsel %vm3544, %v3592, %v3040
      %v3641 = vsel %vm3545, %v3593, %v3051
      %v3642 = vsel %vm3546, %v3594, %v3062
      %v3643 = vsel %vm3547, %v3595, %v3073
      %v3644 = vsel %vm3548, %v3596, %v3084
      %v3645 = vsel %vm3549, %v3597, %v3095
      %v3646 = vsel %vm3550, %v3598, %v3106
      %v3647 = vsel %vm3551, %v3599, %v3117
      %v3648 = vsel %vm3552, %v3600, %v3128
      %v3649 = vsel %vm3553, %v3601, %v3139
      %v3650 = vsel %vm3554, %v3602, %v3150
      %v3651 = vsel %vm3555, %v3603, %v3161
      %v3652 = vsel %vm3556, %v3604, %v3172
      %v3653 = vsel %vm3557, %v3605, %v3183
      %v3654 = vsel %vm3558, %v3606, %v3194
      %v3655 = vsel %vm3559, %v3607, %v3205
      %v3656 = vsel %vm3560, %v3608, %v3216
      %v3657 = vsel %vm3561, %v3609, %v3227
      %v3658 = vsel %vm3562, %v3610, %v3238
      %v3659 = vsel %vm3563, %v3611, %v3249
      %v3660 = vsel %vm3564, %v3612, %v3260
      %v3661 = vsel %vm3565, %v3613, %v3271
      %v3662 = vsel %vm3566, %v3614, %v3282
      %v3663 = vsel %vm3567, %v3615, %v3293
      %v3664 = vsel %vm3568, %v3616, %v3304
      %v3665 = vsel %vm3569, %v3617, %v3315
      %v3666 = vsel %vm3570, %v3618, %v3326
      %v3667 = vsel %vm3571, %v3619, %v3337
      %v3668 = vsel %vm3572, %v3620, %v3348
      %v3669 = vsel %vm3573, %v3621, %v3359
      %v3670 = vsel %vm3574, %v3622, %v3370
      %v3671 = vsel %vm3575, %v3623, %v3381
      %v3672 = vsel %vm3576, %v3624, %v3392
      %v3673 = vsel %vm3577, %v3625, %v3403
      %v3674 = vsel %vm3578, %v3626, %v3414
      %v3675 = vsel %vm3579, %v3627, %v3425
      %v3676 = vsel %vm3580, %v3628, %v3436
      %vm3677 = vcmp.lt.s32.totalorder %v3629, 16
      %vm3678 = vcmp.lt.s32.totalorder %v3630, 16
      %vm3679 = vcmp.lt.s32.totalorder %v3631, 16
      %vm3680 = vcmp.lt.s32.totalorder %v3632, 16
      %vm3681 = vcmp.lt.s32.totalorder %v3633, 16
      %vm3682 = vcmp.lt.s32.totalorder %v3634, 16
      %vm3683 = vcmp.lt.s32.totalorder %v3635, 16
      %vm3684 = vcmp.lt.s32.totalorder %v3636, 16
      %vm3685 = vcmp.lt.s32.totalorder %v3637, 16
      %vm3686 = vcmp.lt.s32.totalorder %v3638, 16
      %vm3687 = vcmp.lt.s32.totalorder %v3639, 16
      %vm3688 = vcmp.lt.s32.totalorder %v3640, 16
      %vm3689 = vcmp.lt.s32.totalorder %v3641, 16
      %vm3690 = vcmp.lt.s32.totalorder %v3642, 16
      %vm3691 = vcmp.lt.s32.totalorder %v3643, 16
      %vm3692 = vcmp.lt.s32.totalorder %v3644, 16
      %vm3693 = vcmp.lt.s32.totalorder %v3645, 16
      %vm3694 = vcmp.lt.s32.totalorder %v3646, 16
      %vm3695 = vcmp.lt.s32.totalorder %v3647, 16
      %vm3696 = vcmp.lt.s32.totalorder %v3648, 16
      %vm3697 = vcmp.lt.s32.totalorder %v3649, 16
      %vm3698 = vcmp.lt.s32.totalorder %v3650, 16
      %vm3699 = vcmp.lt.s32.totalorder %v3651, 16
      %vm3700 = vcmp.lt.s32.totalorder %v3652, 16
      %vm3701 = vcmp.lt.s32.totalorder %v3653, 16
      %vm3702 = vcmp.lt.s32.totalorder %v3654, 16
      %vm3703 = vcmp.lt.s32.totalorder %v3655, 16
      %vm3704 = vcmp.lt.s32.totalorder %v3656, 16
      %vm3705 = vcmp.lt.s32.totalorder %v3657, 16
      %vm3706 = vcmp.lt.s32.totalorder %v3658, 16
      %vm3707 = vcmp.lt.s32.totalorder %v3659, 16
      %vm3708 = vcmp.lt.s32.totalorder %v3660, 16
      %vm3709 = vcmp.lt.s32.totalorder %v3661, 16
      %vm3710 = vcmp.lt.s32.totalorder %v3662, 16
      %vm3711 = vcmp.lt.s32.totalorder %v3663, 16
      %vm3712 = vcmp.lt.s32.totalorder %v3664, 16
      %vm3713 = vcmp.lt.s32.totalorder %v3665, 16
      %vm3714 = vcmp.lt.s32.totalorder %v3666, 16
      %vm3715 = vcmp.lt.s32.totalorder %v3667, 16
      %vm3716 = vcmp.lt.s32.totalorder %v3668, 16
      %vm3717 = vcmp.lt.s32.totalorder %v3669, 16
      %vm3718 = vcmp.lt.s32.totalorder %v3670, 16
      %vm3719 = vcmp.lt.s32.totalorder %v3671, 16
      %vm3720 = vcmp.lt.s32.totalorder %v3672, 16
      %vm3721 = vcmp.lt.s32.totalorder %v3673, 16
      %vm3722 = vcmp.lt.s32.totalorder %v3674, 16
      %vm3723 = vcmp.lt.s32.totalorder %v3675, 16
      %vm3724 = vcmp.lt.s32.totalorder %v3676, 16
      %v3725 = vsel %vm3677, 1, 0
      %v3726 = vsel %vm3678, 1, 0
      %v3727 = vsel %vm3679, 1, 0
      %v3728 = vsel %vm3680, 1, 0
      %v3729 = vsel %vm3681, 1, 0
      %v3730 = vsel %vm3682, 1, 0
      %v3731 = vsel %vm3683, 1, 0
      %v3732 = vsel %vm3684, 1, 0
      %v3733 = vsel %vm3685, 1, 0
      %v3734 = vsel %vm3686, 1, 0
      %v3735 = vsel %vm3687, 1, 0
      %v3736 = vsel %vm3688, 1, 0
      %v3737 = vsel %vm3689, 1, 0
      %v3738 = vsel %vm3690, 1, 0
      %v3739 = vsel %vm3691, 1, 0
      %v3740 = vsel %vm3692, 1, 0
      %v3741 = vsel %vm3693, 1, 0
      %v3742 = vsel %vm3694, 1, 0
      %v3743 = vsel %vm3695, 1, 0
      %v3744 = vsel %vm3696, 1, 0
      %v3745 = vsel %vm3697, 1, 0
      %v3746 = vsel %vm3698, 1, 0
      %v3747 = vsel %vm3699, 1, 0
      %v3748 = vsel %vm3700, 1, 0
      %v3749 = vsel %vm3701, 1, 0
      %v3750 = vsel %vm3702, 1, 0
      %v3751 = vsel %vm3703, 1, 0
      %v3752 = vsel %vm3704, 1, 0
      %v3753 = vsel %vm3705, 1, 0
      %v3754 = vsel %vm3706, 1, 0
      %v3755 = vsel %vm3707, 1, 0
      %v3756 = vsel %vm3708, 1, 0
      %v3757 = vsel %vm3709, 1, 0
      %v3758 = vsel %vm3710, 1, 0
      %v3759 = vsel %vm3711, 1, 0
      %v3760 = vsel %vm3712, 1, 0
      %v3761 = vsel %vm3713, 1, 0
      %v3762 = vsel %vm3714, 1, 0
      %v3763 = vsel %vm3715, 1, 0
      %v3764 = vsel %vm3716, 1, 0
      %v3765 = vsel %vm3717, 1, 0
      %v3766 = vsel %vm3718, 1, 0
      %v3767 = vsel %vm3719, 1, 0
      %v3768 = vsel %vm3720, 1, 0
      %v3769 = vsel %vm3721, 1, 0
      %v3770 = vsel %vm3722, 1, 0
      %v3771 = vsel %vm3723, 1, 0
      %v3772 = vsel %vm3724, 1, 0
      %vm3773 = vcmp.eq.s32.totalorder %v3725, 1
      %vm3774 = vcmp.eq.s32.totalorder %v3726, 1
      %vm3775 = vcmp.eq.s32.totalorder %v3727, 1
      %vm3776 = vcmp.eq.s32.totalorder %v3728, 1
      %vm3777 = vcmp.eq.s32.totalorder %v3729, 1
      %vm3778 = vcmp.eq.s32.totalorder %v3730, 1
      %vm3779 = vcmp.eq.s32.totalorder %v3731, 1
      %vm3780 = vcmp.eq.s32.totalorder %v3732, 1
      %vm3781 = vcmp.eq.s32.totalorder %v3733, 1
      %vm3782 = vcmp.eq.s32.totalorder %v3734, 1
      %vm3783 = vcmp.eq.s32.totalorder %v3735, 1
      %vm3784 = vcmp.eq.s32.totalorder %v3736, 1
      %vm3785 = vcmp.eq.s32.totalorder %v3737, 1
      %vm3786 = vcmp.eq.s32.totalorder %v3738, 1
      %vm3787 = vcmp.eq.s32.totalorder %v3739, 1
      %vm3788 = vcmp.eq.s32.totalorder %v3740, 1
      %vm3789 = vcmp.eq.s32.totalorder %v3741, 1
      %vm3790 = vcmp.eq.s32.totalorder %v3742, 1
      %vm3791 = vcmp.eq.s32.totalorder %v3743, 1
      %vm3792 = vcmp.eq.s32.totalorder %v3744, 1
      %vm3793 = vcmp.eq.s32.totalorder %v3745, 1
      %vm3794 = vcmp.eq.s32.totalorder %v3746, 1
      %vm3795 = vcmp.eq.s32.totalorder %v3747, 1
      %vm3796 = vcmp.eq.s32.totalorder %v3748, 1
      %vm3797 = vcmp.eq.s32.totalorder %v3749, 1
      %vm3798 = vcmp.eq.s32.totalorder %v3750, 1
      %vm3799 = vcmp.eq.s32.totalorder %v3751, 1
      %vm3800 = vcmp.eq.s32.totalorder %v3752, 1
      %vm3801 = vcmp.eq.s32.totalorder %v3753, 1
      %vm3802 = vcmp.eq.s32.totalorder %v3754, 1
      %vm3803 = vcmp.eq.s32.totalorder %v3755, 1
      %vm3804 = vcmp.eq.s32.totalorder %v3756, 1
      %vm3805 = vcmp.eq.s32.totalorder %v3757, 1
      %vm3806 = vcmp.eq.s32.totalorder %v3758, 1
      %vm3807 = vcmp.eq.s32.totalorder %v3759, 1
      %vm3808 = vcmp.eq.s32.totalorder %v3760, 1
      %vm3809 = vcmp.eq.s32.totalorder %v3761, 1
      %vm3810 = vcmp.eq.s32.totalorder %v3762, 1
      %vm3811 = vcmp.eq.s32.totalorder %v3763, 1
      %vm3812 = vcmp.eq.s32.totalorder %v3764, 1
      %vm3813 = vcmp.eq.s32.totalorder %v3765, 1
      %vm3814 = vcmp.eq.s32.totalorder %v3766, 1
      %vm3815 = vcmp.eq.s32.totalorder %v3767, 1
      %vm3816 = vcmp.eq.s32.totalorder %v3768, 1
      %vm3817 = vcmp.eq.s32.totalorder %v3769, 1
      %vm3818 = vcmp.eq.s32.totalorder %v3770, 1
      %vm3819 = vcmp.eq.s32.totalorder %v3771, 1
      %vm3820 = vcmp.eq.s32.totalorder %v3772, 1
      %v3821 = vsel %vm3773, %v2812, 0.0
      %v3822 = vsel %vm3774, %v2813, 0.0
      %v3823 = vsel %vm3775, %v2814, 0.0
      %v3824 = vsel %vm3776, %v2815, 0.0
      %v3825 = vsel %vm3777, %v2816, 0.0
      %v3826 = vsel %vm3778, %v2817, 0.0
      %v3827 = vsel %vm3779, %v2818, 0.0
      %v3828 = vsel %vm3780, %v2819, 0.0
      %v3829 = vsel %vm3781, %v2820, 0.0
      %v3830 = vsel %vm3782, %v2821, 0.0
      %v3831 = vsel %vm3783, %v2822, 0.0
      %v3832 = vsel %vm3784, %v2823, 0.0
      %v3833 = vsel %vm3785, %v2824, 0.0
      %v3834 = vsel %vm3786, %v2825, 0.0
      %v3835 = vsel %vm3787, %v2826, 0.0
      %v3836 = vsel %vm3788, %v2827, 0.0
      %v3837 = vsel %vm3789, %v2828, 0.0
      %v3838 = vsel %vm3790, %v2829, 0.0
      %v3839 = vsel %vm3791, %v2830, 0.0
      %v3840 = vsel %vm3792, %v2831, 0.0
      %v3841 = vsel %vm3793, %v2832, 0.0
      %v3842 = vsel %vm3794, %v2833, 0.0
      %v3843 = vsel %vm3795, %v2834, 0.0
      %v3844 = vsel %vm3796, %v2835, 0.0
      %v3845 = vsel %vm3797, %v2836, 0.0
      %v3846 = vsel %vm3798, %v2837, 0.0
      %v3847 = vsel %vm3799, %v2838, 0.0
      %v3848 = vsel %vm3800, %v2839, 0.0
      %v3849 = vsel %vm3801, %v2840, 0.0
      %v3850 = vsel %vm3802, %v2841, 0.0
      %v3851 = vsel %vm3803, %v2842, 0.0
      %v3852 = vsel %vm3804, %v2843, 0.0
      %v3853 = vsel %vm3805, %v2844, 0.0
      %v3854 = vsel %vm3806, %v2845, 0.0
      %v3855 = vsel %vm3807, %v2846, 0.0
      %v3856 = vsel %vm3808, %v2847, 0.0
      %v3857 = vsel %vm3809, %v2848, 0.0
      %v3858 = vsel %vm3810, %v2849, 0.0
      %v3859 = vsel %vm3811, %v2850, 0.0
      %v3860 = vsel %vm3812, %v2851, 0.0
      %v3861 = vsel %vm3813, %v2852, 0.0
      %v3862 = vsel %vm3814, %v2853, 0.0
      %v3863 = vsel %vm3815, %v2854, 0.0
      %v3864 = vsel %vm3816, %v2855, 0.0
      %v3865 = vsel %vm3817, %v2856, 0.0
      %v3866 = vsel %vm3818, %v2857, 0.0
      %v3867 = vsel %vm3819, %v2858, 0.0
      %v3868 = vsel %vm3820, %v2859, 0.0
      %3869 = vst.msk [vmem:[#allocation3] sm:$0xf] %vm226, 0
      %3870 = vst.msk [vmem:[#allocation3 + $0x4] sm:$0xf] %vm226, 0
      %3871 = vst.msk [vmem:[#allocation3 + $0x8] sm:$0xf] %vm226, 0
      %vm3872 = vcmask 24576
      %vm3873 = vmand %vm3872, %vm251
      %v3874 = vld [vmem:[#allocation3 + $0xc] sm:$0x1]
      %v3875 = vsel %vm3873, 0, %v3874
      %3876 = vst [vmem:[#allocation3 + $0xc] sm:$0x1] %v3875
      %vm3877 = vcmask 27648
      %vm3878 = vsmask.f32 7938
      %vm3879 = vmand %vm3877, %vm3878
      %v3880 = vld [vmem:[#allocation3 + $0xcc] sm:$0xf]
      %v3881 = vsel %vm3879, 0, %v3880
      %3882 = vst [vmem:[#allocation3 + $0xcc] sm:$0xf] %v3881
      %3883 = vst.msk [vmem:[#allocation3 + $0xd0] sm:$0xf] %vm226, 0
      %3884 = vst.msk [vmem:[#allocation3 + $0xd4] sm:$0xf] %vm226, 0
      %3885 = vst.msk [vmem:[#allocation3 + $0xd8] sm:$0xf] %vm226, 0
      %v3886 = vpack.c.bf16 %v3822, %v3821
      %v3887 = vpack.c.bf16 %v3824, %v3823
      %v3888 = vpack.c.bf16 %v3826, %v3825
      %v3889 = vpack.c.bf16 %v3828, %v3827
      %v3890 = vpack.c.bf16 %v3830, %v3829
      %v3891 = vpack.c.bf16 %v3832, %v3831
      %v3892 = vpack.c.bf16 %v3834, %v3833
      %v3893 = vpack.c.bf16 %v3836, %v3835
      %v3894 = vpack.c.bf16 %v3838, %v3837
      %v3895 = vpack.c.bf16 %v3840, %v3839
      %v3896 = vpack.c.bf16 %v3842, %v3841
      %v3897 = vpack.c.bf16 %v3844, %v3843
      %v3898 = vpack.c.bf16 %v3846, %v3845
      %v3899 = vpack.c.bf16 %v3848, %v3847
      %v3900 = vpack.c.bf16 %v3850, %v3849
      %v3901 = vpack.c.bf16 %v3852, %v3851
      %v3902 = vpack.c.bf16 %v3854, %v3853
      %v3903 = vpack.c.bf16 %v3856, %v3855
      %v3904 = vpack.c.bf16 %v3858, %v3857
      %v3905 = vpack.c.bf16 %v3860, %v3859
      %v3906 = vpack.c.bf16 %v3862, %v3861
      %v3907 = vpack.c.bf16 %v3864, %v3863
      %v3908 = vpack.c.bf16 %v3866, %v3865
      %v3909 = vpack.c.bf16 %v3868, %v3867
      %v3934 = vunpack.c.l.b16 %v3886
      %v3935 = vunpack.c.h.b16 %v3886
      %v3936 = vunpack.c.l.b16 %v3887
      %v3937 = vunpack.c.h.b16 %v3887
      %v3938 = vunpack.c.l.b16 %v3888
      %v3939 = vunpack.c.h.b16 %v3888
      %v3940 = vunpack.c.l.b16 %v3889
      %v3941 = vunpack.c.h.b16 %v3889
      %v3942 = vunpack.c.l.b16 %v3890
      %v3943 = vunpack.c.h.b16 %v3890
      %v3944 = vunpack.c.l.b16 %v3891
      %v3945 = vunpack.c.h.b16 %v3891
      %v3946 = vunpack.c.l.b16 %v3892
      %v3947 = vunpack.c.h.b16 %v3892
      %v3948 = vunpack.c.l.b16 %v3893
      %v3949 = vunpack.c.h.b16 %v3893
      %v3950 = vunpack.c.l.b16 %v3894
      %v3951 = vunpack.c.h.b16 %v3894
      %v3952 = vunpack.c.l.b16 %v3895
      %v3953 = vunpack.c.h.b16 %v3895
      %v3954 = vunpack.c.l.b16 %v3896
      %v3955 = vunpack.c.h.b16 %v3896
      %v3956 = vunpack.c.l.b16 %v3897
      %v3957 = vunpack.c.h.b16 %v3897
      %v3958 = vunpack.c.l.b16 %v3898
      %v3959 = vunpack.c.h.b16 %v3898
      %v3960 = vunpack.c.l.b16 %v3899
      %v3961 = vunpack.c.h.b16 %v3899
      %v3962 = vunpack.c.l.b16 %v3900
      %v3963 = vunpack.c.h.b16 %v3900
      %v3964 = vunpack.c.l.b16 %v3901
      %v3965 = vunpack.c.h.b16 %v3901
      %v3966 = vunpack.c.l.b16 %v3902
      %v3967 = vunpack.c.h.b16 %v3902
      %v3968 = vunpack.c.l.b16 %v3903
      %v3969 = vunpack.c.h.b16 %v3903
      %v3970 = vunpack.c.l.b16 %v3904
      %v3971 = vunpack.c.h.b16 %v3904
      %v3972 = vunpack.c.l.b16 %v3905
      %v3973 = vunpack.c.h.b16 %v3905
      %v3974 = vunpack.c.l.b16 %v3906
      %v3975 = vunpack.c.h.b16 %v3906
      %v3976 = vunpack.c.l.b16 %v3907
      %v3977 = vunpack.c.h.b16 %v3907
      %v3978 = vunpack.c.l.b16 %v3908
      %v3979 = vunpack.c.h.b16 %v3908
      %v3980 = vunpack.c.l.b16 %v3909
      %v3981 = vunpack.c.h.b16 %v3909
      %v3982 = vpack.c.b16 %v3934, %v3934
      %v3983 = vpack.c.b16 %v3935, %v3935
      %v3984 = vpack.c.b16 %v3936, %v3936
      %v3985 = vpack.c.b16 %v3937, %v3937
      %v3986 = vpack.c.b16 %v3938, %v3938
      %v3987 = vpack.c.b16 %v3939, %v3939
      %v3988 = vpack.c.b16 %v3940, %v3940
      %v3989 = vpack.c.b16 %v3941, %v3941
      %v3990 = vpack.c.b16 %v3942, %v3942
      %v3991 = vpack.c.b16 %v3943, %v3943
      %v3992 = vpack.c.b16 %v3944, %v3944
      %v3993 = vpack.c.b16 %v3945, %v3945
      %v3994 = vpack.c.b16 %v3946, %v3946
      %v3995 = vpack.c.b16 %v3947, %v3947
      %v3996 = vpack.c.b16 %v3948, %v3948
      %v3997 = vpack.c.b16 %v3949, %v3949
      %v3998 = vpack.c.b16 %v3950, %v3950
      %v3999 = vpack.c.b16 %v3951, %v3951
      %v4000 = vpack.c.b16 %v3952, %v3952
      %v4001 = vpack.c.b16 %v3953, %v3953
      %v4002 = vpack.c.b16 %v3954, %v3954
      %v4003 = vpack.c.b16 %v3955, %v3955
      %v4004 = vpack.c.b16 %v3956, %v3956
      %v4005 = vpack.c.b16 %v3957, %v3957
      %v4006 = vpack.c.b16 %v3958, %v3958
      %v4007 = vpack.c.b16 %v3959, %v3959
      %v4008 = vpack.c.b16 %v3960, %v3960
      %v4009 = vpack.c.b16 %v3961, %v3961
      %v4010 = vpack.c.b16 %v3962, %v3962
      %v4011 = vpack.c.b16 %v3963, %v3963
      %v4012 = vpack.c.b16 %v3964, %v3964
      %v4013 = vpack.c.b16 %v3965, %v3965
      %v4014 = vpack.c.b16 %v3966, %v3966
      %v4015 = vpack.c.b16 %v3967, %v3967
      %v4016 = vpack.c.b16 %v3968, %v3968
      %v4017 = vpack.c.b16 %v3969, %v3969
      %v4018 = vpack.c.b16 %v3970, %v3970
      %v4019 = vpack.c.b16 %v3971, %v3971
      %v4020 = vpack.c.b16 %v3972, %v3972
      %v4021 = vpack.c.b16 %v3973, %v3973
      %v4022 = vpack.c.b16 %v3974, %v3974
      %v4023 = vpack.c.b16 %v3975, %v3975
      %v4024 = vpack.c.b16 %v3976, %v3976
      %v4025 = vpack.c.b16 %v3977, %v3977
      %v4026 = vpack.c.b16 %v3978, %v3978
      %v4027 = vpack.c.b16 %v3979, %v3979
      %v4028 = vpack.c.b16 %v3980, %v3980
      %v4029 = vpack.c.b16 %v3981, %v3981
      %vm4030 = vsmask.f32 4368
      %vm4031 = vmor %vm251, %vm4030
      %v4033 = vshrl.u32 %v3982, 16
      %v4035 = vrot.slane %v4033, 7
      %v4036 = vshll.u32 %v3982, 16
      %v4038 = vor.u32 %v4035, %v4036
      %v4039 = vrot.slane %v4035, 4
      %v4041 = vshrl.u32 %v3983, 16
      %v4043 = vrot.slane %v4041, 7
      %v4044 = vshll.u32 %v3983, 16
      %v4046 = vor.u32 %v4043, %v4044
      %v4047 = vsel %vm4031, %v4039, %v4046
      %v4048 = vrot.slane %v4043, 4
      %v4050 = vshrl.u32 %v3984, 16
      %v4052 = vrot.slane %v4050, 7
      %v4053 = vshll.u32 %v3984, 16
      %v4055 = vor.u32 %v4052, %v4053
      %v4056 = vsel %vm4031, %v4048, %v4055
      %v4057 = vrot.slane %v4052, 4
      %v4059 = vshrl.u32 %v3985, 16
      %v4061 = vrot.slane %v4059, 7
      %v4062 = vshll.u32 %v3985, 16
      %v4064 = vor.u32 %v4061, %v4062
      %v4065 = vsel %vm4031, %v4057, %v4064
      %v4066 = vrot.slane %v4061, 4
      %v4068 = vshrl.u32 %v3986, 16
      %v4070 = vrot.slane %v4068, 7
      %v4071 = vshll.u32 %v3986, 16
      %v4073 = vor.u32 %v4070, %v4071
      %v4074 = vsel %vm4031, %v4066, %v4073
      %v4075 = vrot.slane %v4070, 4
      %v4077 = vshrl.u32 %v3987, 16
      %v4079 = vrot.slane %v4077, 7
      %v4080 = vshll.u32 %v3987, 16
      %v4082 = vor.u32 %v4079, %v4080
      %v4083 = vsel %vm4031, %v4075, %v4082
      %v4084 = vrot.slane %v4079, 4
      %v4086 = vshrl.u32 %v3988, 16
      %v4088 = vrot.slane %v4086, 7
      %v4089 = vshll.u32 %v3988, 16
      %v4091 = vor.u32 %v4088, %v4089
      %v4092 = vsel %vm4031, %v4084, %v4091
      %v4093 = vrot.slane %v4088, 4
      %v4095 = vshrl.u32 %v3989, 16
      %v4097 = vrot.slane %v4095, 7
      %v4098 = vshll.u32 %v3989, 16
      %v4100 = vor.u32 %v4097, %v4098
      %v4101 = vsel %vm4031, %v4093, %v4100
      %v4102 = vrot.slane %v4097, 4
      %v4104 = vshrl.u32 %v3990, 16
      %v4106 = vrot.slane %v4104, 7
      %v4107 = vshll.u32 %v3990, 16
      %v4109 = vor.u32 %v4106, %v4107
      %v4110 = vsel %vm4031, %v4102, %v4109
      %v4111 = vrot.slane %v4106, 4
      %v4113 = vshrl.u32 %v3991, 16
      %v4115 = vrot.slane %v4113, 7
      %v4116 = vshll.u32 %v3991, 16
      %v4118 = vor.u32 %v4115, %v4116
      %v4119 = vsel %vm4031, %v4111, %v4118
      %v4120 = vrot.slane %v4115, 4
      %v4122 = vshrl.u32 %v3992, 16
      %v4124 = vrot.slane %v4122, 7
      %v4125 = vshll.u32 %v3992, 16
      %v4127 = vor.u32 %v4124, %v4125
      %v4128 = vsel %vm4031, %v4120, %v4127
      %v4129 = vrot.slane %v4124, 4
      %v4131 = vshrl.u32 %v3993, 16
      %v4133 = vrot.slane %v4131, 7
      %v4134 = vshll.u32 %v3993, 16
      %v4136 = vor.u32 %v4133, %v4134
      %v4137 = vsel %vm4031, %v4129, %v4136
      %v4138 = vrot.slane %v4133, 4
      %v4140 = vshrl.u32 %v3994, 16
      %v4142 = vrot.slane %v4140, 7
      %v4143 = vshll.u32 %v3994, 16
      %v4145 = vor.u32 %v4142, %v4143
      %v4146 = vsel %vm4031, %v4138, %v4145
      %v4147 = vrot.slane %v4142, 4
      %v4149 = vshrl.u32 %v3995, 16
      %v4151 = vrot.slane %v4149, 7
      %v4152 = vshll.u32 %v3995, 16
      %v4154 = vor.u32 %v4151, %v4152
      %v4155 = vsel %vm4031, %v4147, %v4154
      %v4156 = vrot.slane %v4151, 4
      %v4158 = vshrl.u32 %v3996, 16
      %v4160 = vrot.slane %v4158, 7
      %v4161 = vshll.u32 %v3996, 16
      %v4163 = vor.u32 %v4160, %v4161
      %v4164 = vsel %vm4031, %v4156, %v4163
      %v4165 = vrot.slane %v4160, 4
      %v4167 = vshrl.u32 %v3997, 16
      %v4169 = vrot.slane %v4167, 7
      %v4170 = vshll.u32 %v3997, 16
      %v4172 = vor.u32 %v4169, %v4170
      %v4173 = vsel %vm4031, %v4165, %v4172
      %v4174 = vrot.slane %v4169, 4
      %v4176 = vshrl.u32 %v3998, 16
      %v4178 = vrot.slane %v4176, 7
      %v4179 = vshll.u32 %v3998, 16
      %v4181 = vor.u32 %v4178, %v4179
      %v4182 = vsel %vm4031, %v4174, %v4181
      %v4183 = vrot.slane %v4178, 4
      %v4185 = vshrl.u32 %v3999, 16
      %v4187 = vrot.slane %v4185, 7
      %v4188 = vshll.u32 %v3999, 16
      %v4190 = vor.u32 %v4187, %v4188
      %v4191 = vsel %vm4031, %v4183, %v4190
      %v4192 = vrot.slane %v4187, 4
      %v4194 = vshrl.u32 %v4000, 16
      %v4196 = vrot.slane %v4194, 7
      %v4197 = vshll.u32 %v4000, 16
      %v4199 = vor.u32 %v4196, %v4197
      %v4200 = vsel %vm4031, %v4192, %v4199
      %v4201 = vrot.slane %v4196, 4
      %v4203 = vshrl.u32 %v4001, 16
      %v4205 = vrot.slane %v4203, 7
      %v4206 = vshll.u32 %v4001, 16
      %v4208 = vor.u32 %v4205, %v4206
      %v4209 = vsel %vm4031, %v4201, %v4208
      %v4210 = vrot.slane %v4205, 4
      %v4212 = vshrl.u32 %v4002, 16
      %v4214 = vrot.slane %v4212, 7
      %v4215 = vshll.u32 %v4002, 16
      %v4217 = vor.u32 %v4214, %v4215
      %v4218 = vsel %vm4031, %v4210, %v4217
      %v4219 = vrot.slane %v4214, 4
      %v4221 = vshrl.u32 %v4003, 16
      %v4223 = vrot.slane %v4221, 7
      %v4224 = vshll.u32 %v4003, 16
      %v4226 = vor.u32 %v4223, %v4224
      %v4227 = vsel %vm4031, %v4219, %v4226
      %v4228 = vrot.slane %v4223, 4
      %v4230 = vshrl.u32 %v4004, 16
      %v4232 = vrot.slane %v4230, 7
      %v4233 = vshll.u32 %v4004, 16
      %v4235 = vor.u32 %v4232, %v4233
      %v4236 = vsel %vm4031, %v4228, %v4235
      %v4237 = vrot.slane %v4232, 4
      %v4239 = vshrl.u32 %v4005, 16
      %v4241 = vrot.slane %v4239, 7
      %v4242 = vshll.u32 %v4005, 16
      %v4244 = vor.u32 %v4241, %v4242
      %v4245 = vsel %vm4031, %v4237, %v4244
      %v4246 = vrot.slane %v4241, 4
      %v4248 = vshrl.u32 %v4006, 16
      %v4250 = vrot.slane %v4248, 7
      %v4251 = vshll.u32 %v4006, 16
      %v4253 = vor.u32 %v4250, %v4251
      %v4254 = vsel %vm4031, %v4246, %v4253
      %v4255 = vrot.slane %v4250, 4
      %v4257 = vshrl.u32 %v4007, 16
      %v4259 = vrot.slane %v4257, 7
      %v4260 = vshll.u32 %v4007, 16
      %v4262 = vor.u32 %v4259, %v4260
      %v4263 = vsel %vm4031, %v4255, %v4262
      %v4264 = vrot.slane %v4259, 4
      %v4266 = vshrl.u32 %v4008, 16
      %v4268 = vrot.slane %v4266, 7
      %v4269 = vshll.u32 %v4008, 16
      %v4271 = vor.u32 %v4268, %v4269
      %v4272 = vsel %vm4031, %v4264, %v4271
      %v4273 = vrot.slane %v4268, 4
      %v4275 = vshrl.u32 %v4009, 16
      %v4277 = vrot.slane %v4275, 7
      %v4278 = vshll.u32 %v4009, 16
      %v4280 = vor.u32 %v4277, %v4278
      %v4281 = vsel %vm4031, %v4273, %v4280
      %v4282 = vrot.slane %v4277, 4
      %v4284 = vshrl.u32 %v4010, 16
      %v4286 = vrot.slane %v4284, 7
      %v4287 = vshll.u32 %v4010, 16
      %v4289 = vor.u32 %v4286, %v4287
      %v4290 = vsel %vm4031, %v4282, %v4289
      %v4291 = vrot.slane %v4286, 4
      %v4293 = vshrl.u32 %v4011, 16
      %v4295 = vrot.slane %v4293, 7
      %v4296 = vshll.u32 %v4011, 16
      %v4298 = vor.u32 %v4295, %v4296
      %v4299 = vsel %vm4031, %v4291, %v4298
      %v4300 = vrot.slane %v4295, 4
      %v4302 = vshrl.u32 %v4012, 16
      %v4304 = vrot.slane %v4302, 7
      %v4305 = vshll.u32 %v4012, 16
      %v4307 = vor.u32 %v4304, %v4305
      %v4308 = vsel %vm4031, %v4300, %v4307
      %v4309 = vrot.slane %v4304, 4
      %v4311 = vshrl.u32 %v4013, 16
      %v4313 = vrot.slane %v4311, 7
      %v4314 = vshll.u32 %v4013, 16
      %v4316 = vor.u32 %v4313, %v4314
      %v4317 = vsel %vm4031, %v4309, %v4316
      %v4318 = vrot.slane %v4313, 4
      %v4320 = vshrl.u32 %v4014, 16
      %v4322 = vrot.slane %v4320, 7
      %v4323 = vshll.u32 %v4014, 16
      %v4325 = vor.u32 %v4322, %v4323
      %v4326 = vsel %vm4031, %v4318, %v4325
      %v4327 = vrot.slane %v4322, 4
      %v4329 = vshrl.u32 %v4015, 16
      %v4331 = vrot.slane %v4329, 7
      %v4332 = vshll.u32 %v4015, 16
      %v4334 = vor.u32 %v4331, %v4332
      %v4335 = vsel %vm4031, %v4327, %v4334
      %v4336 = vrot.slane %v4331, 4
      %v4338 = vshrl.u32 %v4016, 16
      %v4340 = vrot.slane %v4338, 7
      %v4341 = vshll.u32 %v4016, 16
      %v4343 = vor.u32 %v4340, %v4341
      %v4344 = vsel %vm4031, %v4336, %v4343
      %v4345 = vrot.slane %v4340, 4
      %v4347 = vshrl.u32 %v4017, 16
      %v4349 = vrot.slane %v4347, 7
      %v4350 = vshll.u32 %v4017, 16
      %v4352 = vor.u32 %v4349, %v4350
      %v4353 = vsel %vm4031, %v4345, %v4352
      %v4354 = vrot.slane %v4349, 4
      %v4356 = vshrl.u32 %v4018, 16
      %v4358 = vrot.slane %v4356, 7
      %v4359 = vshll.u32 %v4018, 16
      %v4361 = vor.u32 %v4358, %v4359
      %v4362 = vsel %vm4031, %v4354, %v4361
      %v4363 = vrot.slane %v4358, 4
      %v4365 = vshrl.u32 %v4019, 16
      %v4367 = vrot.slane %v4365, 7
      %v4368 = vshll.u32 %v4019, 16
      %v4370 = vor.u32 %v4367, %v4368
      %v4371 = vsel %vm4031, %v4363, %v4370
      %v4372 = vrot.slane %v4367, 4
      %v4374 = vshrl.u32 %v4020, 16
      %v4376 = vrot.slane %v4374, 7
      %v4377 = vshll.u32 %v4020, 16
      %v4379 = vor.u32 %v4376, %v4377
      %v4380 = vsel %vm4031, %v4372, %v4379
      %v4381 = vrot.slane %v4376, 4
      %v4383 = vshrl.u32 %v4021, 16
      %v4385 = vrot.slane %v4383, 7
      %v4386 = vshll.u32 %v4021, 16
      %v4388 = vor.u32 %v4385, %v4386
      %v4389 = vsel %vm4031, %v4381, %v4388
      %v4390 = vrot.slane %v4385, 4
      %v4392 = vshrl.u32 %v4022, 16
      %v4394 = vrot.slane %v4392, 7
      %v4395 = vshll.u32 %v4022, 16
      %v4397 = vor.u32 %v4394, %v4395
      %v4398 = vsel %vm4031, %v4390, %v4397
      %v4399 = vrot.slane %v4394, 4
      %v4401 = vshrl.u32 %v4023, 16
      %v4403 = vrot.slane %v4401, 7
      %v4404 = vshll.u32 %v4023, 16
      %v4406 = vor.u32 %v4403, %v4404
      %v4407 = vsel %vm4031, %v4399, %v4406
      %v4408 = vrot.slane %v4403, 4
      %v4410 = vshrl.u32 %v4024, 16
      %v4412 = vrot.slane %v4410, 7
      %v4413 = vshll.u32 %v4024, 16
      %v4415 = vor.u32 %v4412, %v4413
      %v4416 = vsel %vm4031, %v4408, %v4415
      %v4417 = vrot.slane %v4412, 4
      %v4419 = vshrl.u32 %v4025, 16
      %v4421 = vrot.slane %v4419, 7
      %v4422 = vshll.u32 %v4025, 16
      %v4424 = vor.u32 %v4421, %v4422
      %v4425 = vsel %vm4031, %v4417, %v4424
      %v4426 = vrot.slane %v4421, 4
      %v4428 = vshrl.u32 %v4026, 16
      %v4430 = vrot.slane %v4428, 7
      %v4431 = vshll.u32 %v4026, 16
      %v4433 = vor.u32 %v4430, %v4431
      %v4434 = vsel %vm4031, %v4426, %v4433
      %v4435 = vrot.slane %v4430, 4
      %v4437 = vshrl.u32 %v4027, 16
      %v4439 = vrot.slane %v4437, 7
      %v4440 = vshll.u32 %v4027, 16
      %v4442 = vor.u32 %v4439, %v4440
      %v4443 = vsel %vm4031, %v4435, %v4442
      %v4444 = vrot.slane %v4439, 4
      %v4446 = vshrl.u32 %v4028, 16
      %v4448 = vrot.slane %v4446, 7
      %v4449 = vshll.u32 %v4028, 16
      %v4451 = vor.u32 %v4448, %v4449
      %v4452 = vsel %vm4031, %v4444, %v4451
      %v4453 = vrot.slane %v4448, 4
      %v4455 = vshrl.u32 %v4029, 16
      %v4457 = vrot.slane %v4455, 7
      %v4458 = vshll.u32 %v4029, 16
      %v4460 = vor.u32 %v4457, %v4458
      %v4461 = vsel %vm4031, %v4453, %v4460
      %v4462 = vrot.slane %v4457, 4
      %v4512 = vld [vmem:[#allocation3 + $0xc] sm:$0xf]
      %v4513 = vsel %vm3879, %v4038, %v4512
      %4514 = vst [vmem:[#allocation3 + $0xc] sm:$0xf] %v4513
      %4515 = vst.msk [vmem:[#allocation3 + $0x10] sm:$0xf] %vm226, %v4047
      %4516 = vst.msk [vmem:[#allocation3 + $0x14] sm:$0xf] %vm226, %v4056
      %4517 = vst.msk [vmem:[#allocation3 + $0x18] sm:$0xf] %vm226, %v4065
      %4518 = vst.msk [vmem:[#allocation3 + $0x1c] sm:$0xf] %vm226, %v4074
      %4519 = vst.msk [vmem:[#allocation3 + $0x20] sm:$0xf] %vm226, %v4083
      %4520 = vst.msk [vmem:[#allocation3 + $0x24] sm:$0xf] %vm226, %v4092
      %4521 = vst.msk [vmem:[#allocation3 + $0x28] sm:$0xf] %vm226, %v4101
      %4522 = vst.msk [vmem:[#allocation3 + $0x2c] sm:$0xf] %vm226, %v4110
      %4523 = vst.msk [vmem:[#allocation3 + $0x30] sm:$0xf] %vm226, %v4119
      %4524 = vst.msk [vmem:[#allocation3 + $0x34] sm:$0xf] %vm226, %v4128
      %4525 = vst.msk [vmem:[#allocation3 + $0x38] sm:$0xf] %vm226, %v4137
      %4526 = vst.msk [vmem:[#allocation3 + $0x3c] sm:$0xf] %vm226, %v4146
      %4527 = vst.msk [vmem:[#allocation3 + $0x40] sm:$0xf] %vm226, %v4155
      %4528 = vst.msk [vmem:[#allocation3 + $0x44] sm:$0xf] %vm226, %v4164
      %4529 = vst.msk [vmem:[#allocation3 + $0x48] sm:$0xf] %vm226, %v4173
      %4530 = vst.msk [vmem:[#allocation3 + $0x4c] sm:$0xf] %vm226, %v4182
      %4531 = vst.msk [vmem:[#allocation3 + $0x50] sm:$0xf] %vm226, %v4191
      %4532 = vst.msk [vmem:[#allocation3 + $0x54] sm:$0xf] %vm226, %v4200
      %4533 = vst.msk [vmem:[#allocation3 + $0x58] sm:$0xf] %vm226, %v4209
      %4534 = vst.msk [vmem:[#allocation3 + $0x5c] sm:$0xf] %vm226, %v4218
      %4535 = vst.msk [vmem:[#allocation3 + $0x60] sm:$0xf] %vm226, %v4227
      %4536 = vst.msk [vmem:[#allocation3 + $0x64] sm:$0xf] %vm226, %v4236
      %4537 = vst.msk [vmem:[#allocation3 + $0x68] sm:$0xf] %vm226, %v4245
      %4538 = vst.msk [vmem:[#allocation3 + $0x6c] sm:$0xf] %vm226, %v4254
      %4539 = vst.msk [vmem:[#allocation3 + $0x70] sm:$0xf] %vm226, %v4263
      %4540 = vst.msk [vmem:[#allocation3 + $0x74] sm:$0xf] %vm226, %v4272
      %4541 = vst.msk [vmem:[#allocation3 + $0x78] sm:$0xf] %vm226, %v4281
      %4542 = vst.msk [vmem:[#allocation3 + $0x7c] sm:$0xf] %vm226, %v4290
      %4543 = vst.msk [vmem:[#allocation3 + $0x80] sm:$0xf] %vm226, %v4299
      %4544 = vst.msk [vmem:[#allocation3 + $0x84] sm:$0xf] %vm226, %v4308
      %4545 = vst.msk [vmem:[#allocation3 + $0x88] sm:$0xf] %vm226, %v4317
      %4546 = vst.msk [vmem:[#allocation3 + $0x8c] sm:$0xf] %vm226, %v4326
      %4547 = vst.msk [vmem:[#allocation3 + $0x90] sm:$0xf] %vm226, %v4335
      %4548 = vst.msk [vmem:[#allocation3 + $0x94] sm:$0xf] %vm226, %v4344
      %4549 = vst.msk [vmem:[#allocation3 + $0x98] sm:$0xf] %vm226, %v4353
      %4550 = vst.msk [vmem:[#allocation3 + $0x9c] sm:$0xf] %vm226, %v4362
      %4551 = vst.msk [vmem:[#allocation3 + $0xa0] sm:$0xf] %vm226, %v4371
      %4552 = vst.msk [vmem:[#allocation3 + $0xa4] sm:$0xf] %vm226, %v4380
      %4553 = vst.msk [vmem:[#allocation3 + $0xa8] sm:$0xf] %vm226, %v4389
      %4554 = vst.msk [vmem:[#allocation3 + $0xac] sm:$0xf] %vm226, %v4398
      %4555 = vst.msk [vmem:[#allocation3 + $0xb0] sm:$0xf] %vm226, %v4407
      %4556 = vst.msk [vmem:[#allocation3 + $0xb4] sm:$0xf] %vm226, %v4416
      %4557 = vst.msk [vmem:[#allocation3 + $0xb8] sm:$0xf] %vm226, %v4425
      %4558 = vst.msk [vmem:[#allocation3 + $0xbc] sm:$0xf] %vm226, %v4434
      %4559 = vst.msk [vmem:[#allocation3 + $0xc0] sm:$0xf] %vm226, %v4443
      %4560 = vst.msk [vmem:[#allocation3 + $0xc4] sm:$0xf] %vm226, %v4452
      %4561 = vst.msk [vmem:[#allocation3 + $0xc8] sm:$0xf] %vm226, %v4461
      %v4562 = vld [vmem:[#allocation3 + $0xcc] sm:$0x1]
      %v4563 = vsel %vm3873, %v4462, %v4562
      %4564 = vst [vmem:[#allocation3 + $0xcc] sm:$0x1] %v4563
      %v4565 = vld [vmem:[#allocation3] sm:$0xf]
      %v4566 = vld [vmem:[#allocation3 + $0x4] sm:$0xf]
      %v4567 = vld [vmem:[#allocation3 + $0x8] sm:$0xf]
      %v4568 = vld [vmem:[#allocation3 + $0xc] sm:$0xf]
      %v4569 = vld [vmem:[#allocation3 + $0x10] sm:$0xf]
      %v4570 = vld [vmem:[#allocation3 + $0x14] sm:$0xf]
      %v4571 = vld [vmem:[#allocation3 + $0x18] sm:$0xf]
      %v4572 = vld [vmem:[#allocation3 + $0x1c] sm:$0xf]
      %v4573 = vld [vmem:[#allocation3 + $0x20] sm:$0xf]
      %v4574 = vld [vmem:[#allocation3 + $0x24] sm:$0xf]
      %v4575 = vld [vmem:[#allocation3 + $0x28] sm:$0xf]
      %v4576 = vld [vmem:[#allocation3 + $0x2c] sm:$0xf]
      %v4577 = vld [vmem:[#allocation3 + $0x30] sm:$0xf]
      %v4578 = vld [vmem:[#allocation3 + $0x34] sm:$0xf]
      %v4579 = vld [vmem:[#allocation3 + $0x38] sm:$0xf]
      %v4580 = vld [vmem:[#allocation3 + $0x3c] sm:$0xf]
      %v4581 = vld [vmem:[#allocation3 + $0x40] sm:$0xf]
      %v4582 = vld [vmem:[#allocation3 + $0x44] sm:$0xf]
      %v4583 = vld [vmem:[#allocation3 + $0x48] sm:$0xf]
      %v4584 = vld [vmem:[#allocation3 + $0x4c] sm:$0xf]
      %v4585 = vld [vmem:[#allocation3 + $0x50] sm:$0xf]
      %v4586 = vld [vmem:[#allocation3 + $0x54] sm:$0xf]
      %v4587 = vld [vmem:[#allocation3 + $0x58] sm:$0xf]
      %v4588 = vld [vmem:[#allocation3 + $0x5c] sm:$0xf]
      %v4589 = vld [vmem:[#allocation3 + $0x60] sm:$0xf]
      %v4590 = vld [vmem:[#allocation3 + $0x64] sm:$0xf]
      %v4591 = vld [vmem:[#allocation3 + $0x68] sm:$0xf]
      %v4592 = vld [vmem:[#allocation3 + $0x6c] sm:$0xf]
      %v4593 = vld [vmem:[#allocation3 + $0x70] sm:$0xf]
      %v4594 = vld [vmem:[#allocation3 + $0x74] sm:$0xf]
      %v4595 = vld [vmem:[#allocation3 + $0x78] sm:$0xf]
      %v4596 = vld [vmem:[#allocation3 + $0x7c] sm:$0xf]
      %v4597 = vld [vmem:[#allocation3 + $0x80] sm:$0xf]
      %v4598 = vld [vmem:[#allocation3 + $0x84] sm:$0xf]
      %v4599 = vld [vmem:[#allocation3 + $0x88] sm:$0xf]
      %v4600 = vld [vmem:[#allocation3 + $0x8c] sm:$0xf]
      %v4601 = vld [vmem:[#allocation3 + $0x90] sm:$0xf]
      %v4602 = vld [vmem:[#allocation3 + $0x94] sm:$0xf]
      %v4603 = vld [vmem:[#allocation3 + $0x98] sm:$0xf]
      %v4604 = vld [vmem:[#allocation3 + $0x9c] sm:$0xf]
      %v4605 = vld [vmem:[#allocation3 + $0xa0] sm:$0xf]
      %v4606 = vld [vmem:[#allocation3 + $0xa4] sm:$0xf]
      %v4607 = vld [vmem:[#allocation3 + $0xa8] sm:$0xf]
      %v4608 = vld [vmem:[#allocation3 + $0xac] sm:$0xf]
      %v4609 = vld [vmem:[#allocation3 + $0xb0] sm:$0xf]
      %v4610 = vld [vmem:[#allocation3 + $0xb4] sm:$0xf]
      %v4611 = vld [vmem:[#allocation3 + $0xb8] sm:$0xf]
      %v4612 = vld [vmem:[#allocation3 + $0xbc] sm:$0xf]
      %v4613 = vld [vmem:[#allocation3 + $0xc0] sm:$0xf]
      %v4614 = vld [vmem:[%s2] sm:$0x3]
      %v4615 = vld [vmem:[#allocation3 + $0xc4] sm:$0xf]
      %v4616 = vld [vmem:[#allocation3 + $0xc8] sm:$0xf]
      %v4617 = vld [vmem:[#allocation3 + $0xcc] sm:$0xf]
      %s4618 = scalar_lea.vmem %s2, 2
      %v4619 = vld [vmem:[%s4618] sm:$0x3]
      %v4669 = vunpack.c.l.b16 %v4568
      %v4670 = vunpack.c.l.b16 %v4569
      %v4671 = vunpack.c.l.b16 %v4570
      %v4672 = vunpack.c.l.b16 %v4571
      %v4673 = vunpack.c.l.b16 %v4572
      %v4674 = vunpack.c.l.b16 %v4573
      %v4675 = vunpack.c.l.b16 %v4574
      %v4676 = vunpack.c.l.b16 %v4575
      %v4677 = vunpack.c.l.b16 %v4576
      %v4678 = vunpack.c.l.b16 %v4577
      %v4679 = vunpack.c.l.b16 %v4578
      %v4680 = vunpack.c.l.b16 %v4579
      %v4681 = vunpack.c.l.b16 %v4580
      %v4682 = vunpack.c.l.b16 %v4581
      %v4683 = vunpack.c.l.b16 %v4582
      %v4684 = vunpack.c.l.b16 %v4583
      %v4685 = vunpack.c.l.b16 %v4584
      %v4686 = vunpack.c.l.b16 %v4585
      %v4687 = vunpack.c.l.b16 %v4586
      %v4688 = vunpack.c.l.b16 %v4587
      %v4689 = vunpack.c.l.b16 %v4588
      %v4690 = vunpack.c.l.b16 %v4589
      %v4691 = vunpack.c.l.b16 %v4590
      %v4692 = vunpack.c.l.b16 %v4591
      %v4693 = vunpack.c.l.b16 %v4592
      %v4694 = vunpack.c.l.b16 %v4593
      %v4695 = vunpack.c.l.b16 %v4594
      %v4696 = vunpack.c.l.b16 %v4595
      %v4697 = vunpack.c.l.b16 %v4596
      %v4698 = vunpack.c.l.b16 %v4597
      %v4699 = vunpack.c.l.b16 %v4598
      %v4700 = vunpack.c.l.b16 %v4599
      %v4701 = vunpack.c.l.b16 %v4600
      %v4702 = vunpack.c.l.b16 %v4601
      %v4703 = vunpack.c.l.b16 %v4602
      %v4704 = vunpack.c.l.b16 %v4603
      %v4705 = vunpack.c.l.b16 %v4604
      %v4706 = vunpack.c.l.b16 %v4605
      %v4707 = vunpack.c.l.b16 %v4606
      %v4708 = vunpack.c.l.b16 %v4607
      %v4709 = vunpack.c.l.b16 %v4608
      %v4710 = vunpack.c.l.b16 %v4609
      %v4711 = vunpack.c.l.b16 %v4610
      %v4712 = vunpack.c.l.b16 %v4611
      %v4713 = vunpack.c.l.b16 %v4612
      %v4714 = vunpack.c.l.b16 %v4613
      %v4715 = vunpack.c.l.b16 %v4615
      %v4716 = vunpack.c.l.b16 %v4616
      %v4717 = vunpack.c.l.b16 %v4617
      %v4718 = vpack.c.b16 %v4670, %v4669
      %v4719 = vpack.c.b16 %v4672, %v4671
      %v4720 = vpack.c.b16 %v4674, %v4673
      %v4721 = vpack.c.b16 %v4676, %v4675
      %v4722 = vpack.c.b16 %v4678, %v4677
      %v4723 = vpack.c.b16 %v4680, %v4679
      %v4724 = vpack.c.b16 %v4682, %v4681
      %v4725 = vpack.c.b16 %v4684, %v4683
      %v4726 = vpack.c.b16 %v4686, %v4685
      %v4727 = vpack.c.b16 %v4688, %v4687
      %v4728 = vpack.c.b16 %v4690, %v4689
      %v4729 = vpack.c.b16 %v4692, %v4691
      %v4730 = vpack.c.b16 %v4694, %v4693
      %v4731 = vpack.c.b16 %v4696, %v4695
      %v4732 = vpack.c.b16 %v4698, %v4697
      %v4733 = vpack.c.b16 %v4700, %v4699
      %v4734 = vpack.c.b16 %v4702, %v4701
      %v4735 = vpack.c.b16 %v4704, %v4703
      %v4736 = vpack.c.b16 %v4706, %v4705
      %v4737 = vpack.c.b16 %v4708, %v4707
      %v4738 = vpack.c.b16 %v4710, %v4709
      %v4739 = vpack.c.b16 %v4712, %v4711
      %v4740 = vpack.c.b16 %v4714, %v4713
      %v4741 = vpack.c.b16 %v4716, %v4715
      %v4742 = vpack.c.b16 %v4717, %v4717
      %v4744 = vsel %vm942, %v4718, 0
      %v4747 = vsel %vm942, %v4719, 0
      %v4750 = vsel %vm942, %v4720, 0
      %v4753 = vsel %vm942, %v4721, 0
      %v4756 = vsel %vm942, %v4722, 0
      %v4759 = vsel %vm942, %v4723, 0
      %v4762 = vsel %vm942, %v4724, 0
      %v4765 = vsel %vm942, %v4725, 0
      %v4768 = vsel %vm942, %v4726, 0
      %v4771 = vsel %vm942, %v4727, 0
      %v4774 = vsel %vm942, %v4728, 0
      %v4777 = vsel %vm942, %v4729, 0
      %v4780 = vsel %vm942, %v4730, 0
      %v4783 = vsel %vm942, %v4731, 0
      %v4786 = vsel %vm942, %v4732, 0
      %v4789 = vsel %vm942, %v4733, 0
      %v4792 = vsel %vm942, %v4734, 0
      %v4795 = vsel %vm942, %v4735, 0
      %v4798 = vsel %vm942, %v4736, 0
      %v4801 = vsel %vm942, %v4737, 0
      %v4804 = vsel %vm942, %v4738, 0
      %v4807 = vsel %vm942, %v4739, 0
      %v4810 = vsel %vm942, %v4740, 0
      %v4813 = vsel %vm942, %v4741, 0
      %v4816 = vsel %vm942, %v4742, 0
      %v4819 = vsel %vm1018, %v4619, 0
      %4821 = vmatprep.subr.bf16.mxu0 0
      %4822 = vmatpush1.bf16.msra.mxu0 0
      %4823 = vmatprep.subr.bf16.mxu0 0
      %4824 = vmatpush1.bf16.msra.mxu0 0
      %4825 = vmatprep.subr.bf16.mxu0 0
      %4826 = vmatpush1.bf16.msra.mxu0 0
      %4827 = vmatprep.subr.bf16.mxu0 0
      %4828 = vmatpush1.bf16.msra.mxu0 0
      %4829 = vmatprep.subr.bf16.mxu0 0
      %4830 = vmatpush1.bf16.msra.mxu0 0
      %4831 = vmatprep.subr.bf16.mxu0 0
      %4832 = vmatpush1.bf16.msra.mxu0 0
      %4833 = vmatprep.subr.bf16.mxu0 0
      %4834 = vmatpush1.bf16.msra.mxu0 0
      %4835 = vmatprep.subr.bf16.mxu0 0
      %4836 = vmatpush1.bf16.msra.mxu0 %v4819
      %4837 = vmatprep.subr.bf16.mxu0 0
      %4838 = vmatpush2.bf16.msra.mxu0 0
      %4839 = vmatprep.subr.bf16.mxu0 0
      %4840 = vmatpush2.bf16.msra.mxu0 0
      %4841 = vmatprep.subr.bf16.mxu0 0
      %4842 = vmatpush2.bf16.msra.mxu0 0
      %4843 = vmatprep.subr.bf16.mxu0 0
      %4844 = vmatpush2.bf16.msra.mxu0 0
      %4845 = vmatprep.subr.bf16.mxu0 0
      %4846 = vmatpush2.bf16.msra.mxu0 0
      %4847 = vmatprep.subr.bf16.mxu0 0
      %4848 = vmatpush2.bf16.msra.mxu0 0
      %4849 = vmatprep.subr.bf16.mxu0 0
      %4850 = vmatpush2.bf16.msra.mxu0 0
      %4851 = vmatprep.subr.bf16.mxu0 0
      %4852 = vmatpush2.bf16.msra.mxu0 0
      %4853 = vmatprep.mubr.bf16.mxu0 0
      %4854 = vmatmul.mubr.bf16.gmra.mxu0 %v4744
      %v4855 = vpop.f32.mrf.mxu0
      %v4856 = vadd.f32 0.0, %v4855
      %v4857 = vpop.f32.mrf.mxu0
      %v4858 = vpop.f32.mrf.mxu0
      %v4859 = vadd.f32 0.0, %v4858
      %v4860 = vpop.f32.mrf.mxu0
      %4861 = vmatprep.mubr.bf16.mxu0 0
      %4862 = vmatmul.mubr.bf16.gmra.mxu0 %v4747
      %v4863 = vpop.f32.mrf.mxu0
      %v4864 = vadd.f32 0.0, %v4863
      %v4865 = vpop.f32.mrf.mxu0
      %v4866 = vpop.f32.mrf.mxu0
      %v4867 = vadd.f32 0.0, %v4866
      %v4868 = vpop.f32.mrf.mxu0
      %4869 = vmatprep.mubr.bf16.mxu0 0
      %4870 = vmatmul.mubr.bf16.gmra.mxu0 %v4750
      %v4871 = vpop.f32.mrf.mxu0
      %v4872 = vadd.f32 0.0, %v4871
      %v4873 = vpop.f32.mrf.mxu0
      %v4874 = vpop.f32.mrf.mxu0
      %v4875 = vadd.f32 0.0, %v4874
      %v4876 = vpop.f32.mrf.mxu0
      %4877 = vmatprep.mubr.bf16.mxu0 0
      %4878 = vmatmul.mubr.bf16.gmra.mxu0 %v4753
      %v4879 = vpop.f32.mrf.mxu0
      %v4880 = vadd.f32 0.0, %v4879
      %v4881 = vpop.f32.mrf.mxu0
      %v4882 = vpop.f32.mrf.mxu0
      %v4883 = vadd.f32 0.0, %v4882
      %v4884 = vpop.f32.mrf.mxu0
      %4885 = vmatprep.mubr.bf16.mxu0 0
      %4886 = vmatmul.mubr.bf16.gmra.mxu0 %v4756
      %v4887 = vpop.f32.mrf.mxu0
      %v4888 = vadd.f32 0.0, %v4887
      %v4889 = vpop.f32.mrf.mxu0
      %v4890 = vpop.f32.mrf.mxu0
      %v4891 = vadd.f32 0.0, %v4890
      %v4892 = vpop.f32.mrf.mxu0
      %4893 = vmatprep.mubr.bf16.mxu0 0
      %4894 = vmatmul.mubr.bf16.gmra.mxu0 %v4759
      %v4895 = vpop.f32.mrf.mxu0
      %v4896 = vadd.f32 0.0, %v4895
      %v4897 = vpop.f32.mrf.mxu0
      %v4898 = vpop.f32.mrf.mxu0
      %v4899 = vadd.f32 0.0, %v4898
      %v4900 = vpop.f32.mrf.mxu0
      %4901 = vmatprep.mubr.bf16.mxu0 0
      %4902 = vmatmul.mubr.bf16.gmra.mxu0 %v4762
      %v4903 = vpop.f32.mrf.mxu0
      %v4904 = vadd.f32 0.0, %v4903
      %v4905 = vpop.f32.mrf.mxu0
      %v4906 = vpop.f32.mrf.mxu0
      %v4907 = vadd.f32 0.0, %v4906
      %v4908 = vpop.f32.mrf.mxu0
      %4909 = vmatprep.mubr.bf16.mxu0 0
      %4910 = vmatmul.mubr.bf16.gmra.mxu0 %v4765
      %v4911 = vpop.f32.mrf.mxu0
      %v4912 = vadd.f32 0.0, %v4911
      %v4913 = vpop.f32.mrf.mxu0
      %v4914 = vpop.f32.mrf.mxu0
      %v4915 = vadd.f32 0.0, %v4914
      %v4916 = vpop.f32.mrf.mxu0
      %4917 = vmatprep.mubr.bf16.mxu0 0
      %4918 = vmatmul.mubr.bf16.gmra.mxu0 %v4768
      %v4919 = vpop.f32.mrf.mxu0
      %v4920 = vadd.f32 0.0, %v4919
      %v4921 = vpop.f32.mrf.mxu0
      %v4922 = vpop.f32.mrf.mxu0
      %v4923 = vadd.f32 0.0, %v4922
      %v4924 = vpop.f32.mrf.mxu0
      %4925 = vmatprep.mubr.bf16.mxu0 0
      %4926 = vmatmul.mubr.bf16.gmra.mxu0 %v4771
      %v4927 = vpop.f32.mrf.mxu0
      %v4928 = vadd.f32 0.0, %v4927
      %v4929 = vpop.f32.mrf.mxu0
      %v4930 = vpop.f32.mrf.mxu0
      %v4931 = vadd.f32 0.0, %v4930
      %v4932 = vpop.f32.mrf.mxu0
      %4933 = vmatprep.mubr.bf16.mxu0 0
      %4934 = vmatmul.mubr.bf16.gmra.mxu0 %v4774
      %v4935 = vpop.f32.mrf.mxu0
      %v4936 = vadd.f32 0.0, %v4935
      %v4937 = vpop.f32.mrf.mxu0
      %v4938 = vpop.f32.mrf.mxu0
      %v4939 = vadd.f32 0.0, %v4938
      %v4940 = vpop.f32.mrf.mxu0
      %4941 = vmatprep.mubr.bf16.mxu0 0
      %4942 = vmatmul.mubr.bf16.gmra.mxu0 %v4777
      %v4943 = vpop.f32.mrf.mxu0
      %v4944 = vadd.f32 0.0, %v4943
      %v4945 = vpop.f32.mrf.mxu0
      %v4946 = vpop.f32.mrf.mxu0
      %v4947 = vadd.f32 0.0, %v4946
      %v4948 = vpop.f32.mrf.mxu0
      %4949 = vmatprep.mubr.bf16.mxu0 0
      %4950 = vmatmul.mubr.bf16.gmra.mxu0 %v4780
      %v4951 = vpop.f32.mrf.mxu0
      %v4952 = vadd.f32 0.0, %v4951
      %v4953 = vpop.f32.mrf.mxu0
      %v4954 = vpop.f32.mrf.mxu0
      %v4955 = vadd.f32 0.0, %v4954
      %v4956 = vpop.f32.mrf.mxu0
      %4957 = vmatprep.mubr.bf16.mxu0 0
      %4958 = vmatmul.mubr.bf16.gmra.mxu0 %v4783
      %v4959 = vpop.f32.mrf.mxu0
      %v4960 = vadd.f32 0.0, %v4959
      %v4961 = vpop.f32.mrf.mxu0
      %v4962 = vpop.f32.mrf.mxu0
      %v4963 = vadd.f32 0.0, %v4962
      %v4964 = vpop.f32.mrf.mxu0
      %4965 = vmatprep.mubr.bf16.mxu0 0
      %4966 = vmatmul.mubr.bf16.gmra.mxu0 %v4786
      %v4967 = vpop.f32.mrf.mxu0
      %v4968 = vadd.f32 0.0, %v4967
      %v4969 = vpop.f32.mrf.mxu0
      %v4970 = vpop.f32.mrf.mxu0
      %v4971 = vadd.f32 0.0, %v4970
      %v4972 = vpop.f32.mrf.mxu0
      %4973 = vmatprep.mubr.bf16.mxu0 0
      %4974 = vmatmul.mubr.bf16.gmra.mxu0 %v4789
      %v4975 = vpop.f32.mrf.mxu0
      %v4976 = vadd.f32 0.0, %v4975
      %v4977 = vpop.f32.mrf.mxu0
      %v4978 = vpop.f32.mrf.mxu0
      %v4979 = vadd.f32 0.0, %v4978
      %v4980 = vpop.f32.mrf.mxu0
      %4981 = vmatprep.mubr.bf16.mxu0 0
      %4982 = vmatmul.mubr.bf16.gmra.mxu0 %v4792
      %v4983 = vpop.f32.mrf.mxu0
      %v4984 = vadd.f32 0.0, %v4983
      %v4985 = vpop.f32.mrf.mxu0
      %v4986 = vpop.f32.mrf.mxu0
      %v4987 = vadd.f32 0.0, %v4986
      %v4988 = vpop.f32.mrf.mxu0
      %4989 = vmatprep.mubr.bf16.mxu0 0
      %4990 = vmatmul.mubr.bf16.gmra.mxu0 %v4795
      %v4991 = vpop.f32.mrf.mxu0
      %v4992 = vadd.f32 0.0, %v4991
      %v4993 = vpop.f32.mrf.mxu0
      %v4994 = vpop.f32.mrf.mxu0
      %v4995 = vadd.f32 0.0, %v4994
      %v4996 = vpop.f32.mrf.mxu0
      %4997 = vmatprep.mubr.bf16.mxu0 0
      %4998 = vmatmul.mubr.bf16.gmra.mxu0 %v4798
      %v4999 = vpop.f32.mrf.mxu0
      %v5000 = vadd.f32 0.0, %v4999
      %v5001 = vpop.f32.mrf.mxu0
      %v5002 = vpop.f32.mrf.mxu0
      %v5003 = vadd.f32 0.0, %v5002
      %v5004 = vpop.f32.mrf.mxu0
      %5005 = vmatprep.mubr.bf16.mxu0 0
      %5006 = vmatmul.mubr.bf16.gmra.mxu0 %v4801
      %v5007 = vpop.f32.mrf.mxu0
      %v5008 = vadd.f32 0.0, %v5007
      %v5009 = vpop.f32.mrf.mxu0
      %v5010 = vpop.f32.mrf.mxu0
      %v5011 = vadd.f32 0.0, %v5010
      %v5012 = vpop.f32.mrf.mxu0
      %5013 = vmatprep.mubr.bf16.mxu0 0
      %5014 = vmatmul.mubr.bf16.gmra.mxu0 %v4804
      %v5015 = vpop.f32.mrf.mxu0
      %v5016 = vadd.f32 0.0, %v5015
      %v5017 = vpop.f32.mrf.mxu0
      %v5018 = vpop.f32.mrf.mxu0
      %v5019 = vadd.f32 0.0, %v5018
      %v5020 = vpop.f32.mrf.mxu0
      %5021 = vmatprep.mubr.bf16.mxu0 0
      %5022 = vmatmul.mubr.bf16.gmra.mxu0 %v4807
      %v5023 = vpop.f32.mrf.mxu0
      %v5024 = vadd.f32 0.0, %v5023
      %v5025 = vpop.f32.mrf.mxu0
      %v5026 = vpop.f32.mrf.mxu0
      %v5027 = vadd.f32 0.0, %v5026
      %v5028 = vpop.f32.mrf.mxu0
      %5029 = vmatprep.mubr.bf16.mxu0 0
      %5030 = vmatmul.mubr.bf16.gmra.mxu0 %v4810
      %v5031 = vpop.f32.mrf.mxu0
      %v5032 = vadd.f32 0.0, %v5031
      %v5033 = vpop.f32.mrf.mxu0
      %v5034 = vpop.f32.mrf.mxu0
      %v5035 = vadd.f32 0.0, %v5034
      %v5036 = vpop.f32.mrf.mxu0
      %5037 = vmatprep.mubr.bf16.mxu0 0
      %5038 = vmatmul.mubr.bf16.gmra.mxu0 %v4813
      %v5039 = vpop.f32.mrf.mxu0
      %v5040 = vadd.f32 0.0, %v5039
      %v5041 = vpop.f32.mrf.mxu0
      %v5042 = vpop.f32.mrf.mxu0
      %v5043 = vadd.f32 0.0, %v5042
      %v5044 = vpop.f32.mrf.mxu0
      %5045 = vmatprep.mubr.bf16.mxu0 0
      %5046 = vmatmul.mubr.bf16.gmra.mxu0 %v4816
      %v5047 = vpop.f32.mrf.mxu0
      %v5048 = vpop.f32.mrf.mxu0
      %v5049 = vpop.f32.mrf.mxu0
      %v5050 = vpop.f32.mrf.mxu0
      %5051 = vdwg.mxu0
      %v5055 = vunpack.c.l.b16 %v4565
      %v5056 = vunpack.c.l.b16 %v4566
      %v5057 = vunpack.c.l.b16 %v4567
      %v5058 = vpack.c.b16 %v5056, %v5055
      %v5059 = vpack.c.b16 %v4669, %v5057
      %v5060 = vpack.c.b16 %v4671, %v4670
      %v5061 = vpack.c.b16 %v4673, %v4672
      %v5062 = vpack.c.b16 %v4675, %v4674
      %v5063 = vpack.c.b16 %v4677, %v4676
      %v5064 = vpack.c.b16 %v4679, %v4678
      %v5065 = vpack.c.b16 %v4681, %v4680
      %v5066 = vpack.c.b16 %v4683, %v4682
      %v5067 = vpack.c.b16 %v4685, %v4684
      %v5068 = vpack.c.b16 %v4687, %v4686
      %v5069 = vpack.c.b16 %v4689, %v4688
      %v5070 = vpack.c.b16 %v4691, %v4690
      %v5071 = vpack.c.b16 %v4693, %v4692
      %v5072 = vpack.c.b16 %v4695, %v4694
      %v5073 = vpack.c.b16 %v4697, %v4696
      %v5074 = vpack.c.b16 %v4699, %v4698
      %v5075 = vpack.c.b16 %v4701, %v4700
      %v5076 = vpack.c.b16 %v4703, %v4702
      %v5077 = vpack.c.b16 %v4705, %v4704
      %v5078 = vpack.c.b16 %v4707, %v4706
      %v5079 = vpack.c.b16 %v4709, %v4708
      %v5080 = vpack.c.b16 %v4711, %v4710
      %v5081 = vpack.c.b16 %v4713, %v4712
      %v5082 = vpack.c.b16 %v4714, %v4714
      %v5084 = vsel %vm942, %v5058, 0
      %v5087 = vsel %vm942, %v5059, 0
      %v5090 = vsel %vm942, %v5060, 0
      %v5093 = vsel %vm942, %v5061, 0
      %v5096 = vsel %vm942, %v5062, 0
      %v5099 = vsel %vm942, %v5063, 0
      %v5102 = vsel %vm942, %v5064, 0
      %v5105 = vsel %vm942, %v5065, 0
      %v5108 = vsel %vm942, %v5066, 0
      %v5111 = vsel %vm942, %v5067, 0
      %v5114 = vsel %vm942, %v5068, 0
      %v5117 = vsel %vm942, %v5069, 0
      %v5120 = vsel %vm942, %v5070, 0
      %v5123 = vsel %vm942, %v5071, 0
      %v5126 = vsel %vm942, %v5072, 0
      %v5129 = vsel %vm942, %v5073, 0
      %v5132 = vsel %vm942, %v5074, 0
      %v5135 = vsel %vm942, %v5075, 0
      %v5138 = vsel %vm942, %v5076, 0
      %v5141 = vsel %vm942, %v5077, 0
      %v5144 = vsel %vm942, %v5078, 0
      %v5147 = vsel %vm942, %v5079, 0
      %v5150 = vsel %vm942, %v5080, 0
      %v5153 = vsel %vm942, %v5081, 0
      %v5156 = vsel %vm942, %v5082, 0
      %v5159 = vsel %vm1018, %v4614, 0
      %5161 = vmatprep.subr.bf16.mxu0 0
      %5162 = vmatpush1.bf16.msra.mxu0 0
      %5163 = vmatprep.subr.bf16.mxu0 0
      %5164 = vmatpush1.bf16.msra.mxu0 0
      %5165 = vmatprep.subr.bf16.mxu0 0
      %5166 = vmatpush1.bf16.msra.mxu0 0
      %5167 = vmatprep.subr.bf16.mxu0 0
      %5168 = vmatpush1.bf16.msra.mxu0 0
      %5169 = vmatprep.subr.bf16.mxu0 0
      %5170 = vmatpush1.bf16.msra.mxu0 0
      %5171 = vmatprep.subr.bf16.mxu0 0
      %5172 = vmatpush1.bf16.msra.mxu0 0
      %5173 = vmatprep.subr.bf16.mxu0 0
      %5174 = vmatpush1.bf16.msra.mxu0 0
      %5175 = vmatprep.subr.bf16.mxu0 0
      %5176 = vmatpush1.bf16.msra.mxu0 %v5159
      %5177 = vmatprep.subr.bf16.mxu0 0
      %5178 = vmatpush2.bf16.msra.mxu0 0
      %5179 = vmatprep.subr.bf16.mxu0 0
      %5180 = vmatpush2.bf16.msra.mxu0 0
      %5181 = vmatprep.subr.bf16.mxu0 0
      %5182 = vmatpush2.bf16.msra.mxu0 0
      %5183 = vmatprep.subr.bf16.mxu0 0
      %5184 = vmatpush2.bf16.msra.mxu0 0
      %5185 = vmatprep.subr.bf16.mxu0 0
      %5186 = vmatpush2.bf16.msra.mxu0 0
      %5187 = vmatprep.subr.bf16.mxu0 0
      %5188 = vmatpush2.bf16.msra.mxu0 0
      %5189 = vmatprep.subr.bf16.mxu0 0
      %5190 = vmatpush2.bf16.msra.mxu0 0
      %5191 = vmatprep.subr.bf16.mxu0 0
      %5192 = vmatpush2.bf16.msra.mxu0 0
      %5193 = vmatprep.mubr.bf16.mxu0 0
      %5194 = vmatmul.mubr.bf16.gmra.mxu0 %v5084
      %v5195 = vpop.f32.mrf.mxu0
      %v5196 = vadd.f32 %v4856, %v5195
      %v5197 = vpop.f32.mrf.mxu0
      %v5198 = vpop.f32.mrf.mxu0
      %v5199 = vadd.f32 %v4859, %v5198
      %v5200 = vpop.f32.mrf.mxu0
      %5201 = vmatprep.mubr.bf16.mxu0 0
      %5202 = vmatmul.mubr.bf16.gmra.mxu0 %v5087
      %v5203 = vpop.f32.mrf.mxu0
      %v5204 = vadd.f32 %v4864, %v5203
      %v5205 = vpop.f32.mrf.mxu0
      %v5206 = vpop.f32.mrf.mxu0
      %v5207 = vadd.f32 %v4867, %v5206
      %v5208 = vpop.f32.mrf.mxu0
      %5209 = vmatprep.mubr.bf16.mxu0 0
      %5210 = vmatmul.mubr.bf16.gmra.mxu0 %v5090
      %v5211 = vpop.f32.mrf.mxu0
      %v5212 = vadd.f32 %v4872, %v5211
      %v5213 = vpop.f32.mrf.mxu0
      %v5214 = vpop.f32.mrf.mxu0
      %v5215 = vadd.f32 %v4875, %v5214
      %v5216 = vpop.f32.mrf.mxu0
      %5217 = vmatprep.mubr.bf16.mxu0 0
      %5218 = vmatmul.mubr.bf16.gmra.mxu0 %v5093
      %v5219 = vpop.f32.mrf.mxu0
      %v5220 = vadd.f32 %v4880, %v5219
      %v5221 = vpop.f32.mrf.mxu0
      %v5222 = vpop.f32.mrf.mxu0
      %v5223 = vadd.f32 %v4883, %v5222
      %v5224 = vpop.f32.mrf.mxu0
      %5225 = vmatprep.mubr.bf16.mxu0 0
      %5226 = vmatmul.mubr.bf16.gmra.mxu0 %v5096
      %v5227 = vpop.f32.mrf.mxu0
      %v5228 = vadd.f32 %v4888, %v5227
      %v5229 = vpop.f32.mrf.mxu0
      %v5230 = vpop.f32.mrf.mxu0
      %v5231 = vadd.f32 %v4891, %v5230
      %v5232 = vpop.f32.mrf.mxu0
      %5233 = vmatprep.mubr.bf16.mxu0 0
      %5234 = vmatmul.mubr.bf16.gmra.mxu0 %v5099
      %v5235 = vpop.f32.mrf.mxu0
      %v5236 = vadd.f32 %v4896, %v5235
      %v5237 = vpop.f32.mrf.mxu0
      %v5238 = vpop.f32.mrf.mxu0
      %v5239 = vadd.f32 %v4899, %v5238
      %v5240 = vpop.f32.mrf.mxu0
      %5241 = vmatprep.mubr.bf16.mxu0 0
      %5242 = vmatmul.mubr.bf16.gmra.mxu0 %v5102
      %v5243 = vpop.f32.mrf.mxu0
      %v5244 = vadd.f32 %v4904, %v5243
      %v5245 = vpop.f32.mrf.mxu0
      %v5246 = vpop.f32.mrf.mxu0
      %v5247 = vadd.f32 %v4907, %v5246
      %v5248 = vpop.f32.mrf.mxu0
      %5249 = vmatprep.mubr.bf16.mxu0 0
      %5250 = vmatmul.mubr.bf16.gmra.mxu0 %v5105
      %v5251 = vpop.f32.mrf.mxu0
      %v5252 = vadd.f32 %v4912, %v5251
      %v5253 = vpop.f32.mrf.mxu0
      %v5254 = vpop.f32.mrf.mxu0
      %v5255 = vadd.f32 %v4915, %v5254
      %v5256 = vpop.f32.mrf.mxu0
      %5257 = vmatprep.mubr.bf16.mxu0 0
      %5258 = vmatmul.mubr.bf16.gmra.mxu0 %v5108
      %v5259 = vpop.f32.mrf.mxu0
      %v5260 = vadd.f32 %v4920, %v5259
      %v5261 = vpop.f32.mrf.mxu0
      %v5262 = vpop.f32.mrf.mxu0
      %v5263 = vadd.f32 %v4923, %v5262
      %v5264 = vpop.f32.mrf.mxu0
      %5265 = vmatprep.mubr.bf16.mxu0 0
      %5266 = vmatmul.mubr.bf16.gmra.mxu0 %v5111
      %v5267 = vpop.f32.mrf.mxu0
      %v5268 = vadd.f32 %v4928, %v5267
      %v5269 = vpop.f32.mrf.mxu0
      %v5270 = vpop.f32.mrf.mxu0
      %v5271 = vadd.f32 %v4931, %v5270
      %v5272 = vpop.f32.mrf.mxu0
      %5273 = vmatprep.mubr.bf16.mxu0 0
      %5274 = vmatmul.mubr.bf16.gmra.mxu0 %v5114
      %v5275 = vpop.f32.mrf.mxu0
      %v5276 = vadd.f32 %v4936, %v5275
      %v5277 = vpop.f32.mrf.mxu0
      %v5278 = vpop.f32.mrf.mxu0
      %v5279 = vadd.f32 %v4939, %v5278
      %v5280 = vpop.f32.mrf.mxu0
      %5281 = vmatprep.mubr.bf16.mxu0 0
      %5282 = vmatmul.mubr.bf16.gmra.mxu0 %v5117
      %v5283 = vpop.f32.mrf.mxu0
      %v5284 = vadd.f32 %v4944, %v5283
      %v5285 = vpop.f32.mrf.mxu0
      %v5286 = vpop.f32.mrf.mxu0
      %v5287 = vadd.f32 %v4947, %v5286
      %v5288 = vpop.f32.mrf.mxu0
      %5289 = vmatprep.mubr.bf16.mxu0 0
      %5290 = vmatmul.mubr.bf16.gmra.mxu0 %v5120
      %v5291 = vpop.f32.mrf.mxu0
      %v5292 = vadd.f32 %v4952, %v5291
      %v5293 = vpop.f32.mrf.mxu0
      %v5294 = vpop.f32.mrf.mxu0
      %v5295 = vadd.f32 %v4955, %v5294
      %v5296 = vpop.f32.mrf.mxu0
      %5297 = vmatprep.mubr.bf16.mxu0 0
      %5298 = vmatmul.mubr.bf16.gmra.mxu0 %v5123
      %v5299 = vpop.f32.mrf.mxu0
      %v5300 = vadd.f32 %v4960, %v5299
      %v5301 = vpop.f32.mrf.mxu0
      %v5302 = vpop.f32.mrf.mxu0
      %v5303 = vadd.f32 %v4963, %v5302
      %v5304 = vpop.f32.mrf.mxu0
      %5305 = vmatprep.mubr.bf16.mxu0 0
      %5306 = vmatmul.mubr.bf16.gmra.mxu0 %v5126
      %v5307 = vpop.f32.mrf.mxu0
      %v5308 = vadd.f32 %v4968, %v5307
      %v5309 = vpop.f32.mrf.mxu0
      %v5310 = vpop.f32.mrf.mxu0
      %v5311 = vadd.f32 %v4971, %v5310
      %v5312 = vpop.f32.mrf.mxu0
      %5313 = vmatprep.mubr.bf16.mxu0 0
      %5314 = vmatmul.mubr.bf16.gmra.mxu0 %v5129
      %v5315 = vpop.f32.mrf.mxu0
      %v5316 = vadd.f32 %v4976, %v5315
      %v5317 = vpop.f32.mrf.mxu0
      %v5318 = vpop.f32.mrf.mxu0
      %v5319 = vadd.f32 %v4979, %v5318
      %v5320 = vpop.f32.mrf.mxu0
      %5321 = vmatprep.mubr.bf16.mxu0 0
      %5322 = vmatmul.mubr.bf16.gmra.mxu0 %v5132
      %v5323 = vpop.f32.mrf.mxu0
      %v5324 = vadd.f32 %v4984, %v5323
      %v5325 = vpop.f32.mrf.mxu0
      %v5326 = vpop.f32.mrf.mxu0
      %v5327 = vadd.f32 %v4987, %v5326
      %v5328 = vpop.f32.mrf.mxu0
      %5329 = vmatprep.mubr.bf16.mxu0 0
      %5330 = vmatmul.mubr.bf16.gmra.mxu0 %v5135
      %v5331 = vpop.f32.mrf.mxu0
      %v5332 = vadd.f32 %v4992, %v5331
      %v5333 = vpop.f32.mrf.mxu0
      %v5334 = vpop.f32.mrf.mxu0
      %v5335 = vadd.f32 %v4995, %v5334
      %v5336 = vpop.f32.mrf.mxu0
      %5337 = vmatprep.mubr.bf16.mxu0 0
      %5338 = vmatmul.mubr.bf16.gmra.mxu0 %v5138
      %v5339 = vpop.f32.mrf.mxu0
      %v5340 = vadd.f32 %v5000, %v5339
      %v5341 = vpop.f32.mrf.mxu0
      %v5342 = vpop.f32.mrf.mxu0
      %v5343 = vadd.f32 %v5003, %v5342
      %v5344 = vpop.f32.mrf.mxu0
      %5345 = vmatprep.mubr.bf16.mxu0 0
      %5346 = vmatmul.mubr.bf16.gmra.mxu0 %v5141
      %v5347 = vpop.f32.mrf.mxu0
      %v5348 = vadd.f32 %v5008, %v5347
      %v5349 = vpop.f32.mrf.mxu0
      %v5350 = vpop.f32.mrf.mxu0
      %v5351 = vadd.f32 %v5011, %v5350
      %v5352 = vpop.f32.mrf.mxu0
      %5353 = vmatprep.mubr.bf16.mxu0 0
      %5354 = vmatmul.mubr.bf16.gmra.mxu0 %v5144
      %v5355 = vpop.f32.mrf.mxu0
      %v5356 = vadd.f32 %v5016, %v5355
      %v5357 = vpop.f32.mrf.mxu0
      %v5358 = vpop.f32.mrf.mxu0
      %v5359 = vadd.f32 %v5019, %v5358
      %v5360 = vpop.f32.mrf.mxu0
      %5361 = vmatprep.mubr.bf16.mxu0 0
      %5362 = vmatmul.mubr.bf16.gmra.mxu0 %v5147
      %v5363 = vpop.f32.mrf.mxu0
      %v5364 = vadd.f32 %v5024, %v5363
      %v5365 = vpop.f32.mrf.mxu0
      %v5366 = vpop.f32.mrf.mxu0
      %v5367 = vadd.f32 %v5027, %v5366
      %v5368 = vpop.f32.mrf.mxu0
      %5369 = vmatprep.mubr.bf16.mxu0 0
      %5370 = vmatmul.mubr.bf16.gmra.mxu0 %v5150
      %v5371 = vpop.f32.mrf.mxu0
      %v5372 = vadd.f32 %v5032, %v5371
      %v5373 = vpop.f32.mrf.mxu0
      %v5374 = vpop.f32.mrf.mxu0
      %v5375 = vadd.f32 %v5035, %v5374
      %v5376 = vpop.f32.mrf.mxu0
      %5377 = vmatprep.mubr.bf16.mxu0 0
      %5378 = vmatmul.mubr.bf16.gmra.mxu0 %v5153
      %v5379 = vpop.f32.mrf.mxu0
      %v5380 = vadd.f32 %v5040, %v5379
      %v5381 = vpop.f32.mrf.mxu0
      %v5382 = vpop.f32.mrf.mxu0
      %v5383 = vadd.f32 %v5043, %v5382
      %v5384 = vpop.f32.mrf.mxu0
      %5385 = vmatprep.mubr.bf16.mxu0 0
      %5386 = vmatmul.mubr.bf16.gmra.mxu0 %v5156
      %v5387 = vpop.f32.mrf.mxu0
      %v5388 = vpop.f32.mrf.mxu0
      %v5389 = vpop.f32.mrf.mxu0
      %v5390 = vpop.f32.mrf.mxu0
      %5391 = vdwg.mxu0
      %v5392 = vld [vmem:[#allocation3 + $0x18] sm:$0xf]
      %v5393 = vld [vmem:[#allocation3 + $0x1c] sm:$0xf]
      %v5394 = vld [vmem:[#allocation3 + $0x20] sm:$0xf]
      %v5395 = vld [vmem:[#allocation3 + $0x24] sm:$0xf]
      %v5396 = vld [vmem:[#allocation3 + $0x28] sm:$0xf]
      %v5397 = vld [vmem:[#allocation3 + $0x2c] sm:$0xf]
      %v5398 = vld [vmem:[#allocation3 + $0x30] sm:$0xf]
      %v5399 = vld [vmem:[#allocation3 + $0x34] sm:$0xf]
      %v5400 = vld [vmem:[#allocation3 + $0x38] sm:$0xf]
      %v5401 = vld [vmem:[#allocation3 + $0x3c] sm:$0xf]
      %v5402 = vld [vmem:[#allocation3 + $0x40] sm:$0xf]
      %v5403 = vld [vmem:[#allocation3 + $0x44] sm:$0xf]
      %v5404 = vld [vmem:[#allocation3 + $0x48] sm:$0xf]
      %v5405 = vld [vmem:[#allocation3 + $0x4c] sm:$0xf]
      %v5406 = vld [vmem:[#allocation3 + $0x50] sm:$0xf]
      %v5407 = vld [vmem:[#allocation3 + $0x54] sm:$0xf]
      %v5408 = vld [vmem:[#allocation3 + $0x58] sm:$0xf]
      %v5409 = vld [vmem:[#allocation3 + $0x5c] sm:$0xf]
      %v5410 = vld [vmem:[#allocation3 + $0x60] sm:$0xf]
      %v5411 = vld [vmem:[#allocation3 + $0x64] sm:$0xf]
      %v5412 = vld [vmem:[#allocation3 + $0x68] sm:$0xf]
      %v5413 = vld [vmem:[#allocation3 + $0x6c] sm:$0xf]
      %v5414 = vld [vmem:[#allocation3 + $0x70] sm:$0xf]
      %v5415 = vld [vmem:[#allocation3 + $0x74] sm:$0xf]
      %v5416 = vld [vmem:[#allocation3 + $0x78] sm:$0xf]
      %v5417 = vld [vmem:[#allocation3 + $0x7c] sm:$0xf]
      %v5418 = vld [vmem:[#allocation3 + $0x80] sm:$0xf]
      %v5419 = vld [vmem:[#allocation3 + $0x84] sm:$0xf]
      %v5420 = vld [vmem:[#allocation3 + $0x88] sm:$0xf]
      %v5421 = vld [vmem:[#allocation3 + $0x8c] sm:$0xf]
      %v5422 = vld [vmem:[#allocation3 + $0x90] sm:$0xf]
      %v5423 = vld [vmem:[#allocation3 + $0x94] sm:$0xf]
      %v5424 = vld [vmem:[#allocation3 + $0x98] sm:$0xf]
      %v5425 = vld [vmem:[#allocation3 + $0x9c] sm:$0xf]
      %v5426 = vld [vmem:[#allocation3 + $0xa0] sm:$0xf]
      %v5427 = vld [vmem:[#allocation3 + $0xa4] sm:$0xf]
      %v5428 = vld [vmem:[#allocation3 + $0xa8] sm:$0xf]
      %v5429 = vld [vmem:[#allocation3 + $0xac] sm:$0xf]
      %v5430 = vld [vmem:[#allocation3 + $0xb0] sm:$0xf]
      %v5431 = vld [vmem:[#allocation3 + $0xb4] sm:$0xf]
      %v5432 = vld [vmem:[#allocation3 + $0xb8] sm:$0xf]
      %v5433 = vld [vmem:[#allocation3 + $0xbc] sm:$0xf]
      %v5434 = vld [vmem:[#allocation3 + $0xc0] sm:$0xf]
      %v5435 = vld [vmem:[#allocation3 + $0xc4] sm:$0xf]
      %v5436 = vld [vmem:[#allocation3 + $0xc8] sm:$0xf]
      %v5437 = vld [vmem:[#allocation3 + $0xcc] sm:$0xf]
      %v5438 = vld [vmem:[#allocation3 + $0xd0] sm:$0xf]
      %v5439 = vld [vmem:[#allocation3 + $0xd4] sm:$0xf]
      %v5440 = vld [vmem:[#allocation3 + $0xd8] sm:$0xf]
      %s5441 = scalar_lea.vmem %s2, 4
      %v5442 = vld [vmem:[%s5441] sm:$0x3]
      %v5492 = vunpack.c.l.b16 %v5392
      %v5493 = vunpack.c.l.b16 %v5393
      %v5494 = vunpack.c.l.b16 %v5394
      %v5495 = vunpack.c.l.b16 %v5395
      %v5496 = vunpack.c.l.b16 %v5396
      %v5497 = vunpack.c.l.b16 %v5397
      %v5498 = vunpack.c.l.b16 %v5398
      %v5499 = vunpack.c.l.b16 %v5399
      %v5500 = vunpack.c.l.b16 %v5400
      %v5501 = vunpack.c.l.b16 %v5401
      %v5502 = vunpack.c.l.b16 %v5402
      %v5503 = vunpack.c.l.b16 %v5403
      %v5504 = vunpack.c.l.b16 %v5404
      %v5505 = vunpack.c.l.b16 %v5405
      %v5506 = vunpack.c.l.b16 %v5406
      %v5507 = vunpack.c.l.b16 %v5407
      %v5508 = vunpack.c.l.b16 %v5408
      %v5509 = vunpack.c.l.b16 %v5409
      %v5510 = vunpack.c.l.b16 %v5410
      %v5511 = vunpack.c.l.b16 %v5411
      %v5512 = vunpack.c.l.b16 %v5412
      %v5513 = vunpack.c.l.b16 %v5413
      %v5514 = vunpack.c.l.b16 %v5414
      %v5515 = vunpack.c.l.b16 %v5415
      %v5516 = vunpack.c.l.b16 %v5416
      %v5517 = vunpack.c.l.b16 %v5417
      %v5518 = vunpack.c.l.b16 %v5418
      %v5519 = vunpack.c.l.b16 %v5419
      %v5520 = vunpack.c.l.b16 %v5420
      %v5521 = vunpack.c.l.b16 %v5421
      %v5522 = vunpack.c.l.b16 %v5422
      %v5523 = vunpack.c.l.b16 %v5423
      %v5524 = vunpack.c.l.b16 %v5424
      %v5525 = vunpack.c.l.b16 %v5425
      %v5526 = vunpack.c.l.b16 %v5426
      %v5527 = vunpack.c.l.b16 %v5427
      %v5528 = vunpack.c.l.b16 %v5428
      %v5529 = vunpack.c.l.b16 %v5429
      %v5530 = vunpack.c.l.b16 %v5430
      %v5531 = vunpack.c.l.b16 %v5431
      %v5532 = vunpack.c.l.b16 %v5432
      %v5533 = vunpack.c.l.b16 %v5433
      %v5534 = vunpack.c.l.b16 %v5434
      %v5535 = vunpack.c.l.b16 %v5435
      %v5536 = vunpack.c.l.b16 %v5436
      %v5537 = vunpack.c.l.b16 %v5437
      %v5538 = vunpack.c.l.b16 %v5438
      %v5539 = vunpack.c.l.b16 %v5439
      %v5540 = vunpack.c.l.b16 %v5440
      %v5541 = vpack.c.b16 %v5493, %v5492
      %v5542 = vpack.c.b16 %v5495, %v5494
      %v5543 = vpack.c.b16 %v5497, %v5496
      %v5544 = vpack.c.b16 %v5499, %v5498
      %v5545 = vpack.c.b16 %v5501, %v5500
      %v5546 = vpack.c.b16 %v5503, %v5502
      %v5547 = vpack.c.b16 %v5505, %v5504
      %v5548 = vpack.c.b16 %v5507, %v5506
      %v5549 = vpack.c.b16 %v5509, %v5508
      %v5550 = vpack.c.b16 %v5511, %v5510
      %v5551 = vpack.c.b16 %v5513, %v5512
      %v5552 = vpack.c.b16 %v5515, %v5514
      %v5553 = vpack.c.b16 %v5517, %v5516
      %v5554 = vpack.c.b16 %v5519, %v5518
      %v5555 = vpack.c.b16 %v5521, %v5520
      %v5556 = vpack.c.b16 %v5523, %v5522
      %v5557 = vpack.c.b16 %v5525, %v5524
      %v5558 = vpack.c.b16 %v5527, %v5526
      %v5559 = vpack.c.b16 %v5529, %v5528
      %v5560 = vpack.c.b16 %v5531, %v5530
      %v5561 = vpack.c.b16 %v5533, %v5532
      %v5562 = vpack.c.b16 %v5535, %v5534
      %v5563 = vpack.c.b16 %v5537, %v5536
      %v5564 = vpack.c.b16 %v5539, %v5538
      %v5565 = vpack.c.b16 %v5540, %v5540
      %v5567 = vsel %vm942, %v5541, 0
      %v5570 = vsel %vm942, %v5542, 0
      %v5573 = vsel %vm942, %v5543, 0
      %v5576 = vsel %vm942, %v5544, 0
      %v5579 = vsel %vm942, %v5545, 0
      %v5582 = vsel %vm942, %v5546, 0
      %v5585 = vsel %vm942, %v5547, 0
      %v5588 = vsel %vm942, %v5548, 0
      %v5591 = vsel %vm942, %v5549, 0
      %v5594 = vsel %vm942, %v5550, 0
      %v5597 = vsel %vm942, %v5551, 0
      %v5600 = vsel %vm942, %v5552, 0
      %v5603 = vsel %vm942, %v5553, 0
      %v5606 = vsel %vm942, %v5554, 0
      %v5609 = vsel %vm942, %v5555, 0
      %v5612 = vsel %vm942, %v5556, 0
      %v5615 = vsel %vm942, %v5557, 0
      %v5618 = vsel %vm942, %v5558, 0
      %v5621 = vsel %vm942, %v5559, 0
      %v5624 = vsel %vm942, %v5560, 0
      %v5627 = vsel %vm942, %v5561, 0
      %v5630 = vsel %vm942, %v5562, 0
      %v5633 = vsel %vm942, %v5563, 0
      %v5636 = vsel %vm942, %v5564, 0
      %v5639 = vsel %vm942, %v5565, 0
      %v5642 = vsel %vm1018, %v5442, 0
      %5644 = vmatprep.subr.bf16.mxu0 0
      %5645 = vmatpush1.bf16.msra.mxu0 0
      %5646 = vmatprep.subr.bf16.mxu0 0
      %5647 = vmatpush1.bf16.msra.mxu0 0
      %5648 = vmatprep.subr.bf16.mxu0 0
      %5649 = vmatpush1.bf16.msra.mxu0 0
      %5650 = vmatprep.subr.bf16.mxu0 0
      %5651 = vmatpush1.bf16.msra.mxu0 0
      %5652 = vmatprep.subr.bf16.mxu0 0
      %5653 = vmatpush1.bf16.msra.mxu0 0
      %5654 = vmatprep.subr.bf16.mxu0 0
      %5655 = vmatpush1.bf16.msra.mxu0 0
      %5656 = vmatprep.subr.bf16.mxu0 0
      %5657 = vmatpush1.bf16.msra.mxu0 0
      %5658 = vmatprep.subr.bf16.mxu0 0
      %5659 = vmatpush1.bf16.msra.mxu0 %v5642
      %5660 = vmatprep.subr.bf16.mxu0 0
      %5661 = vmatpush2.bf16.msra.mxu0 0
      %5662 = vmatprep.subr.bf16.mxu0 0
      %5663 = vmatpush2.bf16.msra.mxu0 0
      %5664 = vmatprep.subr.bf16.mxu0 0
      %5665 = vmatpush2.bf16.msra.mxu0 0
      %5666 = vmatprep.subr.bf16.mxu0 0
      %5667 = vmatpush2.bf16.msra.mxu0 0
      %5668 = vmatprep.subr.bf16.mxu0 0
      %5669 = vmatpush2.bf16.msra.mxu0 0
      %5670 = vmatprep.subr.bf16.mxu0 0
      %5671 = vmatpush2.bf16.msra.mxu0 0
      %5672 = vmatprep.subr.bf16.mxu0 0
      %5673 = vmatpush2.bf16.msra.mxu0 0
      %5674 = vmatprep.subr.bf16.mxu0 0
      %5675 = vmatpush2.bf16.msra.mxu0 0
      %5676 = vmatprep.mubr.bf16.mxu0 0
      %5677 = vmatmul.mubr.bf16.gmra.mxu0 %v5567
      %v5678 = vpop.f32.mrf.mxu0
      %v5679 = vadd.f32 0.0, %v5678
      %v5680 = vpop.f32.mrf.mxu0
      %v5681 = vpop.f32.mrf.mxu0
      %v5682 = vadd.f32 0.0, %v5681
      %v5683 = vpop.f32.mrf.mxu0
      %5684 = vmatprep.mubr.bf16.mxu0 0
      %5685 = vmatmul.mubr.bf16.gmra.mxu0 %v5570
      %v5686 = vpop.f32.mrf.mxu0
      %v5687 = vadd.f32 0.0, %v5686
      %v5688 = vpop.f32.mrf.mxu0
      %v5689 = vpop.f32.mrf.mxu0
      %v5690 = vadd.f32 0.0, %v5689
      %v5691 = vpop.f32.mrf.mxu0
      %5692 = vmatprep.mubr.bf16.mxu0 0
      %5693 = vmatmul.mubr.bf16.gmra.mxu0 %v5573
      %v5694 = vpop.f32.mrf.mxu0
      %v5695 = vadd.f32 0.0, %v5694
      %v5696 = vpop.f32.mrf.mxu0
      %v5697 = vpop.f32.mrf.mxu0
      %v5698 = vadd.f32 0.0, %v5697
      %v5699 = vpop.f32.mrf.mxu0
      %5700 = vmatprep.mubr.bf16.mxu0 0
      %5701 = vmatmul.mubr.bf16.gmra.mxu0 %v5576
      %v5702 = vpop.f32.mrf.mxu0
      %v5703 = vadd.f32 0.0, %v5702
      %v5704 = vpop.f32.mrf.mxu0
      %v5705 = vpop.f32.mrf.mxu0
      %v5706 = vadd.f32 0.0, %v5705
      %v5707 = vpop.f32.mrf.mxu0
      %5708 = vmatprep.mubr.bf16.mxu0 0
      %5709 = vmatmul.mubr.bf16.gmra.mxu0 %v5579
      %v5710 = vpop.f32.mrf.mxu0
      %v5711 = vadd.f32 0.0, %v5710
      %v5712 = vpop.f32.mrf.mxu0
      %v5713 = vpop.f32.mrf.mxu0
      %v5714 = vadd.f32 0.0, %v5713
      %v5715 = vpop.f32.mrf.mxu0
      %5716 = vmatprep.mubr.bf16.mxu0 0
      %5717 = vmatmul.mubr.bf16.gmra.mxu0 %v5582
      %v5718 = vpop.f32.mrf.mxu0
      %v5719 = vadd.f32 0.0, %v5718
      %v5720 = vpop.f32.mrf.mxu0
      %v5721 = vpop.f32.mrf.mxu0
      %v5722 = vadd.f32 0.0, %v5721
      %v5723 = vpop.f32.mrf.mxu0
      %5724 = vmatprep.mubr.bf16.mxu0 0
      %5725 = vmatmul.mubr.bf16.gmra.mxu0 %v5585
      %v5726 = vpop.f32.mrf.mxu0
      %v5727 = vadd.f32 0.0, %v5726
      %v5728 = vpop.f32.mrf.mxu0
      %v5729 = vpop.f32.mrf.mxu0
      %v5730 = vadd.f32 0.0, %v5729
      %v5731 = vpop.f32.mrf.mxu0
      %5732 = vmatprep.mubr.bf16.mxu0 0
      %5733 = vmatmul.mubr.bf16.gmra.mxu0 %v5588
      %v5734 = vpop.f32.mrf.mxu0
      %v5735 = vadd.f32 0.0, %v5734
      %v5736 = vpop.f32.mrf.mxu0
      %v5737 = vpop.f32.mrf.mxu0
      %v5738 = vadd.f32 0.0, %v5737
      %v5739 = vpop.f32.mrf.mxu0
      %5740 = vmatprep.mubr.bf16.mxu0 0
      %5741 = vmatmul.mubr.bf16.gmra.mxu0 %v5591
      %v5742 = vpop.f32.mrf.mxu0
      %v5743 = vadd.f32 0.0, %v5742
      %v5744 = vpop.f32.mrf.mxu0
      %v5745 = vpop.f32.mrf.mxu0
      %v5746 = vadd.f32 0.0, %v5745
      %v5747 = vpop.f32.mrf.mxu0
      %5748 = vmatprep.mubr.bf16.mxu0 0
      %5749 = vmatmul.mubr.bf16.gmra.mxu0 %v5594
      %v5750 = vpop.f32.mrf.mxu0
      %v5751 = vadd.f32 0.0, %v5750
      %v5752 = vpop.f32.mrf.mxu0
      %v5753 = vpop.f32.mrf.mxu0
      %v5754 = vadd.f32 0.0, %v5753
      %v5755 = vpop.f32.mrf.mxu0
      %5756 = vmatprep.mubr.bf16.mxu0 0
      %5757 = vmatmul.mubr.bf16.gmra.mxu0 %v5597
      %v5758 = vpop.f32.mrf.mxu0
      %v5759 = vadd.f32 0.0, %v5758
      %v5760 = vpop.f32.mrf.mxu0
      %v5761 = vpop.f32.mrf.mxu0
      %v5762 = vadd.f32 0.0, %v5761
      %v5763 = vpop.f32.mrf.mxu0
      %5764 = vmatprep.mubr.bf16.mxu0 0
      %5765 = vmatmul.mubr.bf16.gmra.mxu0 %v5600
      %v5766 = vpop.f32.mrf.mxu0
      %v5767 = vadd.f32 0.0, %v5766
      %v5768 = vpop.f32.mrf.mxu0
      %v5769 = vpop.f32.mrf.mxu0
      %v5770 = vadd.f32 0.0, %v5769
      %v5771 = vpop.f32.mrf.mxu0
      %5772 = vmatprep.mubr.bf16.mxu0 0
      %5773 = vmatmul.mubr.bf16.gmra.mxu0 %v5603
      %v5774 = vpop.f32.mrf.mxu0
      %v5775 = vadd.f32 0.0, %v5774
      %v5776 = vpop.f32.mrf.mxu0
      %v5777 = vpop.f32.mrf.mxu0
      %v5778 = vadd.f32 0.0, %v5777
      %v5779 = vpop.f32.mrf.mxu0
      %5780 = vmatprep.mubr.bf16.mxu0 0
      %5781 = vmatmul.mubr.bf16.gmra.mxu0 %v5606
      %v5782 = vpop.f32.mrf.mxu0
      %v5783 = vadd.f32 0.0, %v5782
      %v5784 = vpop.f32.mrf.mxu0
      %v5785 = vpop.f32.mrf.mxu0
      %v5786 = vadd.f32 0.0, %v5785
      %v5787 = vpop.f32.mrf.mxu0
      %5788 = vmatprep.mubr.bf16.mxu0 0
      %5789 = vmatmul.mubr.bf16.gmra.mxu0 %v5609
      %v5790 = vpop.f32.mrf.mxu0
      %v5791 = vadd.f32 0.0, %v5790
      %v5792 = vpop.f32.mrf.mxu0
      %v5793 = vpop.f32.mrf.mxu0
      %v5794 = vadd.f32 0.0, %v5793
      %v5795 = vpop.f32.mrf.mxu0
      %5796 = vmatprep.mubr.bf16.mxu0 0
      %5797 = vmatmul.mubr.bf16.gmra.mxu0 %v5612
      %v5798 = vpop.f32.mrf.mxu0
      %v5799 = vadd.f32 0.0, %v5798
      %v5800 = vpop.f32.mrf.mxu0
      %v5801 = vpop.f32.mrf.mxu0
      %v5802 = vadd.f32 0.0, %v5801
      %v5803 = vpop.f32.mrf.mxu0
      %5804 = vmatprep.mubr.bf16.mxu0 0
      %5805 = vmatmul.mubr.bf16.gmra.mxu0 %v5615
      %v5806 = vpop.f32.mrf.mxu0
      %v5807 = vadd.f32 0.0, %v5806
      %v5808 = vpop.f32.mrf.mxu0
      %v5809 = vpop.f32.mrf.mxu0
      %v5810 = vadd.f32 0.0, %v5809
      %v5811 = vpop.f32.mrf.mxu0
      %5812 = vmatprep.mubr.bf16.mxu0 0
      %5813 = vmatmul.mubr.bf16.gmra.mxu0 %v5618
      %v5814 = vpop.f32.mrf.mxu0
      %v5815 = vadd.f32 0.0, %v5814
      %v5816 = vpop.f32.mrf.mxu0
      %v5817 = vpop.f32.mrf.mxu0
      %v5818 = vadd.f32 0.0, %v5817
      %v5819 = vpop.f32.mrf.mxu0
      %5820 = vmatprep.mubr.bf16.mxu0 0
      %5821 = vmatmul.mubr.bf16.gmra.mxu0 %v5621
      %v5822 = vpop.f32.mrf.mxu0
      %v5823 = vadd.f32 0.0, %v5822
      %v5824 = vpop.f32.mrf.mxu0
      %v5825 = vpop.f32.mrf.mxu0
      %v5826 = vadd.f32 0.0, %v5825
      %v5827 = vpop.f32.mrf.mxu0
      %5828 = vmatprep.mubr.bf16.mxu0 0
      %5829 = vmatmul.mubr.bf16.gmra.mxu0 %v5624
      %v5830 = vpop.f32.mrf.mxu0
      %v5831 = vadd.f32 0.0, %v5830
      %v5832 = vpop.f32.mrf.mxu0
      %v5833 = vpop.f32.mrf.mxu0
      %v5834 = vadd.f32 0.0, %v5833
      %v5835 = vpop.f32.mrf.mxu0
      %5836 = vmatprep.mubr.bf16.mxu0 0
      %5837 = vmatmul.mubr.bf16.gmra.mxu0 %v5627
      %v5838 = vpop.f32.mrf.mxu0
      %v5839 = vadd.f32 0.0, %v5838
      %v5840 = vpop.f32.mrf.mxu0
      %v5841 = vpop.f32.mrf.mxu0
      %v5842 = vadd.f32 0.0, %v5841
      %v5843 = vpop.f32.mrf.mxu0
      %5844 = vmatprep.mubr.bf16.mxu0 0
      %5845 = vmatmul.mubr.bf16.gmra.mxu0 %v5630
      %v5846 = vpop.f32.mrf.mxu0
      %v5847 = vadd.f32 0.0, %v5846
      %v5848 = vpop.f32.mrf.mxu0
      %v5849 = vpop.f32.mrf.mxu0
      %v5850 = vadd.f32 0.0, %v5849
      %v5851 = vpop.f32.mrf.mxu0
      %5852 = vmatprep.mubr.bf16.mxu0 0
      %5853 = vmatmul.mubr.bf16.gmra.mxu0 %v5633
      %v5854 = vpop.f32.mrf.mxu0
      %v5855 = vadd.f32 0.0, %v5854
      %v5856 = vpop.f32.mrf.mxu0
      %v5857 = vpop.f32.mrf.mxu0
      %v5858 = vadd.f32 0.0, %v5857
      %v5859 = vpop.f32.mrf.mxu0
      %5860 = vmatprep.mubr.bf16.mxu0 0
      %5861 = vmatmul.mubr.bf16.gmra.mxu0 %v5636
      %v5862 = vpop.f32.mrf.mxu0
      %v5863 = vadd.f32 0.0, %v5862
      %v5864 = vpop.f32.mrf.mxu0
      %v5865 = vpop.f32.mrf.mxu0
      %v5866 = vadd.f32 0.0, %v5865
      %v5867 = vpop.f32.mrf.mxu0
      %5868 = vmatprep.mubr.bf16.mxu0 0
      %5869 = vmatmul.mubr.bf16.gmra.mxu0 %v5639
      %v5870 = vpop.f32.mrf.mxu0
      %v5871 = vpop.f32.mrf.mxu0
      %v5872 = vpop.f32.mrf.mxu0
      %v5873 = vpop.f32.mrf.mxu0
      %5874 = vdwg.mxu0
      %v5875 = vadd.f32 %v5196, %v5679
      %v5876 = vadd.f32 %v5199, %v5682
      %v5877 = vadd.f32 %v5204, %v5687
      %v5878 = vadd.f32 %v5207, %v5690
      %v5879 = vadd.f32 %v5212, %v5695
      %v5880 = vadd.f32 %v5215, %v5698
      %v5881 = vadd.f32 %v5220, %v5703
      %v5882 = vadd.f32 %v5223, %v5706
      %v5883 = vadd.f32 %v5228, %v5711
      %v5884 = vadd.f32 %v5231, %v5714
      %v5885 = vadd.f32 %v5236, %v5719
      %v5886 = vadd.f32 %v5239, %v5722
      %v5887 = vadd.f32 %v5244, %v5727
      %v5888 = vadd.f32 %v5247, %v5730
      %v5889 = vadd.f32 %v5252, %v5735
      %v5890 = vadd.f32 %v5255, %v5738
      %v5891 = vadd.f32 %v5260, %v5743
      %v5892 = vadd.f32 %v5263, %v5746
      %v5893 = vadd.f32 %v5268, %v5751
      %v5894 = vadd.f32 %v5271, %v5754
      %v5895 = vadd.f32 %v5276, %v5759
      %v5896 = vadd.f32 %v5279, %v5762
      %v5897 = vadd.f32 %v5284, %v5767
      %v5898 = vadd.f32 %v5287, %v5770
      %v5899 = vadd.f32 %v5292, %v5775
      %v5900 = vadd.f32 %v5295, %v5778
      %v5901 = vadd.f32 %v5300, %v5783
      %v5902 = vadd.f32 %v5303, %v5786
      %v5903 = vadd.f32 %v5308, %v5791
      %v5904 = vadd.f32 %v5311, %v5794
      %v5905 = vadd.f32 %v5316, %v5799
      %v5906 = vadd.f32 %v5319, %v5802
      %v5907 = vadd.f32 %v5324, %v5807
      %v5908 = vadd.f32 %v5327, %v5810
      %v5909 = vadd.f32 %v5332, %v5815
      %v5910 = vadd.f32 %v5335, %v5818
      %v5911 = vadd.f32 %v5340, %v5823
      %v5912 = vadd.f32 %v5343, %v5826
      %v5913 = vadd.f32 %v5348, %v5831
      %v5914 = vadd.f32 %v5351, %v5834
      %v5915 = vadd.f32 %v5356, %v5839
      %v5916 = vadd.f32 %v5359, %v5842
      %v5917 = vadd.f32 %v5364, %v5847
      %v5918 = vadd.f32 %v5367, %v5850
      %v5919 = vadd.f32 %v5372, %v5855
      %v5920 = vadd.f32 %v5375, %v5858
      %v5921 = vadd.f32 %v5380, %v5863
      %v5922 = vadd.f32 %v5383, %v5866
      %v5971 = vrot.slane %v5875, 1
      %v5972 = vrot.slane %v5876, 1
      %v5973 = vsel %vm2177, %v5971, %v5972
      %v5974 = vrot.slane %v5877, 1
      %v5975 = vsel %vm2177, %v5972, %v5974
      %v5976 = vrot.slane %v5878, 1
      %v5977 = vrot.slane %v5879, 1
      %v5978 = vsel %vm2177, %v5976, %v5977
      %v5979 = vrot.slane %v5880, 1
      %v5980 = vsel %vm2177, %v5977, %v5979
      %v5981 = vrot.slane %v5881, 1
      %v5982 = vrot.slane %v5882, 1
      %v5983 = vsel %vm2177, %v5981, %v5982
      %v5984 = vrot.slane %v5883, 1
      %v5985 = vsel %vm2177, %v5982, %v5984
      %v5986 = vrot.slane %v5884, 1
      %v5987 = vrot.slane %v5885, 1
      %v5988 = vsel %vm2177, %v5986, %v5987
      %v5989 = vrot.slane %v5886, 1
      %v5990 = vsel %vm2177, %v5987, %v5989
      %v5991 = vrot.slane %v5887, 1
      %v5992 = vrot.slane %v5888, 1
      %v5993 = vsel %vm2177, %v5991, %v5992
      %v5994 = vrot.slane %v5889, 1
      %v5995 = vsel %vm2177, %v5992, %v5994
      %v5996 = vrot.slane %v5890, 1
      %v5997 = vrot.slane %v5891, 1
      %v5998 = vsel %vm2177, %v5996, %v5997
      %v5999 = vrot.slane %v5892, 1
      %v6000 = vsel %vm2177, %v5997, %v5999
      %v6001 = vrot.slane %v5893, 1
      %v6002 = vrot.slane %v5894, 1
      %v6003 = vsel %vm2177, %v6001, %v6002
      %v6004 = vrot.slane %v5895, 1
      %v6005 = vsel %vm2177, %v6002, %v6004
      %v6006 = vrot.slane %v5896, 1
      %v6007 = vrot.slane %v5897, 1
      %v6008 = vsel %vm2177, %v6006, %v6007
      %v6009 = vrot.slane %v5898, 1
      %v6010 = vsel %vm2177, %v6007, %v6009
      %v6011 = vrot.slane %v5899, 1
      %v6012 = vrot.slane %v5900, 1
      %v6013 = vsel %vm2177, %v6011, %v6012
      %v6014 = vrot.slane %v5901, 1
      %v6015 = vsel %vm2177, %v6012, %v6014
      %v6016 = vrot.slane %v5902, 1
      %v6017 = vrot.slane %v5903, 1
      %v6018 = vsel %vm2177, %v6016, %v6017
      %v6019 = vrot.slane %v5904, 1
      %v6020 = vsel %vm2177, %v6017, %v6019
      %v6021 = vrot.slane %v5905, 1
      %v6022 = vrot.slane %v5906, 1
      %v6023 = vsel %vm2177, %v6021, %v6022
      %v6024 = vrot.slane %v5907, 1
      %v6025 = vsel %vm2177, %v6022, %v6024
      %v6026 = vrot.slane %v5908, 1
      %v6027 = vrot.slane %v5909, 1
      %v6028 = vsel %vm2177, %v6026, %v6027
      %v6029 = vrot.slane %v5910, 1
      %v6030 = vsel %vm2177, %v6027, %v6029
      %v6031 = vrot.slane %v5911, 1
      %v6032 = vrot.slane %v5912, 1
      %v6033 = vsel %vm2177, %v6031, %v6032
      %v6034 = vrot.slane %v5913, 1
      %v6035 = vsel %vm2177, %v6032, %v6034
      %v6036 = vrot.slane %v5914, 1
      %v6037 = vrot.slane %v5915, 1
      %v6038 = vsel %vm2177, %v6036, %v6037
      %v6039 = vrot.slane %v5916, 1
      %v6040 = vsel %vm2177, %v6037, %v6039
      %v6041 = vrot.slane %v5917, 1
      %v6042 = vrot.slane %v5918, 1
      %v6043 = vsel %vm2177, %v6041, %v6042
      %v6044 = vrot.slane %v5919, 1
      %v6045 = vsel %vm2177, %v6042, %v6044
      %v6046 = vrot.slane %v5920, 1
      %v6047 = vrot.slane %v5921, 1
      %v6048 = vsel %vm2177, %v6046, %v6047
      %v6049 = vrot.slane %v5922, 1
      %v6050 = vsel %vm2177, %v6047, %v6049
      %6051 = vrot.lane.b32.xlu0 %v5973, 124
      %v6052 = vpop.permute.xlu0 %6051
      %6053 = vrot.lane.b32.xlu0 %v5975, 124
      %v6054 = vpop.permute.xlu0 %6053
      %6055 = vrot.lane.b32.xlu0 %v5978, 124
      %v6056 = vpop.permute.xlu0 %6055
      %6057 = vrot.lane.b32.xlu0 %v5980, 124
      %v6058 = vpop.permute.xlu0 %6057
      %6059 = vrot.lane.b32.xlu0 %v5983, 124
      %v6060 = vpop.permute.xlu0 %6059
      %6061 = vrot.lane.b32.xlu0 %v5985, 124
      %v6062 = vpop.permute.xlu0 %6061
      %6063 = vrot.lane.b32.xlu0 %v5988, 124
      %v6064 = vpop.permute.xlu0 %6063
      %6065 = vrot.lane.b32.xlu0 %v5990, 124
      %v6066 = vpop.permute.xlu0 %6065
      %6067 = vrot.lane.b32.xlu0 %v5993, 124
      %v6068 = vpop.permute.xlu0 %6067
      %6069 = vrot.lane.b32.xlu0 %v5995, 124
      %v6070 = vpop.permute.xlu0 %6069
      %6071 = vrot.lane.b32.xlu0 %v5998, 124
      %v6072 = vpop.permute.xlu0 %6071
      %6073 = vrot.lane.b32.xlu0 %v6000, 124
      %v6074 = vpop.permute.xlu0 %6073
      %6075 = vrot.lane.b32.xlu0 %v6003, 124
      %v6076 = vpop.permute.xlu0 %6075
      %6077 = vrot.lane.b32.xlu0 %v6005, 124
      %v6078 = vpop.permute.xlu0 %6077
      %6079 = vrot.lane.b32.xlu0 %v6008, 124
      %v6080 = vpop.permute.xlu0 %6079
      %6081 = vrot.lane.b32.xlu0 %v6010, 124
      %v6082 = vpop.permute.xlu0 %6081
      %6083 = vrot.lane.b32.xlu0 %v6013, 124
      %v6084 = vpop.permute.xlu0 %6083
      %6085 = vrot.lane.b32.xlu0 %v6015, 124
      %v6086 = vpop.permute.xlu0 %6085
      %6087 = vrot.lane.b32.xlu0 %v6018, 124
      %v6088 = vpop.permute.xlu0 %6087
      %6089 = vrot.lane.b32.xlu0 %v6020, 124
      %v6090 = vpop.permute.xlu0 %6089
      %6091 = vrot.lane.b32.xlu0 %v6023, 124
      %v6092 = vpop.permute.xlu0 %6091
      %6093 = vrot.lane.b32.xlu0 %v6025, 124
      %v6094 = vpop.permute.xlu0 %6093
      %6095 = vrot.lane.b32.xlu0 %v6028, 124
      %v6096 = vpop.permute.xlu0 %6095
      %6097 = vrot.lane.b32.xlu0 %v6030, 124
      %v6098 = vpop.permute.xlu0 %6097
      %6099 = vrot.lane.b32.xlu0 %v6033, 124
      %v6100 = vpop.permute.xlu0 %6099
      %6101 = vrot.lane.b32.xlu0 %v6035, 124
      %v6102 = vpop.permute.xlu0 %6101
      %6103 = vrot.lane.b32.xlu0 %v6038, 124
      %v6104 = vpop.permute.xlu0 %6103
      %6105 = vrot.lane.b32.xlu0 %v6040, 124
      %v6106 = vpop.permute.xlu0 %6105
      %6107 = vrot.lane.b32.xlu0 %v6043, 124
      %v6108 = vpop.permute.xlu0 %6107
      %6109 = vrot.lane.b32.xlu0 %v6045, 124
      %v6110 = vpop.permute.xlu0 %6109
      %6111 = vrot.lane.b32.xlu0 %v6048, 124
      %v6112 = vpop.permute.xlu0 %6111
      %6113 = vrot.lane.b32.xlu0 %v6050, 124
      %v6114 = vpop.permute.xlu0 %6113
      %v6147 = vadd.f32 %v5875, %v6052
      %v6148 = vadd.f32 %v5876, %v6054
      %v6149 = vadd.f32 %v5878, %v6056
      %v6150 = vadd.f32 %v5879, %v6058
      %v6151 = vadd.f32 %v5881, %v6060
      %v6152 = vadd.f32 %v5882, %v6062
      %v6153 = vadd.f32 %v5884, %v6064
      %v6154 = vadd.f32 %v5885, %v6066
      %v6155 = vadd.f32 %v5887, %v6068
      %v6156 = vadd.f32 %v5888, %v6070
      %v6157 = vadd.f32 %v5890, %v6072
      %v6158 = vadd.f32 %v5891, %v6074
      %v6159 = vadd.f32 %v5893, %v6076
      %v6160 = vadd.f32 %v5894, %v6078
      %v6161 = vadd.f32 %v5896, %v6080
      %v6162 = vadd.f32 %v5897, %v6082
      %v6163 = vadd.f32 %v5899, %v6084
      %v6164 = vadd.f32 %v5900, %v6086
      %v6165 = vadd.f32 %v5902, %v6088
      %v6166 = vadd.f32 %v5903, %v6090
      %v6167 = vadd.f32 %v5905, %v6092
      %v6168 = vadd.f32 %v5906, %v6094
      %v6169 = vadd.f32 %v5908, %v6096
      %v6170 = vadd.f32 %v5909, %v6098
      %v6171 = vadd.f32 %v5911, %v6100
      %v6172 = vadd.f32 %v5912, %v6102
      %v6173 = vadd.f32 %v5914, %v6104
      %v6174 = vadd.f32 %v5915, %v6106
      %v6175 = vadd.f32 %v5917, %v6108
      %v6176 = vadd.f32 %v5918, %v6110
      %v6177 = vadd.f32 %v5920, %v6112
      %v6178 = vadd.f32 %v5921, %v6114
      %v6179 = vrot.slane %v5875, 2
      %v6180 = vrot.slane %v5876, 2
      %v6181 = vsel %vm2467, %v6179, %v6180
      %v6182 = vrot.slane %v5877, 2
      %v6183 = vsel %vm2467, %v6180, %v6182
      %v6184 = vrot.slane %v5878, 2
      %v6185 = vrot.slane %v5879, 2
      %v6186 = vsel %vm2467, %v6184, %v6185
      %v6187 = vrot.slane %v5880, 2
      %v6188 = vsel %vm2467, %v6185, %v6187
      %v6189 = vrot.slane %v5881, 2
      %v6190 = vrot.slane %v5882, 2
      %v6191 = vsel %vm2467, %v6189, %v6190
      %v6192 = vrot.slane %v5883, 2
      %v6193 = vsel %vm2467, %v6190, %v6192
      %v6194 = vrot.slane %v5884, 2
      %v6195 = vrot.slane %v5885, 2
      %v6196 = vsel %vm2467, %v6194, %v6195
      %v6197 = vrot.slane %v5886, 2
      %v6198 = vsel %vm2467, %v6195, %v6197
      %v6199 = vrot.slane %v5887, 2
      %v6200 = vrot.slane %v5888, 2
      %v6201 = vsel %vm2467, %v6199, %v6200
      %v6202 = vrot.slane %v5889, 2
      %v6203 = vsel %vm2467, %v6200, %v6202
      %v6204 = vrot.slane %v5890, 2
      %v6205 = vrot.slane %v5891, 2
      %v6206 = vsel %vm2467, %v6204, %v6205
      %v6207 = vrot.slane %v5892, 2
      %v6208 = vsel %vm2467, %v6205, %v6207
      %v6209 = vrot.slane %v5893, 2
      %v6210 = vrot.slane %v5894, 2
      %v6211 = vsel %vm2467, %v6209, %v6210
      %v6212 = vrot.slane %v5895, 2
      %v6213 = vsel %vm2467, %v6210, %v6212
      %v6214 = vrot.slane %v5896, 2
      %v6215 = vrot.slane %v5897, 2
      %v6216 = vsel %vm2467, %v6214, %v6215
      %v6217 = vrot.slane %v5898, 2
      %v6218 = vsel %vm2467, %v6215, %v6217
      %v6219 = vrot.slane %v5899, 2
      %v6220 = vrot.slane %v5900, 2
      %v6221 = vsel %vm2467, %v6219, %v6220
      %v6222 = vrot.slane %v5901, 2
      %v6223 = vsel %vm2467, %v6220, %v6222
      %v6224 = vrot.slane %v5902, 2
      %v6225 = vrot.slane %v5903, 2
      %v6226 = vsel %vm2467, %v6224, %v6225
      %v6227 = vrot.slane %v5904, 2
      %v6228 = vsel %vm2467, %v6225, %v6227
      %v6229 = vrot.slane %v5905, 2
      %v6230 = vrot.slane %v5906, 2
      %v6231 = vsel %vm2467, %v6229, %v6230
      %v6232 = vrot.slane %v5907, 2
      %v6233 = vsel %vm2467, %v6230, %v6232
      %v6234 = vrot.slane %v5908, 2
      %v6235 = vrot.slane %v5909, 2
      %v6236 = vsel %vm2467, %v6234, %v6235
      %v6237 = vrot.slane %v5910, 2
      %v6238 = vsel %vm2467, %v6235, %v6237
      %v6239 = vrot.slane %v5911, 2
      %v6240 = vrot.slane %v5912, 2
      %v6241 = vsel %vm2467, %v6239, %v6240
      %v6242 = vrot.slane %v5913, 2
      %v6243 = vsel %vm2467, %v6240, %v6242
      %v6244 = vrot.slane %v5914, 2
      %v6245 = vrot.slane %v5915, 2
      %v6246 = vsel %vm2467, %v6244, %v6245
      %v6247 = vrot.slane %v5916, 2
      %v6248 = vsel %vm2467, %v6245, %v6247
      %v6249 = vrot.slane %v5917, 2
      %v6250 = vrot.slane %v5918, 2
      %v6251 = vsel %vm2467, %v6249, %v6250
      %v6252 = vrot.slane %v5919, 2
      %v6253 = vsel %vm2467, %v6250, %v6252
      %v6254 = vrot.slane %v5920, 2
      %v6255 = vrot.slane %v5921, 2
      %v6256 = vsel %vm2467, %v6254, %v6255
      %v6257 = vrot.slane %v5922, 2
      %v6258 = vsel %vm2467, %v6255, %v6257
      %6259 = vrot.lane.b32.xlu0 %v6181, 120
      %v6260 = vpop.permute.xlu0 %6259
      %6261 = vrot.lane.b32.xlu0 %v6183, 120
      %v6262 = vpop.permute.xlu0 %6261
      %6263 = vrot.lane.b32.xlu0 %v6186, 120
      %v6264 = vpop.permute.xlu0 %6263
      %6265 = vrot.lane.b32.xlu0 %v6188, 120
      %v6266 = vpop.permute.xlu0 %6265
      %6267 = vrot.lane.b32.xlu0 %v6191, 120
      %v6268 = vpop.permute.xlu0 %6267
      %6269 = vrot.lane.b32.xlu0 %v6193, 120
      %v6270 = vpop.permute.xlu0 %6269
      %6271 = vrot.lane.b32.xlu0 %v6196, 120
      %v6272 = vpop.permute.xlu0 %6271
      %6273 = vrot.lane.b32.xlu0 %v6198, 120
      %v6274 = vpop.permute.xlu0 %6273
      %6275 = vrot.lane.b32.xlu0 %v6201, 120
      %v6276 = vpop.permute.xlu0 %6275
      %6277 = vrot.lane.b32.xlu0 %v6203, 120
      %v6278 = vpop.permute.xlu0 %6277
      %6279 = vrot.lane.b32.xlu0 %v6206, 120
      %v6280 = vpop.permute.xlu0 %6279
      %6281 = vrot.lane.b32.xlu0 %v6208, 120
      %v6282 = vpop.permute.xlu0 %6281
      %6283 = vrot.lane.b32.xlu0 %v6211, 120
      %v6284 = vpop.permute.xlu0 %6283
      %6285 = vrot.lane.b32.xlu0 %v6213, 120
      %v6286 = vpop.permute.xlu0 %6285
      %6287 = vrot.lane.b32.xlu0 %v6216, 120
      %v6288 = vpop.permute.xlu0 %6287
      %6289 = vrot.lane.b32.xlu0 %v6218, 120
      %v6290 = vpop.permute.xlu0 %6289
      %6291 = vrot.lane.b32.xlu0 %v6221, 120
      %v6292 = vpop.permute.xlu0 %6291
      %6293 = vrot.lane.b32.xlu0 %v6223, 120
      %v6294 = vpop.permute.xlu0 %6293
      %6295 = vrot.lane.b32.xlu0 %v6226, 120
      %v6296 = vpop.permute.xlu0 %6295
      %6297 = vrot.lane.b32.xlu0 %v6228, 120
      %v6298 = vpop.permute.xlu0 %6297
      %6299 = vrot.lane.b32.xlu0 %v6231, 120
      %v6300 = vpop.permute.xlu0 %6299
      %6301 = vrot.lane.b32.xlu0 %v6233, 120
      %v6302 = vpop.permute.xlu0 %6301
      %6303 = vrot.lane.b32.xlu0 %v6236, 120
      %v6304 = vpop.permute.xlu0 %6303
      %6305 = vrot.lane.b32.xlu0 %v6238, 120
      %v6306 = vpop.permute.xlu0 %6305
      %6307 = vrot.lane.b32.xlu0 %v6241, 120
      %v6308 = vpop.permute.xlu0 %6307
      %6309 = vrot.lane.b32.xlu0 %v6243, 120
      %v6310 = vpop.permute.xlu0 %6309
      %6311 = vrot.lane.b32.xlu0 %v6246, 120
      %v6312 = vpop.permute.xlu0 %6311
      %6313 = vrot.lane.b32.xlu0 %v6248, 120
      %v6314 = vpop.permute.xlu0 %6313
      %6315 = vrot.lane.b32.xlu0 %v6251, 120
      %v6316 = vpop.permute.xlu0 %6315
      %6317 = vrot.lane.b32.xlu0 %v6253, 120
      %v6318 = vpop.permute.xlu0 %6317
      %6319 = vrot.lane.b32.xlu0 %v6256, 120
      %v6320 = vpop.permute.xlu0 %6319
      %6321 = vrot.lane.b32.xlu0 %v6258, 120
      %v6322 = vpop.permute.xlu0 %6321
      %v6355 = vadd.f32 %v6147, %v6260
      %v6356 = vadd.f32 %v6148, %v6262
      %v6357 = vadd.f32 %v6149, %v6264
      %v6358 = vadd.f32 %v6150, %v6266
      %v6359 = vadd.f32 %v6151, %v6268
      %v6360 = vadd.f32 %v6152, %v6270
      %v6361 = vadd.f32 %v6153, %v6272
      %v6362 = vadd.f32 %v6154, %v6274
      %v6363 = vadd.f32 %v6155, %v6276
      %v6364 = vadd.f32 %v6156, %v6278
      %v6365 = vadd.f32 %v6157, %v6280
      %v6366 = vadd.f32 %v6158, %v6282
      %v6367 = vadd.f32 %v6159, %v6284
      %v6368 = vadd.f32 %v6160, %v6286
      %v6369 = vadd.f32 %v6161, %v6288
      %v6370 = vadd.f32 %v6162, %v6290
      %v6371 = vadd.f32 %v6163, %v6292
      %v6372 = vadd.f32 %v6164, %v6294
      %v6373 = vadd.f32 %v6165, %v6296
      %v6374 = vadd.f32 %v6166, %v6298
      %v6375 = vadd.f32 %v6167, %v6300
      %v6376 = vadd.f32 %v6168, %v6302
      %v6377 = vadd.f32 %v6169, %v6304
      %v6378 = vadd.f32 %v6170, %v6306
      %v6379 = vadd.f32 %v6171, %v6308
      %v6380 = vadd.f32 %v6172, %v6310
      %v6381 = vadd.f32 %v6173, %v6312
      %v6382 = vadd.f32 %v6174, %v6314
      %v6383 = vadd.f32 %v6175, %v6316
      %v6384 = vadd.f32 %v6176, %v6318
      %v6385 = vadd.f32 %v6177, %v6320
      %v6386 = vadd.f32 %v6178, %v6322
      %v6387 = vld [vmem:[%s4] sm:$0x1]
      %v6389 = vlaneseq
      %v6390 = vshrl.u32 %v6389, 7
      %v6391 = vsub.s32 0, %v6390
      %v6392 = vrot.slane %v6387, %v6391
      %v6394 = vadd.f32 %v6355, %v6392
      %v6395 = vadd.f32 %v6356, %v6392
      %v6396 = vadd.f32 %v6357, %v6392
      %v6397 = vadd.f32 %v6358, %v6392
      %v6398 = vadd.f32 %v6359, %v6392
      %v6399 = vadd.f32 %v6360, %v6392
      %v6400 = vadd.f32 %v6361, %v6392
      %v6401 = vadd.f32 %v6362, %v6392
      %v6402 = vadd.f32 %v6363, %v6392
      %v6403 = vadd.f32 %v6364, %v6392
      %v6404 = vadd.f32 %v6365, %v6392
      %v6405 = vadd.f32 %v6366, %v6392
      %v6406 = vadd.f32 %v6367, %v6392
      %v6407 = vadd.f32 %v6368, %v6392
      %v6408 = vadd.f32 %v6369, %v6392
      %v6409 = vadd.f32 %v6370, %v6392
      %v6410 = vadd.f32 %v6371, %v6392
      %v6411 = vadd.f32 %v6372, %v6392
      %v6412 = vadd.f32 %v6373, %v6392
      %v6413 = vadd.f32 %v6374, %v6392
      %v6414 = vadd.f32 %v6375, %v6392
      %v6415 = vadd.f32 %v6376, %v6392
      %v6416 = vadd.f32 %v6377, %v6392
      %v6417 = vadd.f32 %v6378, %v6392
      %v6418 = vadd.f32 %v6379, %v6392
      %v6419 = vadd.f32 %v6380, %v6392
      %v6420 = vadd.f32 %v6381, %v6392
      %v6421 = vadd.f32 %v6382, %v6392
      %v6422 = vadd.f32 %v6383, %v6392
      %v6423 = vadd.f32 %v6384, %v6392
      %v6424 = vadd.f32 %v6385, %v6392
      %v6425 = vadd.f32 %v6386, %v6392
      %v6426 = vld [vmem:[%s219] sm:$0xf]
      %v6427 = vld [vmem:[%s219 + $0x4] sm:$0xf]
      %v6428 = vunpack.c.l.bf16 %v6426
      %v6429 = vunpack.c.l.bf16 %v6427
      %v6430 = vadd.f32 %v6394, %v6428
      %v6431 = vadd.f32 %v6395, %v6429
      %v6432 = vmax.f32 %v6430, 0.0
      %v6433 = vmax.f32 %v6431, 0.0
      %6434 = vst.msk [vmem:[%s224] sm:$0xff] %vm942, %v6432
      %6435 = vst.msk [vmem:[%s224 + $0x8] sm:$0xff] %vm942, %v6433
      %v6436 = vld [vmem:[%s269] sm:$0xf]
      %v6437 = vld [vmem:[%s269 + $0x4] sm:$0xf]
      %v6438 = vunpack.c.l.bf16 %v6436
      %v6439 = vunpack.c.l.bf16 %v6437
      %v6440 = vadd.f32 %v6396, %v6438
      %v6441 = vadd.f32 %v6397, %v6439
      %v6442 = vmax.f32 %v6440, 0.0
      %v6443 = vmax.f32 %v6441, 0.0
      %s6444 = scalar_lea.vmem %s224, 16
      %6445 = vst.msk [vmem:[%s6444] sm:$0xff] %vm942, %v6442
      %6446 = vst.msk [vmem:[%s6444 + $0x8] sm:$0xff] %vm942, %v6443
      %v6447 = vld [vmem:[%s302] sm:$0xf]
      %v6448 = vld [vmem:[%s302 + $0x4] sm:$0xf]
      %v6449 = vunpack.c.l.bf16 %v6447
      %v6450 = vunpack.c.l.bf16 %v6448
      %v6451 = vadd.f32 %v6398, %v6449
      %v6452 = vadd.f32 %v6399, %v6450
      %v6453 = vmax.f32 %v6451, 0.0
      %v6454 = vmax.f32 %v6452, 0.0
      %s6455 = scalar_lea.vmem %s224, 32
      %6456 = vst.msk [vmem:[%s6455] sm:$0xff] %vm942, %v6453
      %6457 = vst.msk [vmem:[%s6455 + $0x8] sm:$0xff] %vm942, %v6454
      %v6458 = vld [vmem:[%s335] sm:$0xf]
      %v6459 = vld [vmem:[%s335 + $0x4] sm:$0xf]
      %v6460 = vunpack.c.l.bf16 %v6458
      %v6461 = vunpack.c.l.bf16 %v6459
      %v6462 = vadd.f32 %v6400, %v6460
      %v6463 = vadd.f32 %v6401, %v6461
      %v6464 = vmax.f32 %v6462, 0.0
      %v6465 = vmax.f32 %v6463, 0.0
      %s6466 = scalar_lea.vmem %s224, 48
      %6467 = vst.msk [vmem:[%s6466] sm:$0xff] %vm942, %v6464
      %6468 = vst.msk [vmem:[%s6466 + $0x8] sm:$0xff] %vm942, %v6465
      %v6469 = vld [vmem:[%s368] sm:$0xf]
      %v6470 = vld [vmem:[%s368 + $0x4] sm:$0xf]
      %v6471 = vunpack.c.l.bf16 %v6469
      %v6472 = vunpack.c.l.bf16 %v6470
      %v6473 = vadd.f32 %v6402, %v6471
      %v6474 = vadd.f32 %v6403, %v6472
      %v6475 = vmax.f32 %v6473, 0.0
      %v6476 = vmax.f32 %v6474, 0.0
      %s6477 = scalar_lea.vmem %s224, 64
      %6478 = vst.msk [vmem:[%s6477] sm:$0xff] %vm942, %v6475
      %6479 = vst.msk [vmem:[%s6477 + $0x8] sm:$0xff] %vm942, %v6476
      %v6480 = vld [vmem:[%s401] sm:$0xf]
      %v6481 = vld [vmem:[%s401 + $0x4] sm:$0xf]
      %v6482 = vunpack.c.l.bf16 %v6480
      %v6483 = vunpack.c.l.bf16 %v6481
      %v6484 = vadd.f32 %v6404, %v6482
      %v6485 = vadd.f32 %v6405, %v6483
      %v6486 = vmax.f32 %v6484, 0.0
      %v6487 = vmax.f32 %v6485, 0.0
      %s6488 = scalar_lea.vmem %s224, 80
      %6489 = vst.msk [vmem:[%s6488] sm:$0xff] %vm942, %v6486
      %6490 = vst.msk [vmem:[%s6488 + $0x8] sm:$0xff] %vm942, %v6487
      %v6491 = vld [vmem:[%s434] sm:$0xf]
      %v6492 = vld [vmem:[%s434 + $0x4] sm:$0xf]
      %v6493 = vunpack.c.l.bf16 %v6491
      %v6494 = vunpack.c.l.bf16 %v6492
      %v6495 = vadd.f32 %v6406, %v6493
      %v6496 = vadd.f32 %v6407, %v6494
      %v6497 = vmax.f32 %v6495, 0.0
      %v6498 = vmax.f32 %v6496, 0.0
      %s6499 = scalar_lea.vmem %s224, 96
      %6500 = vst.msk [vmem:[%s6499] sm:$0xff] %vm942, %v6497
      %6501 = vst.msk [vmem:[%s6499 + $0x8] sm:$0xff] %vm942, %v6498
      %v6502 = vld [vmem:[%s467] sm:$0xf]
      %v6503 = vld [vmem:[%s467 + $0x4] sm:$0xf]
      %v6504 = vunpack.c.l.bf16 %v6502
      %v6505 = vunpack.c.l.bf16 %v6503
      %v6506 = vadd.f32 %v6408, %v6504
      %v6507 = vadd.f32 %v6409, %v6505
      %v6508 = vmax.f32 %v6506, 0.0
      %v6509 = vmax.f32 %v6507, 0.0
      %s6510 = scalar_lea.vmem %s224, 112
      %6511 = vst.msk [vmem:[%s6510] sm:$0xff] %vm942, %v6508
      %6512 = vst.msk [vmem:[%s6510 + $0x8] sm:$0xff] %vm942, %v6509
      %v6513 = vld [vmem:[%s500] sm:$0xf]
      %v6514 = vld [vmem:[%s500 + $0x4] sm:$0xf]
      %v6515 = vunpack.c.l.bf16 %v6513
      %v6516 = vunpack.c.l.bf16 %v6514
      %v6517 = vadd.f32 %v6410, %v6515
      %v6518 = vadd.f32 %v6411, %v6516
      %v6519 = vmax.f32 %v6517, 0.0
      %v6520 = vmax.f32 %v6518, 0.0
      %s6521 = scalar_lea.vmem %s224, 128
      %6522 = vst.msk [vmem:[%s6521] sm:$0xff] %vm942, %v6519
      %6523 = vst.msk [vmem:[%s6521 + $0x8] sm:$0xff] %vm942, %v6520
      %v6524 = vld [vmem:[%s533] sm:$0xf]
      %v6525 = vld [vmem:[%s533 + $0x4] sm:$0xf]
      %v6526 = vunpack.c.l.bf16 %v6524
      %v6527 = vunpack.c.l.bf16 %v6525
      %v6528 = vadd.f32 %v6412, %v6526
      %v6529 = vadd.f32 %v6413, %v6527
      %v6530 = vmax.f32 %v6528, 0.0
      %v6531 = vmax.f32 %v6529, 0.0
      %s6532 = scalar_lea.vmem %s224, 144
      %6533 = vst.msk [vmem:[%s6532] sm:$0xff] %vm942, %v6530
      %6534 = vst.msk [vmem:[%s6532 + $0x8] sm:$0xff] %vm942, %v6531
      %v6535 = vld [vmem:[%s566] sm:$0xf]
      %v6536 = vld [vmem:[%s566 + $0x4] sm:$0xf]
      %v6537 = vunpack.c.l.bf16 %v6535
      %v6538 = vunpack.c.l.bf16 %v6536
      %v6539 = vadd.f32 %v6414, %v6537
      %v6540 = vadd.f32 %v6415, %v6538
      %v6541 = vmax.f32 %v6539, 0.0
      %v6542 = vmax.f32 %v6540, 0.0
      %s6543 = scalar_lea.vmem %s224, 160
      %6544 = vst.msk [vmem:[%s6543] sm:$0xff] %vm942, %v6541
      %6545 = vst.msk [vmem:[%s6543 + $0x8] sm:$0xff] %vm942, %v6542
      %v6546 = vld [vmem:[%s599] sm:$0xf]
      %v6547 = vld [vmem:[%s599 + $0x4] sm:$0xf]
      %v6548 = vunpack.c.l.bf16 %v6546
      %v6549 = vunpack.c.l.bf16 %v6547
      %v6550 = vadd.f32 %v6416, %v6548
      %v6551 = vadd.f32 %v6417, %v6549
      %v6552 = vmax.f32 %v6550, 0.0
      %v6553 = vmax.f32 %v6551, 0.0
      %s6554 = scalar_lea.vmem %s224, 176
      %6555 = vst.msk [vmem:[%s6554] sm:$0xff] %vm942, %v6552
      %6556 = vst.msk [vmem:[%s6554 + $0x8] sm:$0xff] %vm942, %v6553
      %v6557 = vld [vmem:[%s632] sm:$0xf]
      %v6558 = vld [vmem:[%s632 + $0x4] sm:$0xf]
      %v6559 = vunpack.c.l.bf16 %v6557
      %v6560 = vunpack.c.l.bf16 %v6558
      %v6561 = vadd.f32 %v6418, %v6559
      %v6562 = vadd.f32 %v6419, %v6560
      %v6563 = vmax.f32 %v6561, 0.0
      %v6564 = vmax.f32 %v6562, 0.0
      %s6565 = scalar_lea.vmem %s224, 192
      %6566 = vst.msk [vmem:[%s6565] sm:$0xff] %vm942, %v6563
      %6567 = vst.msk [vmem:[%s6565 + $0x8] sm:$0xff] %vm942, %v6564
      %v6568 = vld [vmem:[%s665] sm:$0xf]
      %v6569 = vld [vmem:[%s665 + $0x4] sm:$0xf]
      %v6570 = vunpack.c.l.bf16 %v6568
      %v6571 = vunpack.c.l.bf16 %v6569
      %v6572 = vadd.f32 %v6420, %v6570
      %v6573 = vadd.f32 %v6421, %v6571
      %v6574 = vmax.f32 %v6572, 0.0
      %v6575 = vmax.f32 %v6573, 0.0
      %s6576 = scalar_lea.vmem %s224, 208
      %6577 = vst.msk [vmem:[%s6576] sm:$0xff] %vm942, %v6574
      %6578 = vst.msk [vmem:[%s6576 + $0x8] sm:$0xff] %vm942, %v6575
      %v6579 = vld [vmem:[%s698] sm:$0xf]
      %v6580 = vld [vmem:[%s698 + $0x4] sm:$0xf]
      %v6581 = vunpack.c.l.bf16 %v6579
      %v6582 = vunpack.c.l.bf16 %v6580
      %v6583 = vadd.f32 %v6422, %v6581
      %v6584 = vadd.f32 %v6423, %v6582
      %v6585 = vmax.f32 %v6583, 0.0
      %v6586 = vmax.f32 %v6584, 0.0
      %s6587 = scalar_lea.vmem %s224, 224
      %6588 = vst.msk [vmem:[%s6587] sm:$0xff] %vm942, %v6585
      %6589 = vst.msk [vmem:[%s6587 + $0x8] sm:$0xff] %vm942, %v6586
      %v6590 = vld [vmem:[%s731] sm:$0xf]
      %v6591 = vld [vmem:[%s731 + $0x4] sm:$0xf]
      %v6592 = vunpack.c.l.bf16 %v6590
      %v6593 = vunpack.c.l.bf16 %v6591
      %v6594 = vadd.f32 %v6424, %v6592
      %v6595 = vadd.f32 %v6425, %v6593
      %v6596 = vmax.f32 %v6594, 0.0
      %v6597 = vmax.f32 %v6595, 0.0
      %s6598 = scalar_lea.vmem %s224, 240
      %6599 = vst.msk [vmem:[%s6598] sm:$0xff] %vm942, %v6596
      %6600 = vst.msk [vmem:[%s6598 + $0x8] sm:$0xff] %vm942, %v6597
      %p6601 = scmp.lt.s32.totalorder %s16, 1
      %s6602 = scalar_select %p6601, %s16, 1
      %s6603 = smul.addr %s6602, 32
      %s6604 = smul.addr %s6603, 8
      %s6605 = scalar_lea.vmem %s5, %s6604
      // Predicated region
      $region41: #{basic_block_forward.1} parent=39 // pred_check
        %p6606 = pneg %p144
      $region42: #{basic_block_forward.1} parent=39 // pred_check_branch
        %6608 = sbr.rel (%p6606) target = $region44
      $region43: #{basic_block_forward.1} parent=39 // pred_region
        _
      $region44: #{basic_block_forward.1} parent=39 // pred_fallthru
        _
    $region40: #{basic_block_forward.1} parent=5 // pred_fallthru
      _
    %p6609 = scmp.le.s32.totalorder 2, %s11
    // Predicated region
    $region45: #{basic_block_forward.1} parent=5 // pred_check
      %p6610 = pneg %p6609
    $region46: #{basic_block_forward.1} parent=5 // pred_check_branch
      %6612 = sbr.rel (%p6610) target = $region48
    $region47: #{basic_block_forward.1} parent=5 // pred_region
      %s6613 = ssub.s32 %s11, 2
      // Predicated region
      $region49: #{basic_block_forward.1} parent=47 // pred_check
        %p6614 = pneg %p150
      $region50: #{basic_block_forward.1} parent=47 // pred_check_branch
        %6616 = sbr.rel (%p6614) target = $region52
      $region51: #{basic_block_forward.1} parent=47 // pred_region
        %p6617 = scmp.lt.s32.totalorder %s17, 1
        %s6618 = scalar_select %p6617, %s17, 1
        %s6619 = smul.addr %s6618, 32
        %s6620 = smul.addr %s6619, 8
        %s6621 = scalar_lea.vmem %s5, %s6620
      $region52: #{basic_block_forward.1} parent=47 // pred_fallthru
        _
    $region48: #{basic_block_forward.1} parent=5 // pred_fallthru
      _
  $region6: #{basic_block_forward.1} parent=0 // loop_footer
    %s15 = sadd.s32 1, %s11
  $region7: #{basic_block_forward.1} parent=0 // loop_footer_branch
    %10 = sbr.rel target = $region3
  $region8: #{basic_block_forward.1} parent=0 // loop_exit
    _

</llo_original>
